<compile_context>
chip_gen: v7x
topology: tpu7x:2x2x1
jax: 0.10.0
libtpu: 0.0.40
codegen_flags: <defaults>
</compile_context>

<pallas_src>
import functools

import jax
import jax.numpy as jnp
from jax.experimental import pallas as pl
from jax.experimental.pallas import tpu as pltpu


def _rup(x, m):
    return -(-x // m) * m


# ----------------------------------------------------------------------------
# Spatial metadata / layout helpers
# ----------------------------------------------------------------------------
def spatial_meta(H, W, kh=3, kw=3):
    ph, pw = kh // 2, kw // 2
    Hp, Wp = H + 2 * ph, W + 2 * pw
    out_len = H * Wp
    S = _rup(out_len, 128)                       # flat width (lane-dense)
    d_max = (kh - 1) * Wp + (kw - 1)
    L = _rup(d_max + S, 128)                     # slab width (tap slices stay in bounds)
    ys = jnp.linspace(-1.0, 1.0, H, dtype=jnp.float32)
    xs = jnp.linspace(-1.0, 1.0, W, dtype=jnp.float32)
    gy2, gx2 = jnp.meshgrid(ys, xs, indexing="ij")          # (H, W)

    def to_flat(a):
        a = jnp.pad(a, ((0, 0), (0, Wp - W)))
        return jnp.pad(a.reshape(1, out_len), ((0, 0), (0, S - out_len)))

    return dict(H=H, W=W, Hp=Hp, Wp=Wp, kh=kh, kw=kw, out_len=out_len, S=S, L=L,
                mask=to_flat(jnp.ones((H, W), jnp.float32)),
                gx=to_flat(gx2), gy=to_flat(gy2))


def image_to_slab(x, meta):
    """(N, C, H, W) f32 -> (N, C_p, L) bf16 slab layout."""
    N, C, H, W = x.shape
    C_p = _rup(C, 16)
    ph, pw = meta["kh"] // 2, meta["kw"] // 2
    xp = jnp.pad(x, ((0, 0), (0, 0), (ph, ph), (pw, pw)))
    flat = xp.reshape(N, C, meta["Hp"] * meta["Wp"])
    flat = jnp.pad(flat, ((0, 0), (0, C_p - C),
                          (0, meta["L"] - meta["Hp"] * meta["Wp"])))
    return flat.astype(jnp.bfloat16)


def flat_to_slab(flat, meta):
    """(N, C_p, S) flat (zeros at invalid lanes) -> (N, C_p, L) slab: lane shift by Wp+1."""
    pad_l = meta["Wp"] + 1
    return jnp.pad(flat, ((0, 0), (0, 0), (pad_l, meta["L"] - meta["S"] - pad_l)))


def flat_to_nchw(flat, C, meta):
    N = flat.shape[0]
    x = flat[:, :C, :meta["out_len"]].reshape(N, C, meta["H"], meta["Wp"])
    return x[:, :, :, :meta["W"]]


# ----------------------------------------------------------------------------
# Conv2d 3x3 (SAME, stride 1): single tap-stacked MXU matmul per image
# ----------------------------------------------------------------------------
def _conv_kernel(x_ref, w_ref, b_ref, mask_ref, o_ref, slab_ref, *,
                 taps, kw, wp, cin_p, s, relu):
    # x_ref: (1, Cin_p, L) bf16   w_ref: (Cout_p, taps*Cin_p) bf16
    # b_ref: (Cout_p, 1) f32      mask_ref: (1, S) f32
    # o_ref: (1, Cout_p, S)       slab_ref: (taps*Cin_p, S) bf16 VMEM scratch
    for t in range(taps):                         # build the im2col slab once
        i, j = divmod(t, kw)
        d = i * wp + j                            # static lane offset
        slab_ref[t * cin_p:(t + 1) * cin_p, :] = x_ref[0, :, d:d + s]
    # One MXU push with contraction depth taps*Cin_p (144 / 288).
    acc = jnp.dot(w_ref[...], slab_ref[...], preferred_element_type=jnp.float32)
    acc = acc + b_ref[...]
    if relu:
        acc = jnp.maximum(acc, 0.0)
    # Zero spatially-invalid lanes; single lane-dense store (S = multiple of 128).
    o_ref[0] = (acc * mask_ref[...]).astype(o_ref.dtype)


def conv2d_3x3(x_slab, w, b, meta, *, relu, out_dtype=jnp.bfloat16):
    """x_slab: (Nb, Cin_p, L) bf16 slab -> (Nb, Cout_p, S) flat layout."""
    Nb, Cin_p, L = x_slab.shape
    Cout, Cin, kh, kw = w.shape
    assert (kh, kw) == (meta["kh"], meta["kw"])
    assert Cin_p == _rup(Cin, 16) and L == meta["L"]
    Cout_p = _rup(Cout, 16)
    taps = kh * kw
    Wp, S = meta["Wp"], meta["S"]

    # Stacked weights: column block t holds w[:, :, i_t, j_t]  (matches slab row blocks).
    w_stk = jnp.transpose(w, (0, 2, 3, 1))                          # (Cout, kh, kw, Cin)
    w_stk = jnp.pad(w_stk, ((0, Cout_p - Cout), (0, 0), (0, 0), (0, Cin_p - Cin)))
    w_stk = w_stk.reshape(Cout_p, taps * Cin_p).astype(jnp.bfloat16)
    b2d = jnp.pad(b, (0, Cout_p - Cout)).reshape(Cout_p, 1).astype(jnp.float32)

    kernel = functools.partial(_conv_kernel, taps=taps, kw=kw, wp=Wp,
                               cin_p=Cin_p, s=S, relu=relu)
    return pl.pallas_call(
        kernel,
        out_shape=jax.ShapeDtypeStruct((Nb, Cout_p, S), out_dtype),
        grid=(Nb,),
        in_specs=[
            pl.BlockSpec((1, Cin_p, L), lambda n: (n, 0, 0)),
            pl.BlockSpec((Cout_p, taps * Cin_p), lambda n: (0, 0)),
            pl.BlockSpec((Cout_p, 1), lambda n: (0, 0)),
            pl.BlockSpec((1, S), lambda n: (0, 0)),
        ],
        out_specs=pl.BlockSpec((1, Cout_p, S), lambda n: (n, 0, 0)),
        scratch_shapes=[pltpu.VMEM((taps * Cin_p, S), jnp.bfloat16)],
        compiler_params=pltpu.CompilerParams(dimension_semantics=("parallel",)),
    )(x_slab, w_stk, b2d, meta["mask"])


# ----------------------------------------------------------------------------
# Fused keypoint head: 1x1 conv -> masked spatial softmax -> coords -> gaussian maps
# ----------------------------------------------------------------------------
def _kpt_head_kernel(h_ref, w_ref, b_ref, mask_ref, gx_ref, gy_ref,
                     g_ref, mux_ref, muy_ref, *, inv_two_var):
    heat = jnp.dot(w_ref[...], h_ref[0], preferred_element_type=jnp.float32) + b_ref[...]
    mask = mask_ref[...]                                     # (1, S), 1 = valid lane
    heat = heat + (mask - 1.0) * 1e30                        # invalid lanes -> -1e30
    m = jnp.max(heat, axis=-1, keepdims=True)
    e = jnp.exp(heat - m)                                    # exactly 0 at invalid lanes
    inv = pl.reciprocal(jnp.sum(e, axis=-1, keepdims=True), approx=True)
    gx = gx_ref[...]
    gy = gy_ref[...]
    mux = jnp.sum(e * gx, axis=-1, keepdims=True) * inv
    muy = jnp.sum(e * gy, axis=-1, keepdims=True) * inv
    dx = gx - mux
    dy = gy - muy
    g_ref[0] = jnp.exp(-(dx * dx + dy * dy) * inv_two_var) * mask
    mux_ref[0] = mux
    muy_ref[0] = muy


def keypoint_head(h_flat, w_kpt2, b_kpt2, meta, std):
    """h_flat: (Nb, c_hid_p, S) bf16 -> gaussian maps (Nb, K_p, S) f32, keypoints (Nb, K, 2)."""
    Nb, c_hid_p, S = h_flat.shape
    K, c_hid = w_kpt2.shape[0], w_kpt2.shape[1]
    K_p = _rup(K, 8)
    w2 = jnp.pad(w_kpt2.reshape(K, c_hid),
                 ((0, K_p - K), (0, c_hid_p - c_hid))).astype(jnp.bfloat16)
    b2 = jnp.pad(b_kpt2, (0, K_p - K)).reshape(K_p, 1).astype(jnp.float32)
    kernel = functools.partial(_kpt_head_kernel, inv_two_var=1.0 / (2.0 * std * std))
    g, mux, muy = pl.pallas_call(
        kernel,
        out_shape=(jax.ShapeDtypeStruct((Nb, K_p, S), jnp.float32),
                   jax.ShapeDtypeStruct((Nb, K_p, 1), jnp.float32),
                   jax.ShapeDtypeStruct((Nb, K_p, 1), jnp.float32)),
        grid=(Nb,),
        in_specs=[
            pl.BlockSpec((1, c_hid_p, S), lambda n: (n, 0, 0)),
            pl.BlockSpec((K_p, c_hid_p), lambda n: (0, 0)),
            pl.BlockSpec((K_p, 1), lambda n: (0, 0)),
            pl.BlockSpec((1, S), lambda n: (0, 0)),
            pl.BlockSpec((1, S), lambda n: (0, 0)),
            pl.BlockSpec((1, S), lambda n: (0, 0)),
        ],
        out_specs=(pl.BlockSpec((1, K_p, S), lambda n: (n, 0, 0)),
                   pl.BlockSpec((1, K_p, 1), lambda n: (n, 0, 0)),
                   pl.BlockSpec((1, K_p, 1), lambda n: (n, 0, 0))),
        compiler_params=pltpu.CompilerParams(dimension_semantics=("parallel",)),
    )(h_flat, w2, b2, meta["mask"], meta["gx"], meta["gy"])
    keypoints = jnp.concatenate([mux[:, :K, :], muy[:, :K, :]], axis=-1)
    return g, keypoints


# ----------------------------------------------------------------------------
# Feature transport (prefix-product form of the keypoint recurrence)
#   out = (prod_k a_k) * sf + (sum_k (prod_{j>k} a_j) * t_k) * tf,  a_k = (1-s_k)(1-t_k)
# ----------------------------------------------------------------------------
def _transport_kernel(mask_ref, sg_ref, tg_ref, sf_ref, tf_ref, o_ref, *, num_kp):
    sg = sg_ref[0]                                           # (K_p, S) f32
    tg = tg_ref[0]
    a = (1.0 - sg) * (1.0 - tg)                              # full-tile VPU pass (hoisted)
    s = sg.shape[-1]
    suf = jnp.ones((1, s), jnp.float32)                      # running suffix prod of a_k
    coef = jnp.zeros((1, s), jnp.float32)                    # sum_k suffix_k * t_k
    for k in reversed(range(num_kp)):
        coef = coef + suf * tg[k:k + 1, :]
        suf = suf * a[k:k + 1, :]
    res = suf * sf_ref[0].astype(jnp.float32) + coef * tf_ref[0].astype(jnp.float32)
    o_ref[0] = (res * mask_ref[...]).astype(o_ref.dtype)


def transport(src_g, tgt_g, src_f, tgt_f, meta, *, num_kp):
    N, K_p, S = src_g.shape
    C_p = src_f.shape[1]
    kernel = functools.partial(_transport_kernel, num_kp=num_kp)
    g_spec = pl.BlockSpec((1, K_p, S), lambda n: (n, 0, 0))
    f_spec = pl.BlockSpec((1, C_p, S), lambda n: (n, 0, 0))
    return pl.pallas_call(
        kernel,
        out_shape=jax.ShapeDtypeStruct((N, C_p, S), jnp.bfloat16),
        grid=(N,),
        in_specs=[pl.BlockSpec((1, S), lambda n: (0, 0)), g_spec, g_spec, f_spec, f_spec],
        out_specs=f_spec,
        compiler_params=pltpu.CompilerParams(dimension_semantics=("parallel",)),
    )(meta["mask"], src_g, tgt_g, src_f, tgt_f)


# ----------------------------------------------------------------------------
# Transporter model
# ----------------------------------------------------------------------------
def _init_conv(key, cout, cin, kh, kw, scale=0.1):
    w = scale * jax.random.normal(key, (cout, cin, kh, kw), jnp.float32)
    b = jnp.zeros((cout,), jnp.float32)
    return w, b


def make_params(key, *, c_img=3, c_hid=32, c_feat=32, num_kp=4):
    ks = jax.random.split(key, 6)
    return {
        "enc1": _init_conv(ks[0], c_hid, c_img, 3, 3),
        "enc2": _init_conv(ks[1], c_feat, c_hid, 3, 3),
        "kpt1": _init_conv(ks[2], c_hid, c_img, 3, 3),
        "kpt2": _init_conv(ks[3], num_kp, c_hid, 1, 1),
        "dec1": _init_conv(ks[4], c_hid, c_feat, 3, 3),
        "dec2": _init_conv(ks[5], c_img, c_hid, 3, 3),
    }


def transporter_forward(params, source_img, target_img, *, gaussian_map_std=0.1):
    N, C_img, H, W = source_img.shape
    meta = spatial_meta(H, W)
    num_kp = params["kpt2"][0].shape[0]

    # Source + target batched: encoder / keypointer run once on 2N images.
    # (torch.no_grad() on the source branch only affects gradients, not values.)
    both = jnp.concatenate([source_img, target_img], axis=0)          # (2N, C, H, W)
    slab0 = image_to_slab(both, meta)                                 # (2N, 16, L) bf16

    # Encoder: conv3x3+relu -> conv3x3+relu (bf16 activations, padded channels kept).
    e1 = conv2d_3x3(slab0, *params["enc1"], meta, relu=True)
    feats = conv2d_3x3(flat_to_slab(e1, meta), *params["enc2"], meta, relu=True)

    # Keypointer: conv3x3+relu, then fused 1x1 conv + softmax + gaussian maps.
    k1 = conv2d_3x3(slab0, *params["kpt1"], meta, relu=True)
    gmaps, _keypoints = keypoint_head(k1, *params["kpt2"], meta, gaussian_map_std)

    src_f, tgt_f = feats[:N], feats[N:]
    src_g, tgt_g = gmaps[:N], gmaps[N:]

    transported = transport(src_g, tgt_g, src_f, tgt_f, meta, num_kp=num_kp)
    assert transported.shape == tgt_f.shape

    # Decoder
    d1 = conv2d_3x3(flat_to_slab(transported, meta), *params["dec1"], meta, relu=True)
    d2 = conv2d_3x3(flat_to_slab(d1, meta), *params["dec2"], meta, relu=False,
                    out_dtype=jnp.float32)
    return flat_to_nchw(d2, C_img, meta)


# ----------------------------------------------------------------------------
# Demo
# ----------------------------------------------------------------------------
if __name__ == "__main__":
    N, C_IMG, H, W = 2, 3, 16, 16
    key = jax.random.PRNGKey(0)
    k_params, k_src, k_tgt = jax.random.split(key, 3)

    params = make_params(k_params, c_img=C_IMG, c_hid=32, c_feat=32, num_kp=4)
    source_img = jax.random.uniform(k_src, (N, C_IMG, H, W), jnp.float32)
    target_img = jax.random.uniform(k_tgt, (N, C_IMG, H, W), jnp.float32)

    fwd = jax.jit(functools.partial(transporter_forward, gaussian_map_std=0.1))
    reconstruction = fwd(params, source_img, target_img)
    reconstruction = jax.block_until_ready(reconstruction)

    assert reconstruction.shape == (N, C_IMG, H, W)
    assert bool(jnp.all(jnp.isfinite(reconstruction)))
    print("KERNEL_OK")
</pallas_src>

<mosaic_0001>
module attributes {stable_mosaic.version = 11 : i64} {
  func.func @_conv_kernel(%arg0: i32, %arg1: memref<1x16x512xbf16, #tpu.memory_space<vmem>>, %arg2: memref<32x144xbf16, #tpu.memory_space<vmem>>, %arg3: memref<32x1xf32, #tpu.memory_space<vmem>>, %arg4: memref<1x384xf32, #tpu.memory_space<vmem>>, %arg5: memref<1x32x384xbf16, #tpu.memory_space<vmem>>, %arg6: memref<144x384xbf16, #tpu.memory_space<vmem>>) attributes {dimension_semantics = [#tpu.dimension_semantics<parallel>], iteration_bounds = array<i64: 4>, scalar_prefetch = 0 : i64, scratch_operands = 1 : i64, tpu.core_type = #tpu.core_type<tc>, window_params = [{transform_indices = @transform_0, window_bounds = array<i64: 1, 16, 512>}, {pipeline_mode = #tpu.pipeline_mode<synchronous>, transform_indices = @transform_1, window_bounds = array<i64: 32, 144>}, {pipeline_mode = #tpu.pipeline_mode<synchronous>, transform_indices = @transform_2, window_bounds = array<i64: 32, 1>}, {pipeline_mode = #tpu.pipeline_mode<synchronous>, transform_indices = @transform_3, window_bounds = array<i64: 1, 384>}, {transform_indices = @transform_4, window_bounds = array<i64: 1, 32, 384>}]} {
    %c0 = arith.constant 0 : index
    %c0_0 = arith.constant 0 : index
    %c0_1 = arith.constant 0 : index
    %0 = vector.load %arg1[%c0, %c0_0, %c0_1] : memref<1x16x512xbf16, #tpu.memory_space<vmem>>, vector<1x16x384xbf16>
    %1 = vector.shape_cast %0 : vector<1x16x384xbf16> to vector<16x384xbf16>
    %c0_2 = arith.constant 0 : index
    %c0_3 = arith.constant 0 : index
    %2 = vector.load %arg6[%c0_2, %c0_3] : memref<144x384xbf16, #tpu.memory_space<vmem>>, vector<16x384xbf16>
    tpu.vector_store %arg6[%c0_2, %c0_3], %1 {strides = array<i32>} : memref<144x384xbf16, #tpu.memory_space<vmem>>, vector<16x384xbf16>,
    %c0_4 = arith.constant 0 : index
    %c0_5 = arith.constant 0 : index
    %c1 = arith.constant 1 : index
    %3 = vector.load %arg1[%c0_4, %c0_5, %c1] : memref<1x16x512xbf16, #tpu.memory_space<vmem>>, vector<1x16x384xbf16>
    %4 = vector.shape_cast %3 : vector<1x16x384xbf16> to vector<16x384xbf16>
    %c16 = arith.constant 16 : index
    %c0_6 = arith.constant 0 : index
    %5 = vector.load %arg6[%c16, %c0_6] : memref<144x384xbf16, #tpu.memory_space<vmem>>, vector<16x384xbf16>
    tpu.vector_store %arg6[%c16, %c0_6], %4 {strides = array<i32>} : memref<144x384xbf16, #tpu.memory_space<vmem>>, vector<16x384xbf16>,
    %c0_7 = arith.constant 0 : index
    %c0_8 = arith.constant 0 : index
    %c2 = arith.constant 2 : index
    %6 = vector.load %arg1[%c0_7, %c0_8, %c2] : memref<1x16x512xbf16, #tpu.memory_space<vmem>>, vector<1x16x384xbf16>
    %7 = vector.shape_cast %6 : vector<1x16x384xbf16> to vector<16x384xbf16>
    %c32 = arith.constant 32 : index
    %c0_9 = arith.constant 0 : index
    %8 = vector.load %arg6[%c32, %c0_9] : memref<144x384xbf16, #tpu.memory_space<vmem>>, vector<16x384xbf16>
    tpu.vector_store %arg6[%c32, %c0_9], %7 {strides = array<i32>} : memref<144x384xbf16, #tpu.memory_space<vmem>>, vector<16x384xbf16>,
    %c0_10 = arith.constant 0 : index
    %c0_11 = arith.constant 0 : index
    %c18 = arith.constant 18 : index
    %9 = vector.load %arg1[%c0_10, %c0_11, %c18] : memref<1x16x512xbf16, #tpu.memory_space<vmem>>, vector<1x16x384xbf16>
    %10 = vector.shape_cast %9 : vector<1x16x384xbf16> to vector<16x384xbf16>
    %c48 = arith.constant 48 : index
    %c0_12 = arith.constant 0 : index
    %11 = vector.load %arg6[%c48, %c0_12] : memref<144x384xbf16, #tpu.memory_space<vmem>>, vector<16x384xbf16>
    tpu.vector_store %arg6[%c48, %c0_12], %10 {strides = array<i32>} : memref<144x384xbf16, #tpu.memory_space<vmem>>, vector<16x384xbf16>,
    %c0_13 = arith.constant 0 : index
    %c0_14 = arith.constant 0 : index
    %c19 = arith.constant 19 : index
    %12 = vector.load %arg1[%c0_13, %c0_14, %c19] : memref<1x16x512xbf16, #tpu.memory_space<vmem>>, vector<1x16x384xbf16>
    %13 = vector.shape_cast %12 : vector<1x16x384xbf16> to vector<16x384xbf16>
    %c64 = arith.constant 64 : index
    %c0_15 = arith.constant 0 : index
    %14 = vector.load %arg6[%c64, %c0_15] : memref<144x384xbf16, #tpu.memory_space<vmem>>, vector<16x384xbf16>
    tpu.vector_store %arg6[%c64, %c0_15], %13 {strides = array<i32>} : memref<144x384xbf16, #tpu.memory_space<vmem>>, vector<16x384xbf16>,
    %c0_16 = arith.constant 0 : index
    %c0_17 = arith.constant 0 : index
    %c20 = arith.constant 20 : index
    %15 = vector.load %arg1[%c0_16, %c0_17, %c20] : memref<1x16x512xbf16, #tpu.memory_space<vmem>>, vector<1x16x384xbf16>
    %16 = vector.shape_cast %15 : vector<1x16x384xbf16> to vector<16x384xbf16>
    %c80 = arith.constant 80 : index
    %c0_18 = arith.constant 0 : index
    %17 = vector.load %arg6[%c80, %c0_18] : memref<144x384xbf16, #tpu.memory_space<vmem>>, vector<16x384xbf16>
    tpu.vector_store %arg6[%c80, %c0_18], %16 {strides = array<i32>} : memref<144x384xbf16, #tpu.memory_space<vmem>>, vector<16x384xbf16>,
    %c0_19 = arith.constant 0 : index
    %c0_20 = arith.constant 0 : index
    %c36 = arith.constant 36 : index
    %18 = vector.load %arg1[%c0_19, %c0_20, %c36] : memref<1x16x512xbf16, #tpu.memory_space<vmem>>, vector<1x16x384xbf16>
    %19 = vector.shape_cast %18 : vector<1x16x384xbf16> to vector<16x384xbf16>
    %c96 = arith.constant 96 : index
    %c0_21 = arith.constant 0 : index
    %20 = vector.load %arg6[%c96, %c0_21] : memref<144x384xbf16, #tpu.memory_space<vmem>>, vector<16x384xbf16>
    tpu.vector_store %arg6[%c96, %c0_21], %19 {strides = array<i32>} : memref<144x384xbf16, #tpu.memory_space<vmem>>, vector<16x384xbf16>,
    %c0_22 = arith.constant 0 : index
    %c0_23 = arith.constant 0 : index
    %c37 = arith.constant 37 : index
    %21 = vector.load %arg1[%c0_22, %c0_23, %c37] : memref<1x16x512xbf16, #tpu.memory_space<vmem>>, vector<1x16x384xbf16>
    %22 = vector.shape_cast %21 : vector<1x16x384xbf16> to vector<16x384xbf16>
    %c112 = arith.constant 112 : index
    %c0_24 = arith.constant 0 : index
    %23 = vector.load %arg6[%c112, %c0_24] : memref<144x384xbf16, #tpu.memory_space<vmem>>, vector<16x384xbf16>
    tpu.vector_store %arg6[%c112, %c0_24], %22 {strides = array<i32>} : memref<144x384xbf16, #tpu.memory_space<vmem>>, vector<16x384xbf16>,
    %c0_25 = arith.constant 0 : index
    %c0_26 = arith.constant 0 : index
    %c38 = arith.constant 38 : index
    %24 = vector.load %arg1[%c0_25, %c0_26, %c38] : memref<1x16x512xbf16, #tpu.memory_space<vmem>>, vector<1x16x384xbf16>
    %25 = vector.shape_cast %24 : vector<1x16x384xbf16> to vector<16x384xbf16>
    %c128 = arith.constant 128 : index
    %c0_27 = arith.constant 0 : index
    %26 = vector.load %arg6[%c128, %c0_27] : memref<144x384xbf16, #tpu.memory_space<vmem>>, vector<16x384xbf16>
    tpu.vector_store %arg6[%c128, %c0_27], %25 {strides = array<i32>} : memref<144x384xbf16, #tpu.memory_space<vmem>>, vector<16x384xbf16>,
    %c0_28 = arith.constant 0 : index
    %c0_29 = arith.constant 0 : index
    %27 = vector.load %arg2[%c0_28, %c0_29] : memref<32x144xbf16, #tpu.memory_space<vmem>>, vector<32x144xbf16>
    %c0_30 = arith.constant 0 : index
    %c0_31 = arith.constant 0 : index
    %28 = vector.load %arg6[%c0_30, %c0_31] : memref<144x384xbf16, #tpu.memory_space<vmem>>, vector<144x384xbf16>
    %cst = arith.constant dense<0.000000e+00> : vector<32x384xf32>
    %29 = tpu.matmul %27, %28, %cst {dimension_numbers = #tpu.dot_dimension_numbers<[1], [0], [0], [1], [0, 0, 1, 1], [], []>} : vector<32x144xbf16>, vector<144x384xbf16>, vector<32x384xf32> -> vector<32x384xf32>
    %c0_32 = arith.constant 0 : index
    %c0_33 = arith.constant 0 : index
    %30 = vector.load %arg3[%c0_32, %c0_33] : memref<32x1xf32, #tpu.memory_space<vmem>>, vector<32x1xf32>
    %31 = vector.broadcast %30 : vector<32x1xf32> to vector<32x384xf32>
    %32 = arith.addf %29, %31 : vector<32x384xf32>
    %cst_34 = arith.constant 0.000000e+00 : f32
    %33 = vector.broadcast %cst_34 : f32 to vector<32x384xf32>
    %34 = arith.maximumf %32, %33 : vector<32x384xf32>
    %c0_35 = arith.constant 0 : index
    %c0_36 = arith.constant 0 : index
    %35 = vector.load %arg4[%c0_35, %c0_36] : memref<1x384xf32, #tpu.memory_space<vmem>>, vector<1x384xf32>
    %36 = vector.broadcast %35 : vector<1x384xf32> to vector<32x384xf32>
    %37 = arith.mulf %34, %36 : vector<32x384xf32>
    %38 = arith.truncf %37 : vector<32x384xf32> to vector<32x384xbf16>
    %c0_37 = arith.constant 0 : index
    %c0_38 = arith.constant 0 : index
    %c0_39 = arith.constant 0 : index
    %39 = vector.load %arg5[%c0_37, %c0_38, %c0_39] : memref<1x32x384xbf16, #tpu.memory_space<vmem>>, vector<1x32x384xbf16>
    %40 = vector.shape_cast %39 : vector<1x32x384xbf16> to vector<32x384xbf16>
    %41 = vector.shape_cast %38 : vector<32x384xbf16> to vector<1x32x384xbf16>
    tpu.vector_store %arg5[%c0_37, %c0_38, %c0_39], %41 {strides = array<i32>} : memref<1x32x384xbf16, #tpu.memory_space<vmem>>, vector<1x32x384xbf16>,
    return
  }
  func.func @transform_0(%arg0: i32) -> (i32, i32, i32) {
    %c0_i32 = arith.constant 0 : i32
    %c0_i32_0 = arith.constant 0 : i32
    %c0_i32_1 = arith.constant 0 : i32
    return %arg0, %c0_i32, %c0_i32_0 : i32, i32, i32
  }
  func.func @transform_1(%arg0: i32) -> (i32, i32) {
    %c0_i32 = arith.constant 0 : i32
    %c0_i32_0 = arith.constant 0 : i32
    %c0_i32_1 = arith.constant 0 : i32
    return %c0_i32, %c0_i32_0 : i32, i32
  }
  func.func @transform_2(%arg0: i32) -> (i32, i32) {
    %c0_i32 = arith.constant 0 : i32
    %c0_i32_0 = arith.constant 0 : i32
    %c0_i32_1 = arith.constant 0 : i32
    return %c0_i32, %c0_i32_0 : i32, i32
  }
  func.func @transform_3(%arg0: i32) -> (i32, i32) {
    %c0_i32 = arith.constant 0 : i32
    %c0_i32_0 = arith.constant 0 : i32
    %c0_i32_1 = arith.constant 0 : i32
    return %c0_i32, %c0_i32_0 : i32, i32
  }
  func.func @transform_4(%arg0: i32) -> (i32, i32, i32) {
    %c0_i32 = arith.constant 0 : i32
    %c0_i32_0 = arith.constant 0 : i32
    %c0_i32_1 = arith.constant 0 : i32
    return %arg0, %c0_i32, %c0_i32_0 : i32, i32, i32
  }
}

module attributes {stable_mosaic.version = 11 : i64} {
  func.func @_kpt_head_kernel(%arg0: i32, %arg1: memref<1x32x384xbf16, #tpu.memory_space<vmem>>, %arg2: memref<8x32xbf16, #tpu.memory_space<vmem>>, %arg3: memref<8x1xf32, #tpu.memory_space<vmem>>, %arg4: memref<1x384xf32, #tpu.memory_space<vmem>>, %arg5: memref<1x384xf32, #tpu.memory_space<vmem>>, %arg6: memref<1x384xf32, #tpu.memory_space<vmem>>, %arg7: memref<1x8x384xf32, #tpu.memory_space<vmem>>, %arg8: memref<1x8x1xf32, #tpu.memory_space<vmem>>, %arg9: memref<1x8x1xf32, #tpu.memory_space<vmem>>) attributes {dimension_semantics = [#tpu.dimension_semantics<parallel>], iteration_bounds = array<i64: 4>, scalar_prefetch = 0 : i64, scratch_operands = 0 : i64, tpu.core_type = #tpu.core_type<tc>, window_params = [{transform_indices = @transform_0, window_bounds = array<i64: 1, 32, 384>}, {pipeline_mode = #tpu.pipeline_mode<synchronous>, transform_indices = @transform_1, window_bounds = array<i64: 8, 32>}, {pipeline_mode = #tpu.pipeline_mode<synchronous>, transform_indices = @transform_2, window_bounds = array<i64: 8, 1>}, {pipeline_mode = #tpu.pipeline_mode<synchronous>, transform_indices = @transform_3, window_bounds = array<i64: 1, 384>}, {pipeline_mode = #tpu.pipeline_mode<synchronous>, transform_indices = @transform_4, window_bounds = array<i64: 1, 384>}, {pipeline_mode = #tpu.pipeline_mode<synchronous>, transform_indices = @transform_5, window_bounds = array<i64: 1, 384>}, {transform_indices = @transform_6, window_bounds = array<i64: 1, 8, 384>}, {transform_indices = @transform_7, window_bounds = array<i64: 1, 8, 1>}, {transform_indices = @transform_8, window_bounds = array<i64: 1, 8, 1>}]} {
    %c0 = arith.constant 0 : index
    %c0_0 = arith.constant 0 : index
    %0 = vector.load %arg2[%c0, %c0_0] : memref<8x32xbf16, #tpu.memory_space<vmem>>, vector<8x32xbf16>
    %c0_1 = arith.constant 0 : index
    %c0_2 = arith.constant 0 : index
    %c0_3 = arith.constant 0 : index
    %1 = vector.load %arg1[%c0_1, %c0_2, %c0_3] : memref<1x32x384xbf16, #tpu.memory_space<vmem>>, vector<1x32x384xbf16>
    %2 = vector.shape_cast %1 : vector<1x32x384xbf16> to vector<32x384xbf16>
    %cst = arith.constant dense<0.000000e+00> : vector<8x384xf32>
    %3 = tpu.matmul %0, %2, %cst {dimension_numbers = #tpu.dot_dimension_numbers<[1], [0], [0], [1], [0, 0, 1, 1], [], []>} : vector<8x32xbf16>, vector<32x384xbf16>, vector<8x384xf32> -> vector<8x384xf32>
    %c0_4 = arith.constant 0 : index
    %c0_5 = arith.constant 0 : index
    %4 = vector.load %arg3[%c0_4, %c0_5] : memref<8x1xf32, #tpu.memory_space<vmem>>, vector<8x1xf32>
    %5 = vector.broadcast %4 : vector<8x1xf32> to vector<8x384xf32>
    %6 = arith.addf %3, %5 : vector<8x384xf32>
    %c0_6 = arith.constant 0 : index
    %c0_7 = arith.constant 0 : index
    %7 = vector.load %arg4[%c0_6, %c0_7] : memref<1x384xf32, #tpu.memory_space<vmem>>, vector<1x384xf32>
    %cst_8 = arith.constant 1.000000e+00 : f32
    %8 = vector.broadcast %cst_8 : f32 to vector<1x384xf32>
    %9 = arith.subf %7, %8 : vector<1x384xf32>
    %cst_9 = arith.constant 1.000000e+30 : f32
    %10 = vector.broadcast %cst_9 : f32 to vector<1x384xf32>
    %11 = arith.mulf %9, %10 : vector<1x384xf32>
    %12 = vector.broadcast %11 : vector<1x384xf32> to vector<8x384xf32>
    %13 = arith.addf %6, %12 : vector<8x384xf32>
    %cst_10 = arith.constant dense<0xFF800000> : vector<8xf32>
    %14 = vector.multi_reduction <maximumf>, %13, %cst_10 [1] : vector<8x384xf32> to vector<8xf32>
    %15 = vector.shape_cast %14 : vector<8xf32> to vector<8x1xf32>
    %16 = vector.broadcast %15 : vector<8x1xf32> to vector<8x384xf32>
    %17 = arith.subf %13, %16 : vector<8x384xf32>
    %18 = math.exp %17 : vector<8x384xf32>
    %cst_11 = arith.constant dense<0.000000e+00> : vector<8xf32>
    %19 = vector.multi_reduction <add>, %18, %cst_11 [1] : vector<8x384xf32> to vector<8xf32>
    %20 = vector.shape_cast %19 : vector<8xf32> to vector<8x1xf32>
    %21 = tpu.reciprocal %20 {approx = true} : vector<8x1xf32> -> vector<8x1xf32>
    %c0_12 = arith.constant 0 : index
    %c0_13 = arith.constant 0 : index
    %22 = vector.load %arg5[%c0_12, %c0_13] : memref<1x384xf32, #tpu.memory_space<vmem>>, vector<1x384xf32>
    %c0_14 = arith.constant 0 : index
    %c0_15 = arith.constant 0 : index
    %23 = vector.load %arg6[%c0_14, %c0_15] : memref<1x384xf32, #tpu.memory_space<vmem>>, vector<1x384xf32>
    %24 = vector.broadcast %22 : vector<1x384xf32> to vector<8x384xf32>
    %25 = arith.mulf %18, %24 : vector<8x384xf32>
    %cst_16 = arith.constant dense<0.000000e+00> : vector<8xf32>
    %26 = vector.multi_reduction <add>, %25, %cst_16 [1] : vector<8x384xf32> to vector<8xf32>
    %27 = vector.shape_cast %26 : vector<8xf32> to vector<8x1xf32>
    %28 = arith.mulf %27, %21 : vector<8x1xf32>
    %29 = vector.broadcast %23 : vector<1x384xf32> to vector<8x384xf32>
    %30 = arith.mulf %18, %29 : vector<8x384xf32>
    %cst_17 = arith.constant dense<0.000000e+00> : vector<8xf32>
    %31 = vector.multi_reduction <add>, %30, %cst_17 [1] : vector<8x384xf32> to vector<8xf32>
    %32 = vector.shape_cast %31 : vector<8xf32> to vector<8x1xf32>
    %33 = arith.mulf %32, %21 : vector<8x1xf32>
    %34 = vector.broadcast %22 : vector<1x384xf32> to vector<8x384xf32>
    %35 = vector.broadcast %28 : vector<8x1xf32> to vector<8x384xf32>
    %36 = arith.subf %34, %35 : vector<8x384xf32>
    %37 = vector.broadcast %23 : vector<1x384xf32> to vector<8x384xf32>
    %38 = vector.broadcast %33 : vector<8x1xf32> to vector<8x384xf32>
    %39 = arith.subf %37, %38 : vector<8x384xf32>
    %40 = arith.mulf %36, %36 : vector<8x384xf32>
    %41 = arith.mulf %39, %39 : vector<8x384xf32>
    %42 = arith.addf %40, %41 : vector<8x384xf32>
    %cst_18 = arith.constant 0.000000e+00 : f32
    %43 = vector.broadcast %cst_18 : f32 to vector<8x384xf32>
    %44 = arith.subf %43, %42 : vector<8x384xf32>
    %cst_19 = arith.constant 5.000000e+01 : f32
    %45 = vector.broadcast %cst_19 : f32 to vector<8x384xf32>
    %46 = arith.mulf %44, %45 : vector<8x384xf32>
    %47 = math.exp %46 : vector<8x384xf32>
    %48 = vector.broadcast %7 : vector<1x384xf32> to vector<8x384xf32>
    %49 = arith.mulf %47, %48 : vector<8x384xf32>
    %c0_20 = arith.constant 0 : index
    %c0_21 = arith.constant 0 : index
    %c0_22 = arith.constant 0 : index
    %50 = vector.load %arg7[%c0_20, %c0_21, %c0_22] : memref<1x8x384xf32, #tpu.memory_space<vmem>>, vector<1x8x384xf32>
    %51 = vector.shape_cast %50 : vector<1x8x384xf32> to vector<8x384xf32>
    %52 = vector.shape_cast %49 : vector<8x384xf32> to vector<1x8x384xf32>
    tpu.vector_store %arg7[%c0_20, %c0_21, %c0_22], %52 {strides = array<i32>} : memref<1x8x384xf32, #tpu.memory_space<vmem>>, vector<1x8x384xf32>,
    %c0_23 = arith.constant 0 : index
    %c0_24 = arith.constant 0 : index
    %c0_25 = arith.constant 0 : index
    %53 = vector.load %arg8[%c0_23, %c0_24, %c0_25] : memref<1x8x1xf32, #tpu.memory_space<vmem>>, vector<1x8x1xf32>
    %54 = vector.shape_cast %53 : vector<1x8x1xf32> to vector<8x1xf32>
    %55 = vector.shape_cast %28 : vector<8x1xf32> to vector<1x8x1xf32>
    tpu.vector_store %arg8[%c0_23, %c0_24, %c0_25], %55 {strides = array<i32>} : memref<1x8x1xf32, #tpu.memory_space<vmem>>, vector<1x8x1xf32>,
    %c0_26 = arith.constant 0 : index
    %c0_27 = arith.constant 0 : index
    %c0_28 = arith.constant 0 : index
    %56 = vector.load %arg9[%c0_26, %c0_27, %c0_28] : memref<1x8x1xf32, #tpu.memory_space<vmem>>, vector<1x8x1xf32>
    %57 = vector.shape_cast %56 : vector<1x8x1xf32> to vector<8x1xf32>
    %58 = vector.shape_cast %33 : vector<8x1xf32> to vector<1x8x1xf32>
    tpu.vector_store %arg9[%c0_26, %c0_27, %c0_28], %58 {strides = array<i32>} : memref<1x8x1xf32, #tpu.memory_space<vmem>>, vector<1x8x1xf32>,
    return
  }
  func.func @transform_0(%arg0: i32) -> (i32, i32, i32) {
    %c0_i32 = arith.constant 0 : i32
    %c0_i32_0 = arith.constant 0 : i32
    %c0_i32_1 = arith.constant 0 : i32
    return %arg0, %c0_i32, %c0_i32_0 : i32, i32, i32
  }
  func.func @transform_1(%arg0: i32) -> (i32, i32) {
    %c0_i32 = arith.constant 0 : i32
    %c0_i32_0 = arith.constant 0 : i32
    %c0_i32_1 = arith.constant 0 : i32
    return %c0_i32, %c0_i32_0 : i32, i32
  }
  func.func @transform_2(%arg0: i32) -> (i32, i32) {
    %c0_i32 = arith.constant 0 : i32
    %c0_i32_0 = arith.constant 0 : i32
    %c0_i32_1 = arith.constant 0 : i32
    return %c0_i32, %c0_i32_0 : i32, i32
  }
  func.func @transform_3(%arg0: i32) -> (i32, i32) {
    %c0_i32 = arith.constant 0 : i32
    %c0_i32_0 = arith.constant 0 : i32
    %c0_i32_1 = arith.constant 0 : i32
    return %c0_i32, %c0_i32_0 : i32, i32
  }
  func.func @transform_4(%arg0: i32) -> (i32, i32) {
    %c0_i32 = arith.constant 0 : i32
    %c0_i32_0 = arith.constant 0 : i32
    %c0_i32_1 = arith.constant 0 : i32
    return %c0_i32, %c0_i32_0 : i32, i32
  }
  func.func @transform_5(%arg0: i32) -> (i32, i32) {
    %c0_i32 = arith.constant 0 : i32
    %c0_i32_0 = arith.constant 0 : i32
    %c0_i32_1 = arith.constant 0 : i32
    return %c0_i32, %c0_i32_0 : i32, i32
  }
  func.func @transform_6(%arg0: i32) -> (i32, i32, i32) {
    %c0_i32 = arith.constant 0 : i32
    %c0_i32_0 = arith.constant 0 : i32
    %c0_i32_1 = arith.constant 0 : i32
    return %arg0, %c0_i32, %c0_i32_0 : i32, i32, i32
  }
  func.func @transform_7(%arg0: i32) -> (i32, i32, i32) {
    %c0_i32 = arith.constant 0 : i32
    %c0_i32_0 = arith.constant 0 : i32
    %c0_i32_1 = arith.constant 0 : i32
    return %arg0, %c0_i32, %c0_i32_0 : i32, i32, i32
  }
  func.func @transform_8(%arg0: i32) -> (i32, i32, i32) {
    %c0_i32 = arith.constant 0 : i32
    %c0_i32_0 = arith.constant 0 : i32
    %c0_i32_1 = arith.constant 0 : i32
    return %arg0, %c0_i32, %c0_i32_0 : i32, i32, i32
  }
}

module attributes {stable_mosaic.version = 11 : i64} {
  func.func @_conv_kernel(%arg0: i32, %arg1: memref<1x32x512xbf16, #tpu.memory_space<vmem>>, %arg2: memref<32x288xbf16, #tpu.memory_space<vmem>>, %arg3: memref<32x1xf32, #tpu.memory_space<vmem>>, %arg4: memref<1x384xf32, #tpu.memory_space<vmem>>, %arg5: memref<1x32x384xbf16, #tpu.memory_space<vmem>>, %arg6: memref<288x384xbf16, #tpu.memory_space<vmem>>) attributes {dimension_semantics = [#tpu.dimension_semantics<parallel>], iteration_bounds = array<i64: 4>, scalar_prefetch = 0 : i64, scratch_operands = 1 : i64, tpu.core_type = #tpu.core_type<tc>, window_params = [{transform_indices = @transform_0, window_bounds = array<i64: 1, 32, 512>}, {pipeline_mode = #tpu.pipeline_mode<synchronous>, transform_indices = @transform_1, window_bounds = array<i64: 32, 288>}, {pipeline_mode = #tpu.pipeline_mode<synchronous>, transform_indices = @transform_2, window_bounds = array<i64: 32, 1>}, {pipeline_mode = #tpu.pipeline_mode<synchronous>, transform_indices = @transform_3, window_bounds = array<i64: 1, 384>}, {transform_indices = @transform_4, window_bounds = array<i64: 1, 32, 384>}]} {
    %c0 = arith.constant 0 : index
    %c0_0 = arith.constant 0 : index
    %c0_1 = arith.constant 0 : index
    %0 = vector.load %arg1[%c0, %c0_0, %c0_1] : memref<1x32x512xbf16, #tpu.memory_space<vmem>>, vector<1x32x384xbf16>
    %1 = vector.shape_cast %0 : vector<1x32x384xbf16> to vector<32x384xbf16>
    %c0_2 = arith.constant 0 : index
    %c0_3 = arith.constant 0 : index
    %2 = vector.load %arg6[%c0_2, %c0_3] : memref<288x384xbf16, #tpu.memory_space<vmem>>, vector<32x384xbf16>
    tpu.vector_store %arg6[%c0_2, %c0_3], %1 {strides = array<i32>} : memref<288x384xbf16, #tpu.memory_space<vmem>>, vector<32x384xbf16>,
    %c0_4 = arith.constant 0 : index
    %c0_5 = arith.constant 0 : index
    %c1 = arith.constant 1 : index
    %3 = vector.load %arg1[%c0_4, %c0_5, %c1] : memref<1x32x512xbf16, #tpu.memory_space<vmem>>, vector<1x32x384xbf16>
    %4 = vector.shape_cast %3 : vector<1x32x384xbf16> to vector<32x384xbf16>
    %c32 = arith.constant 32 : index
    %c0_6 = arith.constant 0 : index
    %5 = vector.load %arg6[%c32, %c0_6] : memref<288x384xbf16, #tpu.memory_space<vmem>>, vector<32x384xbf16>
    tpu.vector_store %arg6[%c32, %c0_6], %4 {strides = array<i32>} : memref<288x384xbf16, #tpu.memory_space<vmem>>, vector<32x384xbf16>,
    %c0_7 = arith.constant 0 : index
    %c0_8 = arith.constant 0 : index
    %c2 = arith.constant 2 : index
    %6 = vector.load %arg1[%c0_7, %c0_8, %c2] : memref<1x32x512xbf16, #tpu.memory_space<vmem>>, vector<1x32x384xbf16>
    %7 = vector.shape_cast %6 : vector<1x32x384xbf16> to vector<32x384xbf16>
    %c64 = arith.constant 64 : index
    %c0_9 = arith.constant 0 : index
    %8 = vector.load %arg6[%c64, %c0_9] : memref<288x384xbf16, #tpu.memory_space<vmem>>, vector<32x384xbf16>
    tpu.vector_store %arg6[%c64, %c0_9], %7 {strides = array<i32>} : memref<288x384xbf16, #tpu.memory_space<vmem>>, vector<32x384xbf16>,
    %c0_10 = arith.constant 0 : index
    %c0_11 = arith.constant 0 : index
    %c18 = arith.constant 18 : index
    %9 = vector.load %arg1[%c0_10, %c0_11, %c18] : memref<1x32x512xbf16, #tpu.memory_space<vmem>>, vector<1x32x384xbf16>
    %10 = vector.shape_cast %9 : vector<1x32x384xbf16> to vector<32x384xbf16>
    %c96 = arith.constant 96 : index
    %c0_12 = arith.constant 0 : index
    %11 = vector.load %arg6[%c96, %c0_12] : memref<288x384xbf16, #tpu.memory_space<vmem>>, vector<32x384xbf16>
    tpu.vector_store %arg6[%c96, %c0_12], %10 {strides = array<i32>} : memref<288x384xbf16, #tpu.memory_space<vmem>>, vector<32x384xbf16>,
    %c0_13 = arith.constant 0 : index
    %c0_14 = arith.constant 0 : index
    %c19 = arith.constant 19 : index
    %12 = vector.load %arg1[%c0_13, %c0_14, %c19] : memref<1x32x512xbf16, #tpu.memory_space<vmem>>, vector<1x32x384xbf16>
    %13 = vector.shape_cast %12 : vector<1x32x384xbf16> to vector<32x384xbf16>
    %c128 = arith.constant 128 : index
    %c0_15 = arith.constant 0 : index
    %14 = vector.load %arg6[%c128, %c0_15] : memref<288x384xbf16, #tpu.memory_space<vmem>>, vector<32x384xbf16>
    tpu.vector_store %arg6[%c128, %c0_15], %13 {strides = array<i32>} : memref<288x384xbf16, #tpu.memory_space<vmem>>, vector<32x384xbf16>,
    %c0_16 = arith.constant 0 : index
    %c0_17 = arith.constant 0 : index
    %c20 = arith.constant 20 : index
    %15 = vector.load %arg1[%c0_16, %c0_17, %c20] : memref<1x32x512xbf16, #tpu.memory_space<vmem>>, vector<1x32x384xbf16>
    %16 = vector.shape_cast %15 : vector<1x32x384xbf16> to vector<32x384xbf16>
    %c160 = arith.constant 160 : index
    %c0_18 = arith.constant 0 : index
    %17 = vector.load %arg6[%c160, %c0_18] : memref<288x384xbf16, #tpu.memory_space<vmem>>, vector<32x384xbf16>
    tpu.vector_store %arg6[%c160, %c0_18], %16 {strides = array<i32>} : memref<288x384xbf16, #tpu.memory_space<vmem>>, vector<32x384xbf16>,
    %c0_19 = arith.constant 0 : index
    %c0_20 = arith.constant 0 : index
    %c36 = arith.constant 36 : index
    %18 = vector.load %arg1[%c0_19, %c0_20, %c36] : memref<1x32x512xbf16, #tpu.memory_space<vmem>>, vector<1x32x384xbf16>
    %19 = vector.shape_cast %18 : vector<1x32x384xbf16> to vector<32x384xbf16>
    %c192 = arith.constant 192 : index
    %c0_21 = arith.constant 0 : index
    %20 = vector.load %arg6[%c192, %c0_21] : memref<288x384xbf16, #tpu.memory_space<vmem>>, vector<32x384xbf16>
    tpu.vector_store %arg6[%c192, %c0_21], %19 {strides = array<i32>} : memref<288x384xbf16, #tpu.memory_space<vmem>>, vector<32x384xbf16>,
    %c0_22 = arith.constant 0 : index
    %c0_23 = arith.constant 0 : index
    %c37 = arith.constant 37 : index
    %21 = vector.load %arg1[%c0_22, %c0_23, %c37] : memref<1x32x512xbf16, #tpu.memory_space<vmem>>, vector<1x32x384xbf16>
    %22 = vector.shape_cast %21 : vector<1x32x384xbf16> to vector<32x384xbf16>
    %c224 = arith.constant 224 : index
    %c0_24 = arith.constant 0 : index
    %23 = vector.load %arg6[%c224, %c0_24] : memref<288x384xbf16, #tpu.memory_space<vmem>>, vector<32x384xbf16>
    tpu.vector_store %arg6[%c224, %c0_24], %22 {strides = array<i32>} : memref<288x384xbf16, #tpu.memory_space<vmem>>, vector<32x384xbf16>,
    %c0_25 = arith.constant 0 : index
    %c0_26 = arith.constant 0 : index
    %c38 = arith.constant 38 : index
    %24 = vector.load %arg1[%c0_25, %c0_26, %c38] : memref<1x32x512xbf16, #tpu.memory_space<vmem>>, vector<1x32x384xbf16>
    %25 = vector.shape_cast %24 : vector<1x32x384xbf16> to vector<32x384xbf16>
    %c256 = arith.constant 256 : index
    %c0_27 = arith.constant 0 : index
    %26 = vector.load %arg6[%c256, %c0_27] : memref<288x384xbf16, #tpu.memory_space<vmem>>, vector<32x384xbf16>
    tpu.vector_store %arg6[%c256, %c0_27], %25 {strides = array<i32>} : memref<288x384xbf16, #tpu.memory_space<vmem>>, vector<32x384xbf16>,
    %c0_28 = arith.constant 0 : index
    %c0_29 = arith.constant 0 : index
    %27 = vector.load %arg2[%c0_28, %c0_29] : memref<32x288xbf16, #tpu.memory_space<vmem>>, vector<32x288xbf16>
    %c0_30 = arith.constant 0 : index
    %c0_31 = arith.constant 0 : index
    %28 = vector.load %arg6[%c0_30, %c0_31] : memref<288x384xbf16, #tpu.memory_space<vmem>>, vector<288x384xbf16>
    %cst = arith.constant dense<0.000000e+00> : vector<32x384xf32>
    %29 = tpu.matmul %27, %28, %cst {dimension_numbers = #tpu.dot_dimension_numbers<[1], [0], [0], [1], [0, 0, 1, 1], [], []>} : vector<32x288xbf16>, vector<288x384xbf16>, vector<32x384xf32> -> vector<32x384xf32>
    %c0_32 = arith.constant 0 : index
    %c0_33 = arith.constant 0 : index
    %30 = vector.load %arg3[%c0_32, %c0_33] : memref<32x1xf32, #tpu.memory_space<vmem>>, vector<32x1xf32>
    %31 = vector.broadcast %30 : vector<32x1xf32> to vector<32x384xf32>
    %32 = arith.addf %29, %31 : vector<32x384xf32>
    %cst_34 = arith.constant 0.000000e+00 : f32
    %33 = vector.broadcast %cst_34 : f32 to vector<32x384xf32>
    %34 = arith.maximumf %32, %33 : vector<32x384xf32>
    %c0_35 = arith.constant 0 : index
    %c0_36 = arith.constant 0 : index
    %35 = vector.load %arg4[%c0_35, %c0_36] : memref<1x384xf32, #tpu.memory_space<vmem>>, vector<1x384xf32>
    %36 = vector.broadcast %35 : vector<1x384xf32> to vector<32x384xf32>
    %37 = arith.mulf %34, %36 : vector<32x384xf32>
    %38 = arith.truncf %37 : vector<32x384xf32> to vector<32x384xbf16>
    %c0_37 = arith.constant 0 : index
    %c0_38 = arith.constant 0 : index
    %c0_39 = arith.constant 0 : index
    %39 = vector.load %arg5[%c0_37, %c0_38, %c0_39] : memref<1x32x384xbf16, #tpu.memory_space<vmem>>, vector<1x32x384xbf16>
    %40 = vector.shape_cast %39 : vector<1x32x384xbf16> to vector<32x384xbf16>
    %41 = vector.shape_cast %38 : vector<32x384xbf16> to vector<1x32x384xbf16>
    tpu.vector_store %arg5[%c0_37, %c0_38, %c0_39], %41 {strides = array<i32>} : memref<1x32x384xbf16, #tpu.memory_space<vmem>>, vector<1x32x384xbf16>,
    return
  }
  func.func @transform_0(%arg0: i32) -> (i32, i32, i32) {
    %c0_i32 = arith.constant 0 : i32
    %c0_i32_0 = arith.constant 0 : i32
    %c0_i32_1 = arith.constant 0 : i32
    return %arg0, %c0_i32, %c0_i32_0 : i32, i32, i32
  }
  func.func @transform_1(%arg0: i32) -> (i32, i32) {
    %c0_i32 = arith.constant 0 : i32
    %c0_i32_0 = arith.constant 0 : i32
    %c0_i32_1 = arith.constant 0 : i32
    return %c0_i32, %c0_i32_0 : i32, i32
  }
  func.func @transform_2(%arg0: i32) -> (i32, i32) {
    %c0_i32 = arith.constant 0 : i32
    %c0_i32_0 = arith.constant 0 : i32
    %c0_i32_1 = arith.constant 0 : i32
    return %c0_i32, %c0_i32_0 : i32, i32
  }
  func.func @transform_3(%arg0: i32) -> (i32, i32) {
    %c0_i32 = arith.constant 0 : i32
    %c0_i32_0 = arith.constant 0 : i32
    %c0_i32_1 = arith.constant 0 : i32
    return %c0_i32, %c0_i32_0 : i32, i32
  }
  func.func @transform_4(%arg0: i32) -> (i32, i32, i32) {
    %c0_i32 = arith.constant 0 : i32
    %c0_i32_0 = arith.constant 0 : i32
    %c0_i32_1 = arith.constant 0 : i32
    return %arg0, %c0_i32, %c0_i32_0 : i32, i32, i32
  }
}

module attributes {stable_mosaic.version = 11 : i64} {
  func.func @_transport_kernel(%arg0: i32, %arg1: memref<1x384xf32, #tpu.memory_space<vmem>>, %arg2: memref<1x8x384xf32, #tpu.memory_space<vmem>>, %arg3: memref<1x8x384xf32, #tpu.memory_space<vmem>>, %arg4: memref<1x32x384xbf16, #tpu.memory_space<vmem>>, %arg5: memref<1x32x384xbf16, #tpu.memory_space<vmem>>, %arg6: memref<1x32x384xbf16, #tpu.memory_space<vmem>>) attributes {dimension_semantics = [#tpu.dimension_semantics<parallel>], iteration_bounds = array<i64: 2>, scalar_prefetch = 0 : i64, scratch_operands = 0 : i64, tpu.core_type = #tpu.core_type<tc>, window_params = [{pipeline_mode = #tpu.pipeline_mode<synchronous>, transform_indices = @transform_0, window_bounds = array<i64: 1, 384>}, {transform_indices = @transform_1, window_bounds = array<i64: 1, 8, 384>}, {transform_indices = @transform_2, window_bounds = array<i64: 1, 8, 384>}, {transform_indices = @transform_3, window_bounds = array<i64: 1, 32, 384>}, {transform_indices = @transform_4, window_bounds = array<i64: 1, 32, 384>}, {transform_indices = @transform_5, window_bounds = array<i64: 1, 32, 384>}]} {
    %c0 = arith.constant 0 : index
    %c0_0 = arith.constant 0 : index
    %c0_1 = arith.constant 0 : index
    %0 = vector.load %arg2[%c0, %c0_0, %c0_1] : memref<1x8x384xf32, #tpu.memory_space<vmem>>, vector<1x8x384xf32>
    %1 = vector.shape_cast %0 : vector<1x8x384xf32> to vector<8x384xf32>
    %c0_2 = arith.constant 0 : index
    %c0_3 = arith.constant 0 : index
    %c0_4 = arith.constant 0 : index
    %2 = vector.load %arg3[%c0_2, %c0_3, %c0_4] : memref<1x8x384xf32, #tpu.memory_space<vmem>>, vector<1x8x384xf32>
    %3 = vector.shape_cast %2 : vector<1x8x384xf32> to vector<8x384xf32>
    %cst = arith.constant 1.000000e+00 : f32
    %4 = vector.broadcast %cst : f32 to vector<8x384xf32>
    %5 = arith.subf %4, %1 : vector<8x384xf32>
    %cst_5 = arith.constant 1.000000e+00 : f32
    %6 = vector.broadcast %cst_5 : f32 to vector<8x384xf32>
    %7 = arith.subf %6, %3 : vector<8x384xf32>
    %8 = arith.mulf %5, %7 : vector<8x384xf32>
    %cst_6 = arith.constant 1.000000e+00 : f32
    %9 = vector.broadcast %cst_6 : f32 to vector<1x384xf32>
    %cst_7 = arith.constant 0.000000e+00 : f32
    %10 = vector.broadcast %cst_7 : f32 to vector<1x384xf32>
    %11 = vector.extract_strided_slice %3 {offsets = [3, 0], sizes = [1, 384], strides = [1, 1]} : vector<8x384xf32> to vector<1x384xf32>
    %12 = arith.mulf %9, %11 : vector<1x384xf32>
    %13 = arith.addf %10, %12 : vector<1x384xf32>
    %14 = vector.extract_strided_slice %8 {offsets = [3, 0], sizes = [1, 384], strides = [1, 1]} : vector<8x384xf32> to vector<1x384xf32>
    %15 = arith.mulf %9, %14 : vector<1x384xf32>
    %16 = vector.extract_strided_slice %3 {offsets = [2, 0], sizes = [1, 384], strides = [1, 1]} : vector<8x384xf32> to vector<1x384xf32>
    %17 = arith.mulf %15, %16 : vector<1x384xf32>
    %18 = arith.addf %13, %17 : vector<1x384xf32>
    %19 = vector.extract_strided_slice %8 {offsets = [2, 0], sizes = [1, 384], strides = [1, 1]} : vector<8x384xf32> to vector<1x384xf32>
    %20 = arith.mulf %15, %19 : vector<1x384xf32>
    %21 = vector.extract_strided_slice %3 {offsets = [1, 0], sizes = [1, 384], strides = [1, 1]} : vector<8x384xf32> to vector<1x384xf32>
    %22 = arith.mulf %20, %21 : vector<1x384xf32>
    %23 = arith.addf %18, %22 : vector<1x384xf32>
    %24 = vector.extract_strided_slice %8 {offsets = [1, 0], sizes = [1, 384], strides = [1, 1]} : vector<8x384xf32> to vector<1x384xf32>
    %25 = arith.mulf %20, %24 : vector<1x384xf32>
    %26 = vector.extract_strided_slice %3 {offsets = [0, 0], sizes = [1, 384], strides = [1, 1]} : vector<8x384xf32> to vector<1x384xf32>
    %27 = arith.mulf %25, %26 : vector<1x384xf32>
    %28 = arith.addf %23, %27 : vector<1x384xf32>
    %29 = vector.extract_strided_slice %8 {offsets = [0, 0], sizes = [1, 384], strides = [1, 1]} : vector<8x384xf32> to vector<1x384xf32>
    %30 = arith.mulf %25, %29 : vector<1x384xf32>
    %c0_8 = arith.constant 0 : index
    %c0_9 = arith.constant 0 : index
    %c0_10 = arith.constant 0 : index
    %31 = vector.load %arg4[%c0_8, %c0_9, %c0_10] : memref<1x32x384xbf16, #tpu.memory_space<vmem>>, vector<1x32x384xbf16>
    %32 = vector.shape_cast %31 : vector<1x32x384xbf16> to vector<32x384xbf16>
    %33 = arith.extf %32 : vector<32x384xbf16> to vector<32x384xf32>
    %34 = vector.broadcast %30 : vector<1x384xf32> to vector<32x384xf32>
    %35 = arith.mulf %34, %33 : vector<32x384xf32>
    %c0_11 = arith.constant 0 : index
    %c0_12 = arith.constant 0 : index
    %c0_13 = arith.constant 0 : index
    %36 = vector.load %arg5[%c0_11, %c0_12, %c0_13] : memref<1x32x384xbf16, #tpu.memory_space<vmem>>, vector<1x32x384xbf16>
    %37 = vector.shape_cast %36 : vector<1x32x384xbf16> to vector<32x384xbf16>
    %38 = arith.extf %37 : vector<32x384xbf16> to vector<32x384xf32>
    %39 = vector.broadcast %28 : vector<1x384xf32> to vector<32x384xf32>
    %40 = arith.mulf %39, %38 : vector<32x384xf32>
    %41 = arith.addf %35, %40 : vector<32x384xf32>
    %c0_14 = arith.constant 0 : index
    %c0_15 = arith.constant 0 : index
    %42 = vector.load %arg1[%c0_14, %c0_15] : memref<1x384xf32, #tpu.memory_space<vmem>>, vector<1x384xf32>
    %43 = vector.broadcast %42 : vector<1x384xf32> to vector<32x384xf32>
    %44 = arith.mulf %41, %43 : vector<32x384xf32>
    %45 = arith.truncf %44 : vector<32x384xf32> to vector<32x384xbf16>
    %c0_16 = arith.constant 0 : index
    %c0_17 = arith.constant 0 : index
    %c0_18 = arith.constant 0 : index
    %46 = vector.load %arg6[%c0_16, %c0_17, %c0_18] : memref<1x32x384xbf16, #tpu.memory_space<vmem>>, vector<1x32x384xbf16>
    %47 = vector.shape_cast %46 : vector<1x32x384xbf16> to vector<32x384xbf16>
    %48 = vector.shape_cast %45 : vector<32x384xbf16> to vector<1x32x384xbf16>
    tpu.vector_store %arg6[%c0_16, %c0_17, %c0_18], %48 {strides = array<i32>} : memref<1x32x384xbf16, #tpu.memory_space<vmem>>, vector<1x32x384xbf16>,
    return
  }
  func.func @transform_0(%arg0: i32) -> (i32, i32) {
    %c0_i32 = arith.constant 0 : i32
    %c0_i32_0 = arith.constant 0 : i32
    %c0_i32_1 = arith.constant 0 : i32
    return %c0_i32, %c0_i32_0 : i32, i32
  }
  func.func @transform_1(%arg0: i32) -> (i32, i32, i32) {
    %c0_i32 = arith.constant 0 : i32
    %c0_i32_0 = arith.constant 0 : i32
    %c0_i32_1 = arith.constant 0 : i32
    return %arg0, %c0_i32, %c0_i32_0 : i32, i32, i32
  }
  func.func @transform_2(%arg0: i32) -> (i32, i32, i32) {
    %c0_i32 = arith.constant 0 : i32
    %c0_i32_0 = arith.constant 0 : i32
    %c0_i32_1 = arith.constant 0 : i32
    return %arg0, %c0_i32, %c0_i32_0 : i32, i32, i32
  }
  func.func @transform_3(%arg0: i32) -> (i32, i32, i32) {
    %c0_i32 = arith.constant 0 : i32
    %c0_i32_0 = arith.constant 0 : i32
    %c0_i32_1 = arith.constant 0 : i32
    return %arg0, %c0_i32, %c0_i32_0 : i32, i32, i32
  }
  func.func @transform_4(%arg0: i32) -> (i32, i32, i32) {
    %c0_i32 = arith.constant 0 : i32
    %c0_i32_0 = arith.constant 0 : i32
    %c0_i32_1 = arith.constant 0 : i32
    return %arg0, %c0_i32, %c0_i32_0 : i32, i32, i32
  }
  func.func @transform_5(%arg0: i32) -> (i32, i32, i32) {
    %c0_i32 = arith.constant 0 : i32
    %c0_i32_0 = arith.constant 0 : i32
    %c0_i32_1 = arith.constant 0 : i32
    return %arg0, %c0_i32, %c0_i32_0 : i32, i32, i32
  }
}

module attributes {stable_mosaic.version = 11 : i64} {
  func.func @_conv_kernel(%arg0: i32, %arg1: memref<1x32x512xbf16, #tpu.memory_space<vmem>>, %arg2: memref<32x288xbf16, #tpu.memory_space<vmem>>, %arg3: memref<32x1xf32, #tpu.memory_space<vmem>>, %arg4: memref<1x384xf32, #tpu.memory_space<vmem>>, %arg5: memref<1x32x384xbf16, #tpu.memory_space<vmem>>, %arg6: memref<288x384xbf16, #tpu.memory_space<vmem>>) attributes {dimension_semantics = [#tpu.dimension_semantics<parallel>], iteration_bounds = array<i64: 2>, scalar_prefetch = 0 : i64, scratch_operands = 1 : i64, tpu.core_type = #tpu.core_type<tc>, window_params = [{transform_indices = @transform_0, window_bounds = array<i64: 1, 32, 512>}, {pipeline_mode = #tpu.pipeline_mode<synchronous>, transform_indices = @transform_1, window_bounds = array<i64: 32, 288>}, {pipeline_mode = #tpu.pipeline_mode<synchronous>, transform_indices = @transform_2, window_bounds = array<i64: 32, 1>}, {pipeline_mode = #tpu.pipeline_mode<synchronous>, transform_indices = @transform_3, window_bounds = array<i64: 1, 384>}, {transform_indices = @transform_4, window_bounds = array<i64: 1, 32, 384>}]} {
    %c0 = arith.constant 0 : index
    %c0_0 = arith.constant 0 : index
    %c0_1 = arith.constant 0 : index
    %0 = vector.load %arg1[%c0, %c0_0, %c0_1] : memref<1x32x512xbf16, #tpu.memory_space<vmem>>, vector<1x32x384xbf16>
    %1 = vector.shape_cast %0 : vector<1x32x384xbf16> to vector<32x384xbf16>
    %c0_2 = arith.constant 0 : index
    %c0_3 = arith.constant 0 : index
    %2 = vector.load %arg6[%c0_2, %c0_3] : memref<288x384xbf16, #tpu.memory_space<vmem>>, vector<32x384xbf16>
    tpu.vector_store %arg6[%c0_2, %c0_3], %1 {strides = array<i32>} : memref<288x384xbf16, #tpu.memory_space<vmem>>, vector<32x384xbf16>,
    %c0_4 = arith.constant 0 : index
    %c0_5 = arith.constant 0 : index
    %c1 = arith.constant 1 : index
    %3 = vector.load %arg1[%c0_4, %c0_5, %c1] : memref<1x32x512xbf16, #tpu.memory_space<vmem>>, vector<1x32x384xbf16>
    %4 = vector.shape_cast %3 : vector<1x32x384xbf16> to vector<32x384xbf16>
    %c32 = arith.constant 32 : index
    %c0_6 = arith.constant 0 : index
    %5 = vector.load %arg6[%c32, %c0_6] : memref<288x384xbf16, #tpu.memory_space<vmem>>, vector<32x384xbf16>
    tpu.vector_store %arg6[%c32, %c0_6], %4 {strides = array<i32>} : memref<288x384xbf16, #tpu.memory_space<vmem>>, vector<32x384xbf16>,
    %c0_7 = arith.constant 0 : index
    %c0_8 = arith.constant 0 : index
    %c2 = arith.constant 2 : index
    %6 = vector.load %arg1[%c0_7, %c0_8, %c2] : memref<1x32x512xbf16, #tpu.memory_space<vmem>>, vector<1x32x384xbf16>
    %7 = vector.shape_cast %6 : vector<1x32x384xbf16> to vector<32x384xbf16>
    %c64 = arith.constant 64 : index
    %c0_9 = arith.constant 0 : index
    %8 = vector.load %arg6[%c64, %c0_9] : memref<288x384xbf16, #tpu.memory_space<vmem>>, vector<32x384xbf16>
    tpu.vector_store %arg6[%c64, %c0_9], %7 {strides = array<i32>} : memref<288x384xbf16, #tpu.memory_space<vmem>>, vector<32x384xbf16>,
    %c0_10 = arith.constant 0 : index
    %c0_11 = arith.constant 0 : index
    %c18 = arith.constant 18 : index
    %9 = vector.load %arg1[%c0_10, %c0_11, %c18] : memref<1x32x512xbf16, #tpu.memory_space<vmem>>, vector<1x32x384xbf16>
    %10 = vector.shape_cast %9 : vector<1x32x384xbf16> to vector<32x384xbf16>
    %c96 = arith.constant 96 : index
    %c0_12 = arith.constant 0 : index
    %11 = vector.load %arg6[%c96, %c0_12] : memref<288x384xbf16, #tpu.memory_space<vmem>>, vector<32x384xbf16>
    tpu.vector_store %arg6[%c96, %c0_12], %10 {strides = array<i32>} : memref<288x384xbf16, #tpu.memory_space<vmem>>, vector<32x384xbf16>,
    %c0_13 = arith.constant 0 : index
    %c0_14 = arith.constant 0 : index
    %c19 = arith.constant 19 : index
    %12 = vector.load %arg1[%c0_13, %c0_14, %c19] : memref<1x32x512xbf16, #tpu.memory_space<vmem>>, vector<1x32x384xbf16>
    %13 = vector.shape_cast %12 : vector<1x32x384xbf16> to vector<32x384xbf16>
    %c128 = arith.constant 128 : index
    %c0_15 = arith.constant 0 : index
    %14 = vector.load %arg6[%c128, %c0_15] : memref<288x384xbf16, #tpu.memory_space<vmem>>, vector<32x384xbf16>
    tpu.vector_store %arg6[%c128, %c0_15], %13 {strides = array<i32>} : memref<288x384xbf16, #tpu.memory_space<vmem>>, vector<32x384xbf16>,
    %c0_16 = arith.constant 0 : index
    %c0_17 = arith.constant 0 : index
    %c20 = arith.constant 20 : index
    %15 = vector.load %arg1[%c0_16, %c0_17, %c20] : memref<1x32x512xbf16, #tpu.memory_space<vmem>>, vector<1x32x384xbf16>
    %16 = vector.shape_cast %15 : vector<1x32x384xbf16> to vector<32x384xbf16>
    %c160 = arith.constant 160 : index
    %c0_18 = arith.constant 0 : index
    %17 = vector.load %arg6[%c160, %c0_18] : memref<288x384xbf16, #tpu.memory_space<vmem>>, vector<32x384xbf16>
    tpu.vector_store %arg6[%c160, %c0_18], %16 {strides = array<i32>} : memref<288x384xbf16, #tpu.memory_space<vmem>>, vector<32x384xbf16>,
    %c0_19 = arith.constant 0 : index
    %c0_20 = arith.constant 0 : index
    %c36 = arith.constant 36 : index
    %18 = vector.load %arg1[%c0_19, %c0_20, %c36] : memref<1x32x512xbf16, #tpu.memory_space<vmem>>, vector<1x32x384xbf16>
    %19 = vector.shape_cast %18 : vector<1x32x384xbf16> to vector<32x384xbf16>
    %c192 = arith.constant 192 : index
    %c0_21 = arith.constant 0 : index
    %20 = vector.load %arg6[%c192, %c0_21] : memref<288x384xbf16, #tpu.memory_space<vmem>>, vector<32x384xbf16>
    tpu.vector_store %arg6[%c192, %c0_21], %19 {strides = array<i32>} : memref<288x384xbf16, #tpu.memory_space<vmem>>, vector<32x384xbf16>,
    %c0_22 = arith.constant 0 : index
    %c0_23 = arith.constant 0 : index
    %c37 = arith.constant 37 : index
    %21 = vector.load %arg1[%c0_22, %c0_23, %c37] : memref<1x32x512xbf16, #tpu.memory_space<vmem>>, vector<1x32x384xbf16>
    %22 = vector.shape_cast %21 : vector<1x32x384xbf16> to vector<32x384xbf16>
    %c224 = arith.constant 224 : index
    %c0_24 = arith.constant 0 : index
    %23 = vector.load %arg6[%c224, %c0_24] : memref<288x384xbf16, #tpu.memory_space<vmem>>, vector<32x384xbf16>
    tpu.vector_store %arg6[%c224, %c0_24], %22 {strides = array<i32>} : memref<288x384xbf16, #tpu.memory_space<vmem>>, vector<32x384xbf16>,
    %c0_25 = arith.constant 0 : index
    %c0_26 = arith.constant 0 : index
    %c38 = arith.constant 38 : index
    %24 = vector.load %arg1[%c0_25, %c0_26, %c38] : memref<1x32x512xbf16, #tpu.memory_space<vmem>>, vector<1x32x384xbf16>
    %25 = vector.shape_cast %24 : vector<1x32x384xbf16> to vector<32x384xbf16>
    %c256 = arith.constant 256 : index
    %c0_27 = arith.constant 0 : index
    %26 = vector.load %arg6[%c256, %c0_27] : memref<288x384xbf16, #tpu.memory_space<vmem>>, vector<32x384xbf16>
    tpu.vector_store %arg6[%c256, %c0_27], %25 {strides = array<i32>} : memref<288x384xbf16, #tpu.memory_space<vmem>>, vector<32x384xbf16>,
    %c0_28 = arith.constant 0 : index
    %c0_29 = arith.constant 0 : index
    %27 = vector.load %arg2[%c0_28, %c0_29] : memref<32x288xbf16, #tpu.memory_space<vmem>>, vector<32x288xbf16>
    %c0_30 = arith.constant 0 : index
    %c0_31 = arith.constant 0 : index
    %28 = vector.load %arg6[%c0_30, %c0_31] : memref<288x384xbf16, #tpu.memory_space<vmem>>, vector<288x384xbf16>
    %cst = arith.constant dense<0.000000e+00> : vector<32x384xf32>
    %29 = tpu.matmul %27, %28, %cst {dimension_numbers = #tpu.dot_dimension_numbers<[1], [0], [0], [1], [0, 0, 1, 1], [], []>} : vector<32x288xbf16>, vector<288x384xbf16>, vector<32x384xf32> -> vector<32x384xf32>
    %c0_32 = arith.constant 0 : index
    %c0_33 = arith.constant 0 : index
    %30 = vector.load %arg3[%c0_32, %c0_33] : memref<32x1xf32, #tpu.memory_space<vmem>>, vector<32x1xf32>
    %31 = vector.broadcast %30 : vector<32x1xf32> to vector<32x384xf32>
    %32 = arith.addf %29, %31 : vector<32x384xf32>
    %cst_34 = arith.constant 0.000000e+00 : f32
    %33 = vector.broadcast %cst_34 : f32 to vector<32x384xf32>
    %34 = arith.maximumf %32, %33 : vector<32x384xf32>
    %c0_35 = arith.constant 0 : index
    %c0_36 = arith.constant 0 : index
    %35 = vector.load %arg4[%c0_35, %c0_36] : memref<1x384xf32, #tpu.memory_space<vmem>>, vector<1x384xf32>
    %36 = vector.broadcast %35 : vector<1x384xf32> to vector<32x384xf32>
    %37 = arith.mulf %34, %36 : vector<32x384xf32>
    %38 = arith.truncf %37 : vector<32x384xf32> to vector<32x384xbf16>
    %c0_37 = arith.constant 0 : index
    %c0_38 = arith.constant 0 : index
    %c0_39 = arith.constant 0 : index
    %39 = vector.load %arg5[%c0_37, %c0_38, %c0_39] : memref<1x32x384xbf16, #tpu.memory_space<vmem>>, vector<1x32x384xbf16>
    %40 = vector.shape_cast %39 : vector<1x32x384xbf16> to vector<32x384xbf16>
    %41 = vector.shape_cast %38 : vector<32x384xbf16> to vector<1x32x384xbf16>
    tpu.vector_store %arg5[%c0_37, %c0_38, %c0_39], %41 {strides = array<i32>} : memref<1x32x384xbf16, #tpu.memory_space<vmem>>, vector<1x32x384xbf16>,
    return
  }
  func.func @transform_0(%arg0: i32) -> (i32, i32, i32) {
    %c0_i32 = arith.constant 0 : i32
    %c0_i32_0 = arith.constant 0 : i32
    %c0_i32_1 = arith.constant 0 : i32
    return %arg0, %c0_i32, %c0_i32_0 : i32, i32, i32
  }
  func.func @transform_1(%arg0: i32) -> (i32, i32) {
    %c0_i32 = arith.constant 0 : i32
    %c0_i32_0 = arith.constant 0 : i32
    %c0_i32_1 = arith.constant 0 : i32
    return %c0_i32, %c0_i32_0 : i32, i32
  }
  func.func @transform_2(%arg0: i32) -> (i32, i32) {
    %c0_i32 = arith.constant 0 : i32
    %c0_i32_0 = arith.constant 0 : i32
    %c0_i32_1 = arith.constant 0 : i32
    return %c0_i32, %c0_i32_0 : i32, i32
  }
  func.func @transform_3(%arg0: i32) -> (i32, i32) {
    %c0_i32 = arith.constant 0 : i32
    %c0_i32_0 = arith.constant 0 : i32
    %c0_i32_1 = arith.constant 0 : i32
    return %c0_i32, %c0_i32_0 : i32, i32
  }
  func.func @transform_4(%arg0: i32) -> (i32, i32, i32) {
    %c0_i32 = arith.constant 0 : i32
    %c0_i32_0 = arith.constant 0 : i32
    %c0_i32_1 = arith.constant 0 : i32
    return %arg0, %c0_i32, %c0_i32_0 : i32, i32, i32
  }
}

module attributes {stable_mosaic.version = 11 : i64} {
  func.func @_conv_kernel(%arg0: i32, %arg1: memref<1x32x512xbf16, #tpu.memory_space<vmem>>, %arg2: memref<16x288xbf16, #tpu.memory_space<vmem>>, %arg3: memref<16x1xf32, #tpu.memory_space<vmem>>, %arg4: memref<1x384xf32, #tpu.memory_space<vmem>>, %arg5: memref<1x16x384xf32, #tpu.memory_space<vmem>>, %arg6: memref<288x384xbf16, #tpu.memory_space<vmem>>) attributes {dimension_semantics = [#tpu.dimension_semantics<parallel>], iteration_bounds = array<i64: 2>, scalar_prefetch = 0 : i64, scratch_operands = 1 : i64, tpu.core_type = #tpu.core_type<tc>, window_params = [{transform_indices = @transform_0, window_bounds = array<i64: 1, 32, 512>}, {pipeline_mode = #tpu.pipeline_mode<synchronous>, transform_indices = @transform_1, window_bounds = array<i64: 16, 288>}, {pipeline_mode = #tpu.pipeline_mode<synchronous>, transform_indices = @transform_2, window_bounds = array<i64: 16, 1>}, {pipeline_mode = #tpu.pipeline_mode<synchronous>, transform_indices = @transform_3, window_bounds = array<i64: 1, 384>}, {transform_indices = @transform_4, window_bounds = array<i64: 1, 16, 384>}]} {
    %c0 = arith.constant 0 : index
    %c0_0 = arith.constant 0 : index
    %c0_1 = arith.constant 0 : index
    %0 = vector.load %arg1[%c0, %c0_0, %c0_1] : memref<1x32x512xbf16, #tpu.memory_space<vmem>>, vector<1x32x384xbf16>
    %1 = vector.shape_cast %0 : vector<1x32x384xbf16> to vector<32x384xbf16>
    %c0_2 = arith.constant 0 : index
    %c0_3 = arith.constant 0 : index
    %2 = vector.load %arg6[%c0_2, %c0_3] : memref<288x384xbf16, #tpu.memory_space<vmem>>, vector<32x384xbf16>
    tpu.vector_store %arg6[%c0_2, %c0_3], %1 {strides = array<i32>} : memref<288x384xbf16, #tpu.memory_space<vmem>>, vector<32x384xbf16>,
    %c0_4 = arith.constant 0 : index
    %c0_5 = arith.constant 0 : index
    %c1 = arith.constant 1 : index
    %3 = vector.load %arg1[%c0_4, %c0_5, %c1] : memref<1x32x512xbf16, #tpu.memory_space<vmem>>, vector<1x32x384xbf16>
    %4 = vector.shape_cast %3 : vector<1x32x384xbf16> to vector<32x384xbf16>
    %c32 = arith.constant 32 : index
    %c0_6 = arith.constant 0 : index
    %5 = vector.load %arg6[%c32, %c0_6] : memref<288x384xbf16, #tpu.memory_space<vmem>>, vector<32x384xbf16>
    tpu.vector_store %arg6[%c32, %c0_6], %4 {strides = array<i32>} : memref<288x384xbf16, #tpu.memory_space<vmem>>, vector<32x384xbf16>,
    %c0_7 = arith.constant 0 : index
    %c0_8 = arith.constant 0 : index
    %c2 = arith.constant 2 : index
    %6 = vector.load %arg1[%c0_7, %c0_8, %c2] : memref<1x32x512xbf16, #tpu.memory_space<vmem>>, vector<1x32x384xbf16>
    %7 = vector.shape_cast %6 : vector<1x32x384xbf16> to vector<32x384xbf16>
    %c64 = arith.constant 64 : index
    %c0_9 = arith.constant 0 : index
    %8 = vector.load %arg6[%c64, %c0_9] : memref<288x384xbf16, #tpu.memory_space<vmem>>, vector<32x384xbf16>
    tpu.vector_store %arg6[%c64, %c0_9], %7 {strides = array<i32>} : memref<288x384xbf16, #tpu.memory_space<vmem>>, vector<32x384xbf16>,
    %c0_10 = arith.constant 0 : index
    %c0_11 = arith.constant 0 : index
    %c18 = arith.constant 18 : index
    %9 = vector.load %arg1[%c0_10, %c0_11, %c18] : memref<1x32x512xbf16, #tpu.memory_space<vmem>>, vector<1x32x384xbf16>
    %10 = vector.shape_cast %9 : vector<1x32x384xbf16> to vector<32x384xbf16>
    %c96 = arith.constant 96 : index
    %c0_12 = arith.constant 0 : index
    %11 = vector.load %arg6[%c96, %c0_12] : memref<288x384xbf16, #tpu.memory_space<vmem>>, vector<32x384xbf16>
    tpu.vector_store %arg6[%c96, %c0_12], %10 {strides = array<i32>} : memref<288x384xbf16, #tpu.memory_space<vmem>>, vector<32x384xbf16>,
    %c0_13 = arith.constant 0 : index
    %c0_14 = arith.constant 0 : index
    %c19 = arith.constant 19 : index
    %12 = vector.load %arg1[%c0_13, %c0_14, %c19] : memref<1x32x512xbf16, #tpu.memory_space<vmem>>, vector<1x32x384xbf16>
    %13 = vector.shape_cast %12 : vector<1x32x384xbf16> to vector<32x384xbf16>
    %c128 = arith.constant 128 : index
    %c0_15 = arith.constant 0 : index
    %14 = vector.load %arg6[%c128, %c0_15] : memref<288x384xbf16, #tpu.memory_space<vmem>>, vector<32x384xbf16>
    tpu.vector_store %arg6[%c128, %c0_15], %13 {strides = array<i32>} : memref<288x384xbf16, #tpu.memory_space<vmem>>, vector<32x384xbf16>,
    %c0_16 = arith.constant 0 : index
    %c0_17 = arith.constant 0 : index
    %c20 = arith.constant 20 : index
    %15 = vector.load %arg1[%c0_16, %c0_17, %c20] : memref<1x32x512xbf16, #tpu.memory_space<vmem>>, vector<1x32x384xbf16>
    %16 = vector.shape_cast %15 : vector<1x32x384xbf16> to vector<32x384xbf16>
    %c160 = arith.constant 160 : index
    %c0_18 = arith.constant 0 : index
    %17 = vector.load %arg6[%c160, %c0_18] : memref<288x384xbf16, #tpu.memory_space<vmem>>, vector<32x384xbf16>
    tpu.vector_store %arg6[%c160, %c0_18], %16 {strides = array<i32>} : memref<288x384xbf16, #tpu.memory_space<vmem>>, vector<32x384xbf16>,
    %c0_19 = arith.constant 0 : index
    %c0_20 = arith.constant 0 : index
    %c36 = arith.constant 36 : index
    %18 = vector.load %arg1[%c0_19, %c0_20, %c36] : memref<1x32x512xbf16, #tpu.memory_space<vmem>>, vector<1x32x384xbf16>
    %19 = vector.shape_cast %18 : vector<1x32x384xbf16> to vector<32x384xbf16>
    %c192 = arith.constant 192 : index
    %c0_21 = arith.constant 0 : index
    %20 = vector.load %arg6[%c192, %c0_21] : memref<288x384xbf16, #tpu.memory_space<vmem>>, vector<32x384xbf16>
    tpu.vector_store %arg6[%c192, %c0_21], %19 {strides = array<i32>} : memref<288x384xbf16, #tpu.memory_space<vmem>>, vector<32x384xbf16>,
    %c0_22 = arith.constant 0 : index
    %c0_23 = arith.constant 0 : index
    %c37 = arith.constant 37 : index
    %21 = vector.load %arg1[%c0_22, %c0_23, %c37] : memref<1x32x512xbf16, #tpu.memory_space<vmem>>, vector<1x32x384xbf16>
    %22 = vector.shape_cast %21 : vector<1x32x384xbf16> to vector<32x384xbf16>
    %c224 = arith.constant 224 : index
    %c0_24 = arith.constant 0 : index
    %23 = vector.load %arg6[%c224, %c0_24] : memref<288x384xbf16, #tpu.memory_space<vmem>>, vector<32x384xbf16>
    tpu.vector_store %arg6[%c224, %c0_24], %22 {strides = array<i32>} : memref<288x384xbf16, #tpu.memory_space<vmem>>, vector<32x384xbf16>,
    %c0_25 = arith.constant 0 : index
    %c0_26 = arith.constant 0 : index
    %c38 = arith.constant 38 : index
    %24 = vector.load %arg1[%c0_25, %c0_26, %c38] : memref<1x32x512xbf16, #tpu.memory_space<vmem>>, vector<1x32x384xbf16>
    %25 = vector.shape_cast %24 : vector<1x32x384xbf16> to vector<32x384xbf16>
    %c256 = arith.constant 256 : index
    %c0_27 = arith.constant 0 : index
    %26 = vector.load %arg6[%c256, %c0_27] : memref<288x384xbf16, #tpu.memory_space<vmem>>, vector<32x384xbf16>
    tpu.vector_store %arg6[%c256, %c0_27], %25 {strides = array<i32>} : memref<288x384xbf16, #tpu.memory_space<vmem>>, vector<32x384xbf16>,
    %c0_28 = arith.constant 0 : index
    %c0_29 = arith.constant 0 : index
    %27 = vector.load %arg2[%c0_28, %c0_29] : memref<16x288xbf16, #tpu.memory_space<vmem>>, vector<16x288xbf16>
    %c0_30 = arith.constant 0 : index
    %c0_31 = arith.constant 0 : index
    %28 = vector.load %arg6[%c0_30, %c0_31] : memref<288x384xbf16, #tpu.memory_space<vmem>>, vector<288x384xbf16>
    %cst = arith.constant dense<0.000000e+00> : vector<16x384xf32>
    %29 = tpu.matmul %27, %28, %cst {dimension_numbers = #tpu.dot_dimension_numbers<[1], [0], [0], [1], [0, 0, 1, 1], [], []>} : vector<16x288xbf16>, vector<288x384xbf16>, vector<16x384xf32> -> vector<16x384xf32>
    %c0_32 = arith.constant 0 : index
    %c0_33 = arith.constant 0 : index
    %30 = vector.load %arg3[%c0_32, %c0_33] : memref<16x1xf32, #tpu.memory_space<vmem>>, vector<16x1xf32>
    %31 = vector.broadcast %30 : vector<16x1xf32> to vector<16x384xf32>
    %32 = arith.addf %29, %31 : vector<16x384xf32>
    %c0_34 = arith.constant 0 : index
    %c0_35 = arith.constant 0 : index
    %33 = vector.load %arg4[%c0_34, %c0_35] : memref<1x384xf32, #tpu.memory_space<vmem>>, vector<1x384xf32>
    %34 = vector.broadcast %33 : vector<1x384xf32> to vector<16x384xf32>
    %35 = arith.mulf %32, %34 : vector<16x384xf32>
    %c0_36 = arith.constant 0 : index
    %c0_37 = arith.constant 0 : index
    %c0_38 = arith.constant 0 : index
    %36 = vector.load %arg5[%c0_36, %c0_37, %c0_38] : memref<1x16x384xf32, #tpu.memory_space<vmem>>, vector<1x16x384xf32>
    %37 = vector.shape_cast %36 : vector<1x16x384xf32> to vector<16x384xf32>
    %38 = vector.shape_cast %35 : vector<16x384xf32> to vector<1x16x384xf32>
    tpu.vector_store %arg5[%c0_36, %c0_37, %c0_38], %38 {strides = array<i32>} : memref<1x16x384xf32, #tpu.memory_space<vmem>>, vector<1x16x384xf32>,
    return
  }
  func.func @transform_0(%arg0: i32) -> (i32, i32, i32) {
    %c0_i32 = arith.constant 0 : i32
    %c0_i32_0 = arith.constant 0 : i32
    %c0_i32_1 = arith.constant 0 : i32
    return %arg0, %c0_i32, %c0_i32_0 : i32, i32, i32
  }
  func.func @transform_1(%arg0: i32) -> (i32, i32) {
    %c0_i32 = arith.constant 0 : i32
    %c0_i32_0 = arith.constant 0 : i32
    %c0_i32_1 = arith.constant 0 : i32
    return %c0_i32, %c0_i32_0 : i32, i32
  }
  func.func @transform_2(%arg0: i32) -> (i32, i32) {
    %c0_i32 = arith.constant 0 : i32
    %c0_i32_0 = arith.constant 0 : i32
    %c0_i32_1 = arith.constant 0 : i32
    return %c0_i32, %c0_i32_0 : i32, i32
  }
  func.func @transform_3(%arg0: i32) -> (i32, i32) {
    %c0_i32 = arith.constant 0 : i32
    %c0_i32_0 = arith.constant 0 : i32
    %c0_i32_1 = arith.constant 0 : i32
    return %c0_i32, %c0_i32_0 : i32, i32
  }
  func.func @transform_4(%arg0: i32) -> (i32, i32, i32) {
    %c0_i32 = arith.constant 0 : i32
    %c0_i32_0 = arith.constant 0 : i32
    %c0_i32_1 = arith.constant 0 : i32
    return %arg0, %c0_i32, %c0_i32_0 : i32, i32, i32
  }
}

</mosaic_0001>

<llo_original>
// kernel: transporter_forward.10
$region0: #{transporter_forward.10}
  #allocation0 [shape = 'u32[]', space=smem, size = 0x4, offset = 0x4, fixed_abs, tag = 'smem constant byte address 0x4 - core index']
  #allocation1 [shape = 'u32[144,128]{1,0:T(1,128)}', space=vmem, size = 0x12000, scoped, tag = 'internal scratch']
  %s0 = inlined_call_operand.vmem [shape: bf16[4,32,384], index: 0, kind: input, shape index: {}]
  %s1 = inlined_call_operand.vmem [shape: bf16[8,32], index: 1, kind: input, shape index: {}]
  %s2 = inlined_call_operand.vmem [shape: f32[8,1], index: 2, kind: input, shape index: {}]
  %s3 = inlined_call_operand.vmem [shape: f32[1,384], index: 3, kind: input, shape index: {}]
  %s4 = inlined_call_operand.vmem [shape: f32[1,384], index: 4, kind: input, shape index: {}]
  %s5 = inlined_call_operand.vmem [shape: f32[1,384], index: 5, kind: input, shape index: {}]
  %s6 = inlined_call_operand.vmem [shape: f32[4,8,384], index: 6, kind: output, shape index: {0}]
  %s7 = inlined_call_operand.hbm [shape: f32[4,8,1], index: 7, kind: output, shape index: {1}]
  %s8 = inlined_call_operand.hbm [shape: f32[4,8,1], index: 8, kind: output, shape index: {2}]
  %9 = xla_tuple %s6, %s7, %s8
  %s10 = sld [smem:[#allocation0]]
  $region73: #{transporter_forward.10} parent=0
    _
  %s12 = ssub.s32 1, %s10
  %s13 = scalar_select 0, %s12, %s10
  $region1: #{transporter_forward.10} parent=0
    #allocation2 [shape = 'u8[8192]{0}', space=vmem, size = 0x2000, scoped, tag = 'output window, operand 1']
    #allocation3 [shape = 's32[2]{0}', space=sflag, size = 0x8, scoped, tag = 'scoped memory for transporter_forward.10']
    #allocation4 [shape = 'u8[8192]{0}', space=vmem, size = 0x2000, scoped, tag = 'output window, operand 2']
    #allocation5 [shape = 's32[2]{0}', space=sflag, size = 0x8, scoped, tag = 'scoped memory for transporter_forward.10']
    %14 = vsyncpa [#allocation3], 0
    %s15 = scalar_lea.sflag [#allocation3], 1
    %16 = vsyncpa %s15, 0
    %17 = vsyncpa [#allocation5], 0
    %s18 = scalar_lea.sflag [#allocation5], 1
    %19 = vsyncpa %s18, 0
    loop: start=0, step=1, limit=6
    $region2: #{transporter_forward.10} parent=1 // loop_pre_header
      _
    $region3: #{transporter_forward.10} parent=1 // loop_header
      %s21 = sphi 0, %s25
      %p22 = scmp.ge.s32.totalorder %s21, 6
      %s31 = sphi 0, %s33
      %s34 = sphi 0, %s31
      %s35 = sphi 0, %s34
      %s51 = sphi 0, %s35
      %s55 = sphi 0, %s55
      %s57 = sphi 0, %s55
      %s58 = sphi 0, %s57
      %s72 = sphi 0, %s58
      %s76 = sphi 0, %s76
      %s78 = sphi 0, %s76
      %s79 = sphi 0, %s78
      %s93 = sphi 0, %s79
      %s97 = sphi 0, %s97
      %s99 = sphi 0, %s97
      %s100 = sphi 0, %s99
      %s114 = sphi 0, %s100
      %s118 = sphi 0, %s118
      %s120 = sphi 0, %s118
      %s121 = sphi 0, %s120
      %s135 = sphi 0, %s121
      %s139 = sphi 0, %s139
      %s141 = sphi 0, %s139
      %s142 = sphi 0, %s141
      %s156 = sphi 0, %s142
      %s162 = sphi 0, %s164
      %s165 = sphi 0, %s162
      %s166 = sphi 0, %s165
      %s182 = sphi 0, %s166
      %s188 = sphi 0, %s190
      %s191 = sphi 0, %s188
      %s192 = sphi 0, %s191
      %s208 = sphi 0, %s192
      %s214 = sphi 0, %s216
      %s217 = sphi 0, %s214
      %s218 = sphi 0, %s217
      %s234 = sphi 0, %s218
    $region4: #{transporter_forward.10} parent=1 // loop_header_branch
      %24 = sbr.rel (%p22) target = $region8
    $region5: #{transporter_forward.10} parent=1 // loop_body
      %s26 = ssub.s32 %s21, 1
      %s27 = ssub.s32 %s21, 2
      %s28 = sadd.s32 %s21, 1
      %s29 = ssub.s32 %s21, %s28
      %p30 = scmp.eq.s32.totalorder %s29, 0
      %s32 = sadd.s32 %s31, 1
      %s33 = scalar_select %p30, %s31, %s32
      %p36 = pneg %p30
      %p37 = scmp.eq.s32.totalorder %s21, 3
      %p38 = por %p36, %p37
      %p39 = scmp.ne.s32.totalorder %s31, %s34
      %p40 = scmp.eq.s32.totalorder %s21, 0
      %p41 = por %p39, %p40
      %p42 = scmp.ne.s32.totalorder %s31, %s34
      %p43 = scmp.eq.s32.totalorder %s26, 3
      %p44 = por %p42, %p43
      %p45 = scmp.ne.s32.totalorder %s34, %s35
      %p46 = scmp.eq.s32.totalorder %s26, 0
      %p47 = por %p45, %p46
      %p48 = scmp.ne.s32.totalorder %s34, %s35
      %p49 = scmp.eq.s32.totalorder %s27, 3
      %p50 = por %p48, %p49
      %p52 = scmp.ne.s32.totalorder %s35, %s51
      %p53 = scmp.eq.s32.totalorder %s27, 0
      %p54 = por %p52, %p53
      %s56 = sadd.s32 %s55, 1
      %p59 = scmp.eq.s32.totalorder %s21, 3
      %p60 = scmp.ne.s32.totalorder %s55, %s57
      %p61 = scmp.eq.s32.totalorder %s21, 0
      %p62 = por %p60, %p61
      %p63 = scmp.ne.s32.totalorder %s55, %s57
      %p64 = scmp.eq.s32.totalorder %s26, 3
      %p65 = por %p63, %p64
      %p66 = scmp.ne.s32.totalorder %s57, %s58
      %p67 = scmp.eq.s32.totalorder %s26, 0
      %p68 = por %p66, %p67
      %p69 = scmp.ne.s32.totalorder %s57, %s58
      %p70 = scmp.eq.s32.totalorder %s27, 3
      %p71 = por %p69, %p70
      %p73 = scmp.ne.s32.totalorder %s58, %s72
      %p74 = scmp.eq.s32.totalorder %s27, 0
      %p75 = por %p73, %p74
      %s77 = sadd.s32 %s76, 1
      %p80 = scmp.eq.s32.totalorder %s21, 3
      %p81 = scmp.ne.s32.totalorder %s76, %s78
      %p82 = scmp.eq.s32.totalorder %s21, 0
      %p83 = por %p81, %p82
      %p84 = scmp.ne.s32.totalorder %s76, %s78
      %p85 = scmp.eq.s32.totalorder %s26, 3
      %p86 = por %p84, %p85
      %p87 = scmp.ne.s32.totalorder %s78, %s79
      %p88 = scmp.eq.s32.totalorder %s26, 0
      %p89 = por %p87, %p88
      %p90 = scmp.ne.s32.totalorder %s78, %s79
      %p91 = scmp.eq.s32.totalorder %s27, 3
      %p92 = por %p90, %p91
      %p94 = scmp.ne.s32.totalorder %s79, %s93
      %p95 = scmp.eq.s32.totalorder %s27, 0
      %p96 = por %p94, %p95
      %s98 = sadd.s32 %s97, 1
      %p101 = scmp.eq.s32.totalorder %s21, 3
      %p102 = scmp.ne.s32.totalorder %s97, %s99
      %p103 = scmp.eq.s32.totalorder %s21, 0
      %p104 = por %p102, %p103
      %p105 = scmp.ne.s32.totalorder %s97, %s99
      %p106 = scmp.eq.s32.totalorder %s26, 3
      %p107 = por %p105, %p106
      %p108 = scmp.ne.s32.totalorder %s99, %s100
      %p109 = scmp.eq.s32.totalorder %s26, 0
      %p110 = por %p108, %p109
      %p111 = scmp.ne.s32.totalorder %s99, %s100
      %p112 = scmp.eq.s32.totalorder %s27, 3
      %p113 = por %p111, %p112
      %p115 = scmp.ne.s32.totalorder %s100, %s114
      %p116 = scmp.eq.s32.totalorder %s27, 0
      %p117 = por %p115, %p116
      %s119 = sadd.s32 %s118, 1
      %p122 = scmp.eq.s32.totalorder %s21, 3
      %p123 = scmp.ne.s32.totalorder %s118, %s120
      %p124 = scmp.eq.s32.totalorder %s21, 0
      %p125 = por %p123, %p124
      %p126 = scmp.ne.s32.totalorder %s118, %s120
      %p127 = scmp.eq.s32.totalorder %s26, 3
      %p128 = por %p126, %p127
      %p129 = scmp.ne.s32.totalorder %s120, %s121
      %p130 = scmp.eq.s32.totalorder %s26, 0
      %p131 = por %p129, %p130
      %p132 = scmp.ne.s32.totalorder %s120, %s121
      %p133 = scmp.eq.s32.totalorder %s27, 3
      %p134 = por %p132, %p133
      %p136 = scmp.ne.s32.totalorder %s121, %s135
      %p137 = scmp.eq.s32.totalorder %s27, 0
      %p138 = por %p136, %p137
      %s140 = sadd.s32 %s139, 1
      %p143 = scmp.eq.s32.totalorder %s21, 3
      %p144 = scmp.ne.s32.totalorder %s139, %s141
      %p145 = scmp.eq.s32.totalorder %s21, 0
      %p146 = por %p144, %p145
      %p147 = scmp.ne.s32.totalorder %s139, %s141
      %p148 = scmp.eq.s32.totalorder %s26, 3
      %p149 = por %p147, %p148
      %p150 = scmp.ne.s32.totalorder %s141, %s142
      %p151 = scmp.eq.s32.totalorder %s26, 0
      %p152 = por %p150, %p151
      %p153 = scmp.ne.s32.totalorder %s141, %s142
      %p154 = scmp.eq.s32.totalorder %s27, 3
      %p155 = por %p153, %p154
      %p157 = scmp.ne.s32.totalorder %s142, %s156
      %p158 = scmp.eq.s32.totalorder %s27, 0
      %p159 = por %p157, %p158
      %s160 = ssub.s32 %s21, %s28
      %p161 = scmp.eq.s32.totalorder %s160, 0
      %s163 = sadd.s32 %s162, 1
      %s164 = scalar_select %p161, %s162, %s163
      %p167 = pneg %p161
      %p168 = scmp.eq.s32.totalorder %s21, 3
      %p169 = por %p167, %p168
      %p170 = scmp.ne.s32.totalorder %s162, %s165
      %p171 = scmp.eq.s32.totalorder %s21, 0
      %p172 = por %p170, %p171
      %p173 = scmp.ne.s32.totalorder %s162, %s165
      %p174 = scmp.eq.s32.totalorder %s26, 3
      %p175 = por %p173, %p174
      %p176 = scmp.ne.s32.totalorder %s165, %s166
      %p177 = scmp.eq.s32.totalorder %s26, 0
      %p178 = por %p176, %p177
      %p179 = scmp.ne.s32.totalorder %s165, %s166
      %p180 = scmp.eq.s32.totalorder %s27, 3
      %p181 = por %p179, %p180
      %p183 = scmp.ne.s32.totalorder %s166, %s182
      %p184 = scmp.eq.s32.totalorder %s27, 0
      %p185 = por %p183, %p184
      %s186 = ssub.s32 %s21, %s28
      %p187 = scmp.eq.s32.totalorder %s186, 0
      %s189 = sadd.s32 %s188, 1
      %s190 = scalar_select %p187, %s188, %s189
      %p193 = pneg %p187
      %p194 = scmp.eq.s32.totalorder %s21, 3
      %p195 = por %p193, %p194
      %p196 = scmp.ne.s32.totalorder %s188, %s191
      %p197 = scmp.eq.s32.totalorder %s21, 0
      %p198 = por %p196, %p197
      %p199 = scmp.ne.s32.totalorder %s188, %s191
      %p200 = scmp.eq.s32.totalorder %s26, 3
      %p201 = por %p199, %p200
      %p202 = scmp.ne.s32.totalorder %s191, %s192
      %p203 = scmp.eq.s32.totalorder %s26, 0
      %p204 = por %p202, %p203
      %p205 = scmp.ne.s32.totalorder %s191, %s192
      %p206 = scmp.eq.s32.totalorder %s27, 3
      %p207 = por %p205, %p206
      %p209 = scmp.ne.s32.totalorder %s192, %s208
      %p210 = scmp.eq.s32.totalorder %s27, 0
      %p211 = por %p209, %p210
      %s212 = ssub.s32 %s21, %s28
      %p213 = scmp.eq.s32.totalorder %s212, 0
      %s215 = sadd.s32 %s214, 1
      %s216 = scalar_select %p213, %s214, %s215
      %p219 = pneg %p213
      %p220 = scmp.eq.s32.totalorder %s21, 3
      %p221 = por %p219, %p220
      %p222 = scmp.ne.s32.totalorder %s214, %s217
      %p223 = scmp.eq.s32.totalorder %s21, 0
      %p224 = por %p222, %p223
      %p225 = scmp.ne.s32.totalorder %s214, %s217
      %p226 = scmp.eq.s32.totalorder %s26, 3
      %p227 = por %p225, %p226
      %p228 = scmp.ne.s32.totalorder %s217, %s218
      %p229 = scmp.eq.s32.totalorder %s26, 0
      %p230 = por %p228, %p229
      %p231 = scmp.ne.s32.totalorder %s217, %s218
      %p232 = scmp.eq.s32.totalorder %s27, 3
      %p233 = por %p231, %p232
      %p235 = scmp.ne.s32.totalorder %s218, %s234
      %p236 = scmp.eq.s32.totalorder %s27, 0
      %p237 = por %p235, %p236
      %p238 = scmp.le.s32.totalorder 1, %s21
      %p239 = scmp.lt.s32.totalorder %s21, 5
      %p240 = pnand %p238, %p239
      %p241 = pneg %p240
      // Predicated region
      $region9: #{transporter_forward.10} parent=5 // pred_check
        _
      $region10: #{transporter_forward.10} parent=5 // pred_check_branch
        %243 = sbr.rel (%p240) target = $region12
      $region11: #{transporter_forward.10} parent=5 // pred_region
        %s244 = ssub.s32 %s21, 1
        // Predicated region
        $region13: #{transporter_forward.10} parent=11 // pred_check
          %p245 = pneg %p68
        $region14: #{transporter_forward.10} parent=11 // pred_check_branch
          %247 = sbr.rel (%p245) target = $region16
        $region15: #{transporter_forward.10} parent=11 // pred_region
          _
        $region16: #{transporter_forward.10} parent=11 // pred_fallthru
          _
        // Predicated region
        $region17: #{transporter_forward.10} parent=11 // pred_check
          %p248 = pneg %p89
        $region18: #{transporter_forward.10} parent=11 // pred_check_branch
          %250 = sbr.rel (%p248) target = $region20
        $region19: #{transporter_forward.10} parent=11 // pred_region
          _
        $region20: #{transporter_forward.10} parent=11 // pred_fallthru
          _
        // Predicated region
        $region21: #{transporter_forward.10} parent=11 // pred_check
          %p251 = pneg %p110
        $region22: #{transporter_forward.10} parent=11 // pred_check_branch
          %253 = sbr.rel (%p251) target = $region24
        $region23: #{transporter_forward.10} parent=11 // pred_region
          _
        $region24: #{transporter_forward.10} parent=11 // pred_fallthru
          _
        // Predicated region
        $region25: #{transporter_forward.10} parent=11 // pred_check
          %p254 = pneg %p131
        $region26: #{transporter_forward.10} parent=11 // pred_check_branch
          %256 = sbr.rel (%p254) target = $region28
        $region27: #{transporter_forward.10} parent=11 // pred_region
          _
        $region28: #{transporter_forward.10} parent=11 // pred_fallthru
          _
        // Predicated region
        $region29: #{transporter_forward.10} parent=11 // pred_check
          %p257 = pneg %p152
        $region30: #{transporter_forward.10} parent=11 // pred_check_branch
          %259 = sbr.rel (%p257) target = $region32
        $region31: #{transporter_forward.10} parent=11 // pred_region
          _
        $region32: #{transporter_forward.10} parent=11 // pred_fallthru
          _
      $region12: #{transporter_forward.10} parent=5 // pred_fallthru
        _
      %p260 = scmp.lt.s32.totalorder %s21, 4
      // Predicated region
      $region33: #{transporter_forward.10} parent=5 // pred_check
        %p261 = pneg %p260
      $region34: #{transporter_forward.10} parent=5 // pred_check_branch
        %263 = sbr.rel (%p261) target = $region36
      $region35: #{transporter_forward.10} parent=5 // pred_region
        // Predicated region
        $region37: #{transporter_forward.10} parent=35 // pred_check
          %p264 = pneg %p41
        $region38: #{transporter_forward.10} parent=35 // pred_check_branch
          %266 = sbr.rel (%p264) target = $region40
        $region39: #{transporter_forward.10} parent=35 // pred_region
          %p267 = scmp.lt.s32.totalorder %s21, 3
          %s268 = scalar_select %p267, %s21, 3
          %s269 = smul.addr %s268, 12
          %s270 = smul.addr %s269, 4
          %s271 = scalar_lea.vmem %s0, %s270
        $region40: #{transporter_forward.10} parent=35 // pred_fallthru
          _
      $region36: #{transporter_forward.10} parent=5 // pred_fallthru
        _
      %p272 = scmp.le.s32.totalorder 1, %s21
      %p273 = scmp.lt.s32.totalorder %s21, 5
      %p274 = pnand %p272, %p273
      %p275 = pneg %p274
      // Predicated region
      $region41: #{transporter_forward.10} parent=5 // pred_check
        _
      $region42: #{transporter_forward.10} parent=5 // pred_check_branch
        %277 = sbr.rel (%p274) target = $region44
      $region43: #{transporter_forward.10} parent=5 // pred_region
        %s278 = ssub.s32 %s21, 1
        %p279 = scmp.lt.s32.totalorder %s26, 3
        %s280 = scalar_select %p279, %s26, 3
        %s281 = smul.addr %s280, 12
        %s282 = smul.addr %s281, 4
        %s283 = scalar_lea.vmem %s0, %s282
        %p284 = pneg %p47
        %p285 = pneg %p44
        %p286 = pneg %p68
        %p287 = pneg %p65
        %p288 = pneg %p89
        %p289 = pneg %p86
        %p290 = pneg %p110
        %p291 = pneg %p107
        %p292 = pneg %p131
        %p293 = pneg %p128
        %p294 = pneg %p152
        %p295 = pneg %p149
        %p296 = pneg %p178
        %p297 = pneg %p175
        %p298 = scmp.lt.s32.totalorder %s26, 3
        %s299 = scalar_select %p298, %s26, 3
        %s300 = smul.addr %s299, 3
        %s301 = smul.addr %s300, 8
        %s302 = scalar_lea.vmem %s6, %s301
        %p303 = pneg %p204
        %p304 = pneg %p201
        %s305 = sand.u32 %s191, 1
        %s306 = scalar_lea.sflag [#allocation3], %s305
        %s307 = sand.u32 %s191, 1
        %s308 = smul.addr %s307, 8
        %s309 = scalar_lea.vmem [#allocation2], %s308
        %p310 = pneg %p230
        %p311 = pneg %p227
        %s312 = sand.u32 %s217, 1
        %s313 = scalar_lea.sflag [#allocation5], %s312
        %s314 = sand.u32 %s217, 1
        %s315 = smul.addr %s314, 8
        %s316 = scalar_lea.vmem [#allocation4], %s315
        %p317 = scmp.lt.s32.totalorder %s26, 3
        %s318 = scalar_select %p317, %s26, 3
        %s319 = smul.addr %s318, 12
        %s320 = smul.addr %s319, 4
        %s321 = scalar_lea.vmem %s0, %s320
        %p322 = scmp.lt.s32.totalorder %s26, 3
        %s323 = scalar_select %p322, %s26, 3
        %s324 = smul.addr %s323, 3
        %s325 = smul.addr %s324, 8
        %s326 = scalar_lea.vmem %s6, %s325
        %v328 = vld [vmem:[%s1] sm:$0xf]
        %v329 = vld [vmem:[%s321] sm:$0xff]
        %v330 = vld [vmem:[%s321 + $0x8] sm:$0xf]
        %v331 = vld [vmem:[%s321 + $0xc] sm:$0xff]
        %v332 = vld [vmem:[%s321 + $0x14] sm:$0xf]
        %v333 = vld [vmem:[%s321 + $0x18] sm:$0xff]
        %v334 = vld [vmem:[%s321 + $0x20] sm:$0xf]
        %v335 = vld [vmem:[%s321 + $0x24] sm:$0xff]
        %v336 = vld [vmem:[%s321 + $0x2c] sm:$0xf]
        %v337 = vld [vmem:[%s2] sm:$0xff]
        %339 = vset.pattern.permute.xlu0 0
        %340 = vperm.xlu0 %339, %v337
        %v341 = vpop.permute.xlu0 %340
        %v351 = vunpack.c.l.b16 %v329
        %v352 = vunpack.c.h.b16 %v329
        %v353 = vunpack.c.l.b16 %v330
        %v354 = vunpack.c.l.b16 %v331
        %v355 = vunpack.c.h.b16 %v331
        %v356 = vunpack.c.l.b16 %v332
        %v357 = vunpack.c.l.b16 %v333
        %v358 = vunpack.c.h.b16 %v333
        %v359 = vunpack.c.l.b16 %v334
        %v360 = vunpack.c.l.b16 %v335
        %v361 = vunpack.c.h.b16 %v335
        %v362 = vunpack.c.l.b16 %v336
        %v363 = vpack.c.b16 %v354, %v351
        %v364 = vpack.c.b16 %v355, %v352
        %v365 = vpack.c.b16 %v356, %v353
        %v366 = vpack.c.b16 %v360, %v357
        %v367 = vpack.c.b16 %v361, %v358
        %v368 = vpack.c.b16 %v362, %v359
        %vm375 = vcmask 261120
        %v377 = vsel %vm375, %v328, 0
        %379 = vmatprep.subr.bf16.mxu0 %v364
        %380 = vmatpush1.bf16.msra.mxu0 %v363
        %381 = vmatprep.subr.bf16.mxu0 %v367
        %382 = vmatpush1.bf16.msra.mxu0 %v366
        %383 = vmatprep.subr.bf16.mxu0 0
        %384 = vmatpush1.bf16.msra.mxu0 0
        %385 = vmatprep.subr.bf16.mxu0 0
        %386 = vmatpush1.bf16.msra.mxu0 0
        %387 = vmatprep.subr.bf16.mxu0 0
        %388 = vmatpush1.bf16.msra.mxu0 0
        %389 = vmatprep.subr.bf16.mxu0 0
        %390 = vmatpush1.bf16.msra.mxu0 0
        %391 = vmatprep.subr.bf16.mxu0 0
        %392 = vmatpush1.bf16.msra.mxu0 0
        %393 = vmatprep.subr.bf16.mxu0 0
        %394 = vmatpush1.bf16.msra.mxu0 0
        %395 = vmatprep.subr.bf16.mxu0 0
        %396 = vmatpush1.bf16.msra.mxu0 0
        %397 = vmatprep.subr.bf16.mxu0 0
        %398 = vmatpush1.bf16.msra.mxu0 0
        %399 = vmatprep.subr.bf16.mxu0 0
        %400 = vmatpush1.bf16.msra.mxu0 0
        %401 = vmatprep.subr.bf16.mxu0 0
        %402 = vmatpush1.bf16.msra.mxu0 0
        %403 = vmatprep.subr.bf16.mxu0 0
        %404 = vmatpush1.bf16.msra.mxu0 0
        %405 = vmatprep.subr.bf16.mxu0 0
        %406 = vmatpush1.bf16.msra.mxu0 0
        %407 = vmatprep.subr.bf16.mxu0 0
        %408 = vmatpush1.bf16.msra.mxu0 0
        %409 = vmatprep.subr.bf16.mxu0 0
        %410 = vmatpush1.bf16.msra.mxu0 0
        %411 = vmatprep.mubr.bf16.mxu0 0
        %412 = vmatmul.mubr.bf16.gmra.mrb[0].mxu0 %v377
        %v413 = vpop.f32.mrb[0].mxu0
        %v414 = vadd.f32 %v341, %v413
        %v415 = vpop.f32.mrb[0].mxu0
        %v416 = vadd.f32 %v341, %v415
        %v417 = vpop.f32.mrb[0].mxu0
        %v418 = vpop.f32.mrb[0].mxu0
        %419 = vdwg.mxu0
        %420 = vmatprep.subr.bf16.mxu0 0
        %421 = vmatpush1.bf16.msra.mxu0 %v365
        %422 = vmatprep.subr.bf16.mxu0 0
        %423 = vmatpush1.bf16.msra.mxu0 %v368
        %424 = vmatprep.subr.bf16.mxu0 0
        %425 = vmatpush1.bf16.msra.mxu0 0
        %426 = vmatprep.subr.bf16.mxu0 0
        %427 = vmatpush1.bf16.msra.mxu0 0
        %428 = vmatprep.subr.bf16.mxu0 0
        %429 = vmatpush1.bf16.msra.mxu0 0
        %430 = vmatprep.subr.bf16.mxu0 0
        %431 = vmatpush1.bf16.msra.mxu0 0
        %432 = vmatprep.subr.bf16.mxu0 0
        %433 = vmatpush1.bf16.msra.mxu0 0
        %434 = vmatprep.subr.bf16.mxu0 0
        %435 = vmatpush1.bf16.msra.mxu0 0
        %436 = vmatprep.subr.bf16.mxu0 0
        %437 = vmatpush1.bf16.msra.mxu0 0
        %438 = vmatprep.subr.bf16.mxu0 0
        %439 = vmatpush1.bf16.msra.mxu0 0
        %440 = vmatprep.subr.bf16.mxu0 0
        %441 = vmatpush1.bf16.msra.mxu0 0
        %442 = vmatprep.subr.bf16.mxu0 0
        %443 = vmatpush1.bf16.msra.mxu0 0
        %444 = vmatprep.subr.bf16.mxu0 0
        %445 = vmatpush1.bf16.msra.mxu0 0
        %446 = vmatprep.subr.bf16.mxu0 0
        %447 = vmatpush1.bf16.msra.mxu0 0
        %448 = vmatprep.subr.bf16.mxu0 0
        %449 = vmatpush1.bf16.msra.mxu0 0
        %450 = vmatprep.subr.bf16.mxu0 0
        %451 = vmatpush1.bf16.msra.mxu0 0
        %452 = vmatprep.mubr.bf16.mxu0 0
        %453 = vmatmul.mubr.bf16.gmra.mrb[0].mxu0 %v377
        %v454 = vpop.f32.mrb[0].mxu0
        %v455 = vadd.f32 %v341, %v454
        %v456 = vpop.f32.mrb[0].mxu0
        %v457 = vpop.f32.mrb[0].mxu0
        %v458 = vpop.f32.mrb[0].mxu0
        %459 = vdwg.mxu0
        %v460 = vld [vmem:[%s3] sm:$0x7]
        %v461 = vsub.f32 %v460, 1.0
        %v462 = vmul.f32 %v461, 1e+30
        %v464 = vlaneseq
        %v465 = vshrl.u32 %v464, 7
        %v466 = vsub.s32 0, %v465
        %v467 = vrot.slane %v462, %v466
        %v468 = vlaneseq
        %v469 = vshrl.u32 %v468, 7
        %v470 = vsub.s32 1, %v469
        %v471 = vrot.slane %v462, %v470
        %v472 = vlaneseq
        %v473 = vshrl.u32 %v472, 7
        %v474 = vsub.s32 2, %v473
        %v475 = vrot.slane %v462, %v474
        %v479 = vadd.f32 %v414, %v467
        %v480 = vadd.f32 %v416, %v471
        %v481 = vadd.f32 %v455, %v475
        %v482 = vmax.f32 %v479, %v480
        %v483 = vmax.f32 %v482, %v481
        %484 = vmax.xlane.f32.xlu0 %v483
        %v485 = vpop.xlane.xlu0 %484
        %v486 = vsub.f32 %v479, %v485
        %v487 = vsub.f32 %v480, %v485
        %v488 = vsub.f32 %v481, %v485
        %v489 = vmul.f32 %v486, 1.442695
        %v490 = vpow.pop %v489
        %v491 = vmul.f32 %v487, 1.442695
        %v492 = vpow.pop %v491
        %v493 = vmul.f32 %v488, 1.442695
        %v494 = vpow.pop %v493
        %v495 = vadd.f32 %v490, %v492
        %v496 = vadd.f32 %v495, %v494
        %497 = vadd.xlane.f32.xlu0 %v496
        %v498 = vpop.xlane.xlu0 %497
        %v499 = vrcp.pop %v498
        %v500 = vld [vmem:[%s4] sm:$0x7]
        %v501 = vld [vmem:[%s5] sm:$0x7]
        %v503 = vlaneseq
        %v504 = vshrl.u32 %v503, 7
        %v505 = vsub.s32 0, %v504
        %v506 = vrot.slane %v500, %v505
        %v507 = vlaneseq
        %v508 = vshrl.u32 %v507, 7
        %v509 = vsub.s32 1, %v508
        %v510 = vrot.slane %v500, %v509
        %v511 = vlaneseq
        %v512 = vshrl.u32 %v511, 7
        %v513 = vsub.s32 2, %v512
        %v514 = vrot.slane %v500, %v513
        %v518 = vmul.f32 %v490, %v506
        %v519 = vmul.f32 %v492, %v510
        %v520 = vmul.f32 %v494, %v514
        %v521 = vadd.f32 %v518, %v519
        %v522 = vadd.f32 %v521, %v520
        %523 = vadd.xlane.f32.xlu0 %v522
        %v524 = vpop.xlane.xlu0 %523
        %v525 = vmul.f32 %v524, %v499
        %v527 = vlaneseq
        %v528 = vshrl.u32 %v527, 7
        %v529 = vsub.s32 0, %v528
        %v530 = vrot.slane %v501, %v529
        %v531 = vlaneseq
        %v532 = vshrl.u32 %v531, 7
        %v533 = vsub.s32 1, %v532
        %v534 = vrot.slane %v501, %v533
        %v535 = vlaneseq
        %v536 = vshrl.u32 %v535, 7
        %v537 = vsub.s32 2, %v536
        %v538 = vrot.slane %v501, %v537
        %v542 = vmul.f32 %v490, %v530
        %v543 = vmul.f32 %v492, %v534
        %v544 = vmul.f32 %v494, %v538
        %v545 = vadd.f32 %v542, %v543
        %v546 = vadd.f32 %v545, %v544
        %547 = vadd.xlane.f32.xlu0 %v546
        %v548 = vpop.xlane.xlu0 %547
        %v549 = vmul.f32 %v548, %v499
        %v550 = vsub.f32 %v506, %v525
        %v551 = vsub.f32 %v510, %v525
        %v552 = vsub.f32 %v514, %v525
        %v553 = vsub.f32 %v530, %v549
        %v554 = vsub.f32 %v534, %v549
        %v555 = vsub.f32 %v538, %v549
        %v556 = vmul.f32 %v550, %v550
        %v557 = vmul.f32 %v551, %v551
        %v558 = vmul.f32 %v552, %v552
        %v559 = vmul.f32 %v553, %v553
        %v560 = vmul.f32 %v554, %v554
        %v561 = vmul.f32 %v555, %v555
        %v562 = vadd.f32 %v556, %v559
        %v563 = vadd.f32 %v557, %v560
        %v564 = vadd.f32 %v558, %v561
        %v565 = vsub.f32 0.0, %v562
        %v566 = vsub.f32 0.0, %v563
        %v567 = vsub.f32 0.0, %v564
        %v568 = vmul.f32 %v565, 50.0
        %v569 = vmul.f32 %v566, 50.0
        %v570 = vmul.f32 %v567, 50.0
        %v571 = vmul.f32 %v568, 1.442695
        %v572 = vpow.pop %v571
        %v573 = vmul.f32 %v569, 1.442695
        %v574 = vpow.pop %v573
        %v575 = vmul.f32 %v570, 1.442695
        %v576 = vpow.pop %v575
        %v578 = vlaneseq
        %v579 = vshrl.u32 %v578, 7
        %v580 = vsub.s32 0, %v579
        %v581 = vrot.slane %v460, %v580
        %v582 = vlaneseq
        %v583 = vshrl.u32 %v582, 7
        %v584 = vsub.s32 1, %v583
        %v585 = vrot.slane %v460, %v584
        %v586 = vlaneseq
        %v587 = vshrl.u32 %v586, 7
        %v588 = vsub.s32 2, %v587
        %v589 = vrot.slane %v460, %v588
        %v593 = vmul.f32 %v572, %v581
        %v594 = vmul.f32 %v574, %v585
        %v595 = vmul.f32 %v576, %v589
        %596 = vst [vmem:[%s326] sm:$0xff] %v593
        %597 = vst [vmem:[%s326 + $0x8] sm:$0xff] %v594
        %598 = vst [vmem:[%s326 + $0x10] sm:$0xff] %v595
        %vm599 = vcmask 7168
        %600 = vst.msk [vmem:[%s309] sm:$0xff] %vm599, %v525
        %601 = vst.msk [vmem:[%s316] sm:$0xff] %vm599, %v549
        %p602 = scmp.lt.s32.totalorder %s26, 3
        %s603 = scalar_select %p602, %s26, 3
        %s604 = smul.addr %s603, 3
        %s605 = smul.addr %s604, 8
        %s606 = scalar_lea.vmem %s6, %s605
        %s607 = sand.u32 %s191, 1
        %s608 = scalar_lea.sflag [#allocation3], %s607
        %s609 = sand.u32 %s191, 1
        %s610 = smul.addr %s609, 8
        %s611 = scalar_lea.vmem [#allocation2], %s610
        %s612 = sand.u32 %s217, 1
        %s613 = scalar_lea.sflag [#allocation5], %s612
        %s614 = sand.u32 %s217, 1
        %s615 = smul.addr %s614, 8
        %s616 = scalar_lea.vmem [#allocation4], %s615
        // Predicated region
        $region45: #{transporter_forward.10} parent=43 // pred_check
          %p617 = pneg %p175
        $region46: #{transporter_forward.10} parent=43 // pred_check_branch
          %619 = sbr.rel (%p617) target = $region48
        $region47: #{transporter_forward.10} parent=43 // pred_region
          _
        $region48: #{transporter_forward.10} parent=43 // pred_fallthru
          _
        // Predicated region
        $region49: #{transporter_forward.10} parent=43 // pred_check
          %p620 = pneg %p201
        $region50: #{transporter_forward.10} parent=43 // pred_check_branch
          %622 = sbr.rel (%p620) target = $region52
        $region51: #{transporter_forward.10} parent=43 // pred_region
          %s624 = ssub.s32 128, 128
          %625 = vsyncadd %s608, %s624
          %s626 = smul.addr %s26, 128
          %s627 = scalar_lea.hbm %s7, %s626
          %s629 = sshll.u32 %s611, 4
          %s630 = int_to_ptr.vmem [resolvable:$true] %s629
          %632 = dma.vmem_to_hbm [thread:$0]  %s630, 128, %s627, %s608
        $region52: #{transporter_forward.10} parent=43 // pred_fallthru
          _
        // Predicated region
        $region53: #{transporter_forward.10} parent=43 // pred_check
          %p633 = pneg %p227
        $region54: #{transporter_forward.10} parent=43 // pred_check_branch
          %635 = sbr.rel (%p633) target = $region56
        $region55: #{transporter_forward.10} parent=43 // pred_region
          %s637 = ssub.s32 128, 128
          %638 = vsyncadd %s613, %s637
          %s639 = smul.addr %s26, 128
          %s640 = scalar_lea.hbm %s8, %s639
          %s642 = sshll.u32 %s616, 4
          %s643 = int_to_ptr.vmem [resolvable:$true] %s642
          %645 = dma.vmem_to_hbm [thread:$0]  %s643, 128, %s640, %s613
        $region56: #{transporter_forward.10} parent=43 // pred_fallthru
          _
      $region44: #{transporter_forward.10} parent=5 // pred_fallthru
        _
      %p646 = scmp.le.s32.totalorder 2, %s21
      // Predicated region
      $region57: #{transporter_forward.10} parent=5 // pred_check
        %p647 = pneg %p646
      $region58: #{transporter_forward.10} parent=5 // pred_check_branch
        %649 = sbr.rel (%p647) target = $region60
      $region59: #{transporter_forward.10} parent=5 // pred_region
        %s650 = ssub.s32 %s21, 2
        // Predicated region
        $region61: #{transporter_forward.10} parent=59 // pred_check
          %p651 = pneg %p181
        $region62: #{transporter_forward.10} parent=59 // pred_check_branch
          %653 = sbr.rel (%p651) target = $region64
        $region63: #{transporter_forward.10} parent=59 // pred_region
          %p654 = scmp.lt.s32.totalorder %s27, 3
          %s655 = scalar_select %p654, %s27, 3
          %s656 = smul.addr %s655, 3
          %s657 = smul.addr %s656, 8
          %s658 = scalar_lea.vmem %s6, %s657
        $region64: #{transporter_forward.10} parent=59 // pred_fallthru
          _
        // Predicated region
        $region65: #{transporter_forward.10} parent=59 // pred_check
          %p659 = pneg %p207
        $region66: #{transporter_forward.10} parent=59 // pred_check_branch
          %661 = sbr.rel (%p659) target = $region68
        $region67: #{transporter_forward.10} parent=59 // pred_region
          %s662 = sand.u32 %s192, 1
          %s663 = scalar_lea.sflag [#allocation3], %s662
          %s664 = sand.u32 %s192, 1
          %s665 = smul.addr %s664, 8
          %s666 = scalar_lea.vmem [#allocation2], %s665
          %667 = dma.done %s663, 128
        $region68: #{transporter_forward.10} parent=59 // pred_fallthru
          _
        // Predicated region
        $region69: #{transporter_forward.10} parent=59 // pred_check
          %p668 = pneg %p233
        $region70: #{transporter_forward.10} parent=59 // pred_check_branch
          %670 = sbr.rel (%p668) target = $region72
        $region71: #{transporter_forward.10} parent=59 // pred_region
          %s671 = sand.u32 %s218, 1
          %s672 = scalar_lea.sflag [#allocation5], %s671
          %s673 = sand.u32 %s218, 1
          %s674 = smul.addr %s673, 8
          %s675 = scalar_lea.vmem [#allocation4], %s674
          %676 = dma.done %s672, 128
        $region72: #{transporter_forward.10} parent=59 // pred_fallthru
          _
      $region60: #{transporter_forward.10} parent=5 // pred_fallthru
        _
    $region6: #{transporter_forward.10} parent=1 // loop_footer
      %s25 = sadd.s32 1, %s21
    $region7: #{transporter_forward.10} parent=1 // loop_footer_branch
      %20 = sbr.rel target = $region3
    $region8: #{transporter_forward.10} parent=1 // loop_exit
      _
    %677 = vsyncpa [#allocation3], 1
    %s678 = scalar_lea.sflag [#allocation3], 1
    %679 = vsyncpa %s678, 1
    %680 = vsyncpa [#allocation5], 1
    %s681 = scalar_lea.sflag [#allocation5], 1
    %682 = vsyncpa %s681, 1

// kernel: transporter_forward.9
$region0: #{transporter_forward.9}
  #allocation0 [shape = 'u32[]', space=smem, size = 0x4, offset = 0x4, fixed_abs, tag = 'smem constant byte address 0x4 - core index']
  #allocation1 [shape = 'u32[144,128]{1,0:T(1,128)}', space=vmem, size = 0x12000, scoped, tag = 'internal scratch']
  #allocation2 [shape = 'bf16[144,384]{1,0:T(16,128)(2,1)}', space=vmem, size = 0x1b000, scoped, tag = 'scratch operand']
  %s0 = inlined_call_operand.vmem [shape: bf16[4,16,512], index: 0, kind: input, shape index: {}]
  %s1 = inlined_call_operand.vmem [shape: bf16[32,144], index: 1, kind: input, shape index: {}]
  %s2 = inlined_call_operand.vmem [shape: f32[32,1], index: 2, kind: input, shape index: {}]
  %s3 = inlined_call_operand.vmem [shape: f32[1,384], index: 3, kind: input, shape index: {}]
  %s4 = inlined_call_operand.vmem [shape: bf16[4,32,384], index: 4, kind: output, shape index: {}]
  %s5 = sld [smem:[#allocation0]]
  $region49: #{transporter_forward.9} parent=0
    _
  %s7 = ssub.s32 1, %s5
  %s8 = scalar_select 0, %s7, %s5
  loop: start=0, step=1, limit=6
  $region2: #{transporter_forward.9} parent=0 // loop_pre_header
    _
  $region3: #{transporter_forward.9} parent=0 // loop_header
    %s10 = sphi 0, %s14
    %p11 = scmp.ge.s32.totalorder %s10, 6
    %s20 = sphi 0, %s22
    %s23 = sphi 0, %s20
    %s24 = sphi 0, %s23
    %s40 = sphi 0, %s24
    %s44 = sphi 0, %s44
    %s46 = sphi 0, %s44
    %s47 = sphi 0, %s46
    %s61 = sphi 0, %s47
    %s65 = sphi 0, %s65
    %s67 = sphi 0, %s65
    %s68 = sphi 0, %s67
    %s82 = sphi 0, %s68
    %s86 = sphi 0, %s86
    %s88 = sphi 0, %s86
    %s89 = sphi 0, %s88
    %s103 = sphi 0, %s89
    %s109 = sphi 0, %s111
    %s112 = sphi 0, %s109
    %s113 = sphi 0, %s112
    %s129 = sphi 0, %s113
  $region4: #{transporter_forward.9} parent=0 // loop_header_branch
    %13 = sbr.rel (%p11) target = $region8
  $region5: #{transporter_forward.9} parent=0 // loop_body
    %s15 = ssub.s32 %s10, 1
    %s16 = ssub.s32 %s10, 2
    %s17 = sadd.s32 %s10, 1
    %s18 = ssub.s32 %s10, %s17
    %p19 = scmp.eq.s32.totalorder %s18, 0
    %s21 = sadd.s32 %s20, 1
    %s22 = scalar_select %p19, %s20, %s21
    %p25 = pneg %p19
    %p26 = scmp.eq.s32.totalorder %s10, 3
    %p27 = por %p25, %p26
    %p28 = scmp.ne.s32.totalorder %s20, %s23
    %p29 = scmp.eq.s32.totalorder %s10, 0
    %p30 = por %p28, %p29
    %p31 = scmp.ne.s32.totalorder %s20, %s23
    %p32 = scmp.eq.s32.totalorder %s15, 3
    %p33 = por %p31, %p32
    %p34 = scmp.ne.s32.totalorder %s23, %s24
    %p35 = scmp.eq.s32.totalorder %s15, 0
    %p36 = por %p34, %p35
    %p37 = scmp.ne.s32.totalorder %s23, %s24
    %p38 = scmp.eq.s32.totalorder %s16, 3
    %p39 = por %p37, %p38
    %p41 = scmp.ne.s32.totalorder %s24, %s40
    %p42 = scmp.eq.s32.totalorder %s16, 0
    %p43 = por %p41, %p42
    %s45 = sadd.s32 %s44, 1
    %p48 = scmp.eq.s32.totalorder %s10, 3
    %p49 = scmp.ne.s32.totalorder %s44, %s46
    %p50 = scmp.eq.s32.totalorder %s10, 0
    %p51 = por %p49, %p50
    %p52 = scmp.ne.s32.totalorder %s44, %s46
    %p53 = scmp.eq.s32.totalorder %s15, 3
    %p54 = por %p52, %p53
    %p55 = scmp.ne.s32.totalorder %s46, %s47
    %p56 = scmp.eq.s32.totalorder %s15, 0
    %p57 = por %p55, %p56
    %p58 = scmp.ne.s32.totalorder %s46, %s47
    %p59 = scmp.eq.s32.totalorder %s16, 3
    %p60 = por %p58, %p59
    %p62 = scmp.ne.s32.totalorder %s47, %s61
    %p63 = scmp.eq.s32.totalorder %s16, 0
    %p64 = por %p62, %p63
    %s66 = sadd.s32 %s65, 1
    %p69 = scmp.eq.s32.totalorder %s10, 3
    %p70 = scmp.ne.s32.totalorder %s65, %s67
    %p71 = scmp.eq.s32.totalorder %s10, 0
    %p72 = por %p70, %p71
    %p73 = scmp.ne.s32.totalorder %s65, %s67
    %p74 = scmp.eq.s32.totalorder %s15, 3
    %p75 = por %p73, %p74
    %p76 = scmp.ne.s32.totalorder %s67, %s68
    %p77 = scmp.eq.s32.totalorder %s15, 0
    %p78 = por %p76, %p77
    %p79 = scmp.ne.s32.totalorder %s67, %s68
    %p80 = scmp.eq.s32.totalorder %s16, 3
    %p81 = por %p79, %p80
    %p83 = scmp.ne.s32.totalorder %s68, %s82
    %p84 = scmp.eq.s32.totalorder %s16, 0
    %p85 = por %p83, %p84
    %s87 = sadd.s32 %s86, 1
    %p90 = scmp.eq.s32.totalorder %s10, 3
    %p91 = scmp.ne.s32.totalorder %s86, %s88
    %p92 = scmp.eq.s32.totalorder %s10, 0
    %p93 = por %p91, %p92
    %p94 = scmp.ne.s32.totalorder %s86, %s88
    %p95 = scmp.eq.s32.totalorder %s15, 3
    %p96 = por %p94, %p95
    %p97 = scmp.ne.s32.totalorder %s88, %s89
    %p98 = scmp.eq.s32.totalorder %s15, 0
    %p99 = por %p97, %p98
    %p100 = scmp.ne.s32.totalorder %s88, %s89
    %p101 = scmp.eq.s32.totalorder %s16, 3
    %p102 = por %p100, %p101
    %p104 = scmp.ne.s32.totalorder %s89, %s103
    %p105 = scmp.eq.s32.totalorder %s16, 0
    %p106 = por %p104, %p105
    %s107 = ssub.s32 %s10, %s17
    %p108 = scmp.eq.s32.totalorder %s107, 0
    %s110 = sadd.s32 %s109, 1
    %s111 = scalar_select %p108, %s109, %s110
    %p114 = pneg %p108
    %p115 = scmp.eq.s32.totalorder %s10, 3
    %p116 = por %p114, %p115
    %p117 = scmp.ne.s32.totalorder %s109, %s112
    %p118 = scmp.eq.s32.totalorder %s10, 0
    %p119 = por %p117, %p118
    %p120 = scmp.ne.s32.totalorder %s109, %s112
    %p121 = scmp.eq.s32.totalorder %s15, 3
    %p122 = por %p120, %p121
    %p123 = scmp.ne.s32.totalorder %s112, %s113
    %p124 = scmp.eq.s32.totalorder %s15, 0
    %p125 = por %p123, %p124
    %p126 = scmp.ne.s32.totalorder %s112, %s113
    %p127 = scmp.eq.s32.totalorder %s16, 3
    %p128 = por %p126, %p127
    %p130 = scmp.ne.s32.totalorder %s113, %s129
    %p131 = scmp.eq.s32.totalorder %s16, 0
    %p132 = por %p130, %p131
    %p133 = scmp.le.s32.totalorder 1, %s10
    %p134 = scmp.lt.s32.totalorder %s10, 5
    %p135 = pnand %p133, %p134
    %p136 = pneg %p135
    // Predicated region
    $region9: #{transporter_forward.9} parent=5 // pred_check
      _
    $region10: #{transporter_forward.9} parent=5 // pred_check_branch
      %138 = sbr.rel (%p135) target = $region12
    $region11: #{transporter_forward.9} parent=5 // pred_region
      %s139 = ssub.s32 %s10, 1
      // Predicated region
      $region13: #{transporter_forward.9} parent=11 // pred_check
        %p140 = pneg %p57
      $region14: #{transporter_forward.9} parent=11 // pred_check_branch
        %142 = sbr.rel (%p140) target = $region16
      $region15: #{transporter_forward.9} parent=11 // pred_region
        _
      $region16: #{transporter_forward.9} parent=11 // pred_fallthru
        _
      // Predicated region
      $region17: #{transporter_forward.9} parent=11 // pred_check
        %p143 = pneg %p78
      $region18: #{transporter_forward.9} parent=11 // pred_check_branch
        %145 = sbr.rel (%p143) target = $region20
      $region19: #{transporter_forward.9} parent=11 // pred_region
        _
      $region20: #{transporter_forward.9} parent=11 // pred_fallthru
        _
      // Predicated region
      $region21: #{transporter_forward.9} parent=11 // pred_check
        %p146 = pneg %p99
      $region22: #{transporter_forward.9} parent=11 // pred_check_branch
        %148 = sbr.rel (%p146) target = $region24
      $region23: #{transporter_forward.9} parent=11 // pred_region
        _
      $region24: #{transporter_forward.9} parent=11 // pred_fallthru
        _
    $region12: #{transporter_forward.9} parent=5 // pred_fallthru
      _
    %p149 = scmp.lt.s32.totalorder %s10, 4
    // Predicated region
    $region25: #{transporter_forward.9} parent=5 // pred_check
      %p150 = pneg %p149
    $region26: #{transporter_forward.9} parent=5 // pred_check_branch
      %152 = sbr.rel (%p150) target = $region28
    $region27: #{transporter_forward.9} parent=5 // pred_region
      // Predicated region
      $region29: #{transporter_forward.9} parent=27 // pred_check
        %p153 = pneg %p30
      $region30: #{transporter_forward.9} parent=27 // pred_check_branch
        %155 = sbr.rel (%p153) target = $region32
      $region31: #{transporter_forward.9} parent=27 // pred_region
        %p156 = scmp.lt.s32.totalorder %s10, 3
        %s157 = scalar_select %p156, %s10, 3
        %s158 = smul.addr %s157, 8
        %s159 = smul.addr %s158, 4
        %s160 = scalar_lea.vmem %s0, %s159
      $region32: #{transporter_forward.9} parent=27 // pred_fallthru
        _
    $region28: #{transporter_forward.9} parent=5 // pred_fallthru
      _
    %p161 = scmp.le.s32.totalorder 1, %s10
    %p162 = scmp.lt.s32.totalorder %s10, 5
    %p163 = pnand %p161, %p162
    %p164 = pneg %p163
    // Predicated region
    $region33: #{transporter_forward.9} parent=5 // pred_check
      _
    $region34: #{transporter_forward.9} parent=5 // pred_check_branch
      %166 = sbr.rel (%p163) target = $region36
    $region35: #{transporter_forward.9} parent=5 // pred_region
      %s167 = ssub.s32 %s10, 1
      %p168 = scmp.lt.s32.totalorder %s15, 3
      %s169 = scalar_select %p168, %s15, 3
      %s170 = smul.addr %s169, 8
      %s171 = smul.addr %s170, 4
      %s172 = scalar_lea.vmem %s0, %s171
      %p173 = pneg %p36
      %p174 = pneg %p33
      %p175 = pneg %p57
      %p176 = pneg %p54
      %p177 = pneg %p78
      %p178 = pneg %p75
      %p179 = pneg %p99
      %p180 = pneg %p96
      %p181 = pneg %p125
      %p182 = pneg %p122
      %p183 = scmp.lt.s32.totalorder %s15, 3
      %s184 = scalar_select %p183, %s15, 3
      %s185 = smul.addr %s184, 12
      %s186 = smul.addr %s185, 4
      %s187 = scalar_lea.vmem %s4, %s186
      %p188 = scmp.lt.s32.totalorder %s15, 3
      %s189 = scalar_select %p188, %s15, 3
      %s190 = smul.addr %s189, 8
      %s191 = smul.addr %s190, 4
      %s192 = scalar_lea.vmem %s0, %s191
      %p193 = scmp.lt.s32.totalorder %s15, 3
      %s194 = scalar_select %p193, %s15, 3
      %s195 = smul.addr %s194, 12
      %s196 = smul.addr %s195, 4
      %s197 = scalar_lea.vmem %s4, %s196
      %v199 = vld [vmem:[%s192] sm:$0xff]
      %v200 = vld [vmem:[%s192 + $0x8] sm:$0xf]
      %v201 = vld [vmem:[%s192 + $0x10] sm:$0xff]
      %v202 = vld [vmem:[%s192 + $0x18] sm:$0xf]
      %v207 = vunpack.c.l.b16 %v199
      %v208 = vunpack.c.h.b16 %v199
      %v209 = vunpack.c.l.b16 %v200
      %v210 = vunpack.c.l.b16 %v201
      %v211 = vunpack.c.h.b16 %v201
      %v212 = vunpack.c.l.b16 %v202
      %v213 = vpack.c.b16 %v210, %v207
      %v214 = vpack.c.b16 %v211, %v208
      %v215 = vpack.c.b16 %v212, %v209
      %219 = vst [vmem:[#allocation2] sm:$0xff] %v213
      %220 = vst [vmem:[#allocation2 + $0x8] sm:$0xff] %v214
      %221 = vst [vmem:[#allocation2 + $0x10] sm:$0xff] %v215
      %v222 = vld [vmem:[%s192] sm:$0xff]
      %v223 = vld [vmem:[%s192 + $0x8] sm:$0xff]
      %v224 = vld [vmem:[%s192 + $0x10] sm:$0xff]
      %v225 = vld [vmem:[%s192 + $0x18] sm:$0xff]
      %v230 = vunpack.c.l.b16 %v222
      %v231 = vunpack.c.h.b16 %v222
      %v232 = vunpack.c.l.b16 %v223
      %v233 = vunpack.c.h.b16 %v223
      %v234 = vunpack.c.l.b16 %v224
      %v235 = vunpack.c.h.b16 %v224
      %v236 = vunpack.c.l.b16 %v225
      %v237 = vunpack.c.h.b16 %v225
      %v238 = vpack.c.b16 %v234, %v230
      %v239 = vpack.c.b16 %v235, %v231
      %v240 = vpack.c.b16 %v236, %v232
      %v241 = vpack.c.b16 %v237, %v233
      %242 = vrot.lane.b32.xlu0 %v238, 127
      %v243 = vpop.permute.xlu0 %242
      %244 = vrot.lane.b32.xlu0 %v239, 127
      %v245 = vpop.permute.xlu0 %244
      %246 = vrot.lane.b32.xlu0 %v240, 127
      %v247 = vpop.permute.xlu0 %246
      %248 = vrot.lane.b32.xlu0 %v241, 127
      %v249 = vpop.permute.xlu0 %248
      %vm250 = vcmask 1039360
      %v251 = vsel %vm250, %v243, %v245
      %v252 = vsel %vm250, %v245, %v247
      %v253 = vsel %vm250, %v247, %v249
      %257 = vst [vmem:[#allocation2 + $0x18] sm:$0xff] %v251
      %258 = vst [vmem:[#allocation2 + $0x20] sm:$0xff] %v252
      %259 = vst [vmem:[#allocation2 + $0x28] sm:$0xff] %v253
      %v260 = vld [vmem:[%s192] sm:$0xff]
      %v261 = vld [vmem:[%s192 + $0x8] sm:$0xff]
      %v262 = vld [vmem:[%s192 + $0x10] sm:$0xff]
      %v263 = vld [vmem:[%s192 + $0x18] sm:$0xff]
      %v268 = vunpack.c.l.b16 %v260
      %v269 = vunpack.c.h.b16 %v260
      %v270 = vunpack.c.l.b16 %v261
      %v271 = vunpack.c.h.b16 %v261
      %v272 = vunpack.c.l.b16 %v262
      %v273 = vunpack.c.h.b16 %v262
      %v274 = vunpack.c.l.b16 %v263
      %v275 = vunpack.c.h.b16 %v263
      %v276 = vpack.c.b16 %v272, %v268
      %v277 = vpack.c.b16 %v273, %v269
      %v278 = vpack.c.b16 %v274, %v270
      %v279 = vpack.c.b16 %v275, %v271
      %280 = vrot.lane.b32.xlu0 %v276, 126
      %v281 = vpop.permute.xlu0 %280
      %282 = vrot.lane.b32.xlu0 %v277, 126
      %v283 = vpop.permute.xlu0 %282
      %284 = vrot.lane.b32.xlu0 %v278, 126
      %v285 = vpop.permute.xlu0 %284
      %286 = vrot.lane.b32.xlu0 %v279, 126
      %v287 = vpop.permute.xlu0 %286
      %vm288 = vcmask 1031168
      %v289 = vsel %vm288, %v281, %v283
      %v290 = vsel %vm288, %v283, %v285
      %v291 = vsel %vm288, %v285, %v287
      %295 = vst [vmem:[#allocation2 + $0x30] sm:$0xff] %v289
      %296 = vst [vmem:[#allocation2 + $0x38] sm:$0xff] %v290
      %297 = vst [vmem:[#allocation2 + $0x40] sm:$0xff] %v291
      %v298 = vld [vmem:[%s192] sm:$0xff]
      %v299 = vld [vmem:[%s192 + $0x8] sm:$0xff]
      %v300 = vld [vmem:[%s192 + $0x10] sm:$0xff]
      %v301 = vld [vmem:[%s192 + $0x18] sm:$0xff]
      %v306 = vunpack.c.l.b16 %v298
      %v307 = vunpack.c.h.b16 %v298
      %v308 = vunpack.c.l.b16 %v299
      %v309 = vunpack.c.h.b16 %v299
      %v310 = vunpack.c.l.b16 %v300
      %v311 = vunpack.c.h.b16 %v300
      %v312 = vunpack.c.l.b16 %v301
      %v313 = vunpack.c.h.b16 %v301
      %v314 = vpack.c.b16 %v310, %v306
      %v315 = vpack.c.b16 %v311, %v307
      %v316 = vpack.c.b16 %v312, %v308
      %v317 = vpack.c.b16 %v313, %v309
      %318 = vrot.lane.b32.xlu0 %v314, 110
      %v319 = vpop.permute.xlu0 %318
      %320 = vrot.lane.b32.xlu0 %v315, 110
      %v321 = vpop.permute.xlu0 %320
      %322 = vrot.lane.b32.xlu0 %v316, 110
      %v323 = vpop.permute.xlu0 %322
      %324 = vrot.lane.b32.xlu0 %v317, 110
      %v325 = vpop.permute.xlu0 %324
      %vm326 = vcmask 900096
      %v327 = vsel %vm326, %v319, %v321
      %v328 = vsel %vm326, %v321, %v323
      %v329 = vsel %vm326, %v323, %v325
      %333 = vst [vmem:[#allocation2 + $0x48] sm:$0xff] %v327
      %334 = vst [vmem:[#allocation2 + $0x50] sm:$0xff] %v328
      %335 = vst [vmem:[#allocation2 + $0x58] sm:$0xff] %v329
      %v336 = vld [vmem:[%s192] sm:$0xff]
      %v337 = vld [vmem:[%s192 + $0x8] sm:$0xff]
      %v338 = vld [vmem:[%s192 + $0x10] sm:$0xff]
      %v339 = vld [vmem:[%s192 + $0x18] sm:$0xff]
      %v344 = vunpack.c.l.b16 %v336
      %v345 = vunpack.c.h.b16 %v336
      %v346 = vunpack.c.l.b16 %v337
      %v347 = vunpack.c.h.b16 %v337
      %v348 = vunpack.c.l.b16 %v338
      %v349 = vunpack.c.h.b16 %v338
      %v350 = vunpack.c.l.b16 %v339
      %v351 = vunpack.c.h.b16 %v339
      %v352 = vpack.c.b16 %v348, %v344
      %v353 = vpack.c.b16 %v349, %v345
      %v354 = vpack.c.b16 %v350, %v346
      %v355 = vpack.c.b16 %v351, %v347
      %356 = vrot.lane.b32.xlu0 %v352, 109
      %v357 = vpop.permute.xlu0 %356
      %358 = vrot.lane.b32.xlu0 %v353, 109
      %v359 = vpop.permute.xlu0 %358
      %360 = vrot.lane.b32.xlu0 %v354, 109
      %v361 = vpop.permute.xlu0 %360
      %362 = vrot.lane.b32.xlu0 %v355, 109
      %v363 = vpop.permute.xlu0 %362
      %vm364 = vcmask 891904
      %v365 = vsel %vm364, %v357, %v359
      %v366 = vsel %vm364, %v359, %v361
      %v367 = vsel %vm364, %v361, %v363
      %371 = vst [vmem:[#allocation2 + $0x60] sm:$0xff] %v365
      %372 = vst [vmem:[#allocation2 + $0x68] sm:$0xff] %v366
      %373 = vst [vmem:[#allocation2 + $0x70] sm:$0xff] %v367
      %v374 = vld [vmem:[%s192] sm:$0xff]
      %v375 = vld [vmem:[%s192 + $0x8] sm:$0xff]
      %v376 = vld [vmem:[%s192 + $0x10] sm:$0xff]
      %v377 = vld [vmem:[%s192 + $0x18] sm:$0xff]
      %v382 = vunpack.c.l.b16 %v374
      %v383 = vunpack.c.h.b16 %v374
      %v384 = vunpack.c.l.b16 %v375
      %v385 = vunpack.c.h.b16 %v375
      %v386 = vunpack.c.l.b16 %v376
      %v387 = vunpack.c.h.b16 %v376
      %v388 = vunpack.c.l.b16 %v377
      %v389 = vunpack.c.h.b16 %v377
      %v390 = vpack.c.b16 %v386, %v382
      %v391 = vpack.c.b16 %v387, %v383
      %v392 = vpack.c.b16 %v388, %v384
      %v393 = vpack.c.b16 %v389, %v385
      %394 = vrot.lane.b32.xlu0 %v390, 108
      %v395 = vpop.permute.xlu0 %394
      %396 = vrot.lane.b32.xlu0 %v391, 108
      %v397 = vpop.permute.xlu0 %396
      %398 = vrot.lane.b32.xlu0 %v392, 108
      %v399 = vpop.permute.xlu0 %398
      %400 = vrot.lane.b32.xlu0 %v393, 108
      %v401 = vpop.permute.xlu0 %400
      %vm402 = vcmask 883712
      %v403 = vsel %vm402, %v395, %v397
      %v404 = vsel %vm402, %v397, %v399
      %v405 = vsel %vm402, %v399, %v401
      %409 = vst [vmem:[#allocation2 + $0x78] sm:$0xff] %v403
      %410 = vst [vmem:[#allocation2 + $0x80] sm:$0xff] %v404
      %411 = vst [vmem:[#allocation2 + $0x88] sm:$0xff] %v405
      %v412 = vld [vmem:[%s192] sm:$0xff]
      %v413 = vld [vmem:[%s192 + $0x8] sm:$0xff]
      %v414 = vld [vmem:[%s192 + $0x10] sm:$0xff]
      %v415 = vld [vmem:[%s192 + $0x18] sm:$0xff]
      %v420 = vunpack.c.l.b16 %v412
      %v421 = vunpack.c.h.b16 %v412
      %v422 = vunpack.c.l.b16 %v413
      %v423 = vunpack.c.h.b16 %v413
      %v424 = vunpack.c.l.b16 %v414
      %v425 = vunpack.c.h.b16 %v414
      %v426 = vunpack.c.l.b16 %v415
      %v427 = vunpack.c.h.b16 %v415
      %v428 = vpack.c.b16 %v424, %v420
      %v429 = vpack.c.b16 %v425, %v421
      %v430 = vpack.c.b16 %v426, %v422
      %v431 = vpack.c.b16 %v427, %v423
      %432 = vrot.lane.b32.xlu0 %v428, 92
      %v433 = vpop.permute.xlu0 %432
      %434 = vrot.lane.b32.xlu0 %v429, 92
      %v435 = vpop.permute.xlu0 %434
      %436 = vrot.lane.b32.xlu0 %v430, 92
      %v437 = vpop.permute.xlu0 %436
      %438 = vrot.lane.b32.xlu0 %v431, 92
      %v439 = vpop.permute.xlu0 %438
      %vm440 = vcmask 752640
      %v441 = vsel %vm440, %v433, %v435
      %v442 = vsel %vm440, %v435, %v437
      %v443 = vsel %vm440, %v437, %v439
      %447 = vst [vmem:[#allocation2 + $0x90] sm:$0xff] %v441
      %448 = vst [vmem:[#allocation2 + $0x98] sm:$0xff] %v442
      %449 = vst [vmem:[#allocation2 + $0xa0] sm:$0xff] %v443
      %v450 = vld [vmem:[%s192] sm:$0xff]
      %v451 = vld [vmem:[%s192 + $0x8] sm:$0xff]
      %v452 = vld [vmem:[%s192 + $0x10] sm:$0xff]
      %v453 = vld [vmem:[%s192 + $0x18] sm:$0xff]
      %v458 = vunpack.c.l.b16 %v450
      %v459 = vunpack.c.h.b16 %v450
      %v460 = vunpack.c.l.b16 %v451
      %v461 = vunpack.c.h.b16 %v451
      %v462 = vunpack.c.l.b16 %v452
      %v463 = vunpack.c.h.b16 %v452
      %v464 = vunpack.c.l.b16 %v453
      %v465 = vunpack.c.h.b16 %v453
      %v466 = vpack.c.b16 %v462, %v458
      %v467 = vpack.c.b16 %v463, %v459
      %v468 = vpack.c.b16 %v464, %v460
      %v469 = vpack.c.b16 %v465, %v461
      %470 = vrot.lane.b32.xlu0 %v466, 91
      %v471 = vpop.permute.xlu0 %470
      %472 = vrot.lane.b32.xlu0 %v467, 91
      %v473 = vpop.permute.xlu0 %472
      %474 = vrot.lane.b32.xlu0 %v468, 91
      %v475 = vpop.permute.xlu0 %474
      %476 = vrot.lane.b32.xlu0 %v469, 91
      %v477 = vpop.permute.xlu0 %476
      %vm478 = vcmask 744448
      %v479 = vsel %vm478, %v471, %v473
      %v480 = vsel %vm478, %v473, %v475
      %v481 = vsel %vm478, %v475, %v477
      %485 = vst [vmem:[#allocation2 + $0xa8] sm:$0xff] %v479
      %486 = vst [vmem:[#allocation2 + $0xb0] sm:$0xff] %v480
      %487 = vst [vmem:[#allocation2 + $0xb8] sm:$0xff] %v481
      %v488 = vld [vmem:[%s192] sm:$0xff]
      %v489 = vld [vmem:[%s192 + $0x8] sm:$0xff]
      %v490 = vld [vmem:[%s192 + $0x10] sm:$0xff]
      %v491 = vld [vmem:[%s192 + $0x18] sm:$0xff]
      %v496 = vunpack.c.l.b16 %v488
      %v497 = vunpack.c.h.b16 %v488
      %v498 = vunpack.c.l.b16 %v489
      %v499 = vunpack.c.h.b16 %v489
      %v500 = vunpack.c.l.b16 %v490
      %v501 = vunpack.c.h.b16 %v490
      %v502 = vunpack.c.l.b16 %v491
      %v503 = vunpack.c.h.b16 %v491
      %v504 = vpack.c.b16 %v500, %v496
      %v505 = vpack.c.b16 %v501, %v497
      %v506 = vpack.c.b16 %v502, %v498
      %v507 = vpack.c.b16 %v503, %v499
      %508 = vrot.lane.b32.xlu0 %v504, 90
      %v509 = vpop.permute.xlu0 %508
      %510 = vrot.lane.b32.xlu0 %v505, 90
      %v511 = vpop.permute.xlu0 %510
      %512 = vrot.lane.b32.xlu0 %v506, 90
      %v513 = vpop.permute.xlu0 %512
      %514 = vrot.lane.b32.xlu0 %v507, 90
      %v515 = vpop.permute.xlu0 %514
      %vm516 = vcmask 736256
      %v517 = vsel %vm516, %v509, %v511
      %v518 = vsel %vm516, %v511, %v513
      %v519 = vsel %vm516, %v513, %v515
      %523 = vst [vmem:[#allocation2 + $0xc0] sm:$0xff] %v517
      %524 = vst [vmem:[#allocation2 + $0xc8] sm:$0xff] %v518
      %525 = vst [vmem:[#allocation2 + $0xd0] sm:$0xff] %v519
      %v526 = vld [vmem:[%s1] sm:$0xff]
      %v527 = vld [vmem:[%s1 + $0x8] sm:$0xff]
      %v528 = vld [vmem:[%s1 + $0x10] sm:$0xff]
      %v529 = vld [vmem:[%s1 + $0x18] sm:$0xff]
      %v530 = vld [vmem:[#allocation2] sm:$0xff]
      %v531 = vld [vmem:[#allocation2 + $0x8] sm:$0xff]
      %v532 = vld [vmem:[#allocation2 + $0x10] sm:$0xff]
      %v533 = vld [vmem:[#allocation2 + $0x18] sm:$0xff]
      %v534 = vld [vmem:[#allocation2 + $0x20] sm:$0xff]
      %v535 = vld [vmem:[#allocation2 + $0x28] sm:$0xff]
      %v536 = vld [vmem:[#allocation2 + $0x30] sm:$0xff]
      %v537 = vld [vmem:[#allocation2 + $0x38] sm:$0xff]
      %v538 = vld [vmem:[#allocation2 + $0x40] sm:$0xff]
      %v539 = vld [vmem:[#allocation2 + $0x48] sm:$0xff]
      %v540 = vld [vmem:[#allocation2 + $0x50] sm:$0xff]
      %v541 = vld [vmem:[#allocation2 + $0x58] sm:$0xff]
      %v542 = vld [vmem:[#allocation2 + $0x60] sm:$0xff]
      %v543 = vld [vmem:[#allocation2 + $0x68] sm:$0xff]
      %v544 = vld [vmem:[#allocation2 + $0x70] sm:$0xff]
      %v545 = vld [vmem:[#allocation2 + $0x78] sm:$0xff]
      %v546 = vld [vmem:[#allocation2 + $0x80] sm:$0xff]
      %v547 = vld [vmem:[#allocation2 + $0x88] sm:$0xff]
      %v548 = vld [vmem:[#allocation2 + $0x90] sm:$0xff]
      %v549 = vld [vmem:[#allocation2 + $0x98] sm:$0xff]
      %v550 = vld [vmem:[#allocation2 + $0xa0] sm:$0xff]
      %v551 = vld [vmem:[#allocation2 + $0xa8] sm:$0xff]
      %v552 = vld [vmem:[#allocation2 + $0xb0] sm:$0xff]
      %v553 = vld [vmem:[#allocation2 + $0xb8] sm:$0xff]
      %v554 = vld [vmem:[#allocation2 + $0xc0] sm:$0xff]
      %v555 = vld [vmem:[#allocation2 + $0xc8] sm:$0xff]
      %v556 = vld [vmem:[#allocation2 + $0xd0] sm:$0xff]
      %v557 = vld [vmem:[%s2] sm:$0xff]
      %v558 = vld [vmem:[%s2 + $0x8] sm:$0xff]
      %v559 = vld [vmem:[%s2 + $0x10] sm:$0xff]
      %v560 = vld [vmem:[%s2 + $0x18] sm:$0xff]
      %562 = vset.pattern.permute.xlu0 0
      %563 = vperm.xlu0 %562, %v557
      %v564 = vpop.permute.xlu0 %563
      %567 = vset.pattern.permute.xlu0 0
      %568 = vperm.xlu0 %567, %v558
      %v569 = vpop.permute.xlu0 %568
      %572 = vset.pattern.permute.xlu0 0
      %573 = vperm.xlu0 %572, %v559
      %v574 = vpop.permute.xlu0 %573
      %577 = vset.pattern.permute.xlu0 0
      %578 = vperm.xlu0 %577, %v560
      %v579 = vpop.permute.xlu0 %578
      %v585 = vunpack.c.l.b16 %v526
      %v586 = vunpack.c.h.b16 %v526
      %v587 = vunpack.c.l.b16 %v527
      %v588 = vunpack.c.h.b16 %v527
      %v589 = vunpack.c.l.b16 %v528
      %v590 = vunpack.c.h.b16 %v528
      %v591 = vunpack.c.l.b16 %v529
      %v592 = vunpack.c.h.b16 %v529
      %v593 = vpack.c.b16 %v587, %v585
      %v594 = vpack.c.b16 %v588, %v586
      %v595 = vpack.c.b16 %v591, %v589
      %v596 = vpack.c.b16 %v592, %v590
      %vm599 = vcmask 130048
      %v601 = vsel %vm599, %v594, 0
      %v604 = vsel %vm599, %v596, 0
      %606 = vmatprep.subr.bf16.mxu0 %v531
      %607 = vmatpush1.bf16.msra.mxu0 %v530
      %608 = vmatprep.subr.bf16.mxu0 %v534
      %609 = vmatpush1.bf16.msra.mxu0 %v533
      %610 = vmatprep.subr.bf16.mxu0 %v537
      %611 = vmatpush1.bf16.msra.mxu0 %v536
      %612 = vmatprep.subr.bf16.mxu0 %v540
      %613 = vmatpush1.bf16.msra.mxu0 %v539
      %614 = vmatprep.subr.bf16.mxu0 %v543
      %615 = vmatpush1.bf16.msra.mxu0 %v542
      %616 = vmatprep.subr.bf16.mxu0 %v546
      %617 = vmatpush1.bf16.msra.mxu0 %v545
      %618 = vmatprep.subr.bf16.mxu0 %v549
      %619 = vmatpush1.bf16.msra.mxu0 %v548
      %620 = vmatprep.subr.bf16.mxu0 %v552
      %621 = vmatpush1.bf16.msra.mxu0 %v551
      %622 = vmatprep.subr.bf16.mxu0 %v555
      %623 = vmatpush1.bf16.msra.mxu0 %v554
      %624 = vmatprep.subr.bf16.mxu0 0
      %625 = vmatpush1.bf16.msra.mxu0 0
      %626 = vmatprep.subr.bf16.mxu0 0
      %627 = vmatpush1.bf16.msra.mxu0 0
      %628 = vmatprep.subr.bf16.mxu0 0
      %629 = vmatpush1.bf16.msra.mxu0 0
      %630 = vmatprep.subr.bf16.mxu0 0
      %631 = vmatpush1.bf16.msra.mxu0 0
      %632 = vmatprep.subr.bf16.mxu0 0
      %633 = vmatpush1.bf16.msra.mxu0 0
      %634 = vmatprep.subr.bf16.mxu0 0
      %635 = vmatpush1.bf16.msra.mxu0 0
      %636 = vmatprep.subr.bf16.mxu0 0
      %637 = vmatpush1.bf16.msra.mxu0 0
      %638 = vmatprep.mubr.bf16.mxu0 %v601
      %639 = vmatmul.mubr.bf16.gmra.mrb[0].mxu0 %v593
      %v640 = vpop.f32.mrb[0].mxu0
      %v641 = vadd.f32 %v564, %v640
      %v642 = vpop.f32.mrb[0].mxu0
      %v643 = vadd.f32 %v564, %v642
      %v644 = vpop.f32.mrb[0].mxu0
      %v645 = vadd.f32 %v569, %v644
      %v646 = vpop.f32.mrb[0].mxu0
      %v647 = vadd.f32 %v569, %v646
      %648 = vmatprep.mubr.bf16.mxu0 %v604
      %649 = vmatmul.mubr.bf16.gmra.mrb[0].mxu0 %v595
      %v650 = vpop.f32.mrb[0].mxu0
      %v651 = vadd.f32 %v574, %v650
      %v652 = vpop.f32.mrb[0].mxu0
      %v653 = vadd.f32 %v574, %v652
      %v654 = vpop.f32.mrb[0].mxu0
      %v655 = vadd.f32 %v579, %v654
      %v656 = vpop.f32.mrb[0].mxu0
      %v657 = vadd.f32 %v579, %v656
      %658 = vdwg.mxu0
      %659 = vmatprep.subr.bf16.mxu0 0
      %660 = vmatpush1.bf16.msra.mxu0 %v532
      %661 = vmatprep.subr.bf16.mxu0 0
      %662 = vmatpush1.bf16.msra.mxu0 %v535
      %663 = vmatprep.subr.bf16.mxu0 0
      %664 = vmatpush1.bf16.msra.mxu0 %v538
      %665 = vmatprep.subr.bf16.mxu0 0
      %666 = vmatpush1.bf16.msra.mxu0 %v541
      %667 = vmatprep.subr.bf16.mxu0 0
      %668 = vmatpush1.bf16.msra.mxu0 %v544
      %669 = vmatprep.subr.bf16.mxu0 0
      %670 = vmatpush1.bf16.msra.mxu0 %v547
      %671 = vmatprep.subr.bf16.mxu0 0
      %672 = vmatpush1.bf16.msra.mxu0 %v550
      %673 = vmatprep.subr.bf16.mxu0 0
      %674 = vmatpush1.bf16.msra.mxu0 %v553
      %675 = vmatprep.subr.bf16.mxu0 0
      %676 = vmatpush1.bf16.msra.mxu0 %v556
      %677 = vmatprep.subr.bf16.mxu0 0
      %678 = vmatpush1.bf16.msra.mxu0 0
      %679 = vmatprep.subr.bf16.mxu0 0
      %680 = vmatpush1.bf16.msra.mxu0 0
      %681 = vmatprep.subr.bf16.mxu0 0
      %682 = vmatpush1.bf16.msra.mxu0 0
      %683 = vmatprep.subr.bf16.mxu0 0
      %684 = vmatpush1.bf16.msra.mxu0 0
      %685 = vmatprep.subr.bf16.mxu0 0
      %686 = vmatpush1.bf16.msra.mxu0 0
      %687 = vmatprep.subr.bf16.mxu0 0
      %688 = vmatpush1.bf16.msra.mxu0 0
      %689 = vmatprep.subr.bf16.mxu0 0
      %690 = vmatpush1.bf16.msra.mxu0 0
      %691 = vmatprep.mubr.bf16.mxu0 %v601
      %692 = vmatmul.mubr.bf16.gmra.mrb[0].mxu0 %v593
      %v693 = vpop.f32.mrb[0].mxu0
      %v694 = vadd.f32 %v564, %v693
      %v695 = vpop.f32.mrb[0].mxu0
      %v696 = vpop.f32.mrb[0].mxu0
      %v697 = vadd.f32 %v569, %v696
      %v698 = vpop.f32.mrb[0].mxu0
      %699 = vmatprep.mubr.bf16.mxu0 %v604
      %700 = vmatmul.mubr.bf16.gmra.mrb[0].mxu0 %v595
      %v701 = vpop.f32.mrb[0].mxu0
      %v702 = vadd.f32 %v574, %v701
      %v703 = vpop.f32.mrb[0].mxu0
      %v704 = vpop.f32.mrb[0].mxu0
      %v705 = vadd.f32 %v579, %v704
      %v706 = vpop.f32.mrb[0].mxu0
      %707 = vdwg.mxu0
      %v708 = vmax.f32 %v641, 0.0
      %v709 = vmax.f32 %v643, 0.0
      %v710 = vmax.f32 %v694, 0.0
      %v711 = vmax.f32 %v645, 0.0
      %v712 = vmax.f32 %v647, 0.0
      %v713 = vmax.f32 %v697, 0.0
      %v714 = vmax.f32 %v651, 0.0
      %v715 = vmax.f32 %v653, 0.0
      %v716 = vmax.f32 %v702, 0.0
      %v717 = vmax.f32 %v655, 0.0
      %v718 = vmax.f32 %v657, 0.0
      %v719 = vmax.f32 %v705, 0.0
      %v720 = vld [vmem:[%s3] sm:$0x7]
      %v722 = vlaneseq
      %v723 = vshrl.u32 %v722, 7
      %v724 = vsub.s32 0, %v723
      %v725 = vrot.slane %v720, %v724
      %v726 = vlaneseq
      %v727 = vshrl.u32 %v726, 7
      %v728 = vsub.s32 1, %v727
      %v729 = vrot.slane %v720, %v728
      %v730 = vlaneseq
      %v731 = vshrl.u32 %v730, 7
      %v732 = vsub.s32 2, %v731
      %v733 = vrot.slane %v720, %v732
      %v737 = vmul.f32 %v708, %v725
      %v738 = vmul.f32 %v709, %v729
      %v739 = vmul.f32 %v710, %v733
      %v740 = vmul.f32 %v711, %v725
      %v741 = vmul.f32 %v712, %v729
      %v742 = vmul.f32 %v713, %v733
      %v743 = vmul.f32 %v714, %v725
      %v744 = vmul.f32 %v715, %v729
      %v745 = vmul.f32 %v716, %v733
      %v746 = vmul.f32 %v717, %v725
      %v747 = vmul.f32 %v718, %v729
      %v748 = vmul.f32 %v719, %v733
      %v749 = vpack.c.bf16 %v740, %v737
      %v750 = vpack.c.bf16 %v741, %v738
      %v751 = vpack.c.bf16 %v742, %v739
      %v752 = vpack.c.bf16 %v746, %v743
      %v753 = vpack.c.bf16 %v747, %v744
      %v754 = vpack.c.bf16 %v748, %v745
      %v761 = vunpack.c.l.b16 %v749
      %v762 = vunpack.c.l.b16 %v750
      %v763 = vunpack.c.l.b16 %v751
      %v764 = vunpack.c.h.b16 %v749
      %v765 = vunpack.c.h.b16 %v750
      %v766 = vunpack.c.h.b16 %v751
      %v767 = vunpack.c.l.b16 %v752
      %v768 = vunpack.c.l.b16 %v753
      %v769 = vunpack.c.l.b16 %v754
      %v770 = vunpack.c.h.b16 %v752
      %v771 = vunpack.c.h.b16 %v753
      %v772 = vunpack.c.h.b16 %v754
      %v773 = vpack.c.b16 %v762, %v761
      %v774 = vpack.c.b16 %v763, %v763
      %v775 = vpack.c.b16 %v765, %v764
      %v776 = vpack.c.b16 %v766, %v766
      %v777 = vpack.c.b16 %v768, %v767
      %v778 = vpack.c.b16 %v769, %v769
      %v779 = vpack.c.b16 %v771, %v770
      %v780 = vpack.c.b16 %v772, %v772
      %789 = vst [vmem:[%s197] sm:$0xff] %v773
      %790 = vst [vmem:[%s197 + $0x8] sm:$0xf] %v774
      %791 = vst [vmem:[%s197 + $0xc] sm:$0xff] %v775
      %792 = vst [vmem:[%s197 + $0x14] sm:$0xf] %v776
      %793 = vst [vmem:[%s197 + $0x18] sm:$0xff] %v777
      %794 = vst [vmem:[%s197 + $0x20] sm:$0xf] %v778
      %795 = vst [vmem:[%s197 + $0x24] sm:$0xff] %v779
      %796 = vst [vmem:[%s197 + $0x2c] sm:$0xf] %v780
      %p797 = scmp.lt.s32.totalorder %s15, 3
      %s798 = scalar_select %p797, %s15, 3
      %s799 = smul.addr %s798, 12
      %s800 = smul.addr %s799, 4
      %s801 = scalar_lea.vmem %s4, %s800
      // Predicated region
      $region37: #{transporter_forward.9} parent=35 // pred_check
        %p802 = pneg %p122
      $region38: #{transporter_forward.9} parent=35 // pred_check_branch
        %804 = sbr.rel (%p802) target = $region40
      $region39: #{transporter_forward.9} parent=35 // pred_region
        _
      $region40: #{transporter_forward.9} parent=35 // pred_fallthru
        _
    $region36: #{transporter_forward.9} parent=5 // pred_fallthru
      _
    %p805 = scmp.le.s32.totalorder 2, %s10
    // Predicated region
    $region41: #{transporter_forward.9} parent=5 // pred_check
      %p806 = pneg %p805
    $region42: #{transporter_forward.9} parent=5 // pred_check_branch
      %808 = sbr.rel (%p806) target = $region44
    $region43: #{transporter_forward.9} parent=5 // pred_region
      %s809 = ssub.s32 %s10, 2
      // Predicated region
      $region45: #{transporter_forward.9} parent=43 // pred_check
        %p810 = pneg %p128
      $region46: #{transporter_forward.9} parent=43 // pred_check_branch
        %812 = sbr.rel (%p810) target = $region48
      $region47: #{transporter_forward.9} parent=43 // pred_region
        %p813 = scmp.lt.s32.totalorder %s16, 3
        %s814 = scalar_select %p813, %s16, 3
        %s815 = smul.addr %s814, 12
        %s816 = smul.addr %s815, 4
        %s817 = scalar_lea.vmem %s4, %s816
      $region48: #{transporter_forward.9} parent=43 // pred_fallthru
        _
    $region44: #{transporter_forward.9} parent=5 // pred_fallthru
      _
  $region6: #{transporter_forward.9} parent=0 // loop_footer
    %s14 = sadd.s32 1, %s10
  $region7: #{transporter_forward.9} parent=0 // loop_footer_branch
    %9 = sbr.rel target = $region3
  $region8: #{transporter_forward.9} parent=0 // loop_exit
    _

// kernel: transporter_forward.11
$region0: #{transporter_forward.11}
  #allocation0 [shape = 'u32[]', space=smem, size = 0x4, offset = 0x4, fixed_abs, tag = 'smem constant byte address 0x4 - core index']
  #allocation1 [shape = 'u32[144,128]{1,0:T(1,128)}', space=vmem, size = 0x12000, scoped, tag = 'internal scratch']
  %s0 = inlined_call_operand.vmem [shape: f32[1,384], index: 0, kind: input, shape index: {}]
  %s1 = inlined_call_operand.vmem [shape: f32[2,8,384], index: 1, kind: input, shape index: {}]
  %s2 = inlined_call_operand.vmem [shape: f32[2,8,384], index: 2, kind: input, shape index: {}]
  %s3 = inlined_call_operand.vmem [shape: bf16[2,32,384], index: 3, kind: input, shape index: {}]
  %s4 = inlined_call_operand.vmem [shape: bf16[2,32,384], index: 4, kind: input, shape index: {}]
  %s5 = inlined_call_operand.vmem [shape: bf16[2,32,384], index: 5, kind: output, shape index: {}]
  %s6 = sld [smem:[#allocation0]]
  $region53: #{transporter_forward.11} parent=0
    _
  %s8 = ssub.s32 1, %s6
  %s9 = scalar_select 0, %s8, %s6
  loop: start=0, step=1, limit=4
  $region2: #{transporter_forward.11} parent=0 // loop_pre_header
    _
  $region3: #{transporter_forward.11} parent=0 // loop_header
    %s11 = sphi 0, %s15
    %p12 = scmp.ge.s32.totalorder %s11, 4
    %s19 = sphi 0, %s19
    %s21 = sphi 0, %s19
    %s22 = sphi 0, %s21
    %s36 = sphi 0, %s22
    %s42 = sphi 0, %s44
    %s45 = sphi 0, %s42
    %s46 = sphi 0, %s45
    %s62 = sphi 0, %s46
    %s68 = sphi 0, %s70
    %s71 = sphi 0, %s68
    %s72 = sphi 0, %s71
    %s88 = sphi 0, %s72
    %s94 = sphi 0, %s96
    %s97 = sphi 0, %s94
    %s98 = sphi 0, %s97
    %s114 = sphi 0, %s98
    %s120 = sphi 0, %s122
    %s123 = sphi 0, %s120
    %s124 = sphi 0, %s123
    %s140 = sphi 0, %s124
    %s146 = sphi 0, %s148
    %s149 = sphi 0, %s146
    %s150 = sphi 0, %s149
    %s166 = sphi 0, %s150
  $region4: #{transporter_forward.11} parent=0 // loop_header_branch
    %14 = sbr.rel (%p12) target = $region8
  $region5: #{transporter_forward.11} parent=0 // loop_body
    %s16 = ssub.s32 %s11, 1
    %s17 = ssub.s32 %s11, 2
    %s18 = sadd.s32 %s11, 1
    %s20 = sadd.s32 %s19, 1
    %p23 = scmp.eq.s32.totalorder %s11, 1
    %p24 = scmp.ne.s32.totalorder %s19, %s21
    %p25 = scmp.eq.s32.totalorder %s11, 0
    %p26 = por %p24, %p25
    %p27 = scmp.ne.s32.totalorder %s19, %s21
    %p28 = scmp.eq.s32.totalorder %s16, 1
    %p29 = por %p27, %p28
    %p30 = scmp.ne.s32.totalorder %s21, %s22
    %p31 = scmp.eq.s32.totalorder %s16, 0
    %p32 = por %p30, %p31
    %p33 = scmp.ne.s32.totalorder %s21, %s22
    %p34 = scmp.eq.s32.totalorder %s17, 1
    %p35 = por %p33, %p34
    %p37 = scmp.ne.s32.totalorder %s22, %s36
    %p38 = scmp.eq.s32.totalorder %s17, 0
    %p39 = por %p37, %p38
    %s40 = ssub.s32 %s11, %s18
    %p41 = scmp.eq.s32.totalorder %s40, 0
    %s43 = sadd.s32 %s42, 1
    %s44 = scalar_select %p41, %s42, %s43
    %p47 = pneg %p41
    %p48 = scmp.eq.s32.totalorder %s11, 1
    %p49 = por %p47, %p48
    %p50 = scmp.ne.s32.totalorder %s42, %s45
    %p51 = scmp.eq.s32.totalorder %s11, 0
    %p52 = por %p50, %p51
    %p53 = scmp.ne.s32.totalorder %s42, %s45
    %p54 = scmp.eq.s32.totalorder %s16, 1
    %p55 = por %p53, %p54
    %p56 = scmp.ne.s32.totalorder %s45, %s46
    %p57 = scmp.eq.s32.totalorder %s16, 0
    %p58 = por %p56, %p57
    %p59 = scmp.ne.s32.totalorder %s45, %s46
    %p60 = scmp.eq.s32.totalorder %s17, 1
    %p61 = por %p59, %p60
    %p63 = scmp.ne.s32.totalorder %s46, %s62
    %p64 = scmp.eq.s32.totalorder %s17, 0
    %p65 = por %p63, %p64
    %s66 = ssub.s32 %s11, %s18
    %p67 = scmp.eq.s32.totalorder %s66, 0
    %s69 = sadd.s32 %s68, 1
    %s70 = scalar_select %p67, %s68, %s69
    %p73 = pneg %p67
    %p74 = scmp.eq.s32.totalorder %s11, 1
    %p75 = por %p73, %p74
    %p76 = scmp.ne.s32.totalorder %s68, %s71
    %p77 = scmp.eq.s32.totalorder %s11, 0
    %p78 = por %p76, %p77
    %p79 = scmp.ne.s32.totalorder %s68, %s71
    %p80 = scmp.eq.s32.totalorder %s16, 1
    %p81 = por %p79, %p80
    %p82 = scmp.ne.s32.totalorder %s71, %s72
    %p83 = scmp.eq.s32.totalorder %s16, 0
    %p84 = por %p82, %p83
    %p85 = scmp.ne.s32.totalorder %s71, %s72
    %p86 = scmp.eq.s32.totalorder %s17, 1
    %p87 = por %p85, %p86
    %p89 = scmp.ne.s32.totalorder %s72, %s88
    %p90 = scmp.eq.s32.totalorder %s17, 0
    %p91 = por %p89, %p90
    %s92 = ssub.s32 %s11, %s18
    %p93 = scmp.eq.s32.totalorder %s92, 0
    %s95 = sadd.s32 %s94, 1
    %s96 = scalar_select %p93, %s94, %s95
    %p99 = pneg %p93
    %p100 = scmp.eq.s32.totalorder %s11, 1
    %p101 = por %p99, %p100
    %p102 = scmp.ne.s32.totalorder %s94, %s97
    %p103 = scmp.eq.s32.totalorder %s11, 0
    %p104 = por %p102, %p103
    %p105 = scmp.ne.s32.totalorder %s94, %s97
    %p106 = scmp.eq.s32.totalorder %s16, 1
    %p107 = por %p105, %p106
    %p108 = scmp.ne.s32.totalorder %s97, %s98
    %p109 = scmp.eq.s32.totalorder %s16, 0
    %p110 = por %p108, %p109
    %p111 = scmp.ne.s32.totalorder %s97, %s98
    %p112 = scmp.eq.s32.totalorder %s17, 1
    %p113 = por %p111, %p112
    %p115 = scmp.ne.s32.totalorder %s98, %s114
    %p116 = scmp.eq.s32.totalorder %s17, 0
    %p117 = por %p115, %p116
    %s118 = ssub.s32 %s11, %s18
    %p119 = scmp.eq.s32.totalorder %s118, 0
    %s121 = sadd.s32 %s120, 1
    %s122 = scalar_select %p119, %s120, %s121
    %p125 = pneg %p119
    %p126 = scmp.eq.s32.totalorder %s11, 1
    %p127 = por %p125, %p126
    %p128 = scmp.ne.s32.totalorder %s120, %s123
    %p129 = scmp.eq.s32.totalorder %s11, 0
    %p130 = por %p128, %p129
    %p131 = scmp.ne.s32.totalorder %s120, %s123
    %p132 = scmp.eq.s32.totalorder %s16, 1
    %p133 = por %p131, %p132
    %p134 = scmp.ne.s32.totalorder %s123, %s124
    %p135 = scmp.eq.s32.totalorder %s16, 0
    %p136 = por %p134, %p135
    %p137 = scmp.ne.s32.totalorder %s123, %s124
    %p138 = scmp.eq.s32.totalorder %s17, 1
    %p139 = por %p137, %p138
    %p141 = scmp.ne.s32.totalorder %s124, %s140
    %p142 = scmp.eq.s32.totalorder %s17, 0
    %p143 = por %p141, %p142
    %s144 = ssub.s32 %s11, %s18
    %p145 = scmp.eq.s32.totalorder %s144, 0
    %s147 = sadd.s32 %s146, 1
    %s148 = scalar_select %p145, %s146, %s147
    %p151 = pneg %p145
    %p152 = scmp.eq.s32.totalorder %s11, 1
    %p153 = por %p151, %p152
    %p154 = scmp.ne.s32.totalorder %s146, %s149
    %p155 = scmp.eq.s32.totalorder %s11, 0
    %p156 = por %p154, %p155
    %p157 = scmp.ne.s32.totalorder %s146, %s149
    %p158 = scmp.eq.s32.totalorder %s16, 1
    %p159 = por %p157, %p158
    %p160 = scmp.ne.s32.totalorder %s149, %s150
    %p161 = scmp.eq.s32.totalorder %s16, 0
    %p162 = por %p160, %p161
    %p163 = scmp.ne.s32.totalorder %s149, %s150
    %p164 = scmp.eq.s32.totalorder %s17, 1
    %p165 = por %p163, %p164
    %p167 = scmp.ne.s32.totalorder %s150, %s166
    %p168 = scmp.eq.s32.totalorder %s17, 0
    %p169 = por %p167, %p168
    %p170 = scmp.le.s32.totalorder 1, %s11
    %p171 = scmp.lt.s32.totalorder %s11, 3
    %p172 = pnand %p170, %p171
    %p173 = pneg %p172
    // Predicated region
    $region9: #{transporter_forward.11} parent=5 // pred_check
      _
    $region10: #{transporter_forward.11} parent=5 // pred_check_branch
      %175 = sbr.rel (%p172) target = $region12
    $region11: #{transporter_forward.11} parent=5 // pred_region
      %s176 = ssub.s32 %s11, 1
      // Predicated region
      $region13: #{transporter_forward.11} parent=11 // pred_check
        %p177 = pneg %p32
      $region14: #{transporter_forward.11} parent=11 // pred_check_branch
        %179 = sbr.rel (%p177) target = $region16
      $region15: #{transporter_forward.11} parent=11 // pred_region
        _
      $region16: #{transporter_forward.11} parent=11 // pred_fallthru
        _
    $region12: #{transporter_forward.11} parent=5 // pred_fallthru
      _
    %p180 = scmp.lt.s32.totalorder %s11, 2
    // Predicated region
    $region17: #{transporter_forward.11} parent=5 // pred_check
      %p181 = pneg %p180
    $region18: #{transporter_forward.11} parent=5 // pred_check_branch
      %183 = sbr.rel (%p181) target = $region20
    $region19: #{transporter_forward.11} parent=5 // pred_region
      // Predicated region
      $region21: #{transporter_forward.11} parent=19 // pred_check
        %p184 = pneg %p52
      $region22: #{transporter_forward.11} parent=19 // pred_check_branch
        %186 = sbr.rel (%p184) target = $region24
      $region23: #{transporter_forward.11} parent=19 // pred_region
        %p187 = scmp.lt.s32.totalorder %s11, 1
        %s188 = scalar_select %p187, %s11, 1
        %s189 = smul.addr %s188, 3
        %s190 = smul.addr %s189, 8
        %s191 = scalar_lea.vmem %s1, %s190
      $region24: #{transporter_forward.11} parent=19 // pred_fallthru
        _
      // Predicated region
      $region25: #{transporter_forward.11} parent=19 // pred_check
        %p192 = pneg %p78
      $region26: #{transporter_forward.11} parent=19 // pred_check_branch
        %194 = sbr.rel (%p192) target = $region28
      $region27: #{transporter_forward.11} parent=19 // pred_region
        %p195 = scmp.lt.s32.totalorder %s11, 1
        %s196 = scalar_select %p195, %s11, 1
        %s197 = smul.addr %s196, 3
        %s198 = smul.addr %s197, 8
        %s199 = scalar_lea.vmem %s2, %s198
      $region28: #{transporter_forward.11} parent=19 // pred_fallthru
        _
      // Predicated region
      $region29: #{transporter_forward.11} parent=19 // pred_check
        %p200 = pneg %p104
      $region30: #{transporter_forward.11} parent=19 // pred_check_branch
        %202 = sbr.rel (%p200) target = $region32
      $region31: #{transporter_forward.11} parent=19 // pred_region
        %p203 = scmp.lt.s32.totalorder %s11, 1
        %s204 = scalar_select %p203, %s11, 1
        %s205 = smul.addr %s204, 12
        %s206 = smul.addr %s205, 4
        %s207 = scalar_lea.vmem %s3, %s206
      $region32: #{transporter_forward.11} parent=19 // pred_fallthru
        _
      // Predicated region
      $region33: #{transporter_forward.11} parent=19 // pred_check
        %p208 = pneg %p130
      $region34: #{transporter_forward.11} parent=19 // pred_check_branch
        %210 = sbr.rel (%p208) target = $region36
      $region35: #{transporter_forward.11} parent=19 // pred_region
        %p211 = scmp.lt.s32.totalorder %s11, 1
        %s212 = scalar_select %p211, %s11, 1
        %s213 = smul.addr %s212, 12
        %s214 = smul.addr %s213, 4
        %s215 = scalar_lea.vmem %s4, %s214
      $region36: #{transporter_forward.11} parent=19 // pred_fallthru
        _
    $region20: #{transporter_forward.11} parent=5 // pred_fallthru
      _
    %p216 = scmp.le.s32.totalorder 1, %s11
    %p217 = scmp.lt.s32.totalorder %s11, 3
    %p218 = pnand %p216, %p217
    %p219 = pneg %p218
    // Predicated region
    $region37: #{transporter_forward.11} parent=5 // pred_check
      _
    $region38: #{transporter_forward.11} parent=5 // pred_check_branch
      %221 = sbr.rel (%p218) target = $region40
    $region39: #{transporter_forward.11} parent=5 // pred_region
      %s222 = ssub.s32 %s11, 1
      %p223 = pneg %p32
      %p224 = pneg %p29
      %p225 = scmp.lt.s32.totalorder %s16, 1
      %s226 = scalar_select %p225, %s16, 1
      %s227 = smul.addr %s226, 3
      %s228 = smul.addr %s227, 8
      %s229 = scalar_lea.vmem %s1, %s228
      %p230 = pneg %p58
      %p231 = pneg %p55
      %p232 = scmp.lt.s32.totalorder %s16, 1
      %s233 = scalar_select %p232, %s16, 1
      %s234 = smul.addr %s233, 3
      %s235 = smul.addr %s234, 8
      %s236 = scalar_lea.vmem %s2, %s235
      %p237 = pneg %p84
      %p238 = pneg %p81
      %p239 = scmp.lt.s32.totalorder %s16, 1
      %s240 = scalar_select %p239, %s16, 1
      %s241 = smul.addr %s240, 12
      %s242 = smul.addr %s241, 4
      %s243 = scalar_lea.vmem %s3, %s242
      %p244 = pneg %p110
      %p245 = pneg %p107
      %p246 = scmp.lt.s32.totalorder %s16, 1
      %s247 = scalar_select %p246, %s16, 1
      %s248 = smul.addr %s247, 12
      %s249 = smul.addr %s248, 4
      %s250 = scalar_lea.vmem %s4, %s249
      %p251 = pneg %p136
      %p252 = pneg %p133
      %p253 = pneg %p162
      %p254 = pneg %p159
      %p255 = scmp.lt.s32.totalorder %s16, 1
      %s256 = scalar_select %p255, %s16, 1
      %s257 = smul.addr %s256, 12
      %s258 = smul.addr %s257, 4
      %s259 = scalar_lea.vmem %s5, %s258
      %p260 = scmp.lt.s32.totalorder %s16, 1
      %s261 = scalar_select %p260, %s16, 1
      %s262 = smul.addr %s261, 3
      %s263 = smul.addr %s262, 8
      %s264 = scalar_lea.vmem %s1, %s263
      %p265 = scmp.lt.s32.totalorder %s16, 1
      %s266 = scalar_select %p265, %s16, 1
      %s267 = smul.addr %s266, 3
      %s268 = smul.addr %s267, 8
      %s269 = scalar_lea.vmem %s2, %s268
      %p270 = scmp.lt.s32.totalorder %s16, 1
      %s271 = scalar_select %p270, %s16, 1
      %s272 = smul.addr %s271, 12
      %s273 = smul.addr %s272, 4
      %s274 = scalar_lea.vmem %s3, %s273
      %p275 = scmp.lt.s32.totalorder %s16, 1
      %s276 = scalar_select %p275, %s16, 1
      %s277 = smul.addr %s276, 12
      %s278 = smul.addr %s277, 4
      %s279 = scalar_lea.vmem %s4, %s278
      %p280 = scmp.lt.s32.totalorder %s16, 1
      %s281 = scalar_select %p280, %s16, 1
      %s282 = smul.addr %s281, 12
      %s283 = smul.addr %s282, 4
      %s284 = scalar_lea.vmem %s5, %s283
      %v285 = vld [vmem:[%s264] sm:$0xff]
      %v286 = vld [vmem:[%s264 + $0x8] sm:$0xff]
      %v287 = vld [vmem:[%s264 + $0x10] sm:$0xff]
      %v288 = vld [vmem:[%s269] sm:$0xff]
      %v289 = vld [vmem:[%s269 + $0x8] sm:$0xff]
      %v290 = vld [vmem:[%s269 + $0x10] sm:$0xff]
      %v291 = vsub.f32 1.0, %v285
      %v292 = vsub.f32 1.0, %v286
      %v293 = vsub.f32 1.0, %v287
      %v294 = vsub.f32 1.0, %v288
      %v295 = vsub.f32 1.0, %v289
      %v296 = vsub.f32 1.0, %v290
      %v297 = vmul.f32 %v291, %v294
      %v298 = vmul.f32 %v292, %v295
      %v299 = vmul.f32 %v293, %v296
      %v300 = vadd.f32 %v288, 0.0
      %v301 = vadd.f32 %v289, 0.0
      %v302 = vadd.f32 %v290, 0.0
      %v306 = vrot.slane %v288, 7
      %v307 = vrot.slane %v289, 7
      %v308 = vrot.slane %v290, 7
      %v312 = vmul.f32 %v297, %v306
      %v313 = vmul.f32 %v298, %v307
      %v314 = vmul.f32 %v299, %v308
      %v315 = vadd.f32 %v300, %v312
      %v316 = vadd.f32 %v301, %v313
      %v317 = vadd.f32 %v302, %v314
      %v321 = vrot.slane %v297, 7
      %v322 = vrot.slane %v298, 7
      %v323 = vrot.slane %v299, 7
      %v327 = vmul.f32 %v297, %v321
      %v328 = vmul.f32 %v298, %v322
      %v329 = vmul.f32 %v299, %v323
      %v330 = vrot.slane %v288, 6
      %v331 = vrot.slane %v289, 6
      %v332 = vrot.slane %v290, 6
      %v336 = vmul.f32 %v327, %v330
      %v337 = vmul.f32 %v328, %v331
      %v338 = vmul.f32 %v329, %v332
      %v339 = vadd.f32 %v315, %v336
      %v340 = vadd.f32 %v316, %v337
      %v341 = vadd.f32 %v317, %v338
      %v342 = vrot.slane %v297, 6
      %v343 = vrot.slane %v298, 6
      %v344 = vrot.slane %v299, 6
      %v348 = vmul.f32 %v327, %v342
      %v349 = vmul.f32 %v328, %v343
      %v350 = vmul.f32 %v329, %v344
      %v351 = vrot.slane %v288, 5
      %v352 = vrot.slane %v289, 5
      %v353 = vrot.slane %v290, 5
      %v357 = vmul.f32 %v348, %v351
      %v358 = vmul.f32 %v349, %v352
      %v359 = vmul.f32 %v350, %v353
      %v360 = vadd.f32 %v339, %v357
      %v361 = vadd.f32 %v340, %v358
      %v362 = vadd.f32 %v341, %v359
      %v363 = vrot.slane %v297, 5
      %v364 = vrot.slane %v298, 5
      %v365 = vrot.slane %v299, 5
      %v369 = vmul.f32 %v348, %v363
      %v370 = vmul.f32 %v349, %v364
      %v371 = vmul.f32 %v350, %v365
      %v372 = vld [vmem:[%s274] sm:$0xff]
      %v373 = vld [vmem:[%s274 + $0x8] sm:$0xf]
      %v374 = vld [vmem:[%s274 + $0xc] sm:$0xff]
      %v375 = vld [vmem:[%s274 + $0x14] sm:$0xf]
      %v376 = vld [vmem:[%s274 + $0x18] sm:$0xff]
      %v377 = vld [vmem:[%s274 + $0x20] sm:$0xf]
      %v378 = vld [vmem:[%s274 + $0x24] sm:$0xff]
      %v379 = vld [vmem:[%s274 + $0x2c] sm:$0xf]
      %v380 = vunpack.c.l.bf16 %v372
      %v381 = vunpack.c.h.bf16 %v372
      %v382 = vunpack.c.l.bf16 %v373
      %v383 = vunpack.c.l.bf16 %v374
      %v384 = vunpack.c.h.bf16 %v374
      %v385 = vunpack.c.l.bf16 %v375
      %v386 = vunpack.c.l.bf16 %v376
      %v387 = vunpack.c.h.bf16 %v376
      %v388 = vunpack.c.l.bf16 %v377
      %v389 = vunpack.c.l.bf16 %v378
      %v390 = vunpack.c.h.bf16 %v378
      %v391 = vunpack.c.l.bf16 %v379
      %v392 = vlaneseq
      %v393 = vshrl.u32 %v392, 7
      %v394 = vsub.s32 3, %v393
      %v395 = vrot.slane %v369, %v394
      %v396 = vlaneseq
      %v397 = vshrl.u32 %v396, 7
      %v398 = vsub.s32 3, %v397
      %v399 = vrot.slane %v370, %v398
      %v400 = vlaneseq
      %v401 = vshrl.u32 %v400, 7
      %v402 = vsub.s32 3, %v401
      %v403 = vrot.slane %v371, %v402
      %v404 = vmul.f32 %v395, %v380
      %v405 = vmul.f32 %v399, %v381
      %v406 = vmul.f32 %v403, %v382
      %v407 = vmul.f32 %v395, %v383
      %v408 = vmul.f32 %v399, %v384
      %v409 = vmul.f32 %v403, %v385
      %v410 = vmul.f32 %v395, %v386
      %v411 = vmul.f32 %v399, %v387
      %v412 = vmul.f32 %v403, %v388
      %v413 = vmul.f32 %v395, %v389
      %v414 = vmul.f32 %v399, %v390
      %v415 = vmul.f32 %v403, %v391
      %v416 = vld [vmem:[%s279] sm:$0xff]
      %v417 = vld [vmem:[%s279 + $0x8] sm:$0xf]
      %v418 = vld [vmem:[%s279 + $0xc] sm:$0xff]
      %v419 = vld [vmem:[%s279 + $0x14] sm:$0xf]
      %v420 = vld [vmem:[%s279 + $0x18] sm:$0xff]
      %v421 = vld [vmem:[%s279 + $0x20] sm:$0xf]
      %v422 = vld [vmem:[%s279 + $0x24] sm:$0xff]
      %v423 = vld [vmem:[%s279 + $0x2c] sm:$0xf]
      %v424 = vunpack.c.l.bf16 %v416
      %v425 = vunpack.c.h.bf16 %v416
      %v426 = vunpack.c.l.bf16 %v417
      %v427 = vunpack.c.l.bf16 %v418
      %v428 = vunpack.c.h.bf16 %v418
      %v429 = vunpack.c.l.bf16 %v419
      %v430 = vunpack.c.l.bf16 %v420
      %v431 = vunpack.c.h.bf16 %v420
      %v432 = vunpack.c.l.bf16 %v421
      %v433 = vunpack.c.l.bf16 %v422
      %v434 = vunpack.c.h.bf16 %v422
      %v435 = vunpack.c.l.bf16 %v423
      %v436 = vlaneseq
      %v437 = vshrl.u32 %v436, 7
      %v438 = vsub.s32 3, %v437
      %v439 = vrot.slane %v360, %v438
      %v440 = vlaneseq
      %v441 = vshrl.u32 %v440, 7
      %v442 = vsub.s32 3, %v441
      %v443 = vrot.slane %v361, %v442
      %v444 = vlaneseq
      %v445 = vshrl.u32 %v444, 7
      %v446 = vsub.s32 3, %v445
      %v447 = vrot.slane %v362, %v446
      %v448 = vmul.f32 %v439, %v424
      %v449 = vmul.f32 %v443, %v425
      %v450 = vmul.f32 %v447, %v426
      %v451 = vmul.f32 %v439, %v427
      %v452 = vmul.f32 %v443, %v428
      %v453 = vmul.f32 %v447, %v429
      %v454 = vmul.f32 %v439, %v430
      %v455 = vmul.f32 %v443, %v431
      %v456 = vmul.f32 %v447, %v432
      %v457 = vmul.f32 %v439, %v433
      %v458 = vmul.f32 %v443, %v434
      %v459 = vmul.f32 %v447, %v435
      %v460 = vadd.f32 %v404, %v448
      %v461 = vadd.f32 %v405, %v449
      %v462 = vadd.f32 %v406, %v450
      %v463 = vadd.f32 %v407, %v451
      %v464 = vadd.f32 %v408, %v452
      %v465 = vadd.f32 %v409, %v453
      %v466 = vadd.f32 %v410, %v454
      %v467 = vadd.f32 %v411, %v455
      %v468 = vadd.f32 %v412, %v456
      %v469 = vadd.f32 %v413, %v457
      %v470 = vadd.f32 %v414, %v458
      %v471 = vadd.f32 %v415, %v459
      %v472 = vld [vmem:[%s0] sm:$0x7]
      %v474 = vlaneseq
      %v475 = vshrl.u32 %v474, 7
      %v476 = vsub.s32 0, %v475
      %v477 = vrot.slane %v472, %v476
      %v478 = vlaneseq
      %v479 = vshrl.u32 %v478, 7
      %v480 = vsub.s32 1, %v479
      %v481 = vrot.slane %v472, %v480
      %v482 = vlaneseq
      %v483 = vshrl.u32 %v482, 7
      %v484 = vsub.s32 2, %v483
      %v485 = vrot.slane %v472, %v484
      %v489 = vmul.f32 %v460, %v477
      %v490 = vmul.f32 %v461, %v481
      %v491 = vmul.f32 %v462, %v485
      %v492 = vmul.f32 %v463, %v477
      %v493 = vmul.f32 %v464, %v481
      %v494 = vmul.f32 %v465, %v485
      %v495 = vmul.f32 %v466, %v477
      %v496 = vmul.f32 %v467, %v481
      %v497 = vmul.f32 %v468, %v485
      %v498 = vmul.f32 %v469, %v477
      %v499 = vmul.f32 %v470, %v481
      %v500 = vmul.f32 %v471, %v485
      %v501 = vpack.c.bf16 %v492, %v489
      %v502 = vpack.c.bf16 %v493, %v490
      %v503 = vpack.c.bf16 %v494, %v491
      %v504 = vpack.c.bf16 %v498, %v495
      %v505 = vpack.c.bf16 %v499, %v496
      %v506 = vpack.c.bf16 %v500, %v497
      %v513 = vunpack.c.l.b16 %v501
      %v514 = vunpack.c.l.b16 %v502
      %v515 = vunpack.c.l.b16 %v503
      %v516 = vunpack.c.h.b16 %v501
      %v517 = vunpack.c.h.b16 %v502
      %v518 = vunpack.c.h.b16 %v503
      %v519 = vunpack.c.l.b16 %v504
      %v520 = vunpack.c.l.b16 %v505
      %v521 = vunpack.c.l.b16 %v506
      %v522 = vunpack.c.h.b16 %v504
      %v523 = vunpack.c.h.b16 %v505
      %v524 = vunpack.c.h.b16 %v506
      %v525 = vpack.c.b16 %v514, %v513
      %v526 = vpack.c.b16 %v515, %v515
      %v527 = vpack.c.b16 %v517, %v516
      %v528 = vpack.c.b16 %v518, %v518
      %v529 = vpack.c.b16 %v520, %v519
      %v530 = vpack.c.b16 %v521, %v521
      %v531 = vpack.c.b16 %v523, %v522
      %v532 = vpack.c.b16 %v524, %v524
      %541 = vst [vmem:[%s284] sm:$0xff] %v525
      %542 = vst [vmem:[%s284 + $0x8] sm:$0xf] %v526
      %543 = vst [vmem:[%s284 + $0xc] sm:$0xff] %v527
      %544 = vst [vmem:[%s284 + $0x14] sm:$0xf] %v528
      %545 = vst [vmem:[%s284 + $0x18] sm:$0xff] %v529
      %546 = vst [vmem:[%s284 + $0x20] sm:$0xf] %v530
      %547 = vst [vmem:[%s284 + $0x24] sm:$0xff] %v531
      %548 = vst [vmem:[%s284 + $0x2c] sm:$0xf] %v532
      %p549 = scmp.lt.s32.totalorder %s16, 1
      %s550 = scalar_select %p549, %s16, 1
      %s551 = smul.addr %s550, 12
      %s552 = smul.addr %s551, 4
      %s553 = scalar_lea.vmem %s5, %s552
      // Predicated region
      $region41: #{transporter_forward.11} parent=39 // pred_check
        %p554 = pneg %p159
      $region42: #{transporter_forward.11} parent=39 // pred_check_branch
        %556 = sbr.rel (%p554) target = $region44
      $region43: #{transporter_forward.11} parent=39 // pred_region
        _
      $region44: #{transporter_forward.11} parent=39 // pred_fallthru
        _
    $region40: #{transporter_forward.11} parent=5 // pred_fallthru
      _
    %p557 = scmp.le.s32.totalorder 2, %s11
    // Predicated region
    $region45: #{transporter_forward.11} parent=5 // pred_check
      %p558 = pneg %p557
    $region46: #{transporter_forward.11} parent=5 // pred_check_branch
      %560 = sbr.rel (%p558) target = $region48
    $region47: #{transporter_forward.11} parent=5 // pred_region
      %s561 = ssub.s32 %s11, 2
      // Predicated region
      $region49: #{transporter_forward.11} parent=47 // pred_check
        %p562 = pneg %p165
      $region50: #{transporter_forward.11} parent=47 // pred_check_branch
        %564 = sbr.rel (%p562) target = $region52
      $region51: #{transporter_forward.11} parent=47 // pred_region
        %p565 = scmp.lt.s32.totalorder %s17, 1
        %s566 = scalar_select %p565, %s17, 1
        %s567 = smul.addr %s566, 12
        %s568 = smul.addr %s567, 4
        %s569 = scalar_lea.vmem %s5, %s568
      $region52: #{transporter_forward.11} parent=47 // pred_fallthru
        _
    $region48: #{transporter_forward.11} parent=5 // pred_fallthru
      _
  $region6: #{transporter_forward.11} parent=0 // loop_footer
    %s15 = sadd.s32 1, %s11
  $region7: #{transporter_forward.11} parent=0 // loop_footer_branch
    %10 = sbr.rel target = $region3
  $region8: #{transporter_forward.11} parent=0 // loop_exit
    _

// kernel: transporter_forward.8
$region0: #{transporter_forward.8}
  #allocation0 [shape = 'u32[]', space=smem, size = 0x4, offset = 0x4, fixed_abs, tag = 'smem constant byte address 0x4 - core index']
  #allocation1 [shape = 'u32[144,128]{1,0:T(1,128)}', space=vmem, size = 0x12000, scoped, tag = 'internal scratch']
  #allocation2 [shape = 'bf16[288,384]{1,0:T(16,128)(2,1)}', space=vmem, size = 0x36000, scoped, tag = 'scratch operand']
  %s0 = inlined_call_operand.vmem [shape: bf16[4,32,512], index: 0, kind: input, shape index: {}]
  %s1 = inlined_call_operand.vmem [shape: bf16[32,288], index: 1, kind: input, shape index: {}]
  %s2 = inlined_call_operand.vmem [shape: f32[32,1], index: 2, kind: input, shape index: {}]
  %s3 = inlined_call_operand.vmem [shape: f32[1,384], index: 3, kind: input, shape index: {}]
  %s4 = inlined_call_operand.vmem [shape: bf16[4,32,384], index: 4, kind: output, shape index: {}]
  %s5 = sld [smem:[#allocation0]]
  $region49: #{transporter_forward.8} parent=0
    _
  %s7 = ssub.s32 1, %s5
  %s8 = scalar_select 0, %s7, %s5
  loop: start=0, step=1, limit=6
  $region2: #{transporter_forward.8} parent=0 // loop_pre_header
    _
  $region3: #{transporter_forward.8} parent=0 // loop_header
    %s10 = sphi 0, %s14
    %p11 = scmp.ge.s32.totalorder %s10, 6
    %s20 = sphi 0, %s22
    %s23 = sphi 0, %s20
    %s24 = sphi 0, %s23
    %s40 = sphi 0, %s24
    %s44 = sphi 0, %s44
    %s46 = sphi 0, %s44
    %s47 = sphi 0, %s46
    %s61 = sphi 0, %s47
    %s65 = sphi 0, %s65
    %s67 = sphi 0, %s65
    %s68 = sphi 0, %s67
    %s82 = sphi 0, %s68
    %s86 = sphi 0, %s86
    %s88 = sphi 0, %s86
    %s89 = sphi 0, %s88
    %s103 = sphi 0, %s89
    %s109 = sphi 0, %s111
    %s112 = sphi 0, %s109
    %s113 = sphi 0, %s112
    %s129 = sphi 0, %s113
  $region4: #{transporter_forward.8} parent=0 // loop_header_branch
    %13 = sbr.rel (%p11) target = $region8
  $region5: #{transporter_forward.8} parent=0 // loop_body
    %s15 = ssub.s32 %s10, 1
    %s16 = ssub.s32 %s10, 2
    %s17 = sadd.s32 %s10, 1
    %s18 = ssub.s32 %s10, %s17
    %p19 = scmp.eq.s32.totalorder %s18, 0
    %s21 = sadd.s32 %s20, 1
    %s22 = scalar_select %p19, %s20, %s21
    %p25 = pneg %p19
    %p26 = scmp.eq.s32.totalorder %s10, 3
    %p27 = por %p25, %p26
    %p28 = scmp.ne.s32.totalorder %s20, %s23
    %p29 = scmp.eq.s32.totalorder %s10, 0
    %p30 = por %p28, %p29
    %p31 = scmp.ne.s32.totalorder %s20, %s23
    %p32 = scmp.eq.s32.totalorder %s15, 3
    %p33 = por %p31, %p32
    %p34 = scmp.ne.s32.totalorder %s23, %s24
    %p35 = scmp.eq.s32.totalorder %s15, 0
    %p36 = por %p34, %p35
    %p37 = scmp.ne.s32.totalorder %s23, %s24
    %p38 = scmp.eq.s32.totalorder %s16, 3
    %p39 = por %p37, %p38
    %p41 = scmp.ne.s32.totalorder %s24, %s40
    %p42 = scmp.eq.s32.totalorder %s16, 0
    %p43 = por %p41, %p42
    %s45 = sadd.s32 %s44, 1
    %p48 = scmp.eq.s32.totalorder %s10, 3
    %p49 = scmp.ne.s32.totalorder %s44, %s46
    %p50 = scmp.eq.s32.totalorder %s10, 0
    %p51 = por %p49, %p50
    %p52 = scmp.ne.s32.totalorder %s44, %s46
    %p53 = scmp.eq.s32.totalorder %s15, 3
    %p54 = por %p52, %p53
    %p55 = scmp.ne.s32.totalorder %s46, %s47
    %p56 = scmp.eq.s32.totalorder %s15, 0
    %p57 = por %p55, %p56
    %p58 = scmp.ne.s32.totalorder %s46, %s47
    %p59 = scmp.eq.s32.totalorder %s16, 3
    %p60 = por %p58, %p59
    %p62 = scmp.ne.s32.totalorder %s47, %s61
    %p63 = scmp.eq.s32.totalorder %s16, 0
    %p64 = por %p62, %p63
    %s66 = sadd.s32 %s65, 1
    %p69 = scmp.eq.s32.totalorder %s10, 3
    %p70 = scmp.ne.s32.totalorder %s65, %s67
    %p71 = scmp.eq.s32.totalorder %s10, 0
    %p72 = por %p70, %p71
    %p73 = scmp.ne.s32.totalorder %s65, %s67
    %p74 = scmp.eq.s32.totalorder %s15, 3
    %p75 = por %p73, %p74
    %p76 = scmp.ne.s32.totalorder %s67, %s68
    %p77 = scmp.eq.s32.totalorder %s15, 0
    %p78 = por %p76, %p77
    %p79 = scmp.ne.s32.totalorder %s67, %s68
    %p80 = scmp.eq.s32.totalorder %s16, 3
    %p81 = por %p79, %p80
    %p83 = scmp.ne.s32.totalorder %s68, %s82
    %p84 = scmp.eq.s32.totalorder %s16, 0
    %p85 = por %p83, %p84
    %s87 = sadd.s32 %s86, 1
    %p90 = scmp.eq.s32.totalorder %s10, 3
    %p91 = scmp.ne.s32.totalorder %s86, %s88
    %p92 = scmp.eq.s32.totalorder %s10, 0
    %p93 = por %p91, %p92
    %p94 = scmp.ne.s32.totalorder %s86, %s88
    %p95 = scmp.eq.s32.totalorder %s15, 3
    %p96 = por %p94, %p95
    %p97 = scmp.ne.s32.totalorder %s88, %s89
    %p98 = scmp.eq.s32.totalorder %s15, 0
    %p99 = por %p97, %p98
    %p100 = scmp.ne.s32.totalorder %s88, %s89
    %p101 = scmp.eq.s32.totalorder %s16, 3
    %p102 = por %p100, %p101
    %p104 = scmp.ne.s32.totalorder %s89, %s103
    %p105 = scmp.eq.s32.totalorder %s16, 0
    %p106 = por %p104, %p105
    %s107 = ssub.s32 %s10, %s17
    %p108 = scmp.eq.s32.totalorder %s107, 0
    %s110 = sadd.s32 %s109, 1
    %s111 = scalar_select %p108, %s109, %s110
    %p114 = pneg %p108
    %p115 = scmp.eq.s32.totalorder %s10, 3
    %p116 = por %p114, %p115
    %p117 = scmp.ne.s32.totalorder %s109, %s112
    %p118 = scmp.eq.s32.totalorder %s10, 0
    %p119 = por %p117, %p118
    %p120 = scmp.ne.s32.totalorder %s109, %s112
    %p121 = scmp.eq.s32.totalorder %s15, 3
    %p122 = por %p120, %p121
    %p123 = scmp.ne.s32.totalorder %s112, %s113
    %p124 = scmp.eq.s32.totalorder %s15, 0
    %p125 = por %p123, %p124
    %p126 = scmp.ne.s32.totalorder %s112, %s113
    %p127 = scmp.eq.s32.totalorder %s16, 3
    %p128 = por %p126, %p127
    %p130 = scmp.ne.s32.totalorder %s113, %s129
    %p131 = scmp.eq.s32.totalorder %s16, 0
    %p132 = por %p130, %p131
    %p133 = scmp.le.s32.totalorder 1, %s10
    %p134 = scmp.lt.s32.totalorder %s10, 5
    %p135 = pnand %p133, %p134
    %p136 = pneg %p135
    // Predicated region
    $region9: #{transporter_forward.8} parent=5 // pred_check
      _
    $region10: #{transporter_forward.8} parent=5 // pred_check_branch
      %138 = sbr.rel (%p135) target = $region12
    $region11: #{transporter_forward.8} parent=5 // pred_region
      %s139 = ssub.s32 %s10, 1
      // Predicated region
      $region13: #{transporter_forward.8} parent=11 // pred_check
        %p140 = pneg %p57
      $region14: #{transporter_forward.8} parent=11 // pred_check_branch
        %142 = sbr.rel (%p140) target = $region16
      $region15: #{transporter_forward.8} parent=11 // pred_region
        _
      $region16: #{transporter_forward.8} parent=11 // pred_fallthru
        _
      // Predicated region
      $region17: #{transporter_forward.8} parent=11 // pred_check
        %p143 = pneg %p78
      $region18: #{transporter_forward.8} parent=11 // pred_check_branch
        %145 = sbr.rel (%p143) target = $region20
      $region19: #{transporter_forward.8} parent=11 // pred_region
        _
      $region20: #{transporter_forward.8} parent=11 // pred_fallthru
        _
      // Predicated region
      $region21: #{transporter_forward.8} parent=11 // pred_check
        %p146 = pneg %p99
      $region22: #{transporter_forward.8} parent=11 // pred_check_branch
        %148 = sbr.rel (%p146) target = $region24
      $region23: #{transporter_forward.8} parent=11 // pred_region
        _
      $region24: #{transporter_forward.8} parent=11 // pred_fallthru
        _
    $region12: #{transporter_forward.8} parent=5 // pred_fallthru
      _
    %p149 = scmp.lt.s32.totalorder %s10, 4
    // Predicated region
    $region25: #{transporter_forward.8} parent=5 // pred_check
      %p150 = pneg %p149
    $region26: #{transporter_forward.8} parent=5 // pred_check_branch
      %152 = sbr.rel (%p150) target = $region28
    $region27: #{transporter_forward.8} parent=5 // pred_region
      // Predicated region
      $region29: #{transporter_forward.8} parent=27 // pred_check
        %p153 = pneg %p30
      $region30: #{transporter_forward.8} parent=27 // pred_check_branch
        %155 = sbr.rel (%p153) target = $region32
      $region31: #{transporter_forward.8} parent=27 // pred_region
        %p156 = scmp.lt.s32.totalorder %s10, 3
        %s157 = scalar_select %p156, %s10, 3
        %s158 = smul.addr %s157, 16
        %s159 = smul.addr %s158, 4
        %s160 = scalar_lea.vmem %s0, %s159
      $region32: #{transporter_forward.8} parent=27 // pred_fallthru
        _
    $region28: #{transporter_forward.8} parent=5 // pred_fallthru
      _
    %p161 = scmp.le.s32.totalorder 1, %s10
    %p162 = scmp.lt.s32.totalorder %s10, 5
    %p163 = pnand %p161, %p162
    %p164 = pneg %p163
    // Predicated region
    $region33: #{transporter_forward.8} parent=5 // pred_check
      _
    $region34: #{transporter_forward.8} parent=5 // pred_check_branch
      %166 = sbr.rel (%p163) target = $region36
    $region35: #{transporter_forward.8} parent=5 // pred_region
      %s167 = ssub.s32 %s10, 1
      %p168 = scmp.lt.s32.totalorder %s15, 3
      %s169 = scalar_select %p168, %s15, 3
      %s170 = smul.addr %s169, 16
      %s171 = smul.addr %s170, 4
      %s172 = scalar_lea.vmem %s0, %s171
      %p173 = pneg %p36
      %p174 = pneg %p33
      %p175 = pneg %p57
      %p176 = pneg %p54
      %p177 = pneg %p78
      %p178 = pneg %p75
      %p179 = pneg %p99
      %p180 = pneg %p96
      %p181 = pneg %p125
      %p182 = pneg %p122
      %p183 = scmp.lt.s32.totalorder %s15, 3
      %s184 = scalar_select %p183, %s15, 3
      %s185 = smul.addr %s184, 12
      %s186 = smul.addr %s185, 4
      %s187 = scalar_lea.vmem %s4, %s186
      %p188 = scmp.lt.s32.totalorder %s15, 3
      %s189 = scalar_select %p188, %s15, 3
      %s190 = smul.addr %s189, 16
      %s191 = smul.addr %s190, 4
      %s192 = scalar_lea.vmem %s0, %s191
      %p193 = scmp.lt.s32.totalorder %s15, 3
      %s194 = scalar_select %p193, %s15, 3
      %s195 = smul.addr %s194, 12
      %s196 = smul.addr %s195, 4
      %s197 = scalar_lea.vmem %s4, %s196
      %v199 = vld [vmem:[%s192] sm:$0xff]
      %v200 = vld [vmem:[%s192 + $0x8] sm:$0xf]
      %v201 = vld [vmem:[%s192 + $0x10] sm:$0xff]
      %v202 = vld [vmem:[%s192 + $0x18] sm:$0xf]
      %v203 = vld [vmem:[%s192 + $0x20] sm:$0xff]
      %v204 = vld [vmem:[%s192 + $0x28] sm:$0xf]
      %v205 = vld [vmem:[%s192 + $0x30] sm:$0xff]
      %v206 = vld [vmem:[%s192 + $0x38] sm:$0xf]
      %v215 = vunpack.c.l.b16 %v199
      %v216 = vunpack.c.h.b16 %v199
      %v217 = vunpack.c.l.b16 %v200
      %v218 = vunpack.c.l.b16 %v201
      %v219 = vunpack.c.h.b16 %v201
      %v220 = vunpack.c.l.b16 %v202
      %v221 = vunpack.c.l.b16 %v203
      %v222 = vunpack.c.h.b16 %v203
      %v223 = vunpack.c.l.b16 %v204
      %v224 = vunpack.c.l.b16 %v205
      %v225 = vunpack.c.h.b16 %v205
      %v226 = vunpack.c.l.b16 %v206
      %v227 = vpack.c.b16 %v218, %v215
      %v228 = vpack.c.b16 %v219, %v216
      %v229 = vpack.c.b16 %v220, %v217
      %v230 = vpack.c.b16 %v224, %v221
      %v231 = vpack.c.b16 %v225, %v222
      %v232 = vpack.c.b16 %v226, %v223
      %239 = vst [vmem:[#allocation2] sm:$0xff] %v227
      %240 = vst [vmem:[#allocation2 + $0x8] sm:$0xff] %v228
      %241 = vst [vmem:[#allocation2 + $0x10] sm:$0xff] %v229
      %242 = vst [vmem:[#allocation2 + $0x18] sm:$0xff] %v230
      %243 = vst [vmem:[#allocation2 + $0x20] sm:$0xff] %v231
      %244 = vst [vmem:[#allocation2 + $0x28] sm:$0xff] %v232
      %v245 = vld [vmem:[%s192] sm:$0xff]
      %v246 = vld [vmem:[%s192 + $0x8] sm:$0xff]
      %v247 = vld [vmem:[%s192 + $0x10] sm:$0xff]
      %v248 = vld [vmem:[%s192 + $0x18] sm:$0xff]
      %v249 = vld [vmem:[%s192 + $0x20] sm:$0xff]
      %v250 = vld [vmem:[%s192 + $0x28] sm:$0xff]
      %v251 = vld [vmem:[%s192 + $0x30] sm:$0xff]
      %v252 = vld [vmem:[%s192 + $0x38] sm:$0xff]
      %v261 = vunpack.c.l.b16 %v245
      %v262 = vunpack.c.h.b16 %v245
      %v263 = vunpack.c.l.b16 %v246
      %v264 = vunpack.c.h.b16 %v246
      %v265 = vunpack.c.l.b16 %v247
      %v266 = vunpack.c.h.b16 %v247
      %v267 = vunpack.c.l.b16 %v248
      %v268 = vunpack.c.h.b16 %v248
      %v269 = vunpack.c.l.b16 %v249
      %v270 = vunpack.c.h.b16 %v249
      %v271 = vunpack.c.l.b16 %v250
      %v272 = vunpack.c.h.b16 %v250
      %v273 = vunpack.c.l.b16 %v251
      %v274 = vunpack.c.h.b16 %v251
      %v275 = vunpack.c.l.b16 %v252
      %v276 = vunpack.c.h.b16 %v252
      %v277 = vpack.c.b16 %v265, %v261
      %v278 = vpack.c.b16 %v266, %v262
      %v279 = vpack.c.b16 %v267, %v263
      %v280 = vpack.c.b16 %v268, %v264
      %v281 = vpack.c.b16 %v273, %v269
      %v282 = vpack.c.b16 %v274, %v270
      %v283 = vpack.c.b16 %v275, %v271
      %v284 = vpack.c.b16 %v276, %v272
      %285 = vrot.lane.b32.xlu0 %v277, 127
      %v286 = vpop.permute.xlu0 %285
      %287 = vrot.lane.b32.xlu0 %v278, 127
      %v288 = vpop.permute.xlu0 %287
      %289 = vrot.lane.b32.xlu0 %v279, 127
      %v290 = vpop.permute.xlu0 %289
      %291 = vrot.lane.b32.xlu0 %v280, 127
      %v292 = vpop.permute.xlu0 %291
      %293 = vrot.lane.b32.xlu0 %v281, 127
      %v294 = vpop.permute.xlu0 %293
      %295 = vrot.lane.b32.xlu0 %v282, 127
      %v296 = vpop.permute.xlu0 %295
      %297 = vrot.lane.b32.xlu0 %v283, 127
      %v298 = vpop.permute.xlu0 %297
      %299 = vrot.lane.b32.xlu0 %v284, 127
      %v300 = vpop.permute.xlu0 %299
      %vm301 = vcmask 1039360
      %v302 = vsel %vm301, %v286, %v288
      %v303 = vsel %vm301, %v288, %v290
      %v304 = vsel %vm301, %v290, %v292
      %v305 = vsel %vm301, %v294, %v296
      %v306 = vsel %vm301, %v296, %v298
      %v307 = vsel %vm301, %v298, %v300
      %314 = vst [vmem:[#allocation2 + $0x30] sm:$0xff] %v302
      %315 = vst [vmem:[#allocation2 + $0x38] sm:$0xff] %v303
      %316 = vst [vmem:[#allocation2 + $0x40] sm:$0xff] %v304
      %317 = vst [vmem:[#allocation2 + $0x48] sm:$0xff] %v305
      %318 = vst [vmem:[#allocation2 + $0x50] sm:$0xff] %v306
      %319 = vst [vmem:[#allocation2 + $0x58] sm:$0xff] %v307
      %v320 = vld [vmem:[%s192] sm:$0xff]
      %v321 = vld [vmem:[%s192 + $0x8] sm:$0xff]
      %v322 = vld [vmem:[%s192 + $0x10] sm:$0xff]
      %v323 = vld [vmem:[%s192 + $0x18] sm:$0xff]
      %v324 = vld [vmem:[%s192 + $0x20] sm:$0xff]
      %v325 = vld [vmem:[%s192 + $0x28] sm:$0xff]
      %v326 = vld [vmem:[%s192 + $0x30] sm:$0xff]
      %v327 = vld [vmem:[%s192 + $0x38] sm:$0xff]
      %v336 = vunpack.c.l.b16 %v320
      %v337 = vunpack.c.h.b16 %v320
      %v338 = vunpack.c.l.b16 %v321
      %v339 = vunpack.c.h.b16 %v321
      %v340 = vunpack.c.l.b16 %v322
      %v341 = vunpack.c.h.b16 %v322
      %v342 = vunpack.c.l.b16 %v323
      %v343 = vunpack.c.h.b16 %v323
      %v344 = vunpack.c.l.b16 %v324
      %v345 = vunpack.c.h.b16 %v324
      %v346 = vunpack.c.l.b16 %v325
      %v347 = vunpack.c.h.b16 %v325
      %v348 = vunpack.c.l.b16 %v326
      %v349 = vunpack.c.h.b16 %v326
      %v350 = vunpack.c.l.b16 %v327
      %v351 = vunpack.c.h.b16 %v327
      %v352 = vpack.c.b16 %v340, %v336
      %v353 = vpack.c.b16 %v341, %v337
      %v354 = vpack.c.b16 %v342, %v338
      %v355 = vpack.c.b16 %v343, %v339
      %v356 = vpack.c.b16 %v348, %v344
      %v357 = vpack.c.b16 %v349, %v345
      %v358 = vpack.c.b16 %v350, %v346
      %v359 = vpack.c.b16 %v351, %v347
      %360 = vrot.lane.b32.xlu0 %v352, 126
      %v361 = vpop.permute.xlu0 %360
      %362 = vrot.lane.b32.xlu0 %v353, 126
      %v363 = vpop.permute.xlu0 %362
      %364 = vrot.lane.b32.xlu0 %v354, 126
      %v365 = vpop.permute.xlu0 %364
      %366 = vrot.lane.b32.xlu0 %v355, 126
      %v367 = vpop.permute.xlu0 %366
      %368 = vrot.lane.b32.xlu0 %v356, 126
      %v369 = vpop.permute.xlu0 %368
      %370 = vrot.lane.b32.xlu0 %v357, 126
      %v371 = vpop.permute.xlu0 %370
      %372 = vrot.lane.b32.xlu0 %v358, 126
      %v373 = vpop.permute.xlu0 %372
      %374 = vrot.lane.b32.xlu0 %v359, 126
      %v375 = vpop.permute.xlu0 %374
      %vm376 = vcmask 1031168
      %v377 = vsel %vm376, %v361, %v363
      %v378 = vsel %vm376, %v363, %v365
      %v379 = vsel %vm376, %v365, %v367
      %v380 = vsel %vm376, %v369, %v371
      %v381 = vsel %vm376, %v371, %v373
      %v382 = vsel %vm376, %v373, %v375
      %389 = vst [vmem:[#allocation2 + $0x60] sm:$0xff] %v377
      %390 = vst [vmem:[#allocation2 + $0x68] sm:$0xff] %v378
      %391 = vst [vmem:[#allocation2 + $0x70] sm:$0xff] %v379
      %392 = vst [vmem:[#allocation2 + $0x78] sm:$0xff] %v380
      %393 = vst [vmem:[#allocation2 + $0x80] sm:$0xff] %v381
      %394 = vst [vmem:[#allocation2 + $0x88] sm:$0xff] %v382
      %v395 = vld [vmem:[%s192] sm:$0xff]
      %v396 = vld [vmem:[%s192 + $0x8] sm:$0xff]
      %v397 = vld [vmem:[%s192 + $0x10] sm:$0xff]
      %v398 = vld [vmem:[%s192 + $0x18] sm:$0xff]
      %v399 = vld [vmem:[%s192 + $0x20] sm:$0xff]
      %v400 = vld [vmem:[%s192 + $0x28] sm:$0xff]
      %v401 = vld [vmem:[%s192 + $0x30] sm:$0xff]
      %v402 = vld [vmem:[%s192 + $0x38] sm:$0xff]
      %v411 = vunpack.c.l.b16 %v395
      %v412 = vunpack.c.h.b16 %v395
      %v413 = vunpack.c.l.b16 %v396
      %v414 = vunpack.c.h.b16 %v396
      %v415 = vunpack.c.l.b16 %v397
      %v416 = vunpack.c.h.b16 %v397
      %v417 = vunpack.c.l.b16 %v398
      %v418 = vunpack.c.h.b16 %v398
      %v419 = vunpack.c.l.b16 %v399
      %v420 = vunpack.c.h.b16 %v399
      %v421 = vunpack.c.l.b16 %v400
      %v422 = vunpack.c.h.b16 %v400
      %v423 = vunpack.c.l.b16 %v401
      %v424 = vunpack.c.h.b16 %v401
      %v425 = vunpack.c.l.b16 %v402
      %v426 = vunpack.c.h.b16 %v402
      %v427 = vpack.c.b16 %v415, %v411
      %v428 = vpack.c.b16 %v416, %v412
      %v429 = vpack.c.b16 %v417, %v413
      %v430 = vpack.c.b16 %v418, %v414
      %v431 = vpack.c.b16 %v423, %v419
      %v432 = vpack.c.b16 %v424, %v420
      %v433 = vpack.c.b16 %v425, %v421
      %v434 = vpack.c.b16 %v426, %v422
      %435 = vrot.lane.b32.xlu0 %v427, 110
      %v436 = vpop.permute.xlu0 %435
      %437 = vrot.lane.b32.xlu0 %v428, 110
      %v438 = vpop.permute.xlu0 %437
      %439 = vrot.lane.b32.xlu0 %v429, 110
      %v440 = vpop.permute.xlu0 %439
      %441 = vrot.lane.b32.xlu0 %v430, 110
      %v442 = vpop.permute.xlu0 %441
      %443 = vrot.lane.b32.xlu0 %v431, 110
      %v444 = vpop.permute.xlu0 %443
      %445 = vrot.lane.b32.xlu0 %v432, 110
      %v446 = vpop.permute.xlu0 %445
      %447 = vrot.lane.b32.xlu0 %v433, 110
      %v448 = vpop.permute.xlu0 %447
      %449 = vrot.lane.b32.xlu0 %v434, 110
      %v450 = vpop.permute.xlu0 %449
      %vm451 = vcmask 900096
      %v452 = vsel %vm451, %v436, %v438
      %v453 = vsel %vm451, %v438, %v440
      %v454 = vsel %vm451, %v440, %v442
      %v455 = vsel %vm451, %v444, %v446
      %v456 = vsel %vm451, %v446, %v448
      %v457 = vsel %vm451, %v448, %v450
      %464 = vst [vmem:[#allocation2 + $0x90] sm:$0xff] %v452
      %465 = vst [vmem:[#allocation2 + $0x98] sm:$0xff] %v453
      %466 = vst [vmem:[#allocation2 + $0xa0] sm:$0xff] %v454
      %467 = vst [vmem:[#allocation2 + $0xa8] sm:$0xff] %v455
      %468 = vst [vmem:[#allocation2 + $0xb0] sm:$0xff] %v456
      %469 = vst [vmem:[#allocation2 + $0xb8] sm:$0xff] %v457
      %v470 = vld [vmem:[%s192] sm:$0xff]
      %v471 = vld [vmem:[%s192 + $0x8] sm:$0xff]
      %v472 = vld [vmem:[%s192 + $0x10] sm:$0xff]
      %v473 = vld [vmem:[%s192 + $0x18] sm:$0xff]
      %v474 = vld [vmem:[%s192 + $0x20] sm:$0xff]
      %v475 = vld [vmem:[%s192 + $0x28] sm:$0xff]
      %v476 = vld [vmem:[%s192 + $0x30] sm:$0xff]
      %v477 = vld [vmem:[%s192 + $0x38] sm:$0xff]
      %v486 = vunpack.c.l.b16 %v470
      %v487 = vunpack.c.h.b16 %v470
      %v488 = vunpack.c.l.b16 %v471
      %v489 = vunpack.c.h.b16 %v471
      %v490 = vunpack.c.l.b16 %v472
      %v491 = vunpack.c.h.b16 %v472
      %v492 = vunpack.c.l.b16 %v473
      %v493 = vunpack.c.h.b16 %v473
      %v494 = vunpack.c.l.b16 %v474
      %v495 = vunpack.c.h.b16 %v474
      %v496 = vunpack.c.l.b16 %v475
      %v497 = vunpack.c.h.b16 %v475
      %v498 = vunpack.c.l.b16 %v476
      %v499 = vunpack.c.h.b16 %v476
      %v500 = vunpack.c.l.b16 %v477
      %v501 = vunpack.c.h.b16 %v477
      %v502 = vpack.c.b16 %v490, %v486
      %v503 = vpack.c.b16 %v491, %v487
      %v504 = vpack.c.b16 %v492, %v488
      %v505 = vpack.c.b16 %v493, %v489
      %v506 = vpack.c.b16 %v498, %v494
      %v507 = vpack.c.b16 %v499, %v495
      %v508 = vpack.c.b16 %v500, %v496
      %v509 = vpack.c.b16 %v501, %v497
      %510 = vrot.lane.b32.xlu0 %v502, 109
      %v511 = vpop.permute.xlu0 %510
      %512 = vrot.lane.b32.xlu0 %v503, 109
      %v513 = vpop.permute.xlu0 %512
      %514 = vrot.lane.b32.xlu0 %v504, 109
      %v515 = vpop.permute.xlu0 %514
      %516 = vrot.lane.b32.xlu0 %v505, 109
      %v517 = vpop.permute.xlu0 %516
      %518 = vrot.lane.b32.xlu0 %v506, 109
      %v519 = vpop.permute.xlu0 %518
      %520 = vrot.lane.b32.xlu0 %v507, 109
      %v521 = vpop.permute.xlu0 %520
      %522 = vrot.lane.b32.xlu0 %v508, 109
      %v523 = vpop.permute.xlu0 %522
      %524 = vrot.lane.b32.xlu0 %v509, 109
      %v525 = vpop.permute.xlu0 %524
      %vm526 = vcmask 891904
      %v527 = vsel %vm526, %v511, %v513
      %v528 = vsel %vm526, %v513, %v515
      %v529 = vsel %vm526, %v515, %v517
      %v530 = vsel %vm526, %v519, %v521
      %v531 = vsel %vm526, %v521, %v523
      %v532 = vsel %vm526, %v523, %v525
      %539 = vst [vmem:[#allocation2 + $0xc0] sm:$0xff] %v527
      %540 = vst [vmem:[#allocation2 + $0xc8] sm:$0xff] %v528
      %541 = vst [vmem:[#allocation2 + $0xd0] sm:$0xff] %v529
      %542 = vst [vmem:[#allocation2 + $0xd8] sm:$0xff] %v530
      %543 = vst [vmem:[#allocation2 + $0xe0] sm:$0xff] %v531
      %544 = vst [vmem:[#allocation2 + $0xe8] sm:$0xff] %v532
      %v545 = vld [vmem:[%s192] sm:$0xff]
      %v546 = vld [vmem:[%s192 + $0x8] sm:$0xff]
      %v547 = vld [vmem:[%s192 + $0x10] sm:$0xff]
      %v548 = vld [vmem:[%s192 + $0x18] sm:$0xff]
      %v549 = vld [vmem:[%s192 + $0x20] sm:$0xff]
      %v550 = vld [vmem:[%s192 + $0x28] sm:$0xff]
      %v551 = vld [vmem:[%s192 + $0x30] sm:$0xff]
      %v552 = vld [vmem:[%s192 + $0x38] sm:$0xff]
      %v561 = vunpack.c.l.b16 %v545
      %v562 = vunpack.c.h.b16 %v545
      %v563 = vunpack.c.l.b16 %v546
      %v564 = vunpack.c.h.b16 %v546
      %v565 = vunpack.c.l.b16 %v547
      %v566 = vunpack.c.h.b16 %v547
      %v567 = vunpack.c.l.b16 %v548
      %v568 = vunpack.c.h.b16 %v548
      %v569 = vunpack.c.l.b16 %v549
      %v570 = vunpack.c.h.b16 %v549
      %v571 = vunpack.c.l.b16 %v550
      %v572 = vunpack.c.h.b16 %v550
      %v573 = vunpack.c.l.b16 %v551
      %v574 = vunpack.c.h.b16 %v551
      %v575 = vunpack.c.l.b16 %v552
      %v576 = vunpack.c.h.b16 %v552
      %v577 = vpack.c.b16 %v565, %v561
      %v578 = vpack.c.b16 %v566, %v562
      %v579 = vpack.c.b16 %v567, %v563
      %v580 = vpack.c.b16 %v568, %v564
      %v581 = vpack.c.b16 %v573, %v569
      %v582 = vpack.c.b16 %v574, %v570
      %v583 = vpack.c.b16 %v575, %v571
      %v584 = vpack.c.b16 %v576, %v572
      %585 = vrot.lane.b32.xlu0 %v577, 108
      %v586 = vpop.permute.xlu0 %585
      %587 = vrot.lane.b32.xlu0 %v578, 108
      %v588 = vpop.permute.xlu0 %587
      %589 = vrot.lane.b32.xlu0 %v579, 108
      %v590 = vpop.permute.xlu0 %589
      %591 = vrot.lane.b32.xlu0 %v580, 108
      %v592 = vpop.permute.xlu0 %591
      %593 = vrot.lane.b32.xlu0 %v581, 108
      %v594 = vpop.permute.xlu0 %593
      %595 = vrot.lane.b32.xlu0 %v582, 108
      %v596 = vpop.permute.xlu0 %595
      %597 = vrot.lane.b32.xlu0 %v583, 108
      %v598 = vpop.permute.xlu0 %597
      %599 = vrot.lane.b32.xlu0 %v584, 108
      %v600 = vpop.permute.xlu0 %599
      %vm601 = vcmask 883712
      %v602 = vsel %vm601, %v586, %v588
      %v603 = vsel %vm601, %v588, %v590
      %v604 = vsel %vm601, %v590, %v592
      %v605 = vsel %vm601, %v594, %v596
      %v606 = vsel %vm601, %v596, %v598
      %v607 = vsel %vm601, %v598, %v600
      %614 = vst [vmem:[#allocation2 + $0xf0] sm:$0xff] %v602
      %615 = vst [vmem:[#allocation2 + $0xf8] sm:$0xff] %v603
      %616 = vst [vmem:[#allocation2 + $0x100] sm:$0xff] %v604
      %617 = vst [vmem:[#allocation2 + $0x108] sm:$0xff] %v605
      %618 = vst [vmem:[#allocation2 + $0x110] sm:$0xff] %v606
      %619 = vst [vmem:[#allocation2 + $0x118] sm:$0xff] %v607
      %v620 = vld [vmem:[%s192] sm:$0xff]
      %v621 = vld [vmem:[%s192 + $0x8] sm:$0xff]
      %v622 = vld [vmem:[%s192 + $0x10] sm:$0xff]
      %v623 = vld [vmem:[%s192 + $0x18] sm:$0xff]
      %v624 = vld [vmem:[%s192 + $0x20] sm:$0xff]
      %v625 = vld [vmem:[%s192 + $0x28] sm:$0xff]
      %v626 = vld [vmem:[%s192 + $0x30] sm:$0xff]
      %v627 = vld [vmem:[%s192 + $0x38] sm:$0xff]
      %v636 = vunpack.c.l.b16 %v620
      %v637 = vunpack.c.h.b16 %v620
      %v638 = vunpack.c.l.b16 %v621
      %v639 = vunpack.c.h.b16 %v621
      %v640 = vunpack.c.l.b16 %v622
      %v641 = vunpack.c.h.b16 %v622
      %v642 = vunpack.c.l.b16 %v623
      %v643 = vunpack.c.h.b16 %v623
      %v644 = vunpack.c.l.b16 %v624
      %v645 = vunpack.c.h.b16 %v624
      %v646 = vunpack.c.l.b16 %v625
      %v647 = vunpack.c.h.b16 %v625
      %v648 = vunpack.c.l.b16 %v626
      %v649 = vunpack.c.h.b16 %v626
      %v650 = vunpack.c.l.b16 %v627
      %v651 = vunpack.c.h.b16 %v627
      %v652 = vpack.c.b16 %v640, %v636
      %v653 = vpack.c.b16 %v641, %v637
      %v654 = vpack.c.b16 %v642, %v638
      %v655 = vpack.c.b16 %v643, %v639
      %v656 = vpack.c.b16 %v648, %v644
      %v657 = vpack.c.b16 %v649, %v645
      %v658 = vpack.c.b16 %v650, %v646
      %v659 = vpack.c.b16 %v651, %v647
      %660 = vrot.lane.b32.xlu0 %v652, 92
      %v661 = vpop.permute.xlu0 %660
      %662 = vrot.lane.b32.xlu0 %v653, 92
      %v663 = vpop.permute.xlu0 %662
      %664 = vrot.lane.b32.xlu0 %v654, 92
      %v665 = vpop.permute.xlu0 %664
      %666 = vrot.lane.b32.xlu0 %v655, 92
      %v667 = vpop.permute.xlu0 %666
      %668 = vrot.lane.b32.xlu0 %v656, 92
      %v669 = vpop.permute.xlu0 %668
      %670 = vrot.lane.b32.xlu0 %v657, 92
      %v671 = vpop.permute.xlu0 %670
      %672 = vrot.lane.b32.xlu0 %v658, 92
      %v673 = vpop.permute.xlu0 %672
      %674 = vrot.lane.b32.xlu0 %v659, 92
      %v675 = vpop.permute.xlu0 %674
      %vm676 = vcmask 752640
      %v677 = vsel %vm676, %v661, %v663
      %v678 = vsel %vm676, %v663, %v665
      %v679 = vsel %vm676, %v665, %v667
      %v680 = vsel %vm676, %v669, %v671
      %v681 = vsel %vm676, %v671, %v673
      %v682 = vsel %vm676, %v673, %v675
      %689 = vst [vmem:[#allocation2 + $0x120] sm:$0xff] %v677
      %690 = vst [vmem:[#allocation2 + $0x128] sm:$0xff] %v678
      %691 = vst [vmem:[#allocation2 + $0x130] sm:$0xff] %v679
      %692 = vst [vmem:[#allocation2 + $0x138] sm:$0xff] %v680
      %693 = vst [vmem:[#allocation2 + $0x140] sm:$0xff] %v681
      %694 = vst [vmem:[#allocation2 + $0x148] sm:$0xff] %v682
      %v695 = vld [vmem:[%s192] sm:$0xff]
      %v696 = vld [vmem:[%s192 + $0x8] sm:$0xff]
      %v697 = vld [vmem:[%s192 + $0x10] sm:$0xff]
      %v698 = vld [vmem:[%s192 + $0x18] sm:$0xff]
      %v699 = vld [vmem:[%s192 + $0x20] sm:$0xff]
      %v700 = vld [vmem:[%s192 + $0x28] sm:$0xff]
      %v701 = vld [vmem:[%s192 + $0x30] sm:$0xff]
      %v702 = vld [vmem:[%s192 + $0x38] sm:$0xff]
      %v711 = vunpack.c.l.b16 %v695
      %v712 = vunpack.c.h.b16 %v695
      %v713 = vunpack.c.l.b16 %v696
      %v714 = vunpack.c.h.b16 %v696
      %v715 = vunpack.c.l.b16 %v697
      %v716 = vunpack.c.h.b16 %v697
      %v717 = vunpack.c.l.b16 %v698
      %v718 = vunpack.c.h.b16 %v698
      %v719 = vunpack.c.l.b16 %v699
      %v720 = vunpack.c.h.b16 %v699
      %v721 = vunpack.c.l.b16 %v700
      %v722 = vunpack.c.h.b16 %v700
      %v723 = vunpack.c.l.b16 %v701
      %v724 = vunpack.c.h.b16 %v701
      %v725 = vunpack.c.l.b16 %v702
      %v726 = vunpack.c.h.b16 %v702
      %v727 = vpack.c.b16 %v715, %v711
      %v728 = vpack.c.b16 %v716, %v712
      %v729 = vpack.c.b16 %v717, %v713
      %v730 = vpack.c.b16 %v718, %v714
      %v731 = vpack.c.b16 %v723, %v719
      %v732 = vpack.c.b16 %v724, %v720
      %v733 = vpack.c.b16 %v725, %v721
      %v734 = vpack.c.b16 %v726, %v722
      %735 = vrot.lane.b32.xlu0 %v727, 91
      %v736 = vpop.permute.xlu0 %735
      %737 = vrot.lane.b32.xlu0 %v728, 91
      %v738 = vpop.permute.xlu0 %737
      %739 = vrot.lane.b32.xlu0 %v729, 91
      %v740 = vpop.permute.xlu0 %739
      %741 = vrot.lane.b32.xlu0 %v730, 91
      %v742 = vpop.permute.xlu0 %741
      %743 = vrot.lane.b32.xlu0 %v731, 91
      %v744 = vpop.permute.xlu0 %743
      %745 = vrot.lane.b32.xlu0 %v732, 91
      %v746 = vpop.permute.xlu0 %745
      %747 = vrot.lane.b32.xlu0 %v733, 91
      %v748 = vpop.permute.xlu0 %747
      %749 = vrot.lane.b32.xlu0 %v734, 91
      %v750 = vpop.permute.xlu0 %749
      %vm751 = vcmask 744448
      %v752 = vsel %vm751, %v736, %v738
      %v753 = vsel %vm751, %v738, %v740
      %v754 = vsel %vm751, %v740, %v742
      %v755 = vsel %vm751, %v744, %v746
      %v756 = vsel %vm751, %v746, %v748
      %v757 = vsel %vm751, %v748, %v750
      %764 = vst [vmem:[#allocation2 + $0x150] sm:$0xff] %v752
      %765 = vst [vmem:[#allocation2 + $0x158] sm:$0xff] %v753
      %766 = vst [vmem:[#allocation2 + $0x160] sm:$0xff] %v754
      %767 = vst [vmem:[#allocation2 + $0x168] sm:$0xff] %v755
      %768 = vst [vmem:[#allocation2 + $0x170] sm:$0xff] %v756
      %769 = vst [vmem:[#allocation2 + $0x178] sm:$0xff] %v757
      %v770 = vld [vmem:[%s192] sm:$0xff]
      %v771 = vld [vmem:[%s192 + $0x8] sm:$0xff]
      %v772 = vld [vmem:[%s192 + $0x10] sm:$0xff]
      %v773 = vld [vmem:[%s192 + $0x18] sm:$0xff]
      %v774 = vld [vmem:[%s192 + $0x20] sm:$0xff]
      %v775 = vld [vmem:[%s192 + $0x28] sm:$0xff]
      %v776 = vld [vmem:[%s192 + $0x30] sm:$0xff]
      %v777 = vld [vmem:[%s192 + $0x38] sm:$0xff]
      %v786 = vunpack.c.l.b16 %v770
      %v787 = vunpack.c.h.b16 %v770
      %v788 = vunpack.c.l.b16 %v771
      %v789 = vunpack.c.h.b16 %v771
      %v790 = vunpack.c.l.b16 %v772
      %v791 = vunpack.c.h.b16 %v772
      %v792 = vunpack.c.l.b16 %v773
      %v793 = vunpack.c.h.b16 %v773
      %v794 = vunpack.c.l.b16 %v774
      %v795 = vunpack.c.h.b16 %v774
      %v796 = vunpack.c.l.b16 %v775
      %v797 = vunpack.c.h.b16 %v775
      %v798 = vunpack.c.l.b16 %v776
      %v799 = vunpack.c.h.b16 %v776
      %v800 = vunpack.c.l.b16 %v777
      %v801 = vunpack.c.h.b16 %v777
      %v802 = vpack.c.b16 %v790, %v786
      %v803 = vpack.c.b16 %v791, %v787
      %v804 = vpack.c.b16 %v792, %v788
      %v805 = vpack.c.b16 %v793, %v789
      %v806 = vpack.c.b16 %v798, %v794
      %v807 = vpack.c.b16 %v799, %v795
      %v808 = vpack.c.b16 %v800, %v796
      %v809 = vpack.c.b16 %v801, %v797
      %810 = vrot.lane.b32.xlu0 %v802, 90
      %v811 = vpop.permute.xlu0 %810
      %812 = vrot.lane.b32.xlu0 %v803, 90
      %v813 = vpop.permute.xlu0 %812
      %814 = vrot.lane.b32.xlu0 %v804, 90
      %v815 = vpop.permute.xlu0 %814
      %816 = vrot.lane.b32.xlu0 %v805, 90
      %v817 = vpop.permute.xlu0 %816
      %818 = vrot.lane.b32.xlu0 %v806, 90
      %v819 = vpop.permute.xlu0 %818
      %820 = vrot.lane.b32.xlu0 %v807, 90
      %v821 = vpop.permute.xlu0 %820
      %822 = vrot.lane.b32.xlu0 %v808, 90
      %v823 = vpop.permute.xlu0 %822
      %824 = vrot.lane.b32.xlu0 %v809, 90
      %v825 = vpop.permute.xlu0 %824
      %vm826 = vcmask 736256
      %v827 = vsel %vm826, %v811, %v813
      %v828 = vsel %vm826, %v813, %v815
      %v829 = vsel %vm826, %v815, %v817
      %v830 = vsel %vm826, %v819, %v821
      %v831 = vsel %vm826, %v821, %v823
      %v832 = vsel %vm826, %v823, %v825
      %839 = vst [vmem:[#allocation2 + $0x180] sm:$0xff] %v827
      %840 = vst [vmem:[#allocation2 + $0x188] sm:$0xff] %v828
      %841 = vst [vmem:[#allocation2 + $0x190] sm:$0xff] %v829
      %842 = vst [vmem:[#allocation2 + $0x198] sm:$0xff] %v830
      %843 = vst [vmem:[#allocation2 + $0x1a0] sm:$0xff] %v831
      %844 = vst [vmem:[#allocation2 + $0x1a8] sm:$0xff] %v832
      %v845 = vld [vmem:[%s1] sm:$0xff]
      %v846 = vld [vmem:[%s1 + $0x8] sm:$0xf]
      %v847 = vld [vmem:[%s1 + $0xc] sm:$0xff]
      %v848 = vld [vmem:[%s1 + $0x14] sm:$0xf]
      %v849 = vld [vmem:[%s1 + $0x18] sm:$0xff]
      %v850 = vld [vmem:[%s1 + $0x20] sm:$0xf]
      %v851 = vld [vmem:[%s1 + $0x24] sm:$0xff]
      %v852 = vld [vmem:[%s1 + $0x2c] sm:$0xf]
      %v853 = vld [vmem:[#allocation2] sm:$0xff]
      %v854 = vld [vmem:[#allocation2 + $0x8] sm:$0xff]
      %v855 = vld [vmem:[#allocation2 + $0x10] sm:$0xff]
      %v856 = vld [vmem:[#allocation2 + $0x18] sm:$0xff]
      %v857 = vld [vmem:[#allocation2 + $0x20] sm:$0xff]
      %v858 = vld [vmem:[#allocation2 + $0x28] sm:$0xff]
      %v859 = vld [vmem:[#allocation2 + $0x30] sm:$0xff]
      %v860 = vld [vmem:[#allocation2 + $0x38] sm:$0xff]
      %v861 = vld [vmem:[#allocation2 + $0x40] sm:$0xff]
      %v862 = vld [vmem:[#allocation2 + $0x48] sm:$0xff]
      %v863 = vld [vmem:[#allocation2 + $0x50] sm:$0xff]
      %v864 = vld [vmem:[#allocation2 + $0x58] sm:$0xff]
      %v865 = vld [vmem:[#allocation2 + $0x60] sm:$0xff]
      %v866 = vld [vmem:[#allocation2 + $0x68] sm:$0xff]
      %v867 = vld [vmem:[#allocation2 + $0x70] sm:$0xff]
      %v868 = vld [vmem:[#allocation2 + $0x78] sm:$0xff]
      %v869 = vld [vmem:[#allocation2 + $0x80] sm:$0xff]
      %v870 = vld [vmem:[#allocation2 + $0x88] sm:$0xff]
      %v871 = vld [vmem:[#allocation2 + $0x90] sm:$0xff]
      %v872 = vld [vmem:[#allocation2 + $0x98] sm:$0xff]
      %v873 = vld [vmem:[#allocation2 + $0xa0] sm:$0xff]
      %v874 = vld [vmem:[#allocation2 + $0xa8] sm:$0xff]
      %v875 = vld [vmem:[#allocation2 + $0xb0] sm:$0xff]
      %v876 = vld [vmem:[#allocation2 + $0xb8] sm:$0xff]
      %v877 = vld [vmem:[#allocation2 + $0xc0] sm:$0xff]
      %v878 = vld [vmem:[#allocation2 + $0xc8] sm:$0xff]
      %v879 = vld [vmem:[#allocation2 + $0xd0] sm:$0xff]
      %v880 = vld [vmem:[#allocation2 + $0xd8] sm:$0xff]
      %v881 = vld [vmem:[#allocation2 + $0xe0] sm:$0xff]
      %v882 = vld [vmem:[#allocation2 + $0xe8] sm:$0xff]
      %v883 = vld [vmem:[#allocation2 + $0xf0] sm:$0xff]
      %v884 = vld [vmem:[#allocation2 + $0xf8] sm:$0xff]
      %v885 = vld [vmem:[#allocation2 + $0x100] sm:$0xff]
      %v886 = vld [vmem:[#allocation2 + $0x108] sm:$0xff]
      %v887 = vld [vmem:[#allocation2 + $0x110] sm:$0xff]
      %v888 = vld [vmem:[#allocation2 + $0x118] sm:$0xff]
      %v889 = vld [vmem:[#allocation2 + $0x120] sm:$0xff]
      %v890 = vld [vmem:[#allocation2 + $0x128] sm:$0xff]
      %v891 = vld [vmem:[#allocation2 + $0x130] sm:$0xff]
      %v892 = vld [vmem:[#allocation2 + $0x138] sm:$0xff]
      %v893 = vld [vmem:[#allocation2 + $0x140] sm:$0xff]
      %v894 = vld [vmem:[#allocation2 + $0x148] sm:$0xff]
      %v895 = vld [vmem:[#allocation2 + $0x150] sm:$0xff]
      %v896 = vld [vmem:[#allocation2 + $0x158] sm:$0xff]
      %v897 = vld [vmem:[#allocation2 + $0x160] sm:$0xff]
      %v898 = vld [vmem:[#allocation2 + $0x168] sm:$0xff]
      %v899 = vld [vmem:[#allocation2 + $0x170] sm:$0xff]
      %v900 = vld [vmem:[#allocation2 + $0x178] sm:$0xff]
      %v901 = vld [vmem:[#allocation2 + $0x180] sm:$0xff]
      %v902 = vld [vmem:[#allocation2 + $0x188] sm:$0xff]
      %v903 = vld [vmem:[#allocation2 + $0x190] sm:$0xff]
      %v904 = vld [vmem:[#allocation2 + $0x198] sm:$0xff]
      %v905 = vld [vmem:[#allocation2 + $0x1a0] sm:$0xff]
      %v906 = vld [vmem:[#allocation2 + $0x1a8] sm:$0xff]
      %v907 = vld [vmem:[%s2] sm:$0xff]
      %v908 = vld [vmem:[%s2 + $0x8] sm:$0xff]
      %v909 = vld [vmem:[%s2 + $0x10] sm:$0xff]
      %v910 = vld [vmem:[%s2 + $0x18] sm:$0xff]
      %912 = vset.pattern.permute.xlu0 0
      %913 = vperm.xlu0 %912, %v907
      %v914 = vpop.permute.xlu0 %913
      %917 = vset.pattern.permute.xlu0 0
      %918 = vperm.xlu0 %917, %v908
      %v919 = vpop.permute.xlu0 %918
      %922 = vset.pattern.permute.xlu0 0
      %923 = vperm.xlu0 %922, %v909
      %v924 = vpop.permute.xlu0 %923
      %927 = vset.pattern.permute.xlu0 0
      %928 = vperm.xlu0 %927, %v910
      %v929 = vpop.permute.xlu0 %928
      %v939 = vunpack.c.l.b16 %v845
      %v940 = vunpack.c.h.b16 %v845
      %v941 = vunpack.c.l.b16 %v846
      %v942 = vunpack.c.l.b16 %v847
      %v943 = vunpack.c.h.b16 %v847
      %v944 = vunpack.c.l.b16 %v848
      %v945 = vunpack.c.l.b16 %v849
      %v946 = vunpack.c.h.b16 %v849
      %v947 = vunpack.c.l.b16 %v850
      %v948 = vunpack.c.l.b16 %v851
      %v949 = vunpack.c.h.b16 %v851
      %v950 = vunpack.c.l.b16 %v852
      %v951 = vpack.c.b16 %v942, %v939
      %v952 = vpack.c.b16 %v943, %v940
      %v953 = vpack.c.b16 %v944, %v941
      %v954 = vpack.c.b16 %v948, %v945
      %v955 = vpack.c.b16 %v949, %v946
      %v956 = vpack.c.b16 %v950, %v947
      %vm961 = vcmask 261120
      %v963 = vsel %vm961, %v953, 0
      %v966 = vsel %vm961, %v956, 0
      %968 = vmatprep.subr.bf16.mxu0 %v854
      %969 = vmatpush1.bf16.msra.mxu0 %v853
      %970 = vmatprep.subr.bf16.mxu0 %v857
      %971 = vmatpush1.bf16.msra.mxu0 %v856
      %972 = vmatprep.subr.bf16.mxu0 %v860
      %973 = vmatpush1.bf16.msra.mxu0 %v859
      %974 = vmatprep.subr.bf16.mxu0 %v863
      %975 = vmatpush1.bf16.msra.mxu0 %v862
      %976 = vmatprep.subr.bf16.mxu0 %v866
      %977 = vmatpush1.bf16.msra.mxu0 %v865
      %978 = vmatprep.subr.bf16.mxu0 %v869
      %979 = vmatpush1.bf16.msra.mxu0 %v868
      %980 = vmatprep.subr.bf16.mxu0 %v872
      %981 = vmatpush1.bf16.msra.mxu0 %v871
      %982 = vmatprep.subr.bf16.mxu0 %v875
      %983 = vmatpush1.bf16.msra.mxu0 %v874
      %984 = vmatprep.subr.bf16.mxu0 %v878
      %985 = vmatpush1.bf16.msra.mxu0 %v877
      %986 = vmatprep.subr.bf16.mxu0 %v881
      %987 = vmatpush1.bf16.msra.mxu0 %v880
      %988 = vmatprep.subr.bf16.mxu0 %v884
      %989 = vmatpush1.bf16.msra.mxu0 %v883
      %990 = vmatprep.subr.bf16.mxu0 %v887
      %991 = vmatpush1.bf16.msra.mxu0 %v886
      %992 = vmatprep.subr.bf16.mxu0 %v890
      %993 = vmatpush1.bf16.msra.mxu0 %v889
      %994 = vmatprep.subr.bf16.mxu0 %v893
      %995 = vmatpush1.bf16.msra.mxu0 %v892
      %996 = vmatprep.subr.bf16.mxu0 %v896
      %997 = vmatpush1.bf16.msra.mxu0 %v895
      %998 = vmatprep.subr.bf16.mxu0 %v899
      %999 = vmatpush1.bf16.msra.mxu0 %v898
      %1000 = vmatprep.mubr.bf16.mxu0 %v952
      %1001 = vmatmul.mubr.bf16.gmra.mrb[0].mxu0 %v951
      %v1002 = vpop.f32.mrb[0].mxu0
      %v1003 = vadd.f32 %v914, %v1002
      %v1004 = vpop.f32.mrb[0].mxu0
      %v1005 = vadd.f32 %v914, %v1004
      %v1006 = vpop.f32.mrb[0].mxu0
      %v1007 = vadd.f32 %v919, %v1006
      %v1008 = vpop.f32.mrb[0].mxu0
      %v1009 = vadd.f32 %v919, %v1008
      %1010 = vmatprep.mubr.bf16.mxu0 %v955
      %1011 = vmatmul.mubr.bf16.gmra.mrb[0].mxu0 %v954
      %v1012 = vpop.f32.mrb[0].mxu0
      %v1013 = vadd.f32 %v924, %v1012
      %v1014 = vpop.f32.mrb[0].mxu0
      %v1015 = vadd.f32 %v924, %v1014
      %v1016 = vpop.f32.mrb[0].mxu0
      %v1017 = vadd.f32 %v929, %v1016
      %v1018 = vpop.f32.mrb[0].mxu0
      %v1019 = vadd.f32 %v929, %v1018
      %1020 = vdwg.mxu0
      %1021 = vmatprep.subr.bf16.mxu0 %v902
      %1022 = vmatpush1.bf16.msra.mxu0 %v901
      %1023 = vmatprep.subr.bf16.mxu0 %v905
      %1024 = vmatpush1.bf16.msra.mxu0 %v904
      %1025 = vmatprep.subr.bf16.mxu0 0
      %1026 = vmatpush1.bf16.msra.mxu0 0
      %1027 = vmatprep.subr.bf16.mxu0 0
      %1028 = vmatpush1.bf16.msra.mxu0 0
      %1029 = vmatprep.subr.bf16.mxu0 0
      %1030 = vmatpush1.bf16.msra.mxu0 0
      %1031 = vmatprep.subr.bf16.mxu0 0
      %1032 = vmatpush1.bf16.msra.mxu0 0
      %1033 = vmatprep.subr.bf16.mxu0 0
      %1034 = vmatpush1.bf16.msra.mxu0 0
      %1035 = vmatprep.subr.bf16.mxu0 0
      %1036 = vmatpush1.bf16.msra.mxu0 0
      %1037 = vmatprep.subr.bf16.mxu0 0
      %1038 = vmatpush1.bf16.msra.mxu0 0
      %1039 = vmatprep.subr.bf16.mxu0 0
      %1040 = vmatpush1.bf16.msra.mxu0 0
      %1041 = vmatprep.subr.bf16.mxu0 0
      %1042 = vmatpush1.bf16.msra.mxu0 0
      %1043 = vmatprep.subr.bf16.mxu0 0
      %1044 = vmatpush1.bf16.msra.mxu0 0
      %1045 = vmatprep.subr.bf16.mxu0 0
      %1046 = vmatpush1.bf16.msra.mxu0 0
      %1047 = vmatprep.subr.bf16.mxu0 0
      %1048 = vmatpush1.bf16.msra.mxu0 0
      %1049 = vmatprep.subr.bf16.mxu0 0
      %1050 = vmatpush1.bf16.msra.mxu0 0
      %1051 = vmatprep.subr.bf16.mxu0 0
      %1052 = vmatpush1.bf16.msra.mxu0 0
      %1053 = vmatprep.mubr.bf16.mxu0 0
      %1054 = vmatmul.mubr.bf16.gmra.mrb[0].mxu0 %v963
      %v1055 = vpop.f32.mrb[0].mxu0
      %v1056 = vadd.f32 %v1003, %v1055
      %v1057 = vpop.f32.mrb[0].mxu0
      %v1058 = vadd.f32 %v1005, %v1057
      %v1059 = vpop.f32.mrb[0].mxu0
      %v1060 = vadd.f32 %v1007, %v1059
      %v1061 = vpop.f32.mrb[0].mxu0
      %v1062 = vadd.f32 %v1009, %v1061
      %1063 = vmatprep.mubr.bf16.mxu0 0
      %1064 = vmatmul.mubr.bf16.gmra.mrb[0].mxu0 %v966
      %v1065 = vpop.f32.mrb[0].mxu0
      %v1066 = vadd.f32 %v1013, %v1065
      %v1067 = vpop.f32.mrb[0].mxu0
      %v1068 = vadd.f32 %v1015, %v1067
      %v1069 = vpop.f32.mrb[0].mxu0
      %v1070 = vadd.f32 %v1017, %v1069
      %v1071 = vpop.f32.mrb[0].mxu0
      %v1072 = vadd.f32 %v1019, %v1071
      %1073 = vdwg.mxu0
      %1074 = vmatprep.subr.bf16.mxu0 0
      %1075 = vmatpush1.bf16.msra.mxu0 %v855
      %1076 = vmatprep.subr.bf16.mxu0 0
      %1077 = vmatpush1.bf16.msra.mxu0 %v858
      %1078 = vmatprep.subr.bf16.mxu0 0
      %1079 = vmatpush1.bf16.msra.mxu0 %v861
      %1080 = vmatprep.subr.bf16.mxu0 0
      %1081 = vmatpush1.bf16.msra.mxu0 %v864
      %1082 = vmatprep.subr.bf16.mxu0 0
      %1083 = vmatpush1.bf16.msra.mxu0 %v867
      %1084 = vmatprep.subr.bf16.mxu0 0
      %1085 = vmatpush1.bf16.msra.mxu0 %v870
      %1086 = vmatprep.subr.bf16.mxu0 0
      %1087 = vmatpush1.bf16.msra.mxu0 %v873
      %1088 = vmatprep.subr.bf16.mxu0 0
      %1089 = vmatpush1.bf16.msra.mxu0 %v876
      %1090 = vmatprep.subr.bf16.mxu0 0
      %1091 = vmatpush1.bf16.msra.mxu0 %v879
      %1092 = vmatprep.subr.bf16.mxu0 0
      %1093 = vmatpush1.bf16.msra.mxu0 %v882
      %1094 = vmatprep.subr.bf16.mxu0 0
      %1095 = vmatpush1.bf16.msra.mxu0 %v885
      %1096 = vmatprep.subr.bf16.mxu0 0
      %1097 = vmatpush1.bf16.msra.mxu0 %v888
      %1098 = vmatprep.subr.bf16.mxu0 0
      %1099 = vmatpush1.bf16.msra.mxu0 %v891
      %1100 = vmatprep.subr.bf16.mxu0 0
      %1101 = vmatpush1.bf16.msra.mxu0 %v894
      %1102 = vmatprep.subr.bf16.mxu0 0
      %1103 = vmatpush1.bf16.msra.mxu0 %v897
      %1104 = vmatprep.subr.bf16.mxu0 0
      %1105 = vmatpush1.bf16.msra.mxu0 %v900
      %1106 = vmatprep.mubr.bf16.mxu0 %v952
      %1107 = vmatmul.mubr.bf16.gmra.mrb[0].mxu0 %v951
      %v1108 = vpop.f32.mrb[0].mxu0
      %v1109 = vadd.f32 %v914, %v1108
      %v1110 = vpop.f32.mrb[0].mxu0
      %v1111 = vpop.f32.mrb[0].mxu0
      %v1112 = vadd.f32 %v919, %v1111
      %v1113 = vpop.f32.mrb[0].mxu0
      %1114 = vmatprep.mubr.bf16.mxu0 %v955
      %1115 = vmatmul.mubr.bf16.gmra.mrb[0].mxu0 %v954
      %v1116 = vpop.f32.mrb[0].mxu0
      %v1117 = vadd.f32 %v924, %v1116
      %v1118 = vpop.f32.mrb[0].mxu0
      %v1119 = vpop.f32.mrb[0].mxu0
      %v1120 = vadd.f32 %v929, %v1119
      %v1121 = vpop.f32.mrb[0].mxu0
      %1122 = vdwg.mxu0
      %1123 = vmatprep.subr.bf16.mxu0 0
      %1124 = vmatpush1.bf16.msra.mxu0 %v903
      %1125 = vmatprep.subr.bf16.mxu0 0
      %1126 = vmatpush1.bf16.msra.mxu0 %v906
      %1127 = vmatprep.subr.bf16.mxu0 0
      %1128 = vmatpush1.bf16.msra.mxu0 0
      %1129 = vmatprep.subr.bf16.mxu0 0
      %1130 = vmatpush1.bf16.msra.mxu0 0
      %1131 = vmatprep.subr.bf16.mxu0 0
      %1132 = vmatpush1.bf16.msra.mxu0 0
      %1133 = vmatprep.subr.bf16.mxu0 0
      %1134 = vmatpush1.bf16.msra.mxu0 0
      %1135 = vmatprep.subr.bf16.mxu0 0
      %1136 = vmatpush1.bf16.msra.mxu0 0
      %1137 = vmatprep.subr.bf16.mxu0 0
      %1138 = vmatpush1.bf16.msra.mxu0 0
      %1139 = vmatprep.subr.bf16.mxu0 0
      %1140 = vmatpush1.bf16.msra.mxu0 0
      %1141 = vmatprep.subr.bf16.mxu0 0
      %1142 = vmatpush1.bf16.msra.mxu0 0
      %1143 = vmatprep.subr.bf16.mxu0 0
      %1144 = vmatpush1.bf16.msra.mxu0 0
      %1145 = vmatprep.subr.bf16.mxu0 0
      %1146 = vmatpush1.bf16.msra.mxu0 0
      %1147 = vmatprep.subr.bf16.mxu0 0
      %1148 = vmatpush1.bf16.msra.mxu0 0
      %1149 = vmatprep.subr.bf16.mxu0 0
      %1150 = vmatpush1.bf16.msra.mxu0 0
      %1151 = vmatprep.subr.bf16.mxu0 0
      %1152 = vmatpush1.bf16.msra.mxu0 0
      %1153 = vmatprep.subr.bf16.mxu0 0
      %1154 = vmatpush1.bf16.msra.mxu0 0
      %1155 = vmatprep.mubr.bf16.mxu0 0
      %1156 = vmatmul.mubr.bf16.gmra.mrb[0].mxu0 %v963
      %v1157 = vpop.f32.mrb[0].mxu0
      %v1158 = vadd.f32 %v1109, %v1157
      %v1159 = vpop.f32.mrb[0].mxu0
      %v1160 = vpop.f32.mrb[0].mxu0
      %v1161 = vadd.f32 %v1112, %v1160
      %v1162 = vpop.f32.mrb[0].mxu0
      %1163 = vmatprep.mubr.bf16.mxu0 0
      %1164 = vmatmul.mubr.bf16.gmra.mrb[0].mxu0 %v966
      %v1165 = vpop.f32.mrb[0].mxu0
      %v1166 = vadd.f32 %v1117, %v1165
      %v1167 = vpop.f32.mrb[0].mxu0
      %v1168 = vpop.f32.mrb[0].mxu0
      %v1169 = vadd.f32 %v1120, %v1168
      %v1170 = vpop.f32.mrb[0].mxu0
      %1171 = vdwg.mxu0
      %v1172 = vmax.f32 %v1056, 0.0
      %v1173 = vmax.f32 %v1058, 0.0
      %v1174 = vmax.f32 %v1158, 0.0
      %v1175 = vmax.f32 %v1060, 0.0
      %v1176 = vmax.f32 %v1062, 0.0
      %v1177 = vmax.f32 %v1161, 0.0
      %v1178 = vmax.f32 %v1066, 0.0
      %v1179 = vmax.f32 %v1068, 0.0
      %v1180 = vmax.f32 %v1166, 0.0
      %v1181 = vmax.f32 %v1070, 0.0
      %v1182 = vmax.f32 %v1072, 0.0
      %v1183 = vmax.f32 %v1169, 0.0
      %v1184 = vld [vmem:[%s3] sm:$0x7]
      %v1186 = vlaneseq
      %v1187 = vshrl.u32 %v1186, 7
      %v1188 = vsub.s32 0, %v1187
      %v1189 = vrot.slane %v1184, %v1188
      %v1190 = vlaneseq
      %v1191 = vshrl.u32 %v1190, 7
      %v1192 = vsub.s32 1, %v1191
      %v1193 = vrot.slane %v1184, %v1192
      %v1194 = vlaneseq
      %v1195 = vshrl.u32 %v1194, 7
      %v1196 = vsub.s32 2, %v1195
      %v1197 = vrot.slane %v1184, %v1196
      %v1201 = vmul.f32 %v1172, %v1189
      %v1202 = vmul.f32 %v1173, %v1193
      %v1203 = vmul.f32 %v1174, %v1197
      %v1204 = vmul.f32 %v1175, %v1189
      %v1205 = vmul.f32 %v1176, %v1193
      %v1206 = vmul.f32 %v1177, %v1197
      %v1207 = vmul.f32 %v1178, %v1189
      %v1208 = vmul.f32 %v1179, %v1193
      %v1209 = vmul.f32 %v1180, %v1197
      %v1210 = vmul.f32 %v1181, %v1189
      %v1211 = vmul.f32 %v1182, %v1193
      %v1212 = vmul.f32 %v1183, %v1197
      %v1213 = vpack.c.bf16 %v1204, %v1201
      %v1214 = vpack.c.bf16 %v1205, %v1202
      %v1215 = vpack.c.bf16 %v1206, %v1203
      %v1216 = vpack.c.bf16 %v1210, %v1207
      %v1217 = vpack.c.bf16 %v1211, %v1208
      %v1218 = vpack.c.bf16 %v1212, %v1209
      %v1225 = vunpack.c.l.b16 %v1213
      %v1226 = vunpack.c.l.b16 %v1214
      %v1227 = vunpack.c.l.b16 %v1215
      %v1228 = vunpack.c.h.b16 %v1213
      %v1229 = vunpack.c.h.b16 %v1214
      %v1230 = vunpack.c.h.b16 %v1215
      %v1231 = vunpack.c.l.b16 %v1216
      %v1232 = vunpack.c.l.b16 %v1217
      %v1233 = vunpack.c.l.b16 %v1218
      %v1234 = vunpack.c.h.b16 %v1216
      %v1235 = vunpack.c.h.b16 %v1217
      %v1236 = vunpack.c.h.b16 %v1218
      %v1237 = vpack.c.b16 %v1226, %v1225
      %v1238 = vpack.c.b16 %v1227, %v1227
      %v1239 = vpack.c.b16 %v1229, %v1228
      %v1240 = vpack.c.b16 %v1230, %v1230
      %v1241 = vpack.c.b16 %v1232, %v1231
      %v1242 = vpack.c.b16 %v1233, %v1233
      %v1243 = vpack.c.b16 %v1235, %v1234
      %v1244 = vpack.c.b16 %v1236, %v1236
      %1253 = vst [vmem:[%s197] sm:$0xff] %v1237
      %1254 = vst [vmem:[%s197 + $0x8] sm:$0xf] %v1238
      %1255 = vst [vmem:[%s197 + $0xc] sm:$0xff] %v1239
      %1256 = vst [vmem:[%s197 + $0x14] sm:$0xf] %v1240
      %1257 = vst [vmem:[%s197 + $0x18] sm:$0xff] %v1241
      %1258 = vst [vmem:[%s197 + $0x20] sm:$0xf] %v1242
      %1259 = vst [vmem:[%s197 + $0x24] sm:$0xff] %v1243
      %1260 = vst [vmem:[%s197 + $0x2c] sm:$0xf] %v1244
      %p1261 = scmp.lt.s32.totalorder %s15, 3
      %s1262 = scalar_select %p1261, %s15, 3
      %s1263 = smul.addr %s1262, 12
      %s1264 = smul.addr %s1263, 4
      %s1265 = scalar_lea.vmem %s4, %s1264
      // Predicated region
      $region37: #{transporter_forward.8} parent=35 // pred_check
        %p1266 = pneg %p122
      $region38: #{transporter_forward.8} parent=35 // pred_check_branch
        %1268 = sbr.rel (%p1266) target = $region40
      $region39: #{transporter_forward.8} parent=35 // pred_region
        _
      $region40: #{transporter_forward.8} parent=35 // pred_fallthru
        _
    $region36: #{transporter_forward.8} parent=5 // pred_fallthru
      _
    %p1269 = scmp.le.s32.totalorder 2, %s10
    // Predicated region
    $region41: #{transporter_forward.8} parent=5 // pred_check
      %p1270 = pneg %p1269
    $region42: #{transporter_forward.8} parent=5 // pred_check_branch
      %1272 = sbr.rel (%p1270) target = $region44
    $region43: #{transporter_forward.8} parent=5 // pred_region
      %s1273 = ssub.s32 %s10, 2
      // Predicated region
      $region45: #{transporter_forward.8} parent=43 // pred_check
        %p1274 = pneg %p128
      $region46: #{transporter_forward.8} parent=43 // pred_check_branch
        %1276 = sbr.rel (%p1274) target = $region48
      $region47: #{transporter_forward.8} parent=43 // pred_region
        %p1277 = scmp.lt.s32.totalorder %s16, 3
        %s1278 = scalar_select %p1277, %s16, 3
        %s1279 = smul.addr %s1278, 12
        %s1280 = smul.addr %s1279, 4
        %s1281 = scalar_lea.vmem %s4, %s1280
      $region48: #{transporter_forward.8} parent=43 // pred_fallthru
        _
    $region44: #{transporter_forward.8} parent=5 // pred_fallthru
      _
  $region6: #{transporter_forward.8} parent=0 // loop_footer
    %s14 = sadd.s32 1, %s10
  $region7: #{transporter_forward.8} parent=0 // loop_footer_branch
    %9 = sbr.rel target = $region3
  $region8: #{transporter_forward.8} parent=0 // loop_exit
    _

// kernel: transporter_forward.12
$region0: #{transporter_forward.12}
  #allocation0 [shape = 'u32[]', space=smem, size = 0x4, offset = 0x4, fixed_abs, tag = 'smem constant byte address 0x4 - core index']
  #allocation1 [shape = 'u32[144,128]{1,0:T(1,128)}', space=vmem, size = 0x12000, scoped, tag = 'internal scratch']
  #allocation2 [shape = 'bf16[288,384]{1,0:T(16,128)(2,1)}', space=vmem, size = 0x36000, scoped, tag = 'scratch operand']
  %s0 = inlined_call_operand.vmem [shape: bf16[2,32,512], index: 0, kind: input, shape index: {}]
  %s1 = inlined_call_operand.vmem [shape: bf16[32,288], index: 1, kind: input, shape index: {}]
  %s2 = inlined_call_operand.vmem [shape: f32[32,1], index: 2, kind: input, shape index: {}]
  %s3 = inlined_call_operand.vmem [shape: f32[1,384], index: 3, kind: input, shape index: {}]
  %s4 = inlined_call_operand.vmem [shape: bf16[2,32,384], index: 4, kind: output, shape index: {}]
  %s5 = sld [smem:[#allocation0]]
  $region49: #{transporter_forward.12} parent=0
    _
  %s7 = ssub.s32 1, %s5
  %s8 = scalar_select 0, %s7, %s5
  loop: start=0, step=1, limit=4
  $region2: #{transporter_forward.12} parent=0 // loop_pre_header
    _
  $region3: #{transporter_forward.12} parent=0 // loop_header
    %s10 = sphi 0, %s14
    %p11 = scmp.ge.s32.totalorder %s10, 4
    %s20 = sphi 0, %s22
    %s23 = sphi 0, %s20
    %s24 = sphi 0, %s23
    %s40 = sphi 0, %s24
    %s44 = sphi 0, %s44
    %s46 = sphi 0, %s44
    %s47 = sphi 0, %s46
    %s61 = sphi 0, %s47
    %s65 = sphi 0, %s65
    %s67 = sphi 0, %s65
    %s68 = sphi 0, %s67
    %s82 = sphi 0, %s68
    %s86 = sphi 0, %s86
    %s88 = sphi 0, %s86
    %s89 = sphi 0, %s88
    %s103 = sphi 0, %s89
    %s109 = sphi 0, %s111
    %s112 = sphi 0, %s109
    %s113 = sphi 0, %s112
    %s129 = sphi 0, %s113
  $region4: #{transporter_forward.12} parent=0 // loop_header_branch
    %13 = sbr.rel (%p11) target = $region8
  $region5: #{transporter_forward.12} parent=0 // loop_body
    %s15 = ssub.s32 %s10, 1
    %s16 = ssub.s32 %s10, 2
    %s17 = sadd.s32 %s10, 1
    %s18 = ssub.s32 %s10, %s17
    %p19 = scmp.eq.s32.totalorder %s18, 0
    %s21 = sadd.s32 %s20, 1
    %s22 = scalar_select %p19, %s20, %s21
    %p25 = pneg %p19
    %p26 = scmp.eq.s32.totalorder %s10, 1
    %p27 = por %p25, %p26
    %p28 = scmp.ne.s32.totalorder %s20, %s23
    %p29 = scmp.eq.s32.totalorder %s10, 0
    %p30 = por %p28, %p29
    %p31 = scmp.ne.s32.totalorder %s20, %s23
    %p32 = scmp.eq.s32.totalorder %s15, 1
    %p33 = por %p31, %p32
    %p34 = scmp.ne.s32.totalorder %s23, %s24
    %p35 = scmp.eq.s32.totalorder %s15, 0
    %p36 = por %p34, %p35
    %p37 = scmp.ne.s32.totalorder %s23, %s24
    %p38 = scmp.eq.s32.totalorder %s16, 1
    %p39 = por %p37, %p38
    %p41 = scmp.ne.s32.totalorder %s24, %s40
    %p42 = scmp.eq.s32.totalorder %s16, 0
    %p43 = por %p41, %p42
    %s45 = sadd.s32 %s44, 1
    %p48 = scmp.eq.s32.totalorder %s10, 1
    %p49 = scmp.ne.s32.totalorder %s44, %s46
    %p50 = scmp.eq.s32.totalorder %s10, 0
    %p51 = por %p49, %p50
    %p52 = scmp.ne.s32.totalorder %s44, %s46
    %p53 = scmp.eq.s32.totalorder %s15, 1
    %p54 = por %p52, %p53
    %p55 = scmp.ne.s32.totalorder %s46, %s47
    %p56 = scmp.eq.s32.totalorder %s15, 0
    %p57 = por %p55, %p56
    %p58 = scmp.ne.s32.totalorder %s46, %s47
    %p59 = scmp.eq.s32.totalorder %s16, 1
    %p60 = por %p58, %p59
    %p62 = scmp.ne.s32.totalorder %s47, %s61
    %p63 = scmp.eq.s32.totalorder %s16, 0
    %p64 = por %p62, %p63
    %s66 = sadd.s32 %s65, 1
    %p69 = scmp.eq.s32.totalorder %s10, 1
    %p70 = scmp.ne.s32.totalorder %s65, %s67
    %p71 = scmp.eq.s32.totalorder %s10, 0
    %p72 = por %p70, %p71
    %p73 = scmp.ne.s32.totalorder %s65, %s67
    %p74 = scmp.eq.s32.totalorder %s15, 1
    %p75 = por %p73, %p74
    %p76 = scmp.ne.s32.totalorder %s67, %s68
    %p77 = scmp.eq.s32.totalorder %s15, 0
    %p78 = por %p76, %p77
    %p79 = scmp.ne.s32.totalorder %s67, %s68
    %p80 = scmp.eq.s32.totalorder %s16, 1
    %p81 = por %p79, %p80
    %p83 = scmp.ne.s32.totalorder %s68, %s82
    %p84 = scmp.eq.s32.totalorder %s16, 0
    %p85 = por %p83, %p84
    %s87 = sadd.s32 %s86, 1
    %p90 = scmp.eq.s32.totalorder %s10, 1
    %p91 = scmp.ne.s32.totalorder %s86, %s88
    %p92 = scmp.eq.s32.totalorder %s10, 0
    %p93 = por %p91, %p92
    %p94 = scmp.ne.s32.totalorder %s86, %s88
    %p95 = scmp.eq.s32.totalorder %s15, 1
    %p96 = por %p94, %p95
    %p97 = scmp.ne.s32.totalorder %s88, %s89
    %p98 = scmp.eq.s32.totalorder %s15, 0
    %p99 = por %p97, %p98
    %p100 = scmp.ne.s32.totalorder %s88, %s89
    %p101 = scmp.eq.s32.totalorder %s16, 1
    %p102 = por %p100, %p101
    %p104 = scmp.ne.s32.totalorder %s89, %s103
    %p105 = scmp.eq.s32.totalorder %s16, 0
    %p106 = por %p104, %p105
    %s107 = ssub.s32 %s10, %s17
    %p108 = scmp.eq.s32.totalorder %s107, 0
    %s110 = sadd.s32 %s109, 1
    %s111 = scalar_select %p108, %s109, %s110
    %p114 = pneg %p108
    %p115 = scmp.eq.s32.totalorder %s10, 1
    %p116 = por %p114, %p115
    %p117 = scmp.ne.s32.totalorder %s109, %s112
    %p118 = scmp.eq.s32.totalorder %s10, 0
    %p119 = por %p117, %p118
    %p120 = scmp.ne.s32.totalorder %s109, %s112
    %p121 = scmp.eq.s32.totalorder %s15, 1
    %p122 = por %p120, %p121
    %p123 = scmp.ne.s32.totalorder %s112, %s113
    %p124 = scmp.eq.s32.totalorder %s15, 0
    %p125 = por %p123, %p124
    %p126 = scmp.ne.s32.totalorder %s112, %s113
    %p127 = scmp.eq.s32.totalorder %s16, 1
    %p128 = por %p126, %p127
    %p130 = scmp.ne.s32.totalorder %s113, %s129
    %p131 = scmp.eq.s32.totalorder %s16, 0
    %p132 = por %p130, %p131
    %p133 = scmp.le.s32.totalorder 1, %s10
    %p134 = scmp.lt.s32.totalorder %s10, 3
    %p135 = pnand %p133, %p134
    %p136 = pneg %p135
    // Predicated region
    $region9: #{transporter_forward.12} parent=5 // pred_check
      _
    $region10: #{transporter_forward.12} parent=5 // pred_check_branch
      %138 = sbr.rel (%p135) target = $region12
    $region11: #{transporter_forward.12} parent=5 // pred_region
      %s139 = ssub.s32 %s10, 1
      // Predicated region
      $region13: #{transporter_forward.12} parent=11 // pred_check
        %p140 = pneg %p57
      $region14: #{transporter_forward.12} parent=11 // pred_check_branch
        %142 = sbr.rel (%p140) target = $region16
      $region15: #{transporter_forward.12} parent=11 // pred_region
        _
      $region16: #{transporter_forward.12} parent=11 // pred_fallthru
        _
      // Predicated region
      $region17: #{transporter_forward.12} parent=11 // pred_check
        %p143 = pneg %p78
      $region18: #{transporter_forward.12} parent=11 // pred_check_branch
        %145 = sbr.rel (%p143) target = $region20
      $region19: #{transporter_forward.12} parent=11 // pred_region
        _
      $region20: #{transporter_forward.12} parent=11 // pred_fallthru
        _
      // Predicated region
      $region21: #{transporter_forward.12} parent=11 // pred_check
        %p146 = pneg %p99
      $region22: #{transporter_forward.12} parent=11 // pred_check_branch
        %148 = sbr.rel (%p146) target = $region24
      $region23: #{transporter_forward.12} parent=11 // pred_region
        _
      $region24: #{transporter_forward.12} parent=11 // pred_fallthru
        _
    $region12: #{transporter_forward.12} parent=5 // pred_fallthru
      _
    %p149 = scmp.lt.s32.totalorder %s10, 2
    // Predicated region
    $region25: #{transporter_forward.12} parent=5 // pred_check
      %p150 = pneg %p149
    $region26: #{transporter_forward.12} parent=5 // pred_check_branch
      %152 = sbr.rel (%p150) target = $region28
    $region27: #{transporter_forward.12} parent=5 // pred_region
      // Predicated region
      $region29: #{transporter_forward.12} parent=27 // pred_check
        %p153 = pneg %p30
      $region30: #{transporter_forward.12} parent=27 // pred_check_branch
        %155 = sbr.rel (%p153) target = $region32
      $region31: #{transporter_forward.12} parent=27 // pred_region
        %p156 = scmp.lt.s32.totalorder %s10, 1
        %s157 = scalar_select %p156, %s10, 1
        %s158 = smul.addr %s157, 16
        %s159 = smul.addr %s158, 4
        %s160 = scalar_lea.vmem %s0, %s159
      $region32: #{transporter_forward.12} parent=27 // pred_fallthru
        _
    $region28: #{transporter_forward.12} parent=5 // pred_fallthru
      _
    %p161 = scmp.le.s32.totalorder 1, %s10
    %p162 = scmp.lt.s32.totalorder %s10, 3
    %p163 = pnand %p161, %p162
    %p164 = pneg %p163
    // Predicated region
    $region33: #{transporter_forward.12} parent=5 // pred_check
      _
    $region34: #{transporter_forward.12} parent=5 // pred_check_branch
      %166 = sbr.rel (%p163) target = $region36
    $region35: #{transporter_forward.12} parent=5 // pred_region
      %s167 = ssub.s32 %s10, 1
      %p168 = scmp.lt.s32.totalorder %s15, 1
      %s169 = scalar_select %p168, %s15, 1
      %s170 = smul.addr %s169, 16
      %s171 = smul.addr %s170, 4
      %s172 = scalar_lea.vmem %s0, %s171
      %p173 = pneg %p36
      %p174 = pneg %p33
      %p175 = pneg %p57
      %p176 = pneg %p54
      %p177 = pneg %p78
      %p178 = pneg %p75
      %p179 = pneg %p99
      %p180 = pneg %p96
      %p181 = pneg %p125
      %p182 = pneg %p122
      %p183 = scmp.lt.s32.totalorder %s15, 1
      %s184 = scalar_select %p183, %s15, 1
      %s185 = smul.addr %s184, 12
      %s186 = smul.addr %s185, 4
      %s187 = scalar_lea.vmem %s4, %s186
      %p188 = scmp.lt.s32.totalorder %s15, 1
      %s189 = scalar_select %p188, %s15, 1
      %s190 = smul.addr %s189, 16
      %s191 = smul.addr %s190, 4
      %s192 = scalar_lea.vmem %s0, %s191
      %p193 = scmp.lt.s32.totalorder %s15, 1
      %s194 = scalar_select %p193, %s15, 1
      %s195 = smul.addr %s194, 12
      %s196 = smul.addr %s195, 4
      %s197 = scalar_lea.vmem %s4, %s196
      %v199 = vld [vmem:[%s192] sm:$0xff]
      %v200 = vld [vmem:[%s192 + $0x8] sm:$0xf]
      %v201 = vld [vmem:[%s192 + $0x10] sm:$0xff]
      %v202 = vld [vmem:[%s192 + $0x18] sm:$0xf]
      %v203 = vld [vmem:[%s192 + $0x20] sm:$0xff]
      %v204 = vld [vmem:[%s192 + $0x28] sm:$0xf]
      %v205 = vld [vmem:[%s192 + $0x30] sm:$0xff]
      %v206 = vld [vmem:[%s192 + $0x38] sm:$0xf]
      %v215 = vunpack.c.l.b16 %v199
      %v216 = vunpack.c.h.b16 %v199
      %v217 = vunpack.c.l.b16 %v200
      %v218 = vunpack.c.l.b16 %v201
      %v219 = vunpack.c.h.b16 %v201
      %v220 = vunpack.c.l.b16 %v202
      %v221 = vunpack.c.l.b16 %v203
      %v222 = vunpack.c.h.b16 %v203
      %v223 = vunpack.c.l.b16 %v204
      %v224 = vunpack.c.l.b16 %v205
      %v225 = vunpack.c.h.b16 %v205
      %v226 = vunpack.c.l.b16 %v206
      %v227 = vpack.c.b16 %v218, %v215
      %v228 = vpack.c.b16 %v219, %v216
      %v229 = vpack.c.b16 %v220, %v217
      %v230 = vpack.c.b16 %v224, %v221
      %v231 = vpack.c.b16 %v225, %v222
      %v232 = vpack.c.b16 %v226, %v223
      %239 = vst [vmem:[#allocation2] sm:$0xff] %v227
      %240 = vst [vmem:[#allocation2 + $0x8] sm:$0xff] %v228
      %241 = vst [vmem:[#allocation2 + $0x10] sm:$0xff] %v229
      %242 = vst [vmem:[#allocation2 + $0x18] sm:$0xff] %v230
      %243 = vst [vmem:[#allocation2 + $0x20] sm:$0xff] %v231
      %244 = vst [vmem:[#allocation2 + $0x28] sm:$0xff] %v232
      %v245 = vld [vmem:[%s192] sm:$0xff]
      %v246 = vld [vmem:[%s192 + $0x8] sm:$0xff]
      %v247 = vld [vmem:[%s192 + $0x10] sm:$0xff]
      %v248 = vld [vmem:[%s192 + $0x18] sm:$0xff]
      %v249 = vld [vmem:[%s192 + $0x20] sm:$0xff]
      %v250 = vld [vmem:[%s192 + $0x28] sm:$0xff]
      %v251 = vld [vmem:[%s192 + $0x30] sm:$0xff]
      %v252 = vld [vmem:[%s192 + $0x38] sm:$0xff]
      %v261 = vunpack.c.l.b16 %v245
      %v262 = vunpack.c.h.b16 %v245
      %v263 = vunpack.c.l.b16 %v246
      %v264 = vunpack.c.h.b16 %v246
      %v265 = vunpack.c.l.b16 %v247
      %v266 = vunpack.c.h.b16 %v247
      %v267 = vunpack.c.l.b16 %v248
      %v268 = vunpack.c.h.b16 %v248
      %v269 = vunpack.c.l.b16 %v249
      %v270 = vunpack.c.h.b16 %v249
      %v271 = vunpack.c.l.b16 %v250
      %v272 = vunpack.c.h.b16 %v250
      %v273 = vunpack.c.l.b16 %v251
      %v274 = vunpack.c.h.b16 %v251
      %v275 = vunpack.c.l.b16 %v252
      %v276 = vunpack.c.h.b16 %v252
      %v277 = vpack.c.b16 %v265, %v261
      %v278 = vpack.c.b16 %v266, %v262
      %v279 = vpack.c.b16 %v267, %v263
      %v280 = vpack.c.b16 %v268, %v264
      %v281 = vpack.c.b16 %v273, %v269
      %v282 = vpack.c.b16 %v274, %v270
      %v283 = vpack.c.b16 %v275, %v271
      %v284 = vpack.c.b16 %v276, %v272
      %285 = vrot.lane.b32.xlu0 %v277, 127
      %v286 = vpop.permute.xlu0 %285
      %287 = vrot.lane.b32.xlu0 %v278, 127
      %v288 = vpop.permute.xlu0 %287
      %289 = vrot.lane.b32.xlu0 %v279, 127
      %v290 = vpop.permute.xlu0 %289
      %291 = vrot.lane.b32.xlu0 %v280, 127
      %v292 = vpop.permute.xlu0 %291
      %293 = vrot.lane.b32.xlu0 %v281, 127
      %v294 = vpop.permute.xlu0 %293
      %295 = vrot.lane.b32.xlu0 %v282, 127
      %v296 = vpop.permute.xlu0 %295
      %297 = vrot.lane.b32.xlu0 %v283, 127
      %v298 = vpop.permute.xlu0 %297
      %299 = vrot.lane.b32.xlu0 %v284, 127
      %v300 = vpop.permute.xlu0 %299
      %vm301 = vcmask 1039360
      %v302 = vsel %vm301, %v286, %v288
      %v303 = vsel %vm301, %v288, %v290
      %v304 = vsel %vm301, %v290, %v292
      %v305 = vsel %vm301, %v294, %v296
      %v306 = vsel %vm301, %v296, %v298
      %v307 = vsel %vm301, %v298, %v300
      %314 = vst [vmem:[#allocation2 + $0x30] sm:$0xff] %v302
      %315 = vst [vmem:[#allocation2 + $0x38] sm:$0xff] %v303
      %316 = vst [vmem:[#allocation2 + $0x40] sm:$0xff] %v304
      %317 = vst [vmem:[#allocation2 + $0x48] sm:$0xff] %v305
      %318 = vst [vmem:[#allocation2 + $0x50] sm:$0xff] %v306
      %319 = vst [vmem:[#allocation2 + $0x58] sm:$0xff] %v307
      %v320 = vld [vmem:[%s192] sm:$0xff]
      %v321 = vld [vmem:[%s192 + $0x8] sm:$0xff]
      %v322 = vld [vmem:[%s192 + $0x10] sm:$0xff]
      %v323 = vld [vmem:[%s192 + $0x18] sm:$0xff]
      %v324 = vld [vmem:[%s192 + $0x20] sm:$0xff]
      %v325 = vld [vmem:[%s192 + $0x28] sm:$0xff]
      %v326 = vld [vmem:[%s192 + $0x30] sm:$0xff]
      %v327 = vld [vmem:[%s192 + $0x38] sm:$0xff]
      %v336 = vunpack.c.l.b16 %v320
      %v337 = vunpack.c.h.b16 %v320
      %v338 = vunpack.c.l.b16 %v321
      %v339 = vunpack.c.h.b16 %v321
      %v340 = vunpack.c.l.b16 %v322
      %v341 = vunpack.c.h.b16 %v322
      %v342 = vunpack.c.l.b16 %v323
      %v343 = vunpack.c.h.b16 %v323
      %v344 = vunpack.c.l.b16 %v324
      %v345 = vunpack.c.h.b16 %v324
      %v346 = vunpack.c.l.b16 %v325
      %v347 = vunpack.c.h.b16 %v325
      %v348 = vunpack.c.l.b16 %v326
      %v349 = vunpack.c.h.b16 %v326
      %v350 = vunpack.c.l.b16 %v327
      %v351 = vunpack.c.h.b16 %v327
      %v352 = vpack.c.b16 %v340, %v336
      %v353 = vpack.c.b16 %v341, %v337
      %v354 = vpack.c.b16 %v342, %v338
      %v355 = vpack.c.b16 %v343, %v339
      %v356 = vpack.c.b16 %v348, %v344
      %v357 = vpack.c.b16 %v349, %v345
      %v358 = vpack.c.b16 %v350, %v346
      %v359 = vpack.c.b16 %v351, %v347
      %360 = vrot.lane.b32.xlu0 %v352, 126
      %v361 = vpop.permute.xlu0 %360
      %362 = vrot.lane.b32.xlu0 %v353, 126
      %v363 = vpop.permute.xlu0 %362
      %364 = vrot.lane.b32.xlu0 %v354, 126
      %v365 = vpop.permute.xlu0 %364
      %366 = vrot.lane.b32.xlu0 %v355, 126
      %v367 = vpop.permute.xlu0 %366
      %368 = vrot.lane.b32.xlu0 %v356, 126
      %v369 = vpop.permute.xlu0 %368
      %370 = vrot.lane.b32.xlu0 %v357, 126
      %v371 = vpop.permute.xlu0 %370
      %372 = vrot.lane.b32.xlu0 %v358, 126
      %v373 = vpop.permute.xlu0 %372
      %374 = vrot.lane.b32.xlu0 %v359, 126
      %v375 = vpop.permute.xlu0 %374
      %vm376 = vcmask 1031168
      %v377 = vsel %vm376, %v361, %v363
      %v378 = vsel %vm376, %v363, %v365
      %v379 = vsel %vm376, %v365, %v367
      %v380 = vsel %vm376, %v369, %v371
      %v381 = vsel %vm376, %v371, %v373
      %v382 = vsel %vm376, %v373, %v375
      %389 = vst [vmem:[#allocation2 + $0x60] sm:$0xff] %v377
      %390 = vst [vmem:[#allocation2 + $0x68] sm:$0xff] %v378
      %391 = vst [vmem:[#allocation2 + $0x70] sm:$0xff] %v379
      %392 = vst [vmem:[#allocation2 + $0x78] sm:$0xff] %v380
      %393 = vst [vmem:[#allocation2 + $0x80] sm:$0xff] %v381
      %394 = vst [vmem:[#allocation2 + $0x88] sm:$0xff] %v382
      %v395 = vld [vmem:[%s192] sm:$0xff]
      %v396 = vld [vmem:[%s192 + $0x8] sm:$0xff]
      %v397 = vld [vmem:[%s192 + $0x10] sm:$0xff]
      %v398 = vld [vmem:[%s192 + $0x18] sm:$0xff]
      %v399 = vld [vmem:[%s192 + $0x20] sm:$0xff]
      %v400 = vld [vmem:[%s192 + $0x28] sm:$0xff]
      %v401 = vld [vmem:[%s192 + $0x30] sm:$0xff]
      %v402 = vld [vmem:[%s192 + $0x38] sm:$0xff]
      %v411 = vunpack.c.l.b16 %v395
      %v412 = vunpack.c.h.b16 %v395
      %v413 = vunpack.c.l.b16 %v396
      %v414 = vunpack.c.h.b16 %v396
      %v415 = vunpack.c.l.b16 %v397
      %v416 = vunpack.c.h.b16 %v397
      %v417 = vunpack.c.l.b16 %v398
      %v418 = vunpack.c.h.b16 %v398
      %v419 = vunpack.c.l.b16 %v399
      %v420 = vunpack.c.h.b16 %v399
      %v421 = vunpack.c.l.b16 %v400
      %v422 = vunpack.c.h.b16 %v400
      %v423 = vunpack.c.l.b16 %v401
      %v424 = vunpack.c.h.b16 %v401
      %v425 = vunpack.c.l.b16 %v402
      %v426 = vunpack.c.h.b16 %v402
      %v427 = vpack.c.b16 %v415, %v411
      %v428 = vpack.c.b16 %v416, %v412
      %v429 = vpack.c.b16 %v417, %v413
      %v430 = vpack.c.b16 %v418, %v414
      %v431 = vpack.c.b16 %v423, %v419
      %v432 = vpack.c.b16 %v424, %v420
      %v433 = vpack.c.b16 %v425, %v421
      %v434 = vpack.c.b16 %v426, %v422
      %435 = vrot.lane.b32.xlu0 %v427, 110
      %v436 = vpop.permute.xlu0 %435
      %437 = vrot.lane.b32.xlu0 %v428, 110
      %v438 = vpop.permute.xlu0 %437
      %439 = vrot.lane.b32.xlu0 %v429, 110
      %v440 = vpop.permute.xlu0 %439
      %441 = vrot.lane.b32.xlu0 %v430, 110
      %v442 = vpop.permute.xlu0 %441
      %443 = vrot.lane.b32.xlu0 %v431, 110
      %v444 = vpop.permute.xlu0 %443
      %445 = vrot.lane.b32.xlu0 %v432, 110
      %v446 = vpop.permute.xlu0 %445
      %447 = vrot.lane.b32.xlu0 %v433, 110
      %v448 = vpop.permute.xlu0 %447
      %449 = vrot.lane.b32.xlu0 %v434, 110
      %v450 = vpop.permute.xlu0 %449
      %vm451 = vcmask 900096
      %v452 = vsel %vm451, %v436, %v438
      %v453 = vsel %vm451, %v438, %v440
      %v454 = vsel %vm451, %v440, %v442
      %v455 = vsel %vm451, %v444, %v446
      %v456 = vsel %vm451, %v446, %v448
      %v457 = vsel %vm451, %v448, %v450
      %464 = vst [vmem:[#allocation2 + $0x90] sm:$0xff] %v452
      %465 = vst [vmem:[#allocation2 + $0x98] sm:$0xff] %v453
      %466 = vst [vmem:[#allocation2 + $0xa0] sm:$0xff] %v454
      %467 = vst [vmem:[#allocation2 + $0xa8] sm:$0xff] %v455
      %468 = vst [vmem:[#allocation2 + $0xb0] sm:$0xff] %v456
      %469 = vst [vmem:[#allocation2 + $0xb8] sm:$0xff] %v457
      %v470 = vld [vmem:[%s192] sm:$0xff]
      %v471 = vld [vmem:[%s192 + $0x8] sm:$0xff]
      %v472 = vld [vmem:[%s192 + $0x10] sm:$0xff]
      %v473 = vld [vmem:[%s192 + $0x18] sm:$0xff]
      %v474 = vld [vmem:[%s192 + $0x20] sm:$0xff]
      %v475 = vld [vmem:[%s192 + $0x28] sm:$0xff]
      %v476 = vld [vmem:[%s192 + $0x30] sm:$0xff]
      %v477 = vld [vmem:[%s192 + $0x38] sm:$0xff]
      %v486 = vunpack.c.l.b16 %v470
      %v487 = vunpack.c.h.b16 %v470
      %v488 = vunpack.c.l.b16 %v471
      %v489 = vunpack.c.h.b16 %v471
      %v490 = vunpack.c.l.b16 %v472
      %v491 = vunpack.c.h.b16 %v472
      %v492 = vunpack.c.l.b16 %v473
      %v493 = vunpack.c.h.b16 %v473
      %v494 = vunpack.c.l.b16 %v474
      %v495 = vunpack.c.h.b16 %v474
      %v496 = vunpack.c.l.b16 %v475
      %v497 = vunpack.c.h.b16 %v475
      %v498 = vunpack.c.l.b16 %v476
      %v499 = vunpack.c.h.b16 %v476
      %v500 = vunpack.c.l.b16 %v477
      %v501 = vunpack.c.h.b16 %v477
      %v502 = vpack.c.b16 %v490, %v486
      %v503 = vpack.c.b16 %v491, %v487
      %v504 = vpack.c.b16 %v492, %v488
      %v505 = vpack.c.b16 %v493, %v489
      %v506 = vpack.c.b16 %v498, %v494
      %v507 = vpack.c.b16 %v499, %v495
      %v508 = vpack.c.b16 %v500, %v496
      %v509 = vpack.c.b16 %v501, %v497
      %510 = vrot.lane.b32.xlu0 %v502, 109
      %v511 = vpop.permute.xlu0 %510
      %512 = vrot.lane.b32.xlu0 %v503, 109
      %v513 = vpop.permute.xlu0 %512
      %514 = vrot.lane.b32.xlu0 %v504, 109
      %v515 = vpop.permute.xlu0 %514
      %516 = vrot.lane.b32.xlu0 %v505, 109
      %v517 = vpop.permute.xlu0 %516
      %518 = vrot.lane.b32.xlu0 %v506, 109
      %v519 = vpop.permute.xlu0 %518
      %520 = vrot.lane.b32.xlu0 %v507, 109
      %v521 = vpop.permute.xlu0 %520
      %522 = vrot.lane.b32.xlu0 %v508, 109
      %v523 = vpop.permute.xlu0 %522
      %524 = vrot.lane.b32.xlu0 %v509, 109
      %v525 = vpop.permute.xlu0 %524
      %vm526 = vcmask 891904
      %v527 = vsel %vm526, %v511, %v513
      %v528 = vsel %vm526, %v513, %v515
      %v529 = vsel %vm526, %v515, %v517
      %v530 = vsel %vm526, %v519, %v521
      %v531 = vsel %vm526, %v521, %v523
      %v532 = vsel %vm526, %v523, %v525
      %539 = vst [vmem:[#allocation2 + $0xc0] sm:$0xff] %v527
      %540 = vst [vmem:[#allocation2 + $0xc8] sm:$0xff] %v528
      %541 = vst [vmem:[#allocation2 + $0xd0] sm:$0xff] %v529
      %542 = vst [vmem:[#allocation2 + $0xd8] sm:$0xff] %v530
      %543 = vst [vmem:[#allocation2 + $0xe0] sm:$0xff] %v531
      %544 = vst [vmem:[#allocation2 + $0xe8] sm:$0xff] %v532
      %v545 = vld [vmem:[%s192] sm:$0xff]
      %v546 = vld [vmem:[%s192 + $0x8] sm:$0xff]
      %v547 = vld [vmem:[%s192 + $0x10] sm:$0xff]
      %v548 = vld [vmem:[%s192 + $0x18] sm:$0xff]
      %v549 = vld [vmem:[%s192 + $0x20] sm:$0xff]
      %v550 = vld [vmem:[%s192 + $0x28] sm:$0xff]
      %v551 = vld [vmem:[%s192 + $0x30] sm:$0xff]
      %v552 = vld [vmem:[%s192 + $0x38] sm:$0xff]
      %v561 = vunpack.c.l.b16 %v545
      %v562 = vunpack.c.h.b16 %v545
      %v563 = vunpack.c.l.b16 %v546
      %v564 = vunpack.c.h.b16 %v546
      %v565 = vunpack.c.l.b16 %v547
      %v566 = vunpack.c.h.b16 %v547
      %v567 = vunpack.c.l.b16 %v548
      %v568 = vunpack.c.h.b16 %v548
      %v569 = vunpack.c.l.b16 %v549
      %v570 = vunpack.c.h.b16 %v549
      %v571 = vunpack.c.l.b16 %v550
      %v572 = vunpack.c.h.b16 %v550
      %v573 = vunpack.c.l.b16 %v551
      %v574 = vunpack.c.h.b16 %v551
      %v575 = vunpack.c.l.b16 %v552
      %v576 = vunpack.c.h.b16 %v552
      %v577 = vpack.c.b16 %v565, %v561
      %v578 = vpack.c.b16 %v566, %v562
      %v579 = vpack.c.b16 %v567, %v563
      %v580 = vpack.c.b16 %v568, %v564
      %v581 = vpack.c.b16 %v573, %v569
      %v582 = vpack.c.b16 %v574, %v570
      %v583 = vpack.c.b16 %v575, %v571
      %v584 = vpack.c.b16 %v576, %v572
      %585 = vrot.lane.b32.xlu0 %v577, 108
      %v586 = vpop.permute.xlu0 %585
      %587 = vrot.lane.b32.xlu0 %v578, 108
      %v588 = vpop.permute.xlu0 %587
      %589 = vrot.lane.b32.xlu0 %v579, 108
      %v590 = vpop.permute.xlu0 %589
      %591 = vrot.lane.b32.xlu0 %v580, 108
      %v592 = vpop.permute.xlu0 %591
      %593 = vrot.lane.b32.xlu0 %v581, 108
      %v594 = vpop.permute.xlu0 %593
      %595 = vrot.lane.b32.xlu0 %v582, 108
      %v596 = vpop.permute.xlu0 %595
      %597 = vrot.lane.b32.xlu0 %v583, 108
      %v598 = vpop.permute.xlu0 %597
      %599 = vrot.lane.b32.xlu0 %v584, 108
      %v600 = vpop.permute.xlu0 %599
      %vm601 = vcmask 883712
      %v602 = vsel %vm601, %v586, %v588
      %v603 = vsel %vm601, %v588, %v590
      %v604 = vsel %vm601, %v590, %v592
      %v605 = vsel %vm601, %v594, %v596
      %v606 = vsel %vm601, %v596, %v598
      %v607 = vsel %vm601, %v598, %v600
      %614 = vst [vmem:[#allocation2 + $0xf0] sm:$0xff] %v602
      %615 = vst [vmem:[#allocation2 + $0xf8] sm:$0xff] %v603
      %616 = vst [vmem:[#allocation2 + $0x100] sm:$0xff] %v604
      %617 = vst [vmem:[#allocation2 + $0x108] sm:$0xff] %v605
      %618 = vst [vmem:[#allocation2 + $0x110] sm:$0xff] %v606
      %619 = vst [vmem:[#allocation2 + $0x118] sm:$0xff] %v607
      %v620 = vld [vmem:[%s192] sm:$0xff]
      %v621 = vld [vmem:[%s192 + $0x8] sm:$0xff]
      %v622 = vld [vmem:[%s192 + $0x10] sm:$0xff]
      %v623 = vld [vmem:[%s192 + $0x18] sm:$0xff]
      %v624 = vld [vmem:[%s192 + $0x20] sm:$0xff]
      %v625 = vld [vmem:[%s192 + $0x28] sm:$0xff]
      %v626 = vld [vmem:[%s192 + $0x30] sm:$0xff]
      %v627 = vld [vmem:[%s192 + $0x38] sm:$0xff]
      %v636 = vunpack.c.l.b16 %v620
      %v637 = vunpack.c.h.b16 %v620
      %v638 = vunpack.c.l.b16 %v621
      %v639 = vunpack.c.h.b16 %v621
      %v640 = vunpack.c.l.b16 %v622
      %v641 = vunpack.c.h.b16 %v622
      %v642 = vunpack.c.l.b16 %v623
      %v643 = vunpack.c.h.b16 %v623
      %v644 = vunpack.c.l.b16 %v624
      %v645 = vunpack.c.h.b16 %v624
      %v646 = vunpack.c.l.b16 %v625
      %v647 = vunpack.c.h.b16 %v625
      %v648 = vunpack.c.l.b16 %v626
      %v649 = vunpack.c.h.b16 %v626
      %v650 = vunpack.c.l.b16 %v627
      %v651 = vunpack.c.h.b16 %v627
      %v652 = vpack.c.b16 %v640, %v636
      %v653 = vpack.c.b16 %v641, %v637
      %v654 = vpack.c.b16 %v642, %v638
      %v655 = vpack.c.b16 %v643, %v639
      %v656 = vpack.c.b16 %v648, %v644
      %v657 = vpack.c.b16 %v649, %v645
      %v658 = vpack.c.b16 %v650, %v646
      %v659 = vpack.c.b16 %v651, %v647
      %660 = vrot.lane.b32.xlu0 %v652, 92
      %v661 = vpop.permute.xlu0 %660
      %662 = vrot.lane.b32.xlu0 %v653, 92
      %v663 = vpop.permute.xlu0 %662
      %664 = vrot.lane.b32.xlu0 %v654, 92
      %v665 = vpop.permute.xlu0 %664
      %666 = vrot.lane.b32.xlu0 %v655, 92
      %v667 = vpop.permute.xlu0 %666
      %668 = vrot.lane.b32.xlu0 %v656, 92
      %v669 = vpop.permute.xlu0 %668
      %670 = vrot.lane.b32.xlu0 %v657, 92
      %v671 = vpop.permute.xlu0 %670
      %672 = vrot.lane.b32.xlu0 %v658, 92
      %v673 = vpop.permute.xlu0 %672
      %674 = vrot.lane.b32.xlu0 %v659, 92
      %v675 = vpop.permute.xlu0 %674
      %vm676 = vcmask 752640
      %v677 = vsel %vm676, %v661, %v663
      %v678 = vsel %vm676, %v663, %v665
      %v679 = vsel %vm676, %v665, %v667
      %v680 = vsel %vm676, %v669, %v671
      %v681 = vsel %vm676, %v671, %v673
      %v682 = vsel %vm676, %v673, %v675
      %689 = vst [vmem:[#allocation2 + $0x120] sm:$0xff] %v677
      %690 = vst [vmem:[#allocation2 + $0x128] sm:$0xff] %v678
      %691 = vst [vmem:[#allocation2 + $0x130] sm:$0xff] %v679
      %692 = vst [vmem:[#allocation2 + $0x138] sm:$0xff] %v680
      %693 = vst [vmem:[#allocation2 + $0x140] sm:$0xff] %v681
      %694 = vst [vmem:[#allocation2 + $0x148] sm:$0xff] %v682
      %v695 = vld [vmem:[%s192] sm:$0xff]
      %v696 = vld [vmem:[%s192 + $0x8] sm:$0xff]
      %v697 = vld [vmem:[%s192 + $0x10] sm:$0xff]
      %v698 = vld [vmem:[%s192 + $0x18] sm:$0xff]
      %v699 = vld [vmem:[%s192 + $0x20] sm:$0xff]
      %v700 = vld [vmem:[%s192 + $0x28] sm:$0xff]
      %v701 = vld [vmem:[%s192 + $0x30] sm:$0xff]
      %v702 = vld [vmem:[%s192 + $0x38] sm:$0xff]
      %v711 = vunpack.c.l.b16 %v695
      %v712 = vunpack.c.h.b16 %v695
      %v713 = vunpack.c.l.b16 %v696
      %v714 = vunpack.c.h.b16 %v696
      %v715 = vunpack.c.l.b16 %v697
      %v716 = vunpack.c.h.b16 %v697
      %v717 = vunpack.c.l.b16 %v698
      %v718 = vunpack.c.h.b16 %v698
      %v719 = vunpack.c.l.b16 %v699
      %v720 = vunpack.c.h.b16 %v699
      %v721 = vunpack.c.l.b16 %v700
      %v722 = vunpack.c.h.b16 %v700
      %v723 = vunpack.c.l.b16 %v701
      %v724 = vunpack.c.h.b16 %v701
      %v725 = vunpack.c.l.b16 %v702
      %v726 = vunpack.c.h.b16 %v702
      %v727 = vpack.c.b16 %v715, %v711
      %v728 = vpack.c.b16 %v716, %v712
      %v729 = vpack.c.b16 %v717, %v713
      %v730 = vpack.c.b16 %v718, %v714
      %v731 = vpack.c.b16 %v723, %v719
      %v732 = vpack.c.b16 %v724, %v720
      %v733 = vpack.c.b16 %v725, %v721
      %v734 = vpack.c.b16 %v726, %v722
      %735 = vrot.lane.b32.xlu0 %v727, 91
      %v736 = vpop.permute.xlu0 %735
      %737 = vrot.lane.b32.xlu0 %v728, 91
      %v738 = vpop.permute.xlu0 %737
      %739 = vrot.lane.b32.xlu0 %v729, 91
      %v740 = vpop.permute.xlu0 %739
      %741 = vrot.lane.b32.xlu0 %v730, 91
      %v742 = vpop.permute.xlu0 %741
      %743 = vrot.lane.b32.xlu0 %v731, 91
      %v744 = vpop.permute.xlu0 %743
      %745 = vrot.lane.b32.xlu0 %v732, 91
      %v746 = vpop.permute.xlu0 %745
      %747 = vrot.lane.b32.xlu0 %v733, 91
      %v748 = vpop.permute.xlu0 %747
      %749 = vrot.lane.b32.xlu0 %v734, 91
      %v750 = vpop.permute.xlu0 %749
      %vm751 = vcmask 744448
      %v752 = vsel %vm751, %v736, %v738
      %v753 = vsel %vm751, %v738, %v740
      %v754 = vsel %vm751, %v740, %v742
      %v755 = vsel %vm751, %v744, %v746
      %v756 = vsel %vm751, %v746, %v748
      %v757 = vsel %vm751, %v748, %v750
      %764 = vst [vmem:[#allocation2 + $0x150] sm:$0xff] %v752
      %765 = vst [vmem:[#allocation2 + $0x158] sm:$0xff] %v753
      %766 = vst [vmem:[#allocation2 + $0x160] sm:$0xff] %v754
      %767 = vst [vmem:[#allocation2 + $0x168] sm:$0xff] %v755
      %768 = vst [vmem:[#allocation2 + $0x170] sm:$0xff] %v756
      %769 = vst [vmem:[#allocation2 + $0x178] sm:$0xff] %v757
      %v770 = vld [vmem:[%s192] sm:$0xff]
      %v771 = vld [vmem:[%s192 + $0x8] sm:$0xff]
      %v772 = vld [vmem:[%s192 + $0x10] sm:$0xff]
      %v773 = vld [vmem:[%s192 + $0x18] sm:$0xff]
      %v774 = vld [vmem:[%s192 + $0x20] sm:$0xff]
      %v775 = vld [vmem:[%s192 + $0x28] sm:$0xff]
      %v776 = vld [vmem:[%s192 + $0x30] sm:$0xff]
      %v777 = vld [vmem:[%s192 + $0x38] sm:$0xff]
      %v786 = vunpack.c.l.b16 %v770
      %v787 = vunpack.c.h.b16 %v770
      %v788 = vunpack.c.l.b16 %v771
      %v789 = vunpack.c.h.b16 %v771
      %v790 = vunpack.c.l.b16 %v772
      %v791 = vunpack.c.h.b16 %v772
      %v792 = vunpack.c.l.b16 %v773
      %v793 = vunpack.c.h.b16 %v773
      %v794 = vunpack.c.l.b16 %v774
      %v795 = vunpack.c.h.b16 %v774
      %v796 = vunpack.c.l.b16 %v775
      %v797 = vunpack.c.h.b16 %v775
      %v798 = vunpack.c.l.b16 %v776
      %v799 = vunpack.c.h.b16 %v776
      %v800 = vunpack.c.l.b16 %v777
      %v801 = vunpack.c.h.b16 %v777
      %v802 = vpack.c.b16 %v790, %v786
      %v803 = vpack.c.b16 %v791, %v787
      %v804 = vpack.c.b16 %v792, %v788
      %v805 = vpack.c.b16 %v793, %v789
      %v806 = vpack.c.b16 %v798, %v794
      %v807 = vpack.c.b16 %v799, %v795
      %v808 = vpack.c.b16 %v800, %v796
      %v809 = vpack.c.b16 %v801, %v797
      %810 = vrot.lane.b32.xlu0 %v802, 90
      %v811 = vpop.permute.xlu0 %810
      %812 = vrot.lane.b32.xlu0 %v803, 90
      %v813 = vpop.permute.xlu0 %812
      %814 = vrot.lane.b32.xlu0 %v804, 90
      %v815 = vpop.permute.xlu0 %814
      %816 = vrot.lane.b32.xlu0 %v805, 90
      %v817 = vpop.permute.xlu0 %816
      %818 = vrot.lane.b32.xlu0 %v806, 90
      %v819 = vpop.permute.xlu0 %818
      %820 = vrot.lane.b32.xlu0 %v807, 90
      %v821 = vpop.permute.xlu0 %820
      %822 = vrot.lane.b32.xlu0 %v808, 90
      %v823 = vpop.permute.xlu0 %822
      %824 = vrot.lane.b32.xlu0 %v809, 90
      %v825 = vpop.permute.xlu0 %824
      %vm826 = vcmask 736256
      %v827 = vsel %vm826, %v811, %v813
      %v828 = vsel %vm826, %v813, %v815
      %v829 = vsel %vm826, %v815, %v817
      %v830 = vsel %vm826, %v819, %v821
      %v831 = vsel %vm826, %v821, %v823
      %v832 = vsel %vm826, %v823, %v825
      %839 = vst [vmem:[#allocation2 + $0x180] sm:$0xff] %v827
      %840 = vst [vmem:[#allocation2 + $0x188] sm:$0xff] %v828
      %841 = vst [vmem:[#allocation2 + $0x190] sm:$0xff] %v829
      %842 = vst [vmem:[#allocation2 + $0x198] sm:$0xff] %v830
      %843 = vst [vmem:[#allocation2 + $0x1a0] sm:$0xff] %v831
      %844 = vst [vmem:[#allocation2 + $0x1a8] sm:$0xff] %v832
      %v845 = vld [vmem:[%s1] sm:$0xff]
      %v846 = vld [vmem:[%s1 + $0x8] sm:$0xf]
      %v847 = vld [vmem:[%s1 + $0xc] sm:$0xff]
      %v848 = vld [vmem:[%s1 + $0x14] sm:$0xf]
      %v849 = vld [vmem:[%s1 + $0x18] sm:$0xff]
      %v850 = vld [vmem:[%s1 + $0x20] sm:$0xf]
      %v851 = vld [vmem:[%s1 + $0x24] sm:$0xff]
      %v852 = vld [vmem:[%s1 + $0x2c] sm:$0xf]
      %v853 = vld [vmem:[#allocation2] sm:$0xff]
      %v854 = vld [vmem:[#allocation2 + $0x8] sm:$0xff]
      %v855 = vld [vmem:[#allocation2 + $0x10] sm:$0xff]
      %v856 = vld [vmem:[#allocation2 + $0x18] sm:$0xff]
      %v857 = vld [vmem:[#allocation2 + $0x20] sm:$0xff]
      %v858 = vld [vmem:[#allocation2 + $0x28] sm:$0xff]
      %v859 = vld [vmem:[#allocation2 + $0x30] sm:$0xff]
      %v860 = vld [vmem:[#allocation2 + $0x38] sm:$0xff]
      %v861 = vld [vmem:[#allocation2 + $0x40] sm:$0xff]
      %v862 = vld [vmem:[#allocation2 + $0x48] sm:$0xff]
      %v863 = vld [vmem:[#allocation2 + $0x50] sm:$0xff]
      %v864 = vld [vmem:[#allocation2 + $0x58] sm:$0xff]
      %v865 = vld [vmem:[#allocation2 + $0x60] sm:$0xff]
      %v866 = vld [vmem:[#allocation2 + $0x68] sm:$0xff]
      %v867 = vld [vmem:[#allocation2 + $0x70] sm:$0xff]
      %v868 = vld [vmem:[#allocation2 + $0x78] sm:$0xff]
      %v869 = vld [vmem:[#allocation2 + $0x80] sm:$0xff]
      %v870 = vld [vmem:[#allocation2 + $0x88] sm:$0xff]
      %v871 = vld [vmem:[#allocation2 + $0x90] sm:$0xff]
      %v872 = vld [vmem:[#allocation2 + $0x98] sm:$0xff]
      %v873 = vld [vmem:[#allocation2 + $0xa0] sm:$0xff]
      %v874 = vld [vmem:[#allocation2 + $0xa8] sm:$0xff]
      %v875 = vld [vmem:[#allocation2 + $0xb0] sm:$0xff]
      %v876 = vld [vmem:[#allocation2 + $0xb8] sm:$0xff]
      %v877 = vld [vmem:[#allocation2 + $0xc0] sm:$0xff]
      %v878 = vld [vmem:[#allocation2 + $0xc8] sm:$0xff]
      %v879 = vld [vmem:[#allocation2 + $0xd0] sm:$0xff]
      %v880 = vld [vmem:[#allocation2 + $0xd8] sm:$0xff]
      %v881 = vld [vmem:[#allocation2 + $0xe0] sm:$0xff]
      %v882 = vld [vmem:[#allocation2 + $0xe8] sm:$0xff]
      %v883 = vld [vmem:[#allocation2 + $0xf0] sm:$0xff]
      %v884 = vld [vmem:[#allocation2 + $0xf8] sm:$0xff]
      %v885 = vld [vmem:[#allocation2 + $0x100] sm:$0xff]
      %v886 = vld [vmem:[#allocation2 + $0x108] sm:$0xff]
      %v887 = vld [vmem:[#allocation2 + $0x110] sm:$0xff]
      %v888 = vld [vmem:[#allocation2 + $0x118] sm:$0xff]
      %v889 = vld [vmem:[#allocation2 + $0x120] sm:$0xff]
      %v890 = vld [vmem:[#allocation2 + $0x128] sm:$0xff]
      %v891 = vld [vmem:[#allocation2 + $0x130] sm:$0xff]
      %v892 = vld [vmem:[#allocation2 + $0x138] sm:$0xff]
      %v893 = vld [vmem:[#allocation2 + $0x140] sm:$0xff]
      %v894 = vld [vmem:[#allocation2 + $0x148] sm:$0xff]
      %v895 = vld [vmem:[#allocation2 + $0x150] sm:$0xff]
      %v896 = vld [vmem:[#allocation2 + $0x158] sm:$0xff]
      %v897 = vld [vmem:[#allocation2 + $0x160] sm:$0xff]
      %v898 = vld [vmem:[#allocation2 + $0x168] sm:$0xff]
      %v899 = vld [vmem:[#allocation2 + $0x170] sm:$0xff]
      %v900 = vld [vmem:[#allocation2 + $0x178] sm:$0xff]
      %v901 = vld [vmem:[#allocation2 + $0x180] sm:$0xff]
      %v902 = vld [vmem:[#allocation2 + $0x188] sm:$0xff]
      %v903 = vld [vmem:[#allocation2 + $0x190] sm:$0xff]
      %v904 = vld [vmem:[#allocation2 + $0x198] sm:$0xff]
      %v905 = vld [vmem:[#allocation2 + $0x1a0] sm:$0xff]
      %v906 = vld [vmem:[#allocation2 + $0x1a8] sm:$0xff]
      %v907 = vld [vmem:[%s2] sm:$0xff]
      %v908 = vld [vmem:[%s2 + $0x8] sm:$0xff]
      %v909 = vld [vmem:[%s2 + $0x10] sm:$0xff]
      %v910 = vld [vmem:[%s2 + $0x18] sm:$0xff]
      %912 = vset.pattern.permute.xlu0 0
      %913 = vperm.xlu0 %912, %v907
      %v914 = vpop.permute.xlu0 %913
      %917 = vset.pattern.permute.xlu0 0
      %918 = vperm.xlu0 %917, %v908
      %v919 = vpop.permute.xlu0 %918
      %922 = vset.pattern.permute.xlu0 0
      %923 = vperm.xlu0 %922, %v909
      %v924 = vpop.permute.xlu0 %923
      %927 = vset.pattern.permute.xlu0 0
      %928 = vperm.xlu0 %927, %v910
      %v929 = vpop.permute.xlu0 %928
      %v939 = vunpack.c.l.b16 %v845
      %v940 = vunpack.c.h.b16 %v845
      %v941 = vunpack.c.l.b16 %v846
      %v942 = vunpack.c.l.b16 %v847
      %v943 = vunpack.c.h.b16 %v847
      %v944 = vunpack.c.l.b16 %v848
      %v945 = vunpack.c.l.b16 %v849
      %v946 = vunpack.c.h.b16 %v849
      %v947 = vunpack.c.l.b16 %v850
      %v948 = vunpack.c.l.b16 %v851
      %v949 = vunpack.c.h.b16 %v851
      %v950 = vunpack.c.l.b16 %v852
      %v951 = vpack.c.b16 %v942, %v939
      %v952 = vpack.c.b16 %v943, %v940
      %v953 = vpack.c.b16 %v944, %v941
      %v954 = vpack.c.b16 %v948, %v945
      %v955 = vpack.c.b16 %v949, %v946
      %v956 = vpack.c.b16 %v950, %v947
      %vm961 = vcmask 261120
      %v963 = vsel %vm961, %v953, 0
      %v966 = vsel %vm961, %v956, 0
      %968 = vmatprep.subr.bf16.mxu0 %v854
      %969 = vmatpush1.bf16.msra.mxu0 %v853
      %970 = vmatprep.subr.bf16.mxu0 %v857
      %971 = vmatpush1.bf16.msra.mxu0 %v856
      %972 = vmatprep.subr.bf16.mxu0 %v860
      %973 = vmatpush1.bf16.msra.mxu0 %v859
      %974 = vmatprep.subr.bf16.mxu0 %v863
      %975 = vmatpush1.bf16.msra.mxu0 %v862
      %976 = vmatprep.subr.bf16.mxu0 %v866
      %977 = vmatpush1.bf16.msra.mxu0 %v865
      %978 = vmatprep.subr.bf16.mxu0 %v869
      %979 = vmatpush1.bf16.msra.mxu0 %v868
      %980 = vmatprep.subr.bf16.mxu0 %v872
      %981 = vmatpush1.bf16.msra.mxu0 %v871
      %982 = vmatprep.subr.bf16.mxu0 %v875
      %983 = vmatpush1.bf16.msra.mxu0 %v874
      %984 = vmatprep.subr.bf16.mxu0 %v878
      %985 = vmatpush1.bf16.msra.mxu0 %v877
      %986 = vmatprep.subr.bf16.mxu0 %v881
      %987 = vmatpush1.bf16.msra.mxu0 %v880
      %988 = vmatprep.subr.bf16.mxu0 %v884
      %989 = vmatpush1.bf16.msra.mxu0 %v883
      %990 = vmatprep.subr.bf16.mxu0 %v887
      %991 = vmatpush1.bf16.msra.mxu0 %v886
      %992 = vmatprep.subr.bf16.mxu0 %v890
      %993 = vmatpush1.bf16.msra.mxu0 %v889
      %994 = vmatprep.subr.bf16.mxu0 %v893
      %995 = vmatpush1.bf16.msra.mxu0 %v892
      %996 = vmatprep.subr.bf16.mxu0 %v896
      %997 = vmatpush1.bf16.msra.mxu0 %v895
      %998 = vmatprep.subr.bf16.mxu0 %v899
      %999 = vmatpush1.bf16.msra.mxu0 %v898
      %1000 = vmatprep.mubr.bf16.mxu0 %v952
      %1001 = vmatmul.mubr.bf16.gmra.mrb[0].mxu0 %v951
      %v1002 = vpop.f32.mrb[0].mxu0
      %v1003 = vadd.f32 %v914, %v1002
      %v1004 = vpop.f32.mrb[0].mxu0
      %v1005 = vadd.f32 %v914, %v1004
      %v1006 = vpop.f32.mrb[0].mxu0
      %v1007 = vadd.f32 %v919, %v1006
      %v1008 = vpop.f32.mrb[0].mxu0
      %v1009 = vadd.f32 %v919, %v1008
      %1010 = vmatprep.mubr.bf16.mxu0 %v955
      %1011 = vmatmul.mubr.bf16.gmra.mrb[0].mxu0 %v954
      %v1012 = vpop.f32.mrb[0].mxu0
      %v1013 = vadd.f32 %v924, %v1012
      %v1014 = vpop.f32.mrb[0].mxu0
      %v1015 = vadd.f32 %v924, %v1014
      %v1016 = vpop.f32.mrb[0].mxu0
      %v1017 = vadd.f32 %v929, %v1016
      %v1018 = vpop.f32.mrb[0].mxu0
      %v1019 = vadd.f32 %v929, %v1018
      %1020 = vdwg.mxu0
      %1021 = vmatprep.subr.bf16.mxu0 %v902
      %1022 = vmatpush1.bf16.msra.mxu0 %v901
      %1023 = vmatprep.subr.bf16.mxu0 %v905
      %1024 = vmatpush1.bf16.msra.mxu0 %v904
      %1025 = vmatprep.subr.bf16.mxu0 0
      %1026 = vmatpush1.bf16.msra.mxu0 0
      %1027 = vmatprep.subr.bf16.mxu0 0
      %1028 = vmatpush1.bf16.msra.mxu0 0
      %1029 = vmatprep.subr.bf16.mxu0 0
      %1030 = vmatpush1.bf16.msra.mxu0 0
      %1031 = vmatprep.subr.bf16.mxu0 0
      %1032 = vmatpush1.bf16.msra.mxu0 0
      %1033 = vmatprep.subr.bf16.mxu0 0
      %1034 = vmatpush1.bf16.msra.mxu0 0
      %1035 = vmatprep.subr.bf16.mxu0 0
      %1036 = vmatpush1.bf16.msra.mxu0 0
      %1037 = vmatprep.subr.bf16.mxu0 0
      %1038 = vmatpush1.bf16.msra.mxu0 0
      %1039 = vmatprep.subr.bf16.mxu0 0
      %1040 = vmatpush1.bf16.msra.mxu0 0
      %1041 = vmatprep.subr.bf16.mxu0 0
      %1042 = vmatpush1.bf16.msra.mxu0 0
      %1043 = vmatprep.subr.bf16.mxu0 0
      %1044 = vmatpush1.bf16.msra.mxu0 0
      %1045 = vmatprep.subr.bf16.mxu0 0
      %1046 = vmatpush1.bf16.msra.mxu0 0
      %1047 = vmatprep.subr.bf16.mxu0 0
      %1048 = vmatpush1.bf16.msra.mxu0 0
      %1049 = vmatprep.subr.bf16.mxu0 0
      %1050 = vmatpush1.bf16.msra.mxu0 0
      %1051 = vmatprep.subr.bf16.mxu0 0
      %1052 = vmatpush1.bf16.msra.mxu0 0
      %1053 = vmatprep.mubr.bf16.mxu0 0
      %1054 = vmatmul.mubr.bf16.gmra.mrb[0].mxu0 %v963
      %v1055 = vpop.f32.mrb[0].mxu0
      %v1056 = vadd.f32 %v1003, %v1055
      %v1057 = vpop.f32.mrb[0].mxu0
      %v1058 = vadd.f32 %v1005, %v1057
      %v1059 = vpop.f32.mrb[0].mxu0
      %v1060 = vadd.f32 %v1007, %v1059
      %v1061 = vpop.f32.mrb[0].mxu0
      %v1062 = vadd.f32 %v1009, %v1061
      %1063 = vmatprep.mubr.bf16.mxu0 0
      %1064 = vmatmul.mubr.bf16.gmra.mrb[0].mxu0 %v966
      %v1065 = vpop.f32.mrb[0].mxu0
      %v1066 = vadd.f32 %v1013, %v1065
      %v1067 = vpop.f32.mrb[0].mxu0
      %v1068 = vadd.f32 %v1015, %v1067
      %v1069 = vpop.f32.mrb[0].mxu0
      %v1070 = vadd.f32 %v1017, %v1069
      %v1071 = vpop.f32.mrb[0].mxu0
      %v1072 = vadd.f32 %v1019, %v1071
      %1073 = vdwg.mxu0
      %1074 = vmatprep.subr.bf16.mxu0 0
      %1075 = vmatpush1.bf16.msra.mxu0 %v855
      %1076 = vmatprep.subr.bf16.mxu0 0
      %1077 = vmatpush1.bf16.msra.mxu0 %v858
      %1078 = vmatprep.subr.bf16.mxu0 0
      %1079 = vmatpush1.bf16.msra.mxu0 %v861
      %1080 = vmatprep.subr.bf16.mxu0 0
      %1081 = vmatpush1.bf16.msra.mxu0 %v864
      %1082 = vmatprep.subr.bf16.mxu0 0
      %1083 = vmatpush1.bf16.msra.mxu0 %v867
      %1084 = vmatprep.subr.bf16.mxu0 0
      %1085 = vmatpush1.bf16.msra.mxu0 %v870
      %1086 = vmatprep.subr.bf16.mxu0 0
      %1087 = vmatpush1.bf16.msra.mxu0 %v873
      %1088 = vmatprep.subr.bf16.mxu0 0
      %1089 = vmatpush1.bf16.msra.mxu0 %v876
      %1090 = vmatprep.subr.bf16.mxu0 0
      %1091 = vmatpush1.bf16.msra.mxu0 %v879
      %1092 = vmatprep.subr.bf16.mxu0 0
      %1093 = vmatpush1.bf16.msra.mxu0 %v882
      %1094 = vmatprep.subr.bf16.mxu0 0
      %1095 = vmatpush1.bf16.msra.mxu0 %v885
      %1096 = vmatprep.subr.bf16.mxu0 0
      %1097 = vmatpush1.bf16.msra.mxu0 %v888
      %1098 = vmatprep.subr.bf16.mxu0 0
      %1099 = vmatpush1.bf16.msra.mxu0 %v891
      %1100 = vmatprep.subr.bf16.mxu0 0
      %1101 = vmatpush1.bf16.msra.mxu0 %v894
      %1102 = vmatprep.subr.bf16.mxu0 0
      %1103 = vmatpush1.bf16.msra.mxu0 %v897
      %1104 = vmatprep.subr.bf16.mxu0 0
      %1105 = vmatpush1.bf16.msra.mxu0 %v900
      %1106 = vmatprep.mubr.bf16.mxu0 %v952
      %1107 = vmatmul.mubr.bf16.gmra.mrb[0].mxu0 %v951
      %v1108 = vpop.f32.mrb[0].mxu0
      %v1109 = vadd.f32 %v914, %v1108
      %v1110 = vpop.f32.mrb[0].mxu0
      %v1111 = vpop.f32.mrb[0].mxu0
      %v1112 = vadd.f32 %v919, %v1111
      %v1113 = vpop.f32.mrb[0].mxu0
      %1114 = vmatprep.mubr.bf16.mxu0 %v955
      %1115 = vmatmul.mubr.bf16.gmra.mrb[0].mxu0 %v954
      %v1116 = vpop.f32.mrb[0].mxu0
      %v1117 = vadd.f32 %v924, %v1116
      %v1118 = vpop.f32.mrb[0].mxu0
      %v1119 = vpop.f32.mrb[0].mxu0
      %v1120 = vadd.f32 %v929, %v1119
      %v1121 = vpop.f32.mrb[0].mxu0
      %1122 = vdwg.mxu0
      %1123 = vmatprep.subr.bf16.mxu0 0
      %1124 = vmatpush1.bf16.msra.mxu0 %v903
      %1125 = vmatprep.subr.bf16.mxu0 0
      %1126 = vmatpush1.bf16.msra.mxu0 %v906
      %1127 = vmatprep.subr.bf16.mxu0 0
      %1128 = vmatpush1.bf16.msra.mxu0 0
      %1129 = vmatprep.subr.bf16.mxu0 0
      %1130 = vmatpush1.bf16.msra.mxu0 0
      %1131 = vmatprep.subr.bf16.mxu0 0
      %1132 = vmatpush1.bf16.msra.mxu0 0
      %1133 = vmatprep.subr.bf16.mxu0 0
      %1134 = vmatpush1.bf16.msra.mxu0 0
      %1135 = vmatprep.subr.bf16.mxu0 0
      %1136 = vmatpush1.bf16.msra.mxu0 0
      %1137 = vmatprep.subr.bf16.mxu0 0
      %1138 = vmatpush1.bf16.msra.mxu0 0
      %1139 = vmatprep.subr.bf16.mxu0 0
      %1140 = vmatpush1.bf16.msra.mxu0 0
      %1141 = vmatprep.subr.bf16.mxu0 0
      %1142 = vmatpush1.bf16.msra.mxu0 0
      %1143 = vmatprep.subr.bf16.mxu0 0
      %1144 = vmatpush1.bf16.msra.mxu0 0
      %1145 = vmatprep.subr.bf16.mxu0 0
      %1146 = vmatpush1.bf16.msra.mxu0 0
      %1147 = vmatprep.subr.bf16.mxu0 0
      %1148 = vmatpush1.bf16.msra.mxu0 0
      %1149 = vmatprep.subr.bf16.mxu0 0
      %1150 = vmatpush1.bf16.msra.mxu0 0
      %1151 = vmatprep.subr.bf16.mxu0 0
      %1152 = vmatpush1.bf16.msra.mxu0 0
      %1153 = vmatprep.subr.bf16.mxu0 0
      %1154 = vmatpush1.bf16.msra.mxu0 0
      %1155 = vmatprep.mubr.bf16.mxu0 0
      %1156 = vmatmul.mubr.bf16.gmra.mrb[0].mxu0 %v963
      %v1157 = vpop.f32.mrb[0].mxu0
      %v1158 = vadd.f32 %v1109, %v1157
      %v1159 = vpop.f32.mrb[0].mxu0
      %v1160 = vpop.f32.mrb[0].mxu0
      %v1161 = vadd.f32 %v1112, %v1160
      %v1162 = vpop.f32.mrb[0].mxu0
      %1163 = vmatprep.mubr.bf16.mxu0 0
      %1164 = vmatmul.mubr.bf16.gmra.mrb[0].mxu0 %v966
      %v1165 = vpop.f32.mrb[0].mxu0
      %v1166 = vadd.f32 %v1117, %v1165
      %v1167 = vpop.f32.mrb[0].mxu0
      %v1168 = vpop.f32.mrb[0].mxu0
      %v1169 = vadd.f32 %v1120, %v1168
      %v1170 = vpop.f32.mrb[0].mxu0
      %1171 = vdwg.mxu0
      %v1172 = vmax.f32 %v1056, 0.0
      %v1173 = vmax.f32 %v1058, 0.0
      %v1174 = vmax.f32 %v1158, 0.0
      %v1175 = vmax.f32 %v1060, 0.0
      %v1176 = vmax.f32 %v1062, 0.0
      %v1177 = vmax.f32 %v1161, 0.0
      %v1178 = vmax.f32 %v1066, 0.0
      %v1179 = vmax.f32 %v1068, 0.0
      %v1180 = vmax.f32 %v1166, 0.0
      %v1181 = vmax.f32 %v1070, 0.0
      %v1182 = vmax.f32 %v1072, 0.0
      %v1183 = vmax.f32 %v1169, 0.0
      %v1184 = vld [vmem:[%s3] sm:$0x7]
      %v1186 = vlaneseq
      %v1187 = vshrl.u32 %v1186, 7
      %v1188 = vsub.s32 0, %v1187
      %v1189 = vrot.slane %v1184, %v1188
      %v1190 = vlaneseq
      %v1191 = vshrl.u32 %v1190, 7
      %v1192 = vsub.s32 1, %v1191
      %v1193 = vrot.slane %v1184, %v1192
      %v1194 = vlaneseq
      %v1195 = vshrl.u32 %v1194, 7
      %v1196 = vsub.s32 2, %v1195
      %v1197 = vrot.slane %v1184, %v1196
      %v1201 = vmul.f32 %v1172, %v1189
      %v1202 = vmul.f32 %v1173, %v1193
      %v1203 = vmul.f32 %v1174, %v1197
      %v1204 = vmul.f32 %v1175, %v1189
      %v1205 = vmul.f32 %v1176, %v1193
      %v1206 = vmul.f32 %v1177, %v1197
      %v1207 = vmul.f32 %v1178, %v1189
      %v1208 = vmul.f32 %v1179, %v1193
      %v1209 = vmul.f32 %v1180, %v1197
      %v1210 = vmul.f32 %v1181, %v1189
      %v1211 = vmul.f32 %v1182, %v1193
      %v1212 = vmul.f32 %v1183, %v1197
      %v1213 = vpack.c.bf16 %v1204, %v1201
      %v1214 = vpack.c.bf16 %v1205, %v1202
      %v1215 = vpack.c.bf16 %v1206, %v1203
      %v1216 = vpack.c.bf16 %v1210, %v1207
      %v1217 = vpack.c.bf16 %v1211, %v1208
      %v1218 = vpack.c.bf16 %v1212, %v1209
      %v1225 = vunpack.c.l.b16 %v1213
      %v1226 = vunpack.c.l.b16 %v1214
      %v1227 = vunpack.c.l.b16 %v1215
      %v1228 = vunpack.c.h.b16 %v1213
      %v1229 = vunpack.c.h.b16 %v1214
      %v1230 = vunpack.c.h.b16 %v1215
      %v1231 = vunpack.c.l.b16 %v1216
      %v1232 = vunpack.c.l.b16 %v1217
      %v1233 = vunpack.c.l.b16 %v1218
      %v1234 = vunpack.c.h.b16 %v1216
      %v1235 = vunpack.c.h.b16 %v1217
      %v1236 = vunpack.c.h.b16 %v1218
      %v1237 = vpack.c.b16 %v1226, %v1225
      %v1238 = vpack.c.b16 %v1227, %v1227
      %v1239 = vpack.c.b16 %v1229, %v1228
      %v1240 = vpack.c.b16 %v1230, %v1230
      %v1241 = vpack.c.b16 %v1232, %v1231
      %v1242 = vpack.c.b16 %v1233, %v1233
      %v1243 = vpack.c.b16 %v1235, %v1234
      %v1244 = vpack.c.b16 %v1236, %v1236
      %1253 = vst [vmem:[%s197] sm:$0xff] %v1237
      %1254 = vst [vmem:[%s197 + $0x8] sm:$0xf] %v1238
      %1255 = vst [vmem:[%s197 + $0xc] sm:$0xff] %v1239
      %1256 = vst [vmem:[%s197 + $0x14] sm:$0xf] %v1240
      %1257 = vst [vmem:[%s197 + $0x18] sm:$0xff] %v1241
      %1258 = vst [vmem:[%s197 + $0x20] sm:$0xf] %v1242
      %1259 = vst [vmem:[%s197 + $0x24] sm:$0xff] %v1243
      %1260 = vst [vmem:[%s197 + $0x2c] sm:$0xf] %v1244
      %p1261 = scmp.lt.s32.totalorder %s15, 1
      %s1262 = scalar_select %p1261, %s15, 1
      %s1263 = smul.addr %s1262, 12
      %s1264 = smul.addr %s1263, 4
      %s1265 = scalar_lea.vmem %s4, %s1264
      // Predicated region
      $region37: #{transporter_forward.12} parent=35 // pred_check
        %p1266 = pneg %p122
      $region38: #{transporter_forward.12} parent=35 // pred_check_branch
        %1268 = sbr.rel (%p1266) target = $region40
      $region39: #{transporter_forward.12} parent=35 // pred_region
        _
      $region40: #{transporter_forward.12} parent=35 // pred_fallthru
        _
    $region36: #{transporter_forward.12} parent=5 // pred_fallthru
      _
    %p1269 = scmp.le.s32.totalorder 2, %s10
    // Predicated region
    $region41: #{transporter_forward.12} parent=5 // pred_check
      %p1270 = pneg %p1269
    $region42: #{transporter_forward.12} parent=5 // pred_check_branch
      %1272 = sbr.rel (%p1270) target = $region44
    $region43: #{transporter_forward.12} parent=5 // pred_region
      %s1273 = ssub.s32 %s10, 2
      // Predicated region
      $region45: #{transporter_forward.12} parent=43 // pred_check
        %p1274 = pneg %p128
      $region46: #{transporter_forward.12} parent=43 // pred_check_branch
        %1276 = sbr.rel (%p1274) target = $region48
      $region47: #{transporter_forward.12} parent=43 // pred_region
        %p1277 = scmp.lt.s32.totalorder %s16, 1
        %s1278 = scalar_select %p1277, %s16, 1
        %s1279 = smul.addr %s1278, 12
        %s1280 = smul.addr %s1279, 4
        %s1281 = scalar_lea.vmem %s4, %s1280
      $region48: #{transporter_forward.12} parent=43 // pred_fallthru
        _
    $region44: #{transporter_forward.12} parent=5 // pred_fallthru
      _
  $region6: #{transporter_forward.12} parent=0 // loop_footer
    %s14 = sadd.s32 1, %s10
  $region7: #{transporter_forward.12} parent=0 // loop_footer_branch
    %9 = sbr.rel target = $region3
  $region8: #{transporter_forward.12} parent=0 // loop_exit
    _

// kernel: transporter_forward.13
$region0: #{transporter_forward.13}
  #allocation0 [shape = 'u32[]', space=smem, size = 0x4, offset = 0x4, fixed_abs, tag = 'smem constant byte address 0x4 - core index']
  #allocation1 [shape = 'u32[144,128]{1,0:T(1,128)}', space=vmem, size = 0x12000, scoped, tag = 'internal scratch']
  #allocation2 [shape = 'bf16[288,384]{1,0:T(16,128)(2,1)}', space=vmem, size = 0x36000, scoped, tag = 'scratch operand']
  %s0 = inlined_call_operand.vmem [shape: bf16[2,32,512], index: 0, kind: input, shape index: {}]
  %s1 = inlined_call_operand.vmem [shape: bf16[16,288], index: 1, kind: input, shape index: {}]
  %s2 = inlined_call_operand.vmem [shape: f32[16,1], index: 2, kind: input, shape index: {}]
  %s3 = inlined_call_operand.vmem [shape: f32[1,384], index: 3, kind: input, shape index: {}]
  %s4 = inlined_call_operand.vmem [shape: f32[2,16,384], index: 4, kind: output, shape index: {}]
  %s5 = sld [smem:[#allocation0]]
  $region49: #{transporter_forward.13} parent=0
    _
  %s7 = ssub.s32 1, %s5
  %s8 = scalar_select 0, %s7, %s5
  loop: start=0, step=1, limit=4
  $region2: #{transporter_forward.13} parent=0 // loop_pre_header
    _
  $region3: #{transporter_forward.13} parent=0 // loop_header
    %s10 = sphi 0, %s14
    %p11 = scmp.ge.s32.totalorder %s10, 4
    %s20 = sphi 0, %s22
    %s23 = sphi 0, %s20
    %s24 = sphi 0, %s23
    %s40 = sphi 0, %s24
    %s44 = sphi 0, %s44
    %s46 = sphi 0, %s44
    %s47 = sphi 0, %s46
    %s61 = sphi 0, %s47
    %s65 = sphi 0, %s65
    %s67 = sphi 0, %s65
    %s68 = sphi 0, %s67
    %s82 = sphi 0, %s68
    %s86 = sphi 0, %s86
    %s88 = sphi 0, %s86
    %s89 = sphi 0, %s88
    %s103 = sphi 0, %s89
    %s109 = sphi 0, %s111
    %s112 = sphi 0, %s109
    %s113 = sphi 0, %s112
    %s129 = sphi 0, %s113
  $region4: #{transporter_forward.13} parent=0 // loop_header_branch
    %13 = sbr.rel (%p11) target = $region8
  $region5: #{transporter_forward.13} parent=0 // loop_body
    %s15 = ssub.s32 %s10, 1
    %s16 = ssub.s32 %s10, 2
    %s17 = sadd.s32 %s10, 1
    %s18 = ssub.s32 %s10, %s17
    %p19 = scmp.eq.s32.totalorder %s18, 0
    %s21 = sadd.s32 %s20, 1
    %s22 = scalar_select %p19, %s20, %s21
    %p25 = pneg %p19
    %p26 = scmp.eq.s32.totalorder %s10, 1
    %p27 = por %p25, %p26
    %p28 = scmp.ne.s32.totalorder %s20, %s23
    %p29 = scmp.eq.s32.totalorder %s10, 0
    %p30 = por %p28, %p29
    %p31 = scmp.ne.s32.totalorder %s20, %s23
    %p32 = scmp.eq.s32.totalorder %s15, 1
    %p33 = por %p31, %p32
    %p34 = scmp.ne.s32.totalorder %s23, %s24
    %p35 = scmp.eq.s32.totalorder %s15, 0
    %p36 = por %p34, %p35
    %p37 = scmp.ne.s32.totalorder %s23, %s24
    %p38 = scmp.eq.s32.totalorder %s16, 1
    %p39 = por %p37, %p38
    %p41 = scmp.ne.s32.totalorder %s24, %s40
    %p42 = scmp.eq.s32.totalorder %s16, 0
    %p43 = por %p41, %p42
    %s45 = sadd.s32 %s44, 1
    %p48 = scmp.eq.s32.totalorder %s10, 1
    %p49 = scmp.ne.s32.totalorder %s44, %s46
    %p50 = scmp.eq.s32.totalorder %s10, 0
    %p51 = por %p49, %p50
    %p52 = scmp.ne.s32.totalorder %s44, %s46
    %p53 = scmp.eq.s32.totalorder %s15, 1
    %p54 = por %p52, %p53
    %p55 = scmp.ne.s32.totalorder %s46, %s47
    %p56 = scmp.eq.s32.totalorder %s15, 0
    %p57 = por %p55, %p56
    %p58 = scmp.ne.s32.totalorder %s46, %s47
    %p59 = scmp.eq.s32.totalorder %s16, 1
    %p60 = por %p58, %p59
    %p62 = scmp.ne.s32.totalorder %s47, %s61
    %p63 = scmp.eq.s32.totalorder %s16, 0
    %p64 = por %p62, %p63
    %s66 = sadd.s32 %s65, 1
    %p69 = scmp.eq.s32.totalorder %s10, 1
    %p70 = scmp.ne.s32.totalorder %s65, %s67
    %p71 = scmp.eq.s32.totalorder %s10, 0
    %p72 = por %p70, %p71
    %p73 = scmp.ne.s32.totalorder %s65, %s67
    %p74 = scmp.eq.s32.totalorder %s15, 1
    %p75 = por %p73, %p74
    %p76 = scmp.ne.s32.totalorder %s67, %s68
    %p77 = scmp.eq.s32.totalorder %s15, 0
    %p78 = por %p76, %p77
    %p79 = scmp.ne.s32.totalorder %s67, %s68
    %p80 = scmp.eq.s32.totalorder %s16, 1
    %p81 = por %p79, %p80
    %p83 = scmp.ne.s32.totalorder %s68, %s82
    %p84 = scmp.eq.s32.totalorder %s16, 0
    %p85 = por %p83, %p84
    %s87 = sadd.s32 %s86, 1
    %p90 = scmp.eq.s32.totalorder %s10, 1
    %p91 = scmp.ne.s32.totalorder %s86, %s88
    %p92 = scmp.eq.s32.totalorder %s10, 0
    %p93 = por %p91, %p92
    %p94 = scmp.ne.s32.totalorder %s86, %s88
    %p95 = scmp.eq.s32.totalorder %s15, 1
    %p96 = por %p94, %p95
    %p97 = scmp.ne.s32.totalorder %s88, %s89
    %p98 = scmp.eq.s32.totalorder %s15, 0
    %p99 = por %p97, %p98
    %p100 = scmp.ne.s32.totalorder %s88, %s89
    %p101 = scmp.eq.s32.totalorder %s16, 1
    %p102 = por %p100, %p101
    %p104 = scmp.ne.s32.totalorder %s89, %s103
    %p105 = scmp.eq.s32.totalorder %s16, 0
    %p106 = por %p104, %p105
    %s107 = ssub.s32 %s10, %s17
    %p108 = scmp.eq.s32.totalorder %s107, 0
    %s110 = sadd.s32 %s109, 1
    %s111 = scalar_select %p108, %s109, %s110
    %p114 = pneg %p108
    %p115 = scmp.eq.s32.totalorder %s10, 1
    %p116 = por %p114, %p115
    %p117 = scmp.ne.s32.totalorder %s109, %s112
    %p118 = scmp.eq.s32.totalorder %s10, 0
    %p119 = por %p117, %p118
    %p120 = scmp.ne.s32.totalorder %s109, %s112
    %p121 = scmp.eq.s32.totalorder %s15, 1
    %p122 = por %p120, %p121
    %p123 = scmp.ne.s32.totalorder %s112, %s113
    %p124 = scmp.eq.s32.totalorder %s15, 0
    %p125 = por %p123, %p124
    %p126 = scmp.ne.s32.totalorder %s112, %s113
    %p127 = scmp.eq.s32.totalorder %s16, 1
    %p128 = por %p126, %p127
    %p130 = scmp.ne.s32.totalorder %s113, %s129
    %p131 = scmp.eq.s32.totalorder %s16, 0
    %p132 = por %p130, %p131
    %p133 = scmp.le.s32.totalorder 1, %s10
    %p134 = scmp.lt.s32.totalorder %s10, 3
    %p135 = pnand %p133, %p134
    %p136 = pneg %p135
    // Predicated region
    $region9: #{transporter_forward.13} parent=5 // pred_check
      _
    $region10: #{transporter_forward.13} parent=5 // pred_check_branch
      %138 = sbr.rel (%p135) target = $region12
    $region11: #{transporter_forward.13} parent=5 // pred_region
      %s139 = ssub.s32 %s10, 1
      // Predicated region
      $region13: #{transporter_forward.13} parent=11 // pred_check
        %p140 = pneg %p57
      $region14: #{transporter_forward.13} parent=11 // pred_check_branch
        %142 = sbr.rel (%p140) target = $region16
      $region15: #{transporter_forward.13} parent=11 // pred_region
        _
      $region16: #{transporter_forward.13} parent=11 // pred_fallthru
        _
      // Predicated region
      $region17: #{transporter_forward.13} parent=11 // pred_check
        %p143 = pneg %p78
      $region18: #{transporter_forward.13} parent=11 // pred_check_branch
        %145 = sbr.rel (%p143) target = $region20
      $region19: #{transporter_forward.13} parent=11 // pred_region
        _
      $region20: #{transporter_forward.13} parent=11 // pred_fallthru
        _
      // Predicated region
      $region21: #{transporter_forward.13} parent=11 // pred_check
        %p146 = pneg %p99
      $region22: #{transporter_forward.13} parent=11 // pred_check_branch
        %148 = sbr.rel (%p146) target = $region24
      $region23: #{transporter_forward.13} parent=11 // pred_region
        _
      $region24: #{transporter_forward.13} parent=11 // pred_fallthru
        _
    $region12: #{transporter_forward.13} parent=5 // pred_fallthru
      _
    %p149 = scmp.lt.s32.totalorder %s10, 2
    // Predicated region
    $region25: #{transporter_forward.13} parent=5 // pred_check
      %p150 = pneg %p149
    $region26: #{transporter_forward.13} parent=5 // pred_check_branch
      %152 = sbr.rel (%p150) target = $region28
    $region27: #{transporter_forward.13} parent=5 // pred_region
      // Predicated region
      $region29: #{transporter_forward.13} parent=27 // pred_check
        %p153 = pneg %p30
      $region30: #{transporter_forward.13} parent=27 // pred_check_branch
        %155 = sbr.rel (%p153) target = $region32
      $region31: #{transporter_forward.13} parent=27 // pred_region
        %p156 = scmp.lt.s32.totalorder %s10, 1
        %s157 = scalar_select %p156, %s10, 1
        %s158 = smul.addr %s157, 16
        %s159 = smul.addr %s158, 4
        %s160 = scalar_lea.vmem %s0, %s159
      $region32: #{transporter_forward.13} parent=27 // pred_fallthru
        _
    $region28: #{transporter_forward.13} parent=5 // pred_fallthru
      _
    %p161 = scmp.le.s32.totalorder 1, %s10
    %p162 = scmp.lt.s32.totalorder %s10, 3
    %p163 = pnand %p161, %p162
    %p164 = pneg %p163
    // Predicated region
    $region33: #{transporter_forward.13} parent=5 // pred_check
      _
    $region34: #{transporter_forward.13} parent=5 // pred_check_branch
      %166 = sbr.rel (%p163) target = $region36
    $region35: #{transporter_forward.13} parent=5 // pred_region
      %s167 = ssub.s32 %s10, 1
      %p168 = scmp.lt.s32.totalorder %s15, 1
      %s169 = scalar_select %p168, %s15, 1
      %s170 = smul.addr %s169, 16
      %s171 = smul.addr %s170, 4
      %s172 = scalar_lea.vmem %s0, %s171
      %p173 = pneg %p36
      %p174 = pneg %p33
      %p175 = pneg %p57
      %p176 = pneg %p54
      %p177 = pneg %p78
      %p178 = pneg %p75
      %p179 = pneg %p99
      %p180 = pneg %p96
      %p181 = pneg %p125
      %p182 = pneg %p122
      %p183 = scmp.lt.s32.totalorder %s15, 1
      %s184 = scalar_select %p183, %s15, 1
      %s185 = smul.addr %s184, 6
      %s186 = smul.addr %s185, 8
      %s187 = scalar_lea.vmem %s4, %s186
      %p188 = scmp.lt.s32.totalorder %s15, 1
      %s189 = scalar_select %p188, %s15, 1
      %s190 = smul.addr %s189, 16
      %s191 = smul.addr %s190, 4
      %s192 = scalar_lea.vmem %s0, %s191
      %p193 = scmp.lt.s32.totalorder %s15, 1
      %s194 = scalar_select %p193, %s15, 1
      %s195 = smul.addr %s194, 6
      %s196 = smul.addr %s195, 8
      %s197 = scalar_lea.vmem %s4, %s196
      %v199 = vld [vmem:[%s192] sm:$0xff]
      %v200 = vld [vmem:[%s192 + $0x8] sm:$0xf]
      %v201 = vld [vmem:[%s192 + $0x10] sm:$0xff]
      %v202 = vld [vmem:[%s192 + $0x18] sm:$0xf]
      %v203 = vld [vmem:[%s192 + $0x20] sm:$0xff]
      %v204 = vld [vmem:[%s192 + $0x28] sm:$0xf]
      %v205 = vld [vmem:[%s192 + $0x30] sm:$0xff]
      %v206 = vld [vmem:[%s192 + $0x38] sm:$0xf]
      %v215 = vunpack.c.l.b16 %v199
      %v216 = vunpack.c.h.b16 %v199
      %v217 = vunpack.c.l.b16 %v200
      %v218 = vunpack.c.l.b16 %v201
      %v219 = vunpack.c.h.b16 %v201
      %v220 = vunpack.c.l.b16 %v202
      %v221 = vunpack.c.l.b16 %v203
      %v222 = vunpack.c.h.b16 %v203
      %v223 = vunpack.c.l.b16 %v204
      %v224 = vunpack.c.l.b16 %v205
      %v225 = vunpack.c.h.b16 %v205
      %v226 = vunpack.c.l.b16 %v206
      %v227 = vpack.c.b16 %v218, %v215
      %v228 = vpack.c.b16 %v219, %v216
      %v229 = vpack.c.b16 %v220, %v217
      %v230 = vpack.c.b16 %v224, %v221
      %v231 = vpack.c.b16 %v225, %v222
      %v232 = vpack.c.b16 %v226, %v223
      %239 = vst [vmem:[#allocation2] sm:$0xff] %v227
      %240 = vst [vmem:[#allocation2 + $0x8] sm:$0xff] %v228
      %241 = vst [vmem:[#allocation2 + $0x10] sm:$0xff] %v229
      %242 = vst [vmem:[#allocation2 + $0x18] sm:$0xff] %v230
      %243 = vst [vmem:[#allocation2 + $0x20] sm:$0xff] %v231
      %244 = vst [vmem:[#allocation2 + $0x28] sm:$0xff] %v232
      %v245 = vld [vmem:[%s192] sm:$0xff]
      %v246 = vld [vmem:[%s192 + $0x8] sm:$0xff]
      %v247 = vld [vmem:[%s192 + $0x10] sm:$0xff]
      %v248 = vld [vmem:[%s192 + $0x18] sm:$0xff]
      %v249 = vld [vmem:[%s192 + $0x20] sm:$0xff]
      %v250 = vld [vmem:[%s192 + $0x28] sm:$0xff]
      %v251 = vld [vmem:[%s192 + $0x30] sm:$0xff]
      %v252 = vld [vmem:[%s192 + $0x38] sm:$0xff]
      %v261 = vunpack.c.l.b16 %v245
      %v262 = vunpack.c.h.b16 %v245
      %v263 = vunpack.c.l.b16 %v246
      %v264 = vunpack.c.h.b16 %v246
      %v265 = vunpack.c.l.b16 %v247
      %v266 = vunpack.c.h.b16 %v247
      %v267 = vunpack.c.l.b16 %v248
      %v268 = vunpack.c.h.b16 %v248
      %v269 = vunpack.c.l.b16 %v249
      %v270 = vunpack.c.h.b16 %v249
      %v271 = vunpack.c.l.b16 %v250
      %v272 = vunpack.c.h.b16 %v250
      %v273 = vunpack.c.l.b16 %v251
      %v274 = vunpack.c.h.b16 %v251
      %v275 = vunpack.c.l.b16 %v252
      %v276 = vunpack.c.h.b16 %v252
      %v277 = vpack.c.b16 %v265, %v261
      %v278 = vpack.c.b16 %v266, %v262
      %v279 = vpack.c.b16 %v267, %v263
      %v280 = vpack.c.b16 %v268, %v264
      %v281 = vpack.c.b16 %v273, %v269
      %v282 = vpack.c.b16 %v274, %v270
      %v283 = vpack.c.b16 %v275, %v271
      %v284 = vpack.c.b16 %v276, %v272
      %285 = vrot.lane.b32.xlu0 %v277, 127
      %v286 = vpop.permute.xlu0 %285
      %287 = vrot.lane.b32.xlu0 %v278, 127
      %v288 = vpop.permute.xlu0 %287
      %289 = vrot.lane.b32.xlu0 %v279, 127
      %v290 = vpop.permute.xlu0 %289
      %291 = vrot.lane.b32.xlu0 %v280, 127
      %v292 = vpop.permute.xlu0 %291
      %293 = vrot.lane.b32.xlu0 %v281, 127
      %v294 = vpop.permute.xlu0 %293
      %295 = vrot.lane.b32.xlu0 %v282, 127
      %v296 = vpop.permute.xlu0 %295
      %297 = vrot.lane.b32.xlu0 %v283, 127
      %v298 = vpop.permute.xlu0 %297
      %299 = vrot.lane.b32.xlu0 %v284, 127
      %v300 = vpop.permute.xlu0 %299
      %vm301 = vcmask 1039360
      %v302 = vsel %vm301, %v286, %v288
      %v303 = vsel %vm301, %v288, %v290
      %v304 = vsel %vm301, %v290, %v292
      %v305 = vsel %vm301, %v294, %v296
      %v306 = vsel %vm301, %v296, %v298
      %v307 = vsel %vm301, %v298, %v300
      %314 = vst [vmem:[#allocation2 + $0x30] sm:$0xff] %v302
      %315 = vst [vmem:[#allocation2 + $0x38] sm:$0xff] %v303
      %316 = vst [vmem:[#allocation2 + $0x40] sm:$0xff] %v304
      %317 = vst [vmem:[#allocation2 + $0x48] sm:$0xff] %v305
      %318 = vst [vmem:[#allocation2 + $0x50] sm:$0xff] %v306
      %319 = vst [vmem:[#allocation2 + $0x58] sm:$0xff] %v307
      %v320 = vld [vmem:[%s192] sm:$0xff]
      %v321 = vld [vmem:[%s192 + $0x8] sm:$0xff]
      %v322 = vld [vmem:[%s192 + $0x10] sm:$0xff]
      %v323 = vld [vmem:[%s192 + $0x18] sm:$0xff]
      %v324 = vld [vmem:[%s192 + $0x20] sm:$0xff]
      %v325 = vld [vmem:[%s192 + $0x28] sm:$0xff]
      %v326 = vld [vmem:[%s192 + $0x30] sm:$0xff]
      %v327 = vld [vmem:[%s192 + $0x38] sm:$0xff]
      %v336 = vunpack.c.l.b16 %v320
      %v337 = vunpack.c.h.b16 %v320
      %v338 = vunpack.c.l.b16 %v321
      %v339 = vunpack.c.h.b16 %v321
      %v340 = vunpack.c.l.b16 %v322
      %v341 = vunpack.c.h.b16 %v322
      %v342 = vunpack.c.l.b16 %v323
      %v343 = vunpack.c.h.b16 %v323
      %v344 = vunpack.c.l.b16 %v324
      %v345 = vunpack.c.h.b16 %v324
      %v346 = vunpack.c.l.b16 %v325
      %v347 = vunpack.c.h.b16 %v325
      %v348 = vunpack.c.l.b16 %v326
      %v349 = vunpack.c.h.b16 %v326
      %v350 = vunpack.c.l.b16 %v327
      %v351 = vunpack.c.h.b16 %v327
      %v352 = vpack.c.b16 %v340, %v336
      %v353 = vpack.c.b16 %v341, %v337
      %v354 = vpack.c.b16 %v342, %v338
      %v355 = vpack.c.b16 %v343, %v339
      %v356 = vpack.c.b16 %v348, %v344
      %v357 = vpack.c.b16 %v349, %v345
      %v358 = vpack.c.b16 %v350, %v346
      %v359 = vpack.c.b16 %v351, %v347
      %360 = vrot.lane.b32.xlu0 %v352, 126
      %v361 = vpop.permute.xlu0 %360
      %362 = vrot.lane.b32.xlu0 %v353, 126
      %v363 = vpop.permute.xlu0 %362
      %364 = vrot.lane.b32.xlu0 %v354, 126
      %v365 = vpop.permute.xlu0 %364
      %366 = vrot.lane.b32.xlu0 %v355, 126
      %v367 = vpop.permute.xlu0 %366
      %368 = vrot.lane.b32.xlu0 %v356, 126
      %v369 = vpop.permute.xlu0 %368
      %370 = vrot.lane.b32.xlu0 %v357, 126
      %v371 = vpop.permute.xlu0 %370
      %372 = vrot.lane.b32.xlu0 %v358, 126
      %v373 = vpop.permute.xlu0 %372
      %374 = vrot.lane.b32.xlu0 %v359, 126
      %v375 = vpop.permute.xlu0 %374
      %vm376 = vcmask 1031168
      %v377 = vsel %vm376, %v361, %v363
      %v378 = vsel %vm376, %v363, %v365
      %v379 = vsel %vm376, %v365, %v367
      %v380 = vsel %vm376, %v369, %v371
      %v381 = vsel %vm376, %v371, %v373
      %v382 = vsel %vm376, %v373, %v375
      %389 = vst [vmem:[#allocation2 + $0x60] sm:$0xff] %v377
      %390 = vst [vmem:[#allocation2 + $0x68] sm:$0xff] %v378
      %391 = vst [vmem:[#allocation2 + $0x70] sm:$0xff] %v379
      %392 = vst [vmem:[#allocation2 + $0x78] sm:$0xff] %v380
      %393 = vst [vmem:[#allocation2 + $0x80] sm:$0xff] %v381
      %394 = vst [vmem:[#allocation2 + $0x88] sm:$0xff] %v382
      %v395 = vld [vmem:[%s192] sm:$0xff]
      %v396 = vld [vmem:[%s192 + $0x8] sm:$0xff]
      %v397 = vld [vmem:[%s192 + $0x10] sm:$0xff]
      %v398 = vld [vmem:[%s192 + $0x18] sm:$0xff]
      %v399 = vld [vmem:[%s192 + $0x20] sm:$0xff]
      %v400 = vld [vmem:[%s192 + $0x28] sm:$0xff]
      %v401 = vld [vmem:[%s192 + $0x30] sm:$0xff]
      %v402 = vld [vmem:[%s192 + $0x38] sm:$0xff]
      %v411 = vunpack.c.l.b16 %v395
      %v412 = vunpack.c.h.b16 %v395
      %v413 = vunpack.c.l.b16 %v396
      %v414 = vunpack.c.h.b16 %v396
      %v415 = vunpack.c.l.b16 %v397
      %v416 = vunpack.c.h.b16 %v397
      %v417 = vunpack.c.l.b16 %v398
      %v418 = vunpack.c.h.b16 %v398
      %v419 = vunpack.c.l.b16 %v399
      %v420 = vunpack.c.h.b16 %v399
      %v421 = vunpack.c.l.b16 %v400
      %v422 = vunpack.c.h.b16 %v400
      %v423 = vunpack.c.l.b16 %v401
      %v424 = vunpack.c.h.b16 %v401
      %v425 = vunpack.c.l.b16 %v402
      %v426 = vunpack.c.h.b16 %v402
      %v427 = vpack.c.b16 %v415, %v411
      %v428 = vpack.c.b16 %v416, %v412
      %v429 = vpack.c.b16 %v417, %v413
      %v430 = vpack.c.b16 %v418, %v414
      %v431 = vpack.c.b16 %v423, %v419
      %v432 = vpack.c.b16 %v424, %v420
      %v433 = vpack.c.b16 %v425, %v421
      %v434 = vpack.c.b16 %v426, %v422
      %435 = vrot.lane.b32.xlu0 %v427, 110
      %v436 = vpop.permute.xlu0 %435
      %437 = vrot.lane.b32.xlu0 %v428, 110
      %v438 = vpop.permute.xlu0 %437
      %439 = vrot.lane.b32.xlu0 %v429, 110
      %v440 = vpop.permute.xlu0 %439
      %441 = vrot.lane.b32.xlu0 %v430, 110
      %v442 = vpop.permute.xlu0 %441
      %443 = vrot.lane.b32.xlu0 %v431, 110
      %v444 = vpop.permute.xlu0 %443
      %445 = vrot.lane.b32.xlu0 %v432, 110
      %v446 = vpop.permute.xlu0 %445
      %447 = vrot.lane.b32.xlu0 %v433, 110
      %v448 = vpop.permute.xlu0 %447
      %449 = vrot.lane.b32.xlu0 %v434, 110
      %v450 = vpop.permute.xlu0 %449
      %vm451 = vcmask 900096
      %v452 = vsel %vm451, %v436, %v438
      %v453 = vsel %vm451, %v438, %v440
      %v454 = vsel %vm451, %v440, %v442
      %v455 = vsel %vm451, %v444, %v446
      %v456 = vsel %vm451, %v446, %v448
      %v457 = vsel %vm451, %v448, %v450
      %464 = vst [vmem:[#allocation2 + $0x90] sm:$0xff] %v452
      %465 = vst [vmem:[#allocation2 + $0x98] sm:$0xff] %v453
      %466 = vst [vmem:[#allocation2 + $0xa0] sm:$0xff] %v454
      %467 = vst [vmem:[#allocation2 + $0xa8] sm:$0xff] %v455
      %468 = vst [vmem:[#allocation2 + $0xb0] sm:$0xff] %v456
      %469 = vst [vmem:[#allocation2 + $0xb8] sm:$0xff] %v457
      %v470 = vld [vmem:[%s192] sm:$0xff]
      %v471 = vld [vmem:[%s192 + $0x8] sm:$0xff]
      %v472 = vld [vmem:[%s192 + $0x10] sm:$0xff]
      %v473 = vld [vmem:[%s192 + $0x18] sm:$0xff]
      %v474 = vld [vmem:[%s192 + $0x20] sm:$0xff]
      %v475 = vld [vmem:[%s192 + $0x28] sm:$0xff]
      %v476 = vld [vmem:[%s192 + $0x30] sm:$0xff]
      %v477 = vld [vmem:[%s192 + $0x38] sm:$0xff]
      %v486 = vunpack.c.l.b16 %v470
      %v487 = vunpack.c.h.b16 %v470
      %v488 = vunpack.c.l.b16 %v471
      %v489 = vunpack.c.h.b16 %v471
      %v490 = vunpack.c.l.b16 %v472
      %v491 = vunpack.c.h.b16 %v472
      %v492 = vunpack.c.l.b16 %v473
      %v493 = vunpack.c.h.b16 %v473
      %v494 = vunpack.c.l.b16 %v474
      %v495 = vunpack.c.h.b16 %v474
      %v496 = vunpack.c.l.b16 %v475
      %v497 = vunpack.c.h.b16 %v475
      %v498 = vunpack.c.l.b16 %v476
      %v499 = vunpack.c.h.b16 %v476
      %v500 = vunpack.c.l.b16 %v477
      %v501 = vunpack.c.h.b16 %v477
      %v502 = vpack.c.b16 %v490, %v486
      %v503 = vpack.c.b16 %v491, %v487
      %v504 = vpack.c.b16 %v492, %v488
      %v505 = vpack.c.b16 %v493, %v489
      %v506 = vpack.c.b16 %v498, %v494
      %v507 = vpack.c.b16 %v499, %v495
      %v508 = vpack.c.b16 %v500, %v496
      %v509 = vpack.c.b16 %v501, %v497
      %510 = vrot.lane.b32.xlu0 %v502, 109
      %v511 = vpop.permute.xlu0 %510
      %512 = vrot.lane.b32.xlu0 %v503, 109
      %v513 = vpop.permute.xlu0 %512
      %514 = vrot.lane.b32.xlu0 %v504, 109
      %v515 = vpop.permute.xlu0 %514
      %516 = vrot.lane.b32.xlu0 %v505, 109
      %v517 = vpop.permute.xlu0 %516
      %518 = vrot.lane.b32.xlu0 %v506, 109
      %v519 = vpop.permute.xlu0 %518
      %520 = vrot.lane.b32.xlu0 %v507, 109
      %v521 = vpop.permute.xlu0 %520
      %522 = vrot.lane.b32.xlu0 %v508, 109
      %v523 = vpop.permute.xlu0 %522
      %524 = vrot.lane.b32.xlu0 %v509, 109
      %v525 = vpop.permute.xlu0 %524
      %vm526 = vcmask 891904
      %v527 = vsel %vm526, %v511, %v513
      %v528 = vsel %vm526, %v513, %v515
      %v529 = vsel %vm526, %v515, %v517
      %v530 = vsel %vm526, %v519, %v521
      %v531 = vsel %vm526, %v521, %v523
      %v532 = vsel %vm526, %v523, %v525
      %539 = vst [vmem:[#allocation2 + $0xc0] sm:$0xff] %v527
      %540 = vst [vmem:[#allocation2 + $0xc8] sm:$0xff] %v528
      %541 = vst [vmem:[#allocation2 + $0xd0] sm:$0xff] %v529
      %542 = vst [vmem:[#allocation2 + $0xd8] sm:$0xff] %v530
      %543 = vst [vmem:[#allocation2 + $0xe0] sm:$0xff] %v531
      %544 = vst [vmem:[#allocation2 + $0xe8] sm:$0xff] %v532
      %v545 = vld [vmem:[%s192] sm:$0xff]
      %v546 = vld [vmem:[%s192 + $0x8] sm:$0xff]
      %v547 = vld [vmem:[%s192 + $0x10] sm:$0xff]
      %v548 = vld [vmem:[%s192 + $0x18] sm:$0xff]
      %v549 = vld [vmem:[%s192 + $0x20] sm:$0xff]
      %v550 = vld [vmem:[%s192 + $0x28] sm:$0xff]
      %v551 = vld [vmem:[%s192 + $0x30] sm:$0xff]
      %v552 = vld [vmem:[%s192 + $0x38] sm:$0xff]
      %v561 = vunpack.c.l.b16 %v545
      %v562 = vunpack.c.h.b16 %v545
      %v563 = vunpack.c.l.b16 %v546
      %v564 = vunpack.c.h.b16 %v546
      %v565 = vunpack.c.l.b16 %v547
      %v566 = vunpack.c.h.b16 %v547
      %v567 = vunpack.c.l.b16 %v548
      %v568 = vunpack.c.h.b16 %v548
      %v569 = vunpack.c.l.b16 %v549
      %v570 = vunpack.c.h.b16 %v549
      %v571 = vunpack.c.l.b16 %v550
      %v572 = vunpack.c.h.b16 %v550
      %v573 = vunpack.c.l.b16 %v551
      %v574 = vunpack.c.h.b16 %v551
      %v575 = vunpack.c.l.b16 %v552
      %v576 = vunpack.c.h.b16 %v552
      %v577 = vpack.c.b16 %v565, %v561
      %v578 = vpack.c.b16 %v566, %v562
      %v579 = vpack.c.b16 %v567, %v563
      %v580 = vpack.c.b16 %v568, %v564
      %v581 = vpack.c.b16 %v573, %v569
      %v582 = vpack.c.b16 %v574, %v570
      %v583 = vpack.c.b16 %v575, %v571
      %v584 = vpack.c.b16 %v576, %v572
      %585 = vrot.lane.b32.xlu0 %v577, 108
      %v586 = vpop.permute.xlu0 %585
      %587 = vrot.lane.b32.xlu0 %v578, 108
      %v588 = vpop.permute.xlu0 %587
      %589 = vrot.lane.b32.xlu0 %v579, 108
      %v590 = vpop.permute.xlu0 %589
      %591 = vrot.lane.b32.xlu0 %v580, 108
      %v592 = vpop.permute.xlu0 %591
      %593 = vrot.lane.b32.xlu0 %v581, 108
      %v594 = vpop.permute.xlu0 %593
      %595 = vrot.lane.b32.xlu0 %v582, 108
      %v596 = vpop.permute.xlu0 %595
      %597 = vrot.lane.b32.xlu0 %v583, 108
      %v598 = vpop.permute.xlu0 %597
      %599 = vrot.lane.b32.xlu0 %v584, 108
      %v600 = vpop.permute.xlu0 %599
      %vm601 = vcmask 883712
      %v602 = vsel %vm601, %v586, %v588
      %v603 = vsel %vm601, %v588, %v590
      %v604 = vsel %vm601, %v590, %v592
      %v605 = vsel %vm601, %v594, %v596
      %v606 = vsel %vm601, %v596, %v598
      %v607 = vsel %vm601, %v598, %v600
      %614 = vst [vmem:[#allocation2 + $0xf0] sm:$0xff] %v602
      %615 = vst [vmem:[#allocation2 + $0xf8] sm:$0xff] %v603
      %616 = vst [vmem:[#allocation2 + $0x100] sm:$0xff] %v604
      %617 = vst [vmem:[#allocation2 + $0x108] sm:$0xff] %v605
      %618 = vst [vmem:[#allocation2 + $0x110] sm:$0xff] %v606
      %619 = vst [vmem:[#allocation2 + $0x118] sm:$0xff] %v607
      %v620 = vld [vmem:[%s192] sm:$0xff]
      %v621 = vld [vmem:[%s192 + $0x8] sm:$0xff]
      %v622 = vld [vmem:[%s192 + $0x10] sm:$0xff]
      %v623 = vld [vmem:[%s192 + $0x18] sm:$0xff]
      %v624 = vld [vmem:[%s192 + $0x20] sm:$0xff]
      %v625 = vld [vmem:[%s192 + $0x28] sm:$0xff]
      %v626 = vld [vmem:[%s192 + $0x30] sm:$0xff]
      %v627 = vld [vmem:[%s192 + $0x38] sm:$0xff]
      %v636 = vunpack.c.l.b16 %v620
      %v637 = vunpack.c.h.b16 %v620
      %v638 = vunpack.c.l.b16 %v621
      %v639 = vunpack.c.h.b16 %v621
      %v640 = vunpack.c.l.b16 %v622
      %v641 = vunpack.c.h.b16 %v622
      %v642 = vunpack.c.l.b16 %v623
      %v643 = vunpack.c.h.b16 %v623
      %v644 = vunpack.c.l.b16 %v624
      %v645 = vunpack.c.h.b16 %v624
      %v646 = vunpack.c.l.b16 %v625
      %v647 = vunpack.c.h.b16 %v625
      %v648 = vunpack.c.l.b16 %v626
      %v649 = vunpack.c.h.b16 %v626
      %v650 = vunpack.c.l.b16 %v627
      %v651 = vunpack.c.h.b16 %v627
      %v652 = vpack.c.b16 %v640, %v636
      %v653 = vpack.c.b16 %v641, %v637
      %v654 = vpack.c.b16 %v642, %v638
      %v655 = vpack.c.b16 %v643, %v639
      %v656 = vpack.c.b16 %v648, %v644
      %v657 = vpack.c.b16 %v649, %v645
      %v658 = vpack.c.b16 %v650, %v646
      %v659 = vpack.c.b16 %v651, %v647
      %660 = vrot.lane.b32.xlu0 %v652, 92
      %v661 = vpop.permute.xlu0 %660
      %662 = vrot.lane.b32.xlu0 %v653, 92
      %v663 = vpop.permute.xlu0 %662
      %664 = vrot.lane.b32.xlu0 %v654, 92
      %v665 = vpop.permute.xlu0 %664
      %666 = vrot.lane.b32.xlu0 %v655, 92
      %v667 = vpop.permute.xlu0 %666
      %668 = vrot.lane.b32.xlu0 %v656, 92
      %v669 = vpop.permute.xlu0 %668
      %670 = vrot.lane.b32.xlu0 %v657, 92
      %v671 = vpop.permute.xlu0 %670
      %672 = vrot.lane.b32.xlu0 %v658, 92
      %v673 = vpop.permute.xlu0 %672
      %674 = vrot.lane.b32.xlu0 %v659, 92
      %v675 = vpop.permute.xlu0 %674
      %vm676 = vcmask 752640
      %v677 = vsel %vm676, %v661, %v663
      %v678 = vsel %vm676, %v663, %v665
      %v679 = vsel %vm676, %v665, %v667
      %v680 = vsel %vm676, %v669, %v671
      %v681 = vsel %vm676, %v671, %v673
      %v682 = vsel %vm676, %v673, %v675
      %689 = vst [vmem:[#allocation2 + $0x120] sm:$0xff] %v677
      %690 = vst [vmem:[#allocation2 + $0x128] sm:$0xff] %v678
      %691 = vst [vmem:[#allocation2 + $0x130] sm:$0xff] %v679
      %692 = vst [vmem:[#allocation2 + $0x138] sm:$0xff] %v680
      %693 = vst [vmem:[#allocation2 + $0x140] sm:$0xff] %v681
      %694 = vst [vmem:[#allocation2 + $0x148] sm:$0xff] %v682
      %v695 = vld [vmem:[%s192] sm:$0xff]
      %v696 = vld [vmem:[%s192 + $0x8] sm:$0xff]
      %v697 = vld [vmem:[%s192 + $0x10] sm:$0xff]
      %v698 = vld [vmem:[%s192 + $0x18] sm:$0xff]
      %v699 = vld [vmem:[%s192 + $0x20] sm:$0xff]
      %v700 = vld [vmem:[%s192 + $0x28] sm:$0xff]
      %v701 = vld [vmem:[%s192 + $0x30] sm:$0xff]
      %v702 = vld [vmem:[%s192 + $0x38] sm:$0xff]
      %v711 = vunpack.c.l.b16 %v695
      %v712 = vunpack.c.h.b16 %v695
      %v713 = vunpack.c.l.b16 %v696
      %v714 = vunpack.c.h.b16 %v696
      %v715 = vunpack.c.l.b16 %v697
      %v716 = vunpack.c.h.b16 %v697
      %v717 = vunpack.c.l.b16 %v698
      %v718 = vunpack.c.h.b16 %v698
      %v719 = vunpack.c.l.b16 %v699
      %v720 = vunpack.c.h.b16 %v699
      %v721 = vunpack.c.l.b16 %v700
      %v722 = vunpack.c.h.b16 %v700
      %v723 = vunpack.c.l.b16 %v701
      %v724 = vunpack.c.h.b16 %v701
      %v725 = vunpack.c.l.b16 %v702
      %v726 = vunpack.c.h.b16 %v702
      %v727 = vpack.c.b16 %v715, %v711
      %v728 = vpack.c.b16 %v716, %v712
      %v729 = vpack.c.b16 %v717, %v713
      %v730 = vpack.c.b16 %v718, %v714
      %v731 = vpack.c.b16 %v723, %v719
      %v732 = vpack.c.b16 %v724, %v720
      %v733 = vpack.c.b16 %v725, %v721
      %v734 = vpack.c.b16 %v726, %v722
      %735 = vrot.lane.b32.xlu0 %v727, 91
      %v736 = vpop.permute.xlu0 %735
      %737 = vrot.lane.b32.xlu0 %v728, 91
      %v738 = vpop.permute.xlu0 %737
      %739 = vrot.lane.b32.xlu0 %v729, 91
      %v740 = vpop.permute.xlu0 %739
      %741 = vrot.lane.b32.xlu0 %v730, 91
      %v742 = vpop.permute.xlu0 %741
      %743 = vrot.lane.b32.xlu0 %v731, 91
      %v744 = vpop.permute.xlu0 %743
      %745 = vrot.lane.b32.xlu0 %v732, 91
      %v746 = vpop.permute.xlu0 %745
      %747 = vrot.lane.b32.xlu0 %v733, 91
      %v748 = vpop.permute.xlu0 %747
      %749 = vrot.lane.b32.xlu0 %v734, 91
      %v750 = vpop.permute.xlu0 %749
      %vm751 = vcmask 744448
      %v752 = vsel %vm751, %v736, %v738
      %v753 = vsel %vm751, %v738, %v740
      %v754 = vsel %vm751, %v740, %v742
      %v755 = vsel %vm751, %v744, %v746
      %v756 = vsel %vm751, %v746, %v748
      %v757 = vsel %vm751, %v748, %v750
      %764 = vst [vmem:[#allocation2 + $0x150] sm:$0xff] %v752
      %765 = vst [vmem:[#allocation2 + $0x158] sm:$0xff] %v753
      %766 = vst [vmem:[#allocation2 + $0x160] sm:$0xff] %v754
      %767 = vst [vmem:[#allocation2 + $0x168] sm:$0xff] %v755
      %768 = vst [vmem:[#allocation2 + $0x170] sm:$0xff] %v756
      %769 = vst [vmem:[#allocation2 + $0x178] sm:$0xff] %v757
      %v770 = vld [vmem:[%s192] sm:$0xff]
      %v771 = vld [vmem:[%s192 + $0x8] sm:$0xff]
      %v772 = vld [vmem:[%s192 + $0x10] sm:$0xff]
      %v773 = vld [vmem:[%s192 + $0x18] sm:$0xff]
      %v774 = vld [vmem:[%s192 + $0x20] sm:$0xff]
      %v775 = vld [vmem:[%s192 + $0x28] sm:$0xff]
      %v776 = vld [vmem:[%s192 + $0x30] sm:$0xff]
      %v777 = vld [vmem:[%s192 + $0x38] sm:$0xff]
      %v786 = vunpack.c.l.b16 %v770
      %v787 = vunpack.c.h.b16 %v770
      %v788 = vunpack.c.l.b16 %v771
      %v789 = vunpack.c.h.b16 %v771
      %v790 = vunpack.c.l.b16 %v772
      %v791 = vunpack.c.h.b16 %v772
      %v792 = vunpack.c.l.b16 %v773
      %v793 = vunpack.c.h.b16 %v773
      %v794 = vunpack.c.l.b16 %v774
      %v795 = vunpack.c.h.b16 %v774
      %v796 = vunpack.c.l.b16 %v775
      %v797 = vunpack.c.h.b16 %v775
      %v798 = vunpack.c.l.b16 %v776
      %v799 = vunpack.c.h.b16 %v776
      %v800 = vunpack.c.l.b16 %v777
      %v801 = vunpack.c.h.b16 %v777
      %v802 = vpack.c.b16 %v790, %v786
      %v803 = vpack.c.b16 %v791, %v787
      %v804 = vpack.c.b16 %v792, %v788
      %v805 = vpack.c.b16 %v793, %v789
      %v806 = vpack.c.b16 %v798, %v794
      %v807 = vpack.c.b16 %v799, %v795
      %v808 = vpack.c.b16 %v800, %v796
      %v809 = vpack.c.b16 %v801, %v797
      %810 = vrot.lane.b32.xlu0 %v802, 90
      %v811 = vpop.permute.xlu0 %810
      %812 = vrot.lane.b32.xlu0 %v803, 90
      %v813 = vpop.permute.xlu0 %812
      %814 = vrot.lane.b32.xlu0 %v804, 90
      %v815 = vpop.permute.xlu0 %814
      %816 = vrot.lane.b32.xlu0 %v805, 90
      %v817 = vpop.permute.xlu0 %816
      %818 = vrot.lane.b32.xlu0 %v806, 90
      %v819 = vpop.permute.xlu0 %818
      %820 = vrot.lane.b32.xlu0 %v807, 90
      %v821 = vpop.permute.xlu0 %820
      %822 = vrot.lane.b32.xlu0 %v808, 90
      %v823 = vpop.permute.xlu0 %822
      %824 = vrot.lane.b32.xlu0 %v809, 90
      %v825 = vpop.permute.xlu0 %824
      %vm826 = vcmask 736256
      %v827 = vsel %vm826, %v811, %v813
      %v828 = vsel %vm826, %v813, %v815
      %v829 = vsel %vm826, %v815, %v817
      %v830 = vsel %vm826, %v819, %v821
      %v831 = vsel %vm826, %v821, %v823
      %v832 = vsel %vm826, %v823, %v825
      %839 = vst [vmem:[#allocation2 + $0x180] sm:$0xff] %v827
      %840 = vst [vmem:[#allocation2 + $0x188] sm:$0xff] %v828
      %841 = vst [vmem:[#allocation2 + $0x190] sm:$0xff] %v829
      %842 = vst [vmem:[#allocation2 + $0x198] sm:$0xff] %v830
      %843 = vst [vmem:[#allocation2 + $0x1a0] sm:$0xff] %v831
      %844 = vst [vmem:[#allocation2 + $0x1a8] sm:$0xff] %v832
      %v845 = vld [vmem:[%s1] sm:$0xff]
      %v846 = vld [vmem:[%s1 + $0x8] sm:$0xf]
      %v847 = vld [vmem:[%s1 + $0xc] sm:$0xff]
      %v848 = vld [vmem:[%s1 + $0x14] sm:$0xf]
      %v849 = vld [vmem:[#allocation2] sm:$0xff]
      %v850 = vld [vmem:[#allocation2 + $0x8] sm:$0xff]
      %v851 = vld [vmem:[#allocation2 + $0x10] sm:$0xff]
      %v852 = vld [vmem:[#allocation2 + $0x18] sm:$0xff]
      %v853 = vld [vmem:[#allocation2 + $0x20] sm:$0xff]
      %v854 = vld [vmem:[#allocation2 + $0x28] sm:$0xff]
      %v855 = vld [vmem:[#allocation2 + $0x30] sm:$0xff]
      %v856 = vld [vmem:[#allocation2 + $0x38] sm:$0xff]
      %v857 = vld [vmem:[#allocation2 + $0x40] sm:$0xff]
      %v858 = vld [vmem:[#allocation2 + $0x48] sm:$0xff]
      %v859 = vld [vmem:[#allocation2 + $0x50] sm:$0xff]
      %v860 = vld [vmem:[#allocation2 + $0x58] sm:$0xff]
      %v861 = vld [vmem:[#allocation2 + $0x60] sm:$0xff]
      %v862 = vld [vmem:[#allocation2 + $0x68] sm:$0xff]
      %v863 = vld [vmem:[#allocation2 + $0x70] sm:$0xff]
      %v864 = vld [vmem:[#allocation2 + $0x78] sm:$0xff]
      %v865 = vld [vmem:[#allocation2 + $0x80] sm:$0xff]
      %v866 = vld [vmem:[#allocation2 + $0x88] sm:$0xff]
      %v867 = vld [vmem:[#allocation2 + $0x90] sm:$0xff]
      %v868 = vld [vmem:[#allocation2 + $0x98] sm:$0xff]
      %v869 = vld [vmem:[#allocation2 + $0xa0] sm:$0xff]
      %v870 = vld [vmem:[#allocation2 + $0xa8] sm:$0xff]
      %v871 = vld [vmem:[#allocation2 + $0xb0] sm:$0xff]
      %v872 = vld [vmem:[#allocation2 + $0xb8] sm:$0xff]
      %v873 = vld [vmem:[#allocation2 + $0xc0] sm:$0xff]
      %v874 = vld [vmem:[#allocation2 + $0xc8] sm:$0xff]
      %v875 = vld [vmem:[#allocation2 + $0xd0] sm:$0xff]
      %v876 = vld [vmem:[#allocation2 + $0xd8] sm:$0xff]
      %v877 = vld [vmem:[#allocation2 + $0xe0] sm:$0xff]
      %v878 = vld [vmem:[#allocation2 + $0xe8] sm:$0xff]
      %v879 = vld [vmem:[#allocation2 + $0xf0] sm:$0xff]
      %v880 = vld [vmem:[#allocation2 + $0xf8] sm:$0xff]
      %v881 = vld [vmem:[#allocation2 + $0x100] sm:$0xff]
      %v882 = vld [vmem:[#allocation2 + $0x108] sm:$0xff]
      %v883 = vld [vmem:[#allocation2 + $0x110] sm:$0xff]
      %v884 = vld [vmem:[#allocation2 + $0x118] sm:$0xff]
      %v885 = vld [vmem:[#allocation2 + $0x120] sm:$0xff]
      %v886 = vld [vmem:[#allocation2 + $0x128] sm:$0xff]
      %v887 = vld [vmem:[#allocation2 + $0x130] sm:$0xff]
      %v888 = vld [vmem:[#allocation2 + $0x138] sm:$0xff]
      %v889 = vld [vmem:[#allocation2 + $0x140] sm:$0xff]
      %v890 = vld [vmem:[#allocation2 + $0x148] sm:$0xff]
      %v891 = vld [vmem:[#allocation2 + $0x150] sm:$0xff]
      %v892 = vld [vmem:[#allocation2 + $0x158] sm:$0xff]
      %v893 = vld [vmem:[#allocation2 + $0x160] sm:$0xff]
      %v894 = vld [vmem:[#allocation2 + $0x168] sm:$0xff]
      %v895 = vld [vmem:[#allocation2 + $0x170] sm:$0xff]
      %v896 = vld [vmem:[#allocation2 + $0x178] sm:$0xff]
      %v897 = vld [vmem:[#allocation2 + $0x180] sm:$0xff]
      %v898 = vld [vmem:[#allocation2 + $0x188] sm:$0xff]
      %v899 = vld [vmem:[#allocation2 + $0x190] sm:$0xff]
      %v900 = vld [vmem:[#allocation2 + $0x198] sm:$0xff]
      %v901 = vld [vmem:[#allocation2 + $0x1a0] sm:$0xff]
      %v902 = vld [vmem:[#allocation2 + $0x1a8] sm:$0xff]
      %v903 = vld [vmem:[%s2] sm:$0xff]
      %v904 = vld [vmem:[%s2 + $0x8] sm:$0xff]
      %906 = vset.pattern.permute.xlu0 0
      %907 = vperm.xlu0 %906, %v903
      %v908 = vpop.permute.xlu0 %907
      %911 = vset.pattern.permute.xlu0 0
      %912 = vperm.xlu0 %911, %v904
      %v913 = vpop.permute.xlu0 %912
      %v919 = vunpack.c.l.b16 %v845
      %v920 = vunpack.c.h.b16 %v845
      %v921 = vunpack.c.l.b16 %v846
      %v922 = vunpack.c.l.b16 %v847
      %v923 = vunpack.c.h.b16 %v847
      %v924 = vunpack.c.l.b16 %v848
      %v925 = vpack.c.b16 %v922, %v919
      %v926 = vpack.c.b16 %v923, %v920
      %v927 = vpack.c.b16 %v924, %v921
      %vm930 = vcmask 261120
      %v932 = vsel %vm930, %v927, 0
      %934 = vmatprep.subr.bf16.mxu0 %v850
      %935 = vmatpush1.bf16.msra.mxu0 %v849
      %936 = vmatprep.subr.bf16.mxu0 %v853
      %937 = vmatpush1.bf16.msra.mxu0 %v852
      %938 = vmatprep.subr.bf16.mxu0 %v856
      %939 = vmatpush1.bf16.msra.mxu0 %v855
      %940 = vmatprep.subr.bf16.mxu0 %v859
      %941 = vmatpush1.bf16.msra.mxu0 %v858
      %942 = vmatprep.subr.bf16.mxu0 %v862
      %943 = vmatpush1.bf16.msra.mxu0 %v861
      %944 = vmatprep.subr.bf16.mxu0 %v865
      %945 = vmatpush1.bf16.msra.mxu0 %v864
      %946 = vmatprep.subr.bf16.mxu0 %v868
      %947 = vmatpush1.bf16.msra.mxu0 %v867
      %948 = vmatprep.subr.bf16.mxu0 %v871
      %949 = vmatpush1.bf16.msra.mxu0 %v870
      %950 = vmatprep.subr.bf16.mxu0 %v874
      %951 = vmatpush1.bf16.msra.mxu0 %v873
      %952 = vmatprep.subr.bf16.mxu0 %v877
      %953 = vmatpush1.bf16.msra.mxu0 %v876
      %954 = vmatprep.subr.bf16.mxu0 %v880
      %955 = vmatpush1.bf16.msra.mxu0 %v879
      %956 = vmatprep.subr.bf16.mxu0 %v883
      %957 = vmatpush1.bf16.msra.mxu0 %v882
      %958 = vmatprep.subr.bf16.mxu0 %v886
      %959 = vmatpush1.bf16.msra.mxu0 %v885
      %960 = vmatprep.subr.bf16.mxu0 %v889
      %961 = vmatpush1.bf16.msra.mxu0 %v888
      %962 = vmatprep.subr.bf16.mxu0 %v892
      %963 = vmatpush1.bf16.msra.mxu0 %v891
      %964 = vmatprep.subr.bf16.mxu0 %v895
      %965 = vmatpush1.bf16.msra.mxu0 %v894
      %966 = vmatprep.mubr.bf16.mxu0 %v926
      %967 = vmatmul.mubr.bf16.gmra.mrb[0].mxu0 %v925
      %v968 = vpop.f32.mrb[0].mxu0
      %v969 = vadd.f32 %v908, %v968
      %v970 = vpop.f32.mrb[0].mxu0
      %v971 = vadd.f32 %v908, %v970
      %v972 = vpop.f32.mrb[0].mxu0
      %v973 = vadd.f32 %v913, %v972
      %v974 = vpop.f32.mrb[0].mxu0
      %v975 = vadd.f32 %v913, %v974
      %976 = vdwg.mxu0
      %977 = vmatprep.subr.bf16.mxu0 %v898
      %978 = vmatpush1.bf16.msra.mxu0 %v897
      %979 = vmatprep.subr.bf16.mxu0 %v901
      %980 = vmatpush1.bf16.msra.mxu0 %v900
      %981 = vmatprep.subr.bf16.mxu0 0
      %982 = vmatpush1.bf16.msra.mxu0 0
      %983 = vmatprep.subr.bf16.mxu0 0
      %984 = vmatpush1.bf16.msra.mxu0 0
      %985 = vmatprep.subr.bf16.mxu0 0
      %986 = vmatpush1.bf16.msra.mxu0 0
      %987 = vmatprep.subr.bf16.mxu0 0
      %988 = vmatpush1.bf16.msra.mxu0 0
      %989 = vmatprep.subr.bf16.mxu0 0
      %990 = vmatpush1.bf16.msra.mxu0 0
      %991 = vmatprep.subr.bf16.mxu0 0
      %992 = vmatpush1.bf16.msra.mxu0 0
      %993 = vmatprep.subr.bf16.mxu0 0
      %994 = vmatpush1.bf16.msra.mxu0 0
      %995 = vmatprep.subr.bf16.mxu0 0
      %996 = vmatpush1.bf16.msra.mxu0 0
      %997 = vmatprep.subr.bf16.mxu0 0
      %998 = vmatpush1.bf16.msra.mxu0 0
      %999 = vmatprep.subr.bf16.mxu0 0
      %1000 = vmatpush1.bf16.msra.mxu0 0
      %1001 = vmatprep.subr.bf16.mxu0 0
      %1002 = vmatpush1.bf16.msra.mxu0 0
      %1003 = vmatprep.subr.bf16.mxu0 0
      %1004 = vmatpush1.bf16.msra.mxu0 0
      %1005 = vmatprep.subr.bf16.mxu0 0
      %1006 = vmatpush1.bf16.msra.mxu0 0
      %1007 = vmatprep.subr.bf16.mxu0 0
      %1008 = vmatpush1.bf16.msra.mxu0 0
      %1009 = vmatprep.mubr.bf16.mxu0 0
      %1010 = vmatmul.mubr.bf16.gmra.mrb[0].mxu0 %v932
      %v1011 = vpop.f32.mrb[0].mxu0
      %v1012 = vadd.f32 %v969, %v1011
      %v1013 = vpop.f32.mrb[0].mxu0
      %v1014 = vadd.f32 %v971, %v1013
      %v1015 = vpop.f32.mrb[0].mxu0
      %v1016 = vadd.f32 %v973, %v1015
      %v1017 = vpop.f32.mrb[0].mxu0
      %v1018 = vadd.f32 %v975, %v1017
      %1019 = vdwg.mxu0
      %1020 = vmatprep.subr.bf16.mxu0 0
      %1021 = vmatpush1.bf16.msra.mxu0 %v851
      %1022 = vmatprep.subr.bf16.mxu0 0
      %1023 = vmatpush1.bf16.msra.mxu0 %v854
      %1024 = vmatprep.subr.bf16.mxu0 0
      %1025 = vmatpush1.bf16.msra.mxu0 %v857
      %1026 = vmatprep.subr.bf16.mxu0 0
      %1027 = vmatpush1.bf16.msra.mxu0 %v860
      %1028 = vmatprep.subr.bf16.mxu0 0
      %1029 = vmatpush1.bf16.msra.mxu0 %v863
      %1030 = vmatprep.subr.bf16.mxu0 0
      %1031 = vmatpush1.bf16.msra.mxu0 %v866
      %1032 = vmatprep.subr.bf16.mxu0 0
      %1033 = vmatpush1.bf16.msra.mxu0 %v869
      %1034 = vmatprep.subr.bf16.mxu0 0
      %1035 = vmatpush1.bf16.msra.mxu0 %v872
      %1036 = vmatprep.subr.bf16.mxu0 0
      %1037 = vmatpush1.bf16.msra.mxu0 %v875
      %1038 = vmatprep.subr.bf16.mxu0 0
      %1039 = vmatpush1.bf16.msra.mxu0 %v878
      %1040 = vmatprep.subr.bf16.mxu0 0
      %1041 = vmatpush1.bf16.msra.mxu0 %v881
      %1042 = vmatprep.subr.bf16.mxu0 0
      %1043 = vmatpush1.bf16.msra.mxu0 %v884
      %1044 = vmatprep.subr.bf16.mxu0 0
      %1045 = vmatpush1.bf16.msra.mxu0 %v887
      %1046 = vmatprep.subr.bf16.mxu0 0
      %1047 = vmatpush1.bf16.msra.mxu0 %v890
      %1048 = vmatprep.subr.bf16.mxu0 0
      %1049 = vmatpush1.bf16.msra.mxu0 %v893
      %1050 = vmatprep.subr.bf16.mxu0 0
      %1051 = vmatpush1.bf16.msra.mxu0 %v896
      %1052 = vmatprep.mubr.bf16.mxu0 %v926
      %1053 = vmatmul.mubr.bf16.gmra.mrb[0].mxu0 %v925
      %v1054 = vpop.f32.mrb[0].mxu0
      %v1055 = vadd.f32 %v908, %v1054
      %v1056 = vpop.f32.mrb[0].mxu0
      %v1057 = vpop.f32.mrb[0].mxu0
      %v1058 = vadd.f32 %v913, %v1057
      %v1059 = vpop.f32.mrb[0].mxu0
      %1060 = vdwg.mxu0
      %1061 = vmatprep.subr.bf16.mxu0 0
      %1062 = vmatpush1.bf16.msra.mxu0 %v899
      %1063 = vmatprep.subr.bf16.mxu0 0
      %1064 = vmatpush1.bf16.msra.mxu0 %v902
      %1065 = vmatprep.subr.bf16.mxu0 0
      %1066 = vmatpush1.bf16.msra.mxu0 0
      %1067 = vmatprep.subr.bf16.mxu0 0
      %1068 = vmatpush1.bf16.msra.mxu0 0
      %1069 = vmatprep.subr.bf16.mxu0 0
      %1070 = vmatpush1.bf16.msra.mxu0 0
      %1071 = vmatprep.subr.bf16.mxu0 0
      %1072 = vmatpush1.bf16.msra.mxu0 0
      %1073 = vmatprep.subr.bf16.mxu0 0
      %1074 = vmatpush1.bf16.msra.mxu0 0
      %1075 = vmatprep.subr.bf16.mxu0 0
      %1076 = vmatpush1.bf16.msra.mxu0 0
      %1077 = vmatprep.subr.bf16.mxu0 0
      %1078 = vmatpush1.bf16.msra.mxu0 0
      %1079 = vmatprep.subr.bf16.mxu0 0
      %1080 = vmatpush1.bf16.msra.mxu0 0
      %1081 = vmatprep.subr.bf16.mxu0 0
      %1082 = vmatpush1.bf16.msra.mxu0 0
      %1083 = vmatprep.subr.bf16.mxu0 0
      %1084 = vmatpush1.bf16.msra.mxu0 0
      %1085 = vmatprep.subr.bf16.mxu0 0
      %1086 = vmatpush1.bf16.msra.mxu0 0
      %1087 = vmatprep.subr.bf16.mxu0 0
      %1088 = vmatpush1.bf16.msra.mxu0 0
      %1089 = vmatprep.subr.bf16.mxu0 0
      %1090 = vmatpush1.bf16.msra.mxu0 0
      %1091 = vmatprep.subr.bf16.mxu0 0
      %1092 = vmatpush1.bf16.msra.mxu0 0
      %1093 = vmatprep.mubr.bf16.mxu0 0
      %1094 = vmatmul.mubr.bf16.gmra.mrb[0].mxu0 %v932
      %v1095 = vpop.f32.mrb[0].mxu0
      %v1096 = vadd.f32 %v1055, %v1095
      %v1097 = vpop.f32.mrb[0].mxu0
      %v1098 = vpop.f32.mrb[0].mxu0
      %v1099 = vadd.f32 %v1058, %v1098
      %v1100 = vpop.f32.mrb[0].mxu0
      %1101 = vdwg.mxu0
      %v1102 = vld [vmem:[%s3] sm:$0x7]
      %v1104 = vlaneseq
      %v1105 = vshrl.u32 %v1104, 7
      %v1106 = vsub.s32 0, %v1105
      %v1107 = vrot.slane %v1102, %v1106
      %v1108 = vlaneseq
      %v1109 = vshrl.u32 %v1108, 7
      %v1110 = vsub.s32 1, %v1109
      %v1111 = vrot.slane %v1102, %v1110
      %v1112 = vlaneseq
      %v1113 = vshrl.u32 %v1112, 7
      %v1114 = vsub.s32 2, %v1113
      %v1115 = vrot.slane %v1102, %v1114
      %v1119 = vmul.f32 %v1012, %v1107
      %v1120 = vmul.f32 %v1014, %v1111
      %v1121 = vmul.f32 %v1096, %v1115
      %v1122 = vmul.f32 %v1016, %v1107
      %v1123 = vmul.f32 %v1018, %v1111
      %v1124 = vmul.f32 %v1099, %v1115
      %1125 = vst [vmem:[%s197] sm:$0xff] %v1119
      %1126 = vst [vmem:[%s197 + $0x8] sm:$0xff] %v1120
      %1127 = vst [vmem:[%s197 + $0x10] sm:$0xff] %v1121
      %1128 = vst [vmem:[%s197 + $0x18] sm:$0xff] %v1122
      %1129 = vst [vmem:[%s197 + $0x20] sm:$0xff] %v1123
      %1130 = vst [vmem:[%s197 + $0x28] sm:$0xff] %v1124
      %p1131 = scmp.lt.s32.totalorder %s15, 1
      %s1132 = scalar_select %p1131, %s15, 1
      %s1133 = smul.addr %s1132, 6
      %s1134 = smul.addr %s1133, 8
      %s1135 = scalar_lea.vmem %s4, %s1134
      // Predicated region
      $region37: #{transporter_forward.13} parent=35 // pred_check
        %p1136 = pneg %p122
      $region38: #{transporter_forward.13} parent=35 // pred_check_branch
        %1138 = sbr.rel (%p1136) target = $region40
      $region39: #{transporter_forward.13} parent=35 // pred_region
        _
      $region40: #{transporter_forward.13} parent=35 // pred_fallthru
        _
    $region36: #{transporter_forward.13} parent=5 // pred_fallthru
      _
    %p1139 = scmp.le.s32.totalorder 2, %s10
    // Predicated region
    $region41: #{transporter_forward.13} parent=5 // pred_check
      %p1140 = pneg %p1139
    $region42: #{transporter_forward.13} parent=5 // pred_check_branch
      %1142 = sbr.rel (%p1140) target = $region44
    $region43: #{transporter_forward.13} parent=5 // pred_region
      %s1143 = ssub.s32 %s10, 2
      // Predicated region
      $region45: #{transporter_forward.13} parent=43 // pred_check
        %p1144 = pneg %p128
      $region46: #{transporter_forward.13} parent=43 // pred_check_branch
        %1146 = sbr.rel (%p1144) target = $region48
      $region47: #{transporter_forward.13} parent=43 // pred_region
        %p1147 = scmp.lt.s32.totalorder %s16, 1
        %s1148 = scalar_select %p1147, %s16, 1
        %s1149 = smul.addr %s1148, 6
        %s1150 = smul.addr %s1149, 8
        %s1151 = scalar_lea.vmem %s4, %s1150
      $region48: #{transporter_forward.13} parent=43 // pred_fallthru
        _
    $region44: #{transporter_forward.13} parent=5 // pred_fallthru
      _
  $region6: #{transporter_forward.13} parent=0 // loop_footer
    %s14 = sadd.s32 1, %s10
  $region7: #{transporter_forward.13} parent=0 // loop_footer_branch
    %9 = sbr.rel target = $region3
  $region8: #{transporter_forward.13} parent=0 // loop_exit
    _

</llo_original>
